<compile_context>
chip_gen: v5e
topology: v5e:2x2
jax: 0.10.0
libtpu: 0.0.40
codegen_flags: <defaults>
</compile_context>

<pallas_src>
import functools

import jax
import jax.numpy as jnp
from jax.experimental import pallas as pl
from jax.experimental.pallas import tpu as pltpu


# ----------------------------------------------------------------------------
# Kernel 1: fused FlowCNN (4x [3x3 conv + folded-BN + ReLU], im2col matmuls)
# ----------------------------------------------------------------------------
def _flowcnn_kernel(x_ref, w1_ref, b1_ref, w2_ref, b2_ref, w3_ref, b3_ref,
                    w4_ref, b4_ref, o_ref, pad_ref, *, H, W):
    HW = H * W

    def conv3x3(cin, w, b):
        p = pad_ref[...]                                   # (H+2, W+2, 32)
        cols = [p[dy:dy + H, dx:dx + W, :cin].reshape(HW, cin)
                for dy in range(3) for dx in range(3)]
        patches = jnp.concatenate(cols, axis=-1)           # (HW, 9*cin)
        y = jnp.dot(patches, w, preferred_element_type=jnp.float32) + b
        return jnp.maximum(y, 0.0)                         # ReLU on every conv (spec)

    pad_ref[...] = jnp.zeros_like(pad_ref)                 # zero border once
    x = x_ref[0]                                           # (H, W, 11)
    flow0 = x[:, :, 0:2].reshape(HW, 2)                    # RAFT flow, reused below

    pad_ref[1:H + 1, 1:W + 1, 0:11] = x
    h1 = conv3x3(11, w1_ref[...], b1_ref[...])             # (HW, 16)
    pad_ref[1:H + 1, 1:W + 1, 0:16] = h1.reshape(H, W, 16)
    h2 = conv3x3(16, w2_ref[...], b2_ref[...])             # (HW, 32)
    pad_ref[1:H + 1, 1:W + 1, 0:32] = h2.reshape(H, W, 32)
    h3 = conv3x3(32, w3_ref[...], b3_ref[...])             # (HW, 2)
    x4 = jnp.concatenate([flow0, h3], axis=-1)             # cat([flow, x], 1)
    pad_ref[1:H + 1, 1:W + 1, 0:4] = x4.reshape(H, W, 4)
    f = conv3x3(4, w4_ref[...], b4_ref[...])               # (HW, 2)

    o_ref[0] = f.T                                         # (2, HW) lane-dense


def flowcnn_call(x_nhwc, p):
    N, H, W, _ = x_nhwc.shape
    HW = H * W
    kern = functools.partial(_flowcnn_kernel, H=H, W=W)
    return pl.pallas_call(
        kern,
        out_shape=jax.ShapeDtypeStruct((N, 2, HW), jnp.float32),
        grid=(N,),
        in_specs=[
            pl.BlockSpec((1, H, W, 11), lambda n: (n, 0, 0, 0)),
            pl.BlockSpec(p['fc1_w'].shape, lambda n: (0, 0)),
            pl.BlockSpec(p['fc1_b'].shape, lambda n: (0, 0)),
            pl.BlockSpec(p['fc2_w'].shape, lambda n: (0, 0)),
            pl.BlockSpec(p['fc2_b'].shape, lambda n: (0, 0)),
            pl.BlockSpec(p['fc3_w'].shape, lambda n: (0, 0)),
            pl.BlockSpec(p['fc3_b'].shape, lambda n: (0, 0)),
            pl.BlockSpec(p['fc4_w'].shape, lambda n: (0, 0)),
            pl.BlockSpec(p['fc4_b'].shape, lambda n: (0, 0)),
        ],
        out_specs=pl.BlockSpec((1, 2, HW), lambda n: (n, 0, 0)),
        scratch_shapes=[pltpu.VMEM((H + 2, W + 2, 32), jnp.float32)],
        compiler_params=pltpu.CompilerParams(
            dimension_semantics=("parallel",),
            vmem_limit_bytes=32 * 1024 * 1024),
    )(x_nhwc, p['fc1_w'], p['fc1_b'], p['fc2_w'], p['fc2_b'],
      p['fc3_w'], p['fc3_b'], p['fc4_w'], p['fc4_b'])


# ----------------------------------------------------------------------------
# Kernel 2: flowwarp (grid_sample bilinear, align_corners=False, zero padding)
#           via 4 weighted row-gathers, fused with w_a*base + w_b*warp(feat),
#           tiled over channel blocks.
# ----------------------------------------------------------------------------
def _warp_fuse_kernel(base_ref, feat_ref, fx_ref, fy_ref, wa_ref, wb_ref,
                      o_ref, *, H, W):
    HW = H * W
    cb = base_ref.shape[-1]
    base = base_ref[0].reshape(HW, cb).astype(jnp.float32)
    feat = feat_ref[0].reshape(HW, cb).astype(jnp.float32)
    fx = fx_ref[0]                                          # (HW, 1) f32
    fy = fy_ref[0]

    pos = jax.lax.broadcasted_iota(jnp.int32, (HW, 1), 0)
    xx = (pos % W).astype(jnp.float32)
    yy = (pos // W).astype(jnp.float32)
    # flowwarp normalization (/(dim-1)) then grid_sample align_corners=False
    # un-normalization -- exactly the mixed convention of the reference.
    vx = 2.0 * (xx + fx) / float(max(W - 1, 1)) - 1.0
    vy = 2.0 * (yy + fy) / float(max(H - 1, 1)) - 1.0
    ix = ((vx + 1.0) * W - 1.0) * 0.5
    iy = ((vy + 1.0) * H - 1.0) * 0.5
    x0f = jnp.floor(ix)
    y0f = jnp.floor(iy)
    wx = ix - x0f
    wy = iy - y0f
    x0 = x0f.astype(jnp.int32)
    y0 = y0f.astype(jnp.int32)

    acc = jnp.zeros((HW, cb), jnp.float32)
    for ddx, ddy, wgt in ((0, 0, (1.0 - wx) * (1.0 - wy)),
                          (1, 0, wx * (1.0 - wy)),
                          (0, 1, (1.0 - wx) * wy),
                          (1, 1, wx * wy)):
        xc = x0 + ddx
        yc = y0 + ddy
        valid = (xc >= 0) & (xc < W) & (yc >= 0) & (yc < H)
        idx = jnp.clip(yc, 0, H - 1) * W + jnp.clip(xc, 0, W - 1)   # (HW, 1)
        g = jnp.take(feat, idx.reshape(HW), axis=0, mode="clip")    # (HW, cb)
        acc = acc + jnp.where(valid, wgt, 0.0) * g

    out = wa_ref[...] * base + wb_ref[...] * acc
    o_ref[0] = out.reshape(H, W, cb).astype(o_ref.dtype)


def warp_fuse_call(base_nhwc, feat_nhwc, fx, fy, w_a, w_b, cb=128):
    N, H, W, C = base_nhwc.shape
    HW = H * W
    cb = min(cb, C)
    assert C % cb == 0
    kern = functools.partial(_warp_fuse_kernel, H=H, W=W)
    return pl.pallas_call(
        kern,
        out_shape=jax.ShapeDtypeStruct((N, H, W, C), jnp.bfloat16),
        grid=(N, C // cb),
        in_specs=[
            pl.BlockSpec((1, H, W, cb), lambda n, c: (n, 0, 0, c)),
            pl.BlockSpec((1, H, W, cb), lambda n, c: (n, 0, 0, c)),
            pl.BlockSpec((1, HW, 1), lambda n, c: (n, 0, 0)),
            pl.BlockSpec((1, HW, 1), lambda n, c: (n, 0, 0)),
            pl.BlockSpec((1, cb), lambda n, c: (0, c)),
            pl.BlockSpec((1, cb), lambda n, c: (0, c)),
        ],
        out_specs=pl.BlockSpec((1, H, W, cb), lambda n, c: (n, 0, 0, c)),
        compiler_params=pltpu.CompilerParams(
            dimension_semantics=("parallel", "parallel"),
            vmem_limit_bytes=32 * 1024 * 1024),
    )(base_nhwc, feat_nhwc, fx, fy, w_a.reshape(1, C), w_b.reshape(1, C))


# ----------------------------------------------------------------------------
# Kernel 3: conv_last_ = 3x3 conv (BN folded) + ReLU + [Dropout eval=id] +
#           1x1 conv + bias, with grid reduction over Cin blocks and an f32
#           VMEM accumulator; bf16 MXU operands, f32 accumulation; logits
#           written channel-first (K, HW) -> lane-dense.
# ----------------------------------------------------------------------------
def _conv_last_kernel(x_ref, w0_ref, b0_ref, w1_ref, b1_ref, o_ref,
                      pad_ref, acc_ref, *, H, W):
    HW = H * W
    cb = x_ref.shape[-1]
    mid = w0_ref.shape[-1]
    kin = pl.program_id(1)

    @pl.when(kin == 0)
    def _():
        acc_ref[...] = jnp.zeros_like(acc_ref)
        pad_ref[...] = jnp.zeros_like(pad_ref)

    pad_ref[1:H + 1, 1:W + 1, :] = x_ref[0].astype(jnp.float32)
    p = pad_ref[...]
    cols = [p[dy:dy + H, dx:dx + W, :].reshape(HW, cb)
            for dy in range(3) for dx in range(3)]
    patches = jnp.concatenate(cols, axis=-1).astype(jnp.bfloat16)   # (HW, 9*cb)
    w0 = w0_ref[...].reshape(9 * cb, mid)                           # (9*cb, MID) bf16
    acc_ref[...] += jnp.dot(patches, w0, preferred_element_type=jnp.float32)

    @pl.when(kin == pl.num_programs(1) - 1)
    def _():
        h = jnp.maximum(acc_ref[...] + b0_ref[...], 0.0)   # folded BN bias + ReLU
        # TODO(synk): Dropout2d(0.1) is identity in eval mode.
        y = jnp.dot(h, w1_ref[...],
                    preferred_element_type=jnp.float32) + b1_ref[...]   # (HW, K)
        o_ref[0] = y.T                                     # (K, HW) lane-dense


def conv_last_call(x_nhwc, w0, b0, w1, b1, kin_blk=128):
    N, H, W, Cin = x_nhwc.shape
    MID = w0.shape[-1]
    K = w1.shape[-1]
    HW = H * W
    kb = min(kin_blk, Cin)
    assert Cin % kb == 0
    kern = functools.partial(_conv_last_kernel, H=H, W=W)
    return pl.pallas_call(
        kern,
        out_shape=jax.ShapeDtypeStruct((N, K, HW), jnp.float32),
        grid=(N, Cin // kb),
        in_specs=[
            pl.BlockSpec((1, H, W, kb), lambda n, k: (n, 0, 0, k)),
            pl.BlockSpec((3, 3, kb, MID), lambda n, k: (0, 0, k, 0)),
            pl.BlockSpec((1, MID), lambda n, k: (0, 0)),
            pl.BlockSpec((MID, K), lambda n, k: (0, 0)),
            pl.BlockSpec((1, K), lambda n, k: (0, 0)),
        ],
        out_specs=pl.BlockSpec((1, K, HW), lambda n, k: (n, 0, 0)),
        scratch_shapes=[pltpu.VMEM((H + 2, W + 2, kb), jnp.float32),
                        pltpu.VMEM((HW, MID), jnp.float32)],
        compiler_params=pltpu.CompilerParams(
            dimension_semantics=("parallel", "arbitrary"),
            vmem_limit_bytes=32 * 1024 * 1024),
    )(x_nhwc, w0, b0, w1, b1)


# ----------------------------------------------------------------------------
# Kernel 4: fused bilinear upsample to segSize (align_corners=False, PyTorch
#           convention via interpolation matrices on the MXU) + channel softmax
#           (EUP exp + approx reciprocal). Output is already NCHW.
# ----------------------------------------------------------------------------
def _upsample_softmax_kernel(x_ref, rh_ref, rw_ref, o_ref, *, K):
    x = x_ref[0]                     # (K, Hd, Wd) f32
    rh = rh_ref[...]                 # (Hs, Hd)
    rw = rw_ref[...]                 # (Wd, Ws)
    ys = []
    for k in range(K):               # K is small and static
        t = jnp.dot(x[k], rw, preferred_element_type=jnp.float32)     # (Hd, Ws)
        ys.append(jnp.dot(rh, t, preferred_element_type=jnp.float32))  # (Hs, Ws)
    y = jnp.stack(ys, axis=0)        # (K, Hs, Ws)
    m = jnp.max(y, axis=0, keepdims=True)
    e = jnp.exp(y - m)
    s = jnp.sum(e, axis=0, keepdims=True)
    o_ref[0] = e * pl.reciprocal(s, approx=True)


def _interp_matrix(out_size, in_size):
    # PyTorch F.interpolate bilinear, align_corners=False.
    i = jnp.arange(out_size, dtype=jnp.float32)
    src = jnp.maximum((i + 0.5) * (in_size / out_size) - 0.5, 0.0)
    i0 = jnp.clip(jnp.floor(src).astype(jnp.int32), 0, in_size - 1)
    frac = src - i0.astype(jnp.float32)
    i1 = jnp.clip(i0 + 1, 0, in_size - 1)
    cols = jnp.arange(in_size)[None, :]
    m = ((cols == i0[:, None]).astype(jnp.float32) * (1.0 - frac)[:, None]
         + (cols == i1[:, None]).astype(jnp.float32) * frac[:, None])
    return m                         # (out, in)


def upsample_softmax_call(logits_nchw, seg_size):
    N, K, H, W = logits_nchw.shape
    Hs, Ws = seg_size
    rh = _interp_matrix(Hs, H)               # (Hs, H)
    rw = _interp_matrix(Ws, W).T             # (W, Ws)
    kern = functools.partial(_upsample_softmax_kernel, K=K)
    return pl.pallas_call(
        kern,
        out_shape=jax.ShapeDtypeStruct((N, K, Hs, Ws), jnp.float32),
        grid=(N,),
        in_specs=[
            pl.BlockSpec((1, K, H, W), lambda n: (n, 0, 0, 0)),
            pl.BlockSpec((Hs, H), lambda n: (0, 0)),
            pl.BlockSpec((W, Ws), lambda n: (0, 0)),
        ],
        out_specs=pl.BlockSpec((1, K, Hs, Ws), lambda n: (n, 0, 0, 0)),
        compiler_params=pltpu.CompilerParams(
            dimension_semantics=("parallel",),
            vmem_limit_bytes=32 * 1024 * 1024),
    )(logits_nchw, rh, rw)


# ----------------------------------------------------------------------------
# Glue helpers (plain JAX: transposes, nearest-resize index bookkeeping)
# ----------------------------------------------------------------------------
def to_nhwc(x_nchw):
    return jnp.transpose(x_nchw, (0, 2, 3, 1))


def nearest_resize_nchw(x, out_h, out_w):
    # F.interpolate(mode='nearest'): src_idx = floor(dst_idx * in / out)
    _, _, H, W = x.shape
    hi = (jnp.arange(out_h) * H) // out_h
    wi = (jnp.arange(out_w) * W) // out_w
    return x[:, :, hi][:, :, :, wi]


# ----------------------------------------------------------------------------
# Parameters (deterministic; channel counts scaled: 2048->C1, 4096->C2,
# 512->MID, num_class->K). BN (eval, fresh stats) is folded into conv weights.
# ----------------------------------------------------------------------------
def make_params(key, C1, C2, MID, K):
    eps = 1e-5
    bn_scale = (1.0 + eps) ** -0.5            # gamma=1, var=1 -> 1/sqrt(1+eps)

    def conv_folded(k, cin, cout):
        fan_in = 9 * cin
        w = jax.random.normal(k, (3, 3, cin, cout), jnp.float32) * (2.0 / fan_in) ** 0.5
        return w * bn_scale                    # fold BN scale; BN bias is 0

    ks = jax.random.split(key, 7)
    p = {}
    # FlowCNN (im2col weight layout (9*Cin, Cout))
    p['fc1_w'] = conv_folded(ks[0], 11, 16).reshape(9 * 11, 16)
    p['fc1_b'] = jnp.zeros((1, 16), jnp.float32)
    p['fc2_w'] = conv_folded(ks[1], 16, 32).reshape(9 * 16, 32)
    p['fc2_b'] = jnp.zeros((1, 32), jnp.float32)
    p['fc3_w'] = conv_folded(ks[2], 32, 2).reshape(9 * 32, 2)
    p['fc3_b'] = jnp.zeros((1, 2), jnp.float32)
    p['fc4_w'] = conv_folded(ks[3], 4, 2).reshape(9 * 4, 2)
    p['fc4_b'] = jnp.zeros((1, 2), jnp.float32)
    # conv_last_: 3x3 (bf16, BN folded) + 1x1 (f32)
    p['cl0_w'] = conv_folded(ks[4], C2, MID).astype(jnp.bfloat16)   # (3,3,C2,MID)
    p['cl0_b'] = jnp.zeros((1, MID), jnp.float32)
    p['cl1_w'] = jax.random.normal(ks[5], (MID, K), jnp.float32) * (1.0 / MID) ** 0.5
    p['cl1_b'] = jax.random.normal(ks[6], (1, K), jnp.float32) * 0.01
    # NetWarp fusion weights — exactly as in __init__ (fill 1.0 / 0.0)
    p['w0_0'] = jnp.ones((C1,), jnp.float32)
    p['w0_1'] = jnp.zeros((C1,), jnp.float32)
    p['w1_0'] = jnp.ones((C2,), jnp.float32)
    p['w1_1'] = jnp.zeros((C2,), jnp.float32)
    return p


# ----------------------------------------------------------------------------
# NetWarp forward (inference / segSize branch)
# ----------------------------------------------------------------------------
def netwarp_forward(params, c_img, c_pre_img, raft_flow, enc_feat, dec_feat, seg_size):
    N, _, H, W = c_img.shape
    c_img_h = to_nhwc(c_img)
    c_pre_h = to_nhwc(c_pre_img)
    flow_h = to_nhwc(raft_flow)                              # (N, H, W, 2)

    mean = jnp.array([0.485, 0.456, 0.406], jnp.float32)
    std = jnp.array([0.229, 0.224, 0.225], jnp.float32)
    c_img_f = (c_img_h * std + mean) * 255.0
    c_pre_img_f = (c_pre_h * std + mean) * 255.0

    # TODO(synk): RAFT flow estimator is an external pretrained net; `raft_flow`
    # stands in for its (no_grad) output.

    # --- FlowCNN: cat([flow, img1, img2, img2-img1]) -> fused 4-conv kernel ---
    x0 = jnp.concatenate([flow_h, c_img_f, c_pre_img_f, c_pre_img_f - c_img_f],
                         axis=-1)                            # (N, H, W, 11)
    flow = flowcnn_call(x0, params).reshape(N, 2, H, W)      # refined flow, NCHW

    # --- encoder-level fusion -------------------------------------------------
    # TODO(synk): encoder/decoder are external modules; their feature maps are
    # synthetic inputs (enc_feat = clip_tmp[-1], dec_feat = clip_tmp2).
    enc_h = to_nhwc(enc_feat).astype(jnp.bfloat16)           # (2N, Hf, Wf, C1)
    c_img_f1, c_pre_img_f1 = enc_h[:N], enc_h[N:]
    Hf, Wf = c_img_f1.shape[1:3]
    fl1 = nearest_resize_nchw(flow, Hf, Wf)
    fx1 = fl1[:, 0].reshape(N, Hf * Wf, 1)
    fy1 = fl1[:, 1].reshape(N, Hf * Wf, 1)
    new_c_img_f1 = warp_fuse_call(c_img_f1, c_pre_img_f1, fx1, fy1,
                                  params['w0_0'], params['w0_1'])
    # would be concatenated with c_pre_img_f1 and fed to the (external) decoder
    del new_c_img_f1

    # --- decoder-level fusion -------------------------------------------------
    dec_h = to_nhwc(dec_feat).astype(jnp.bfloat16)           # (2N, Hd, Wd, C2)
    c_img_f2, c_pre_img_f2 = dec_h[:N], dec_h[N:]
    Hd, Wd = c_img_f2.shape[1:3]
    fl2 = nearest_resize_nchw(flow, Hd, Wd)
    fx2 = fl2[:, 0].reshape(N, Hd * Wd, 1)
    fy2 = fl2[:, 1].reshape(N, Hd * Wd, 1)
    new_feat = warp_fuse_call(c_img_f2, c_pre_img_f2, fx2, fy2,
                              params['w1_0'], params['w1_1'])   # bf16 NHWC

    # --- conv_last_ (fused 3x3+BN+ReLU+Dropout(eval)+1x1) ----------------------
    logits = conv_last_call(new_feat, params['cl0_w'], params['cl0_b'],
                            params['cl1_w'], params['cl1_b'])    # (N, K, Hd*Wd)
    logits = logits.reshape(N, -1, Hd, Wd)

    # --- segSize branch: fused bilinear upsample + channel softmax (NCHW out) -
    return upsample_softmax_call(logits, seg_size)


# ----------------------------------------------------------------------------
if __name__ == "__main__":
    N, H, W = 2, 16, 16              # image resolution
    Hf = Wf = 8                      # encoder / decoder feature resolution
    C1, C2, MID, K = 128, 256, 32, 8  # stand-ins for 2048, 4096, 512, num_class

    key = jax.random.PRNGKey(0)
    k_par, k_in = jax.random.split(key)
    params = make_params(k_par, C1, C2, MID, K)

    ks = jax.random.split(k_in, 5)
    c_img = jax.random.normal(ks[0], (N, 3, H, W), jnp.float32)
    c_pre_img = jax.random.normal(ks[1], (N, 3, H, W), jnp.float32)
    raft_flow = jax.random.normal(ks[2], (N, 2, H, W), jnp.float32) * 2.0
    enc_feat = jax.random.normal(ks[3], (2 * N, C1, Hf, Wf), jnp.float32)
    dec_feat = jax.random.normal(ks[4], (2 * N, C2, Hf, Wf), jnp.float32)

    pred = netwarp_forward(params, c_img, c_pre_img, raft_flow,
                           enc_feat, dec_feat, (H, W))
    pred = jax.block_until_ready(pred)
    assert pred.shape == (N, K, H, W)
    assert bool(jnp.all(jnp.isfinite(pred)))
    print("KERNEL_OK")
</pallas_src>

<mosaic_0001>
module attributes {stable_mosaic.version = 11 : i64} {
  func.func @_flowcnn_kernel(%arg0: i32, %arg1: memref<1x16x16x11xf32, #tpu.memory_space<vmem>>, %arg2: memref<99x16xf32, #tpu.memory_space<vmem>>, %arg3: memref<1x16xf32, #tpu.memory_space<vmem>>, %arg4: memref<144x32xf32, #tpu.memory_space<vmem>>, %arg5: memref<1x32xf32, #tpu.memory_space<vmem>>, %arg6: memref<288x2xf32, #tpu.memory_space<vmem>>, %arg7: memref<1x2xf32, #tpu.memory_space<vmem>>, %arg8: memref<36x2xf32, #tpu.memory_space<vmem>>, %arg9: memref<1x2xf32, #tpu.memory_space<vmem>>, %arg10: memref<1x2x256xf32, #tpu.memory_space<vmem>>, %arg11: memref<18x18x32xf32, #tpu.memory_space<vmem>>) attributes {dimension_semantics = [#tpu.dimension_semantics<parallel>], iteration_bounds = array<i64: 2>, scalar_prefetch = 0 : i64, scratch_operands = 1 : i64, tpu.core_type = #tpu.core_type<tc>, window_params = [{transform_indices = @transform_0, window_bounds = array<i64: 1, 16, 16, 11>}, {pipeline_mode = #tpu.pipeline_mode<synchronous>, transform_indices = @transform_1, window_bounds = array<i64: 99, 16>}, {pipeline_mode = #tpu.pipeline_mode<synchronous>, transform_indices = @transform_2, window_bounds = array<i64: 1, 16>}, {pipeline_mode = #tpu.pipeline_mode<synchronous>, transform_indices = @transform_3, window_bounds = array<i64: 144, 32>}, {pipeline_mode = #tpu.pipeline_mode<synchronous>, transform_indices = @transform_4, window_bounds = array<i64: 1, 32>}, {pipeline_mode = #tpu.pipeline_mode<synchronous>, transform_indices = @transform_5, window_bounds = array<i64: 288, 2>}, {pipeline_mode = #tpu.pipeline_mode<synchronous>, transform_indices = @transform_6, window_bounds = array<i64: 1, 2>}, {pipeline_mode = #tpu.pipeline_mode<synchronous>, transform_indices = @transform_7, window_bounds = array<i64: 36, 2>}, {pipeline_mode = #tpu.pipeline_mode<synchronous>, transform_indices = @transform_8, window_bounds = array<i64: 1, 2>}, {transform_indices = @transform_9, window_bounds = array<i64: 1, 2, 256>}]} {
    %cst = arith.constant 0.000000e+00 : f32
    %0 = vector.broadcast %cst : f32 to vector<18x18x32xf32>
    %c0 = arith.constant 0 : index
    %c0_0 = arith.constant 0 : index
    %c0_1 = arith.constant 0 : index
    %1 = vector.load %arg11[%c0, %c0_0, %c0_1] : memref<18x18x32xf32, #tpu.memory_space<vmem>>, vector<18x18x32xf32>
    tpu.vector_store %arg11[%c0, %c0_0, %c0_1], %0 {strides = array<i32>} : memref<18x18x32xf32, #tpu.memory_space<vmem>>, vector<18x18x32xf32>,
    %c0_2 = arith.constant 0 : index
    %c0_3 = arith.constant 0 : index
    %c0_4 = arith.constant 0 : index
    %c0_5 = arith.constant 0 : index
    %2 = vector.load %arg1[%c0_2, %c0_3, %c0_4, %c0_5] : memref<1x16x16x11xf32, #tpu.memory_space<vmem>>, vector<1x16x16x11xf32>
    %3 = vector.shape_cast %2 : vector<1x16x16x11xf32> to vector<16x16x11xf32>
    %4 = vector.extract_strided_slice %3 {offsets = [0, 0, 0], sizes = [16, 16, 2], strides = [1, 1, 1]} : vector<16x16x11xf32> to vector<16x16x2xf32>
    %5 = vector.shape_cast %4 : vector<16x16x2xf32> to vector<256x2xf32>
    %c1 = arith.constant 1 : index
    %c1_6 = arith.constant 1 : index
    %c0_7 = arith.constant 0 : index
    %6 = vector.load %arg11[%c1, %c1_6, %c0_7] : memref<18x18x32xf32, #tpu.memory_space<vmem>>, vector<16x16x11xf32>
    tpu.vector_store %arg11[%c1, %c1_6, %c0_7], %3 {strides = array<i32>} : memref<18x18x32xf32, #tpu.memory_space<vmem>>, vector<16x16x11xf32>,
    %c0_8 = arith.constant 0 : index
    %c0_9 = arith.constant 0 : index
    %7 = vector.load %arg2[%c0_8, %c0_9] : memref<99x16xf32, #tpu.memory_space<vmem>>, vector<99x16xf32>
    %c0_10 = arith.constant 0 : index
    %c0_11 = arith.constant 0 : index
    %8 = vector.load %arg3[%c0_10, %c0_11] : memref<1x16xf32, #tpu.memory_space<vmem>>, vector<1x16xf32>
    %c0_12 = arith.constant 0 : index
    %c0_13 = arith.constant 0 : index
    %c0_14 = arith.constant 0 : index
    %9 = vector.load %arg11[%c0_12, %c0_13, %c0_14] : memref<18x18x32xf32, #tpu.memory_space<vmem>>, vector<18x18x32xf32>
    %10 = vector.extract_strided_slice %9 {offsets = [0, 0, 0], sizes = [16, 16, 11], strides = [1, 1, 1]} : vector<18x18x32xf32> to vector<16x16x11xf32>
    %11 = vector.shape_cast %10 : vector<16x16x11xf32> to vector<256x11xf32>
    %12 = vector.extract_strided_slice %9 {offsets = [0, 1, 0], sizes = [16, 16, 11], strides = [1, 1, 1]} : vector<18x18x32xf32> to vector<16x16x11xf32>
    %13 = vector.shape_cast %12 : vector<16x16x11xf32> to vector<256x11xf32>
    %14 = vector.extract_strided_slice %9 {offsets = [0, 2, 0], sizes = [16, 16, 11], strides = [1, 1, 1]} : vector<18x18x32xf32> to vector<16x16x11xf32>
    %15 = vector.shape_cast %14 : vector<16x16x11xf32> to vector<256x11xf32>
    %16 = vector.extract_strided_slice %9 {offsets = [1, 0, 0], sizes = [16, 16, 11], strides = [1, 1, 1]} : vector<18x18x32xf32> to vector<16x16x11xf32>
    %17 = vector.shape_cast %16 : vector<16x16x11xf32> to vector<256x11xf32>
    %18 = vector.extract_strided_slice %9 {offsets = [1, 1, 0], sizes = [16, 16, 11], strides = [1, 1, 1]} : vector<18x18x32xf32> to vector<16x16x11xf32>
    %19 = vector.shape_cast %18 : vector<16x16x11xf32> to vector<256x11xf32>
    %20 = vector.extract_strided_slice %9 {offsets = [1, 2, 0], sizes = [16, 16, 11], strides = [1, 1, 1]} : vector<18x18x32xf32> to vector<16x16x11xf32>
    %21 = vector.shape_cast %20 : vector<16x16x11xf32> to vector<256x11xf32>
    %22 = vector.extract_strided_slice %9 {offsets = [2, 0, 0], sizes = [16, 16, 11], strides = [1, 1, 1]} : vector<18x18x32xf32> to vector<16x16x11xf32>
    %23 = vector.shape_cast %22 : vector<16x16x11xf32> to vector<256x11xf32>
    %24 = vector.extract_strided_slice %9 {offsets = [2, 1, 0], sizes = [16, 16, 11], strides = [1, 1, 1]} : vector<18x18x32xf32> to vector<16x16x11xf32>
    %25 = vector.shape_cast %24 : vector<16x16x11xf32> to vector<256x11xf32>
    %26 = vector.extract_strided_slice %9 {offsets = [2, 2, 0], sizes = [16, 16, 11], strides = [1, 1, 1]} : vector<18x18x32xf32> to vector<16x16x11xf32>
    %27 = vector.shape_cast %26 : vector<16x16x11xf32> to vector<256x11xf32>
    %28 = tpu.concatenate %11, %13, %15, %17, %19, %21, %23, %25, %27 in 1 : vector<256x11xf32>, vector<256x11xf32>, vector<256x11xf32>, vector<256x11xf32>, vector<256x11xf32>, vector<256x11xf32>, vector<256x11xf32>, vector<256x11xf32>, vector<256x11xf32> -> vector<256x99xf32>
    %cst_15 = arith.constant dense<0.000000e+00> : vector<256x16xf32>
    %29 = tpu.matmul %28, %7, %cst_15 {dimension_numbers = #tpu.dot_dimension_numbers<[1], [0], [0], [1], [0, 0, 1, 1], [], []>} : vector<256x99xf32>, vector<99x16xf32>, vector<256x16xf32> -> vector<256x16xf32>
    %30 = vector.broadcast %8 : vector<1x16xf32> to vector<256x16xf32>
    %31 = arith.addf %29, %30 : vector<256x16xf32>
    %cst_16 = arith.constant 0.000000e+00 : f32
    %32 = vector.broadcast %cst_16 : f32 to vector<256x16xf32>
    %33 = arith.maximumf %31, %32 : vector<256x16xf32>
    %34 = vector.shape_cast %33 : vector<256x16xf32> to vector<16x16x16xf32>
    %c1_17 = arith.constant 1 : index
    %c1_18 = arith.constant 1 : index
    %c0_19 = arith.constant 0 : index
    %35 = vector.load %arg11[%c1_17, %c1_18, %c0_19] : memref<18x18x32xf32, #tpu.memory_space<vmem>>, vector<16x16x16xf32>
    tpu.vector_store %arg11[%c1_17, %c1_18, %c0_19], %34 {strides = array<i32>} : memref<18x18x32xf32, #tpu.memory_space<vmem>>, vector<16x16x16xf32>,
    %c0_20 = arith.constant 0 : index
    %c0_21 = arith.constant 0 : index
    %36 = vector.load %arg4[%c0_20, %c0_21] : memref<144x32xf32, #tpu.memory_space<vmem>>, vector<144x32xf32>
    %c0_22 = arith.constant 0 : index
    %c0_23 = arith.constant 0 : index
    %37 = vector.load %arg5[%c0_22, %c0_23] : memref<1x32xf32, #tpu.memory_space<vmem>>, vector<1x32xf32>
    %c0_24 = arith.constant 0 : index
    %c0_25 = arith.constant 0 : index
    %c0_26 = arith.constant 0 : index
    %38 = vector.load %arg11[%c0_24, %c0_25, %c0_26] : memref<18x18x32xf32, #tpu.memory_space<vmem>>, vector<18x18x32xf32>
    %39 = vector.extract_strided_slice %38 {offsets = [0, 0, 0], sizes = [16, 16, 16], strides = [1, 1, 1]} : vector<18x18x32xf32> to vector<16x16x16xf32>
    %40 = vector.shape_cast %39 : vector<16x16x16xf32> to vector<256x16xf32>
    %41 = vector.extract_strided_slice %38 {offsets = [0, 1, 0], sizes = [16, 16, 16], strides = [1, 1, 1]} : vector<18x18x32xf32> to vector<16x16x16xf32>
    %42 = vector.shape_cast %41 : vector<16x16x16xf32> to vector<256x16xf32>
    %43 = vector.extract_strided_slice %38 {offsets = [0, 2, 0], sizes = [16, 16, 16], strides = [1, 1, 1]} : vector<18x18x32xf32> to vector<16x16x16xf32>
    %44 = vector.shape_cast %43 : vector<16x16x16xf32> to vector<256x16xf32>
    %45 = vector.extract_strided_slice %38 {offsets = [1, 0, 0], sizes = [16, 16, 16], strides = [1, 1, 1]} : vector<18x18x32xf32> to vector<16x16x16xf32>
    %46 = vector.shape_cast %45 : vector<16x16x16xf32> to vector<256x16xf32>
    %47 = vector.extract_strided_slice %38 {offsets = [1, 1, 0], sizes = [16, 16, 16], strides = [1, 1, 1]} : vector<18x18x32xf32> to vector<16x16x16xf32>
    %48 = vector.shape_cast %47 : vector<16x16x16xf32> to vector<256x16xf32>
    %49 = vector.extract_strided_slice %38 {offsets = [1, 2, 0], sizes = [16, 16, 16], strides = [1, 1, 1]} : vector<18x18x32xf32> to vector<16x16x16xf32>
    %50 = vector.shape_cast %49 : vector<16x16x16xf32> to vector<256x16xf32>
    %51 = vector.extract_strided_slice %38 {offsets = [2, 0, 0], sizes = [16, 16, 16], strides = [1, 1, 1]} : vector<18x18x32xf32> to vector<16x16x16xf32>
    %52 = vector.shape_cast %51 : vector<16x16x16xf32> to vector<256x16xf32>
    %53 = vector.extract_strided_slice %38 {offsets = [2, 1, 0], sizes = [16, 16, 16], strides = [1, 1, 1]} : vector<18x18x32xf32> to vector<16x16x16xf32>
    %54 = vector.shape_cast %53 : vector<16x16x16xf32> to vector<256x16xf32>
    %55 = vector.extract_strided_slice %38 {offsets = [2, 2, 0], sizes = [16, 16, 16], strides = [1, 1, 1]} : vector<18x18x32xf32> to vector<16x16x16xf32>
    %56 = vector.shape_cast %55 : vector<16x16x16xf32> to vector<256x16xf32>
    %57 = tpu.concatenate %40, %42, %44, %46, %48, %50, %52, %54, %56 in 1 : vector<256x16xf32>, vector<256x16xf32>, vector<256x16xf32>, vector<256x16xf32>, vector<256x16xf32>, vector<256x16xf32>, vector<256x16xf32>, vector<256x16xf32>, vector<256x16xf32> -> vector<256x144xf32>
    %cst_27 = arith.constant dense<0.000000e+00> : vector<256x32xf32>
    %58 = tpu.matmul %57, %36, %cst_27 {dimension_numbers = #tpu.dot_dimension_numbers<[1], [0], [0], [1], [0, 0, 1, 1], [], []>} : vector<256x144xf32>, vector<144x32xf32>, vector<256x32xf32> -> vector<256x32xf32>
    %59 = vector.broadcast %37 : vector<1x32xf32> to vector<256x32xf32>
    %60 = arith.addf %58, %59 : vector<256x32xf32>
    %cst_28 = arith.constant 0.000000e+00 : f32
    %61 = vector.broadcast %cst_28 : f32 to vector<256x32xf32>
    %62 = arith.maximumf %60, %61 : vector<256x32xf32>
    %63 = vector.shape_cast %62 : vector<256x32xf32> to vector<16x16x32xf32>
    %c1_29 = arith.constant 1 : index
    %c1_30 = arith.constant 1 : index
    %c0_31 = arith.constant 0 : index
    %64 = vector.load %arg11[%c1_29, %c1_30, %c0_31] : memref<18x18x32xf32, #tpu.memory_space<vmem>>, vector<16x16x32xf32>
    tpu.vector_store %arg11[%c1_29, %c1_30, %c0_31], %63 {strides = array<i32>} : memref<18x18x32xf32, #tpu.memory_space<vmem>>, vector<16x16x32xf32>,
    %c0_32 = arith.constant 0 : index
    %c0_33 = arith.constant 0 : index
    %65 = vector.load %arg6[%c0_32, %c0_33] : memref<288x2xf32, #tpu.memory_space<vmem>>, vector<288x2xf32>
    %c0_34 = arith.constant 0 : index
    %c0_35 = arith.constant 0 : index
    %66 = vector.load %arg7[%c0_34, %c0_35] : memref<1x2xf32, #tpu.memory_space<vmem>>, vector<1x2xf32>
    %c0_36 = arith.constant 0 : index
    %c0_37 = arith.constant 0 : index
    %c0_38 = arith.constant 0 : index
    %67 = vector.load %arg11[%c0_36, %c0_37, %c0_38] : memref<18x18x32xf32, #tpu.memory_space<vmem>>, vector<18x18x32xf32>
    %68 = vector.extract_strided_slice %67 {offsets = [0, 0, 0], sizes = [16, 16, 32], strides = [1, 1, 1]} : vector<18x18x32xf32> to vector<16x16x32xf32>
    %69 = vector.shape_cast %68 : vector<16x16x32xf32> to vector<256x32xf32>
    %70 = vector.extract_strided_slice %67 {offsets = [0, 1, 0], sizes = [16, 16, 32], strides = [1, 1, 1]} : vector<18x18x32xf32> to vector<16x16x32xf32>
    %71 = vector.shape_cast %70 : vector<16x16x32xf32> to vector<256x32xf32>
    %72 = vector.extract_strided_slice %67 {offsets = [0, 2, 0], sizes = [16, 16, 32], strides = [1, 1, 1]} : vector<18x18x32xf32> to vector<16x16x32xf32>
    %73 = vector.shape_cast %72 : vector<16x16x32xf32> to vector<256x32xf32>
    %74 = vector.extract_strided_slice %67 {offsets = [1, 0, 0], sizes = [16, 16, 32], strides = [1, 1, 1]} : vector<18x18x32xf32> to vector<16x16x32xf32>
    %75 = vector.shape_cast %74 : vector<16x16x32xf32> to vector<256x32xf32>
    %76 = vector.extract_strided_slice %67 {offsets = [1, 1, 0], sizes = [16, 16, 32], strides = [1, 1, 1]} : vector<18x18x32xf32> to vector<16x16x32xf32>
    %77 = vector.shape_cast %76 : vector<16x16x32xf32> to vector<256x32xf32>
    %78 = vector.extract_strided_slice %67 {offsets = [1, 2, 0], sizes = [16, 16, 32], strides = [1, 1, 1]} : vector<18x18x32xf32> to vector<16x16x32xf32>
    %79 = vector.shape_cast %78 : vector<16x16x32xf32> to vector<256x32xf32>
    %80 = vector.extract_strided_slice %67 {offsets = [2, 0, 0], sizes = [16, 16, 32], strides = [1, 1, 1]} : vector<18x18x32xf32> to vector<16x16x32xf32>
    %81 = vector.shape_cast %80 : vector<16x16x32xf32> to vector<256x32xf32>
    %82 = vector.extract_strided_slice %67 {offsets = [2, 1, 0], sizes = [16, 16, 32], strides = [1, 1, 1]} : vector<18x18x32xf32> to vector<16x16x32xf32>
    %83 = vector.shape_cast %82 : vector<16x16x32xf32> to vector<256x32xf32>
    %84 = vector.extract_strided_slice %67 {offsets = [2, 2, 0], sizes = [16, 16, 32], strides = [1, 1, 1]} : vector<18x18x32xf32> to vector<16x16x32xf32>
    %85 = vector.shape_cast %84 : vector<16x16x32xf32> to vector<256x32xf32>
    %86 = tpu.concatenate %69, %71, %73, %75, %77, %79, %81, %83, %85 in 1 : vector<256x32xf32>, vector<256x32xf32>, vector<256x32xf32>, vector<256x32xf32>, vector<256x32xf32>, vector<256x32xf32>, vector<256x32xf32>, vector<256x32xf32>, vector<256x32xf32> -> vector<256x288xf32>
    %cst_39 = arith.constant dense<0.000000e+00> : vector<256x2xf32>
    %87 = tpu.matmul %86, %65, %cst_39 {dimension_numbers = #tpu.dot_dimension_numbers<[1], [0], [0], [1], [0, 0, 1, 1], [], []>} : vector<256x288xf32>, vector<288x2xf32>, vector<256x2xf32> -> vector<256x2xf32>
    %88 = vector.broadcast %66 : vector<1x2xf32> to vector<256x2xf32>
    %89 = arith.addf %87, %88 : vector<256x2xf32>
    %cst_40 = arith.constant 0.000000e+00 : f32
    %90 = vector.broadcast %cst_40 : f32 to vector<256x2xf32>
    %91 = arith.maximumf %89, %90 : vector<256x2xf32>
    %92 = tpu.concatenate %5, %91 in 1 : vector<256x2xf32>, vector<256x2xf32> -> vector<256x4xf32>
    %93 = vector.shape_cast %92 : vector<256x4xf32> to vector<16x16x4xf32>
    %c1_41 = arith.constant 1 : index
    %c1_42 = arith.constant 1 : index
    %c0_43 = arith.constant 0 : index
    %94 = vector.load %arg11[%c1_41, %c1_42, %c0_43] : memref<18x18x32xf32, #tpu.memory_space<vmem>>, vector<16x16x4xf32>
    tpu.vector_store %arg11[%c1_41, %c1_42, %c0_43], %93 {strides = array<i32>} : memref<18x18x32xf32, #tpu.memory_space<vmem>>, vector<16x16x4xf32>,
    %c0_44 = arith.constant 0 : index
    %c0_45 = arith.constant 0 : index
    %95 = vector.load %arg8[%c0_44, %c0_45] : memref<36x2xf32, #tpu.memory_space<vmem>>, vector<36x2xf32>
    %c0_46 = arith.constant 0 : index
    %c0_47 = arith.constant 0 : index
    %96 = vector.load %arg9[%c0_46, %c0_47] : memref<1x2xf32, #tpu.memory_space<vmem>>, vector<1x2xf32>
    %c0_48 = arith.constant 0 : index
    %c0_49 = arith.constant 0 : index
    %c0_50 = arith.constant 0 : index
    %97 = vector.load %arg11[%c0_48, %c0_49, %c0_50] : memref<18x18x32xf32, #tpu.memory_space<vmem>>, vector<18x18x32xf32>
    %98 = vector.extract_strided_slice %97 {offsets = [0, 0, 0], sizes = [16, 16, 4], strides = [1, 1, 1]} : vector<18x18x32xf32> to vector<16x16x4xf32>
    %99 = vector.shape_cast %98 : vector<16x16x4xf32> to vector<256x4xf32>
    %100 = vector.extract_strided_slice %97 {offsets = [0, 1, 0], sizes = [16, 16, 4], strides = [1, 1, 1]} : vector<18x18x32xf32> to vector<16x16x4xf32>
    %101 = vector.shape_cast %100 : vector<16x16x4xf32> to vector<256x4xf32>
    %102 = vector.extract_strided_slice %97 {offsets = [0, 2, 0], sizes = [16, 16, 4], strides = [1, 1, 1]} : vector<18x18x32xf32> to vector<16x16x4xf32>
    %103 = vector.shape_cast %102 : vector<16x16x4xf32> to vector<256x4xf32>
    %104 = vector.extract_strided_slice %97 {offsets = [1, 0, 0], sizes = [16, 16, 4], strides = [1, 1, 1]} : vector<18x18x32xf32> to vector<16x16x4xf32>
    %105 = vector.shape_cast %104 : vector<16x16x4xf32> to vector<256x4xf32>
    %106 = vector.extract_strided_slice %97 {offsets = [1, 1, 0], sizes = [16, 16, 4], strides = [1, 1, 1]} : vector<18x18x32xf32> to vector<16x16x4xf32>
    %107 = vector.shape_cast %106 : vector<16x16x4xf32> to vector<256x4xf32>
    %108 = vector.extract_strided_slice %97 {offsets = [1, 2, 0], sizes = [16, 16, 4], strides = [1, 1, 1]} : vector<18x18x32xf32> to vector<16x16x4xf32>
    %109 = vector.shape_cast %108 : vector<16x16x4xf32> to vector<256x4xf32>
    %110 = vector.extract_strided_slice %97 {offsets = [2, 0, 0], sizes = [16, 16, 4], strides = [1, 1, 1]} : vector<18x18x32xf32> to vector<16x16x4xf32>
    %111 = vector.shape_cast %110 : vector<16x16x4xf32> to vector<256x4xf32>
    %112 = vector.extract_strided_slice %97 {offsets = [2, 1, 0], sizes = [16, 16, 4], strides = [1, 1, 1]} : vector<18x18x32xf32> to vector<16x16x4xf32>
    %113 = vector.shape_cast %112 : vector<16x16x4xf32> to vector<256x4xf32>
    %114 = vector.extract_strided_slice %97 {offsets = [2, 2, 0], sizes = [16, 16, 4], strides = [1, 1, 1]} : vector<18x18x32xf32> to vector<16x16x4xf32>
    %115 = vector.shape_cast %114 : vector<16x16x4xf32> to vector<256x4xf32>
    %116 = tpu.concatenate %99, %101, %103, %105, %107, %109, %111, %113, %115 in 1 : vector<256x4xf32>, vector<256x4xf32>, vector<256x4xf32>, vector<256x4xf32>, vector<256x4xf32>, vector<256x4xf32>, vector<256x4xf32>, vector<256x4xf32>, vector<256x4xf32> -> vector<256x36xf32>
    %cst_51 = arith.constant dense<0.000000e+00> : vector<256x2xf32>
    %117 = tpu.matmul %116, %95, %cst_51 {dimension_numbers = #tpu.dot_dimension_numbers<[1], [0], [0], [1], [0, 0, 1, 1], [], []>} : vector<256x36xf32>, vector<36x2xf32>, vector<256x2xf32> -> vector<256x2xf32>
    %118 = vector.broadcast %96 : vector<1x2xf32> to vector<256x2xf32>
    %119 = arith.addf %117, %118 : vector<256x2xf32>
    %cst_52 = arith.constant 0.000000e+00 : f32
    %120 = vector.broadcast %cst_52 : f32 to vector<256x2xf32>
    %121 = arith.maximumf %119, %120 : vector<256x2xf32>
    %122 = tpu.transpose %121, [1, 0] : vector<256x2xf32> -> vector<2x256xf32>
    %c0_53 = arith.constant 0 : index
    %c0_54 = arith.constant 0 : index
    %c0_55 = arith.constant 0 : index
    %123 = vector.load %arg10[%c0_53, %c0_54, %c0_55] : memref<1x2x256xf32, #tpu.memory_space<vmem>>, vector<1x2x256xf32>
    %124 = vector.shape_cast %123 : vector<1x2x256xf32> to vector<2x256xf32>
    %125 = vector.shape_cast %122 : vector<2x256xf32> to vector<1x2x256xf32>
    tpu.vector_store %arg10[%c0_53, %c0_54, %c0_55], %125 {strides = array<i32>} : memref<1x2x256xf32, #tpu.memory_space<vmem>>, vector<1x2x256xf32>,
    return
  }
  func.func @transform_0(%arg0: i32) -> (i32, i32, i32, i32) {
    %c0_i32 = arith.constant 0 : i32
    %c0_i32_0 = arith.constant 0 : i32
    %c0_i32_1 = arith.constant 0 : i32
    %c0_i32_2 = arith.constant 0 : i32
    return %arg0, %c0_i32, %c0_i32_0, %c0_i32_1 : i32, i32, i32, i32
  }
  func.func @transform_1(%arg0: i32) -> (i32, i32) {
    %c0_i32 = arith.constant 0 : i32
    %c0_i32_0 = arith.constant 0 : i32
    %c0_i32_1 = arith.constant 0 : i32
    return %c0_i32, %c0_i32_0 : i32, i32
  }
  func.func @transform_2(%arg0: i32) -> (i32, i32) {
    %c0_i32 = arith.constant 0 : i32
    %c0_i32_0 = arith.constant 0 : i32
    %c0_i32_1 = arith.constant 0 : i32
    return %c0_i32, %c0_i32_0 : i32, i32
  }
  func.func @transform_3(%arg0: i32) -> (i32, i32) {
    %c0_i32 = arith.constant 0 : i32
    %c0_i32_0 = arith.constant 0 : i32
    %c0_i32_1 = arith.constant 0 : i32
    return %c0_i32, %c0_i32_0 : i32, i32
  }
  func.func @transform_4(%arg0: i32) -> (i32, i32) {
    %c0_i32 = arith.constant 0 : i32
    %c0_i32_0 = arith.constant 0 : i32
    %c0_i32_1 = arith.constant 0 : i32
    return %c0_i32, %c0_i32_0 : i32, i32
  }
  func.func @transform_5(%arg0: i32) -> (i32, i32) {
    %c0_i32 = arith.constant 0 : i32
    %c0_i32_0 = arith.constant 0 : i32
    %c0_i32_1 = arith.constant 0 : i32
    return %c0_i32, %c0_i32_0 : i32, i32
  }
  func.func @transform_6(%arg0: i32) -> (i32, i32) {
    %c0_i32 = arith.constant 0 : i32
    %c0_i32_0 = arith.constant 0 : i32
    %c0_i32_1 = arith.constant 0 : i32
    return %c0_i32, %c0_i32_0 : i32, i32
  }
  func.func @transform_7(%arg0: i32) -> (i32, i32) {
    %c0_i32 = arith.constant 0 : i32
    %c0_i32_0 = arith.constant 0 : i32
    %c0_i32_1 = arith.constant 0 : i32
    return %c0_i32, %c0_i32_0 : i32, i32
  }
  func.func @transform_8(%arg0: i32) -> (i32, i32) {
    %c0_i32 = arith.constant 0 : i32
    %c0_i32_0 = arith.constant 0 : i32
    %c0_i32_1 = arith.constant 0 : i32
    return %c0_i32, %c0_i32_0 : i32, i32
  }
  func.func @transform_9(%arg0: i32) -> (i32, i32, i32) {
    %c0_i32 = arith.constant 0 : i32
    %c0_i32_0 = arith.constant 0 : i32
    %c0_i32_1 = arith.constant 0 : i32
    return %arg0, %c0_i32, %c0_i32_0 : i32, i32, i32
  }
}

</mosaic_0001>

<llo_original>
// kernel: tpu_custom_call.1
$region0: #{tpu_custom_call.1}
  #allocation0 [shape = 'u32[]', space=smem, size = 0x4, offset = 0x4, fixed_abs, tag = 'smem constant byte address 0x4 - core index']
  #allocation1 [shape = 'u32[72,128]{1,0:T(1,128)}', space=vmem, size = 0x9000, scoped, tag = 'internal scratch']
  #allocation2 [shape = 'f32[18,18,32]{2,1,0:T(8,128)}', space=vmem, size = 0x36000, scoped, tag = 'scratch operand']
  %s0 = inlined_call_operand.vmem [shape: f32[2,16,16,11], index: 0, kind: input, shape index: {}]
  %s1 = inlined_call_operand.vmem [shape: f32[99,16], index: 1, kind: input, shape index: {}]
  %s2 = inlined_call_operand.vmem [shape: f32[1,16], index: 2, kind: input, shape index: {}]
  %s3 = inlined_call_operand.vmem [shape: f32[144,32], index: 3, kind: input, shape index: {}]
  %s4 = inlined_call_operand.vmem [shape: f32[1,32], index: 4, kind: input, shape index: {}]
  %s5 = inlined_call_operand.vmem [shape: f32[288,2], index: 5, kind: input, shape index: {}]
  %s6 = inlined_call_operand.vmem [shape: f32[1,2], index: 6, kind: input, shape index: {}]
  %s7 = inlined_call_operand.vmem [shape: f32[36,2], index: 7, kind: input, shape index: {}]
  %s8 = inlined_call_operand.vmem [shape: f32[1,2], index: 8, kind: input, shape index: {}]
  %s9 = inlined_call_operand.hbm [shape: f32[2,2,256], index: 9, kind: output, shape index: {}]
  %s10 = sld [smem:[#allocation0]]
  $region69: #{tpu_custom_call.1} parent=0
    _
  %s12 = ssub.s32 1, %s10
  %s13 = scalar_select 0, %s12, %s10
  $region1: #{tpu_custom_call.1} parent=0
    #allocation3 [shape = 'u8[4096]{0}', space=vmem, size = 0x1000, scoped, tag = 'output window, operand 0']
    #allocation4 [shape = 's32[2]{0}', space=sflag, size = 0x8, scoped, tag = 'scoped memory for tpu_custom_call.1']
    %14 = vsyncpa [#allocation4], 0
    %s15 = scalar_lea.sflag [#allocation4], 1
    %16 = vsyncpa %s15, 0
    loop: start=0, step=1, limit=4
    $region2: #{tpu_custom_call.1} parent=1 // loop_pre_header
      _
    $region3: #{tpu_custom_call.1} parent=1 // loop_header
      %s18 = sphi 0, %s22
      %p19 = scmp.ge.s32.totalorder %s18, 4
      %s28 = sphi 0, %s30
      %s31 = sphi 0, %s28
      %s32 = sphi 0, %s31
      %s48 = sphi 0, %s32
      %s52 = sphi 0, %s52
      %s54 = sphi 0, %s52
      %s55 = sphi 0, %s54
      %s69 = sphi 0, %s55
      %s73 = sphi 0, %s73
      %s75 = sphi 0, %s73
      %s76 = sphi 0, %s75
      %s90 = sphi 0, %s76
      %s94 = sphi 0, %s94
      %s96 = sphi 0, %s94
      %s97 = sphi 0, %s96
      %s111 = sphi 0, %s97
      %s115 = sphi 0, %s115
      %s117 = sphi 0, %s115
      %s118 = sphi 0, %s117
      %s132 = sphi 0, %s118
      %s136 = sphi 0, %s136
      %s138 = sphi 0, %s136
      %s139 = sphi 0, %s138
      %s153 = sphi 0, %s139
      %s157 = sphi 0, %s157
      %s159 = sphi 0, %s157
      %s160 = sphi 0, %s159
      %s174 = sphi 0, %s160
      %s178 = sphi 0, %s178
      %s180 = sphi 0, %s178
      %s181 = sphi 0, %s180
      %s195 = sphi 0, %s181
      %s199 = sphi 0, %s199
      %s201 = sphi 0, %s199
      %s202 = sphi 0, %s201
      %s216 = sphi 0, %s202
      %s222 = sphi 0, %s224
      %s225 = sphi 0, %s222
      %s226 = sphi 0, %s225
      %s242 = sphi 0, %s226
    $region4: #{tpu_custom_call.1} parent=1 // loop_header_branch
      %21 = sbr.rel (%p19) target = $region8
    $region5: #{tpu_custom_call.1} parent=1 // loop_body
      %s23 = ssub.s32 %s18, 1
      %s24 = ssub.s32 %s18, 2
      %s25 = sadd.s32 %s18, 1
      %s26 = ssub.s32 %s18, %s25
      %p27 = scmp.eq.s32.totalorder %s26, 0
      %s29 = sadd.s32 %s28, 1
      %s30 = scalar_select %p27, %s28, %s29
      %p33 = pneg %p27
      %p34 = scmp.eq.s32.totalorder %s18, 1
      %p35 = por %p33, %p34
      %p36 = scmp.ne.s32.totalorder %s28, %s31
      %p37 = scmp.eq.s32.totalorder %s18, 0
      %p38 = por %p36, %p37
      %p39 = scmp.ne.s32.totalorder %s28, %s31
      %p40 = scmp.eq.s32.totalorder %s23, 1
      %p41 = por %p39, %p40
      %p42 = scmp.ne.s32.totalorder %s31, %s32
      %p43 = scmp.eq.s32.totalorder %s23, 0
      %p44 = por %p42, %p43
      %p45 = scmp.ne.s32.totalorder %s31, %s32
      %p46 = scmp.eq.s32.totalorder %s24, 1
      %p47 = por %p45, %p46
      %p49 = scmp.ne.s32.totalorder %s32, %s48
      %p50 = scmp.eq.s32.totalorder %s24, 0
      %p51 = por %p49, %p50
      %s53 = sadd.s32 %s52, 1
      %p56 = scmp.eq.s32.totalorder %s18, 1
      %p57 = scmp.ne.s32.totalorder %s52, %s54
      %p58 = scmp.eq.s32.totalorder %s18, 0
      %p59 = por %p57, %p58
      %p60 = scmp.ne.s32.totalorder %s52, %s54
      %p61 = scmp.eq.s32.totalorder %s23, 1
      %p62 = por %p60, %p61
      %p63 = scmp.ne.s32.totalorder %s54, %s55
      %p64 = scmp.eq.s32.totalorder %s23, 0
      %p65 = por %p63, %p64
      %p66 = scmp.ne.s32.totalorder %s54, %s55
      %p67 = scmp.eq.s32.totalorder %s24, 1
      %p68 = por %p66, %p67
      %p70 = scmp.ne.s32.totalorder %s55, %s69
      %p71 = scmp.eq.s32.totalorder %s24, 0
      %p72 = por %p70, %p71
      %s74 = sadd.s32 %s73, 1
      %p77 = scmp.eq.s32.totalorder %s18, 1
      %p78 = scmp.ne.s32.totalorder %s73, %s75
      %p79 = scmp.eq.s32.totalorder %s18, 0
      %p80 = por %p78, %p79
      %p81 = scmp.ne.s32.totalorder %s73, %s75
      %p82 = scmp.eq.s32.totalorder %s23, 1
      %p83 = por %p81, %p82
      %p84 = scmp.ne.s32.totalorder %s75, %s76
      %p85 = scmp.eq.s32.totalorder %s23, 0
      %p86 = por %p84, %p85
      %p87 = scmp.ne.s32.totalorder %s75, %s76
      %p88 = scmp.eq.s32.totalorder %s24, 1
      %p89 = por %p87, %p88
      %p91 = scmp.ne.s32.totalorder %s76, %s90
      %p92 = scmp.eq.s32.totalorder %s24, 0
      %p93 = por %p91, %p92
      %s95 = sadd.s32 %s94, 1
      %p98 = scmp.eq.s32.totalorder %s18, 1
      %p99 = scmp.ne.s32.totalorder %s94, %s96
      %p100 = scmp.eq.s32.totalorder %s18, 0
      %p101 = por %p99, %p100
      %p102 = scmp.ne.s32.totalorder %s94, %s96
      %p103 = scmp.eq.s32.totalorder %s23, 1
      %p104 = por %p102, %p103
      %p105 = scmp.ne.s32.totalorder %s96, %s97
      %p106 = scmp.eq.s32.totalorder %s23, 0
      %p107 = por %p105, %p106
      %p108 = scmp.ne.s32.totalorder %s96, %s97
      %p109 = scmp.eq.s32.totalorder %s24, 1
      %p110 = por %p108, %p109
      %p112 = scmp.ne.s32.totalorder %s97, %s111
      %p113 = scmp.eq.s32.totalorder %s24, 0
      %p114 = por %p112, %p113
      %s116 = sadd.s32 %s115, 1
      %p119 = scmp.eq.s32.totalorder %s18, 1
      %p120 = scmp.ne.s32.totalorder %s115, %s117
      %p121 = scmp.eq.s32.totalorder %s18, 0
      %p122 = por %p120, %p121
      %p123 = scmp.ne.s32.totalorder %s115, %s117
      %p124 = scmp.eq.s32.totalorder %s23, 1
      %p125 = por %p123, %p124
      %p126 = scmp.ne.s32.totalorder %s117, %s118
      %p127 = scmp.eq.s32.totalorder %s23, 0
      %p128 = por %p126, %p127
      %p129 = scmp.ne.s32.totalorder %s117, %s118
      %p130 = scmp.eq.s32.totalorder %s24, 1
      %p131 = por %p129, %p130
      %p133 = scmp.ne.s32.totalorder %s118, %s132
      %p134 = scmp.eq.s32.totalorder %s24, 0
      %p135 = por %p133, %p134
      %s137 = sadd.s32 %s136, 1
      %p140 = scmp.eq.s32.totalorder %s18, 1
      %p141 = scmp.ne.s32.totalorder %s136, %s138
      %p142 = scmp.eq.s32.totalorder %s18, 0
      %p143 = por %p141, %p142
      %p144 = scmp.ne.s32.totalorder %s136, %s138
      %p145 = scmp.eq.s32.totalorder %s23, 1
      %p146 = por %p144, %p145
      %p147 = scmp.ne.s32.totalorder %s138, %s139
      %p148 = scmp.eq.s32.totalorder %s23, 0
      %p149 = por %p147, %p148
      %p150 = scmp.ne.s32.totalorder %s138, %s139
      %p151 = scmp.eq.s32.totalorder %s24, 1
      %p152 = por %p150, %p151
      %p154 = scmp.ne.s32.totalorder %s139, %s153
      %p155 = scmp.eq.s32.totalorder %s24, 0
      %p156 = por %p154, %p155
      %s158 = sadd.s32 %s157, 1
      %p161 = scmp.eq.s32.totalorder %s18, 1
      %p162 = scmp.ne.s32.totalorder %s157, %s159
      %p163 = scmp.eq.s32.totalorder %s18, 0
      %p164 = por %p162, %p163
      %p165 = scmp.ne.s32.totalorder %s157, %s159
      %p166 = scmp.eq.s32.totalorder %s23, 1
      %p167 = por %p165, %p166
      %p168 = scmp.ne.s32.totalorder %s159, %s160
      %p169 = scmp.eq.s32.totalorder %s23, 0
      %p170 = por %p168, %p169
      %p171 = scmp.ne.s32.totalorder %s159, %s160
      %p172 = scmp.eq.s32.totalorder %s24, 1
      %p173 = por %p171, %p172
      %p175 = scmp.ne.s32.totalorder %s160, %s174
      %p176 = scmp.eq.s32.totalorder %s24, 0
      %p177 = por %p175, %p176
      %s179 = sadd.s32 %s178, 1
      %p182 = scmp.eq.s32.totalorder %s18, 1
      %p183 = scmp.ne.s32.totalorder %s178, %s180
      %p184 = scmp.eq.s32.totalorder %s18, 0
      %p185 = por %p183, %p184
      %p186 = scmp.ne.s32.totalorder %s178, %s180
      %p187 = scmp.eq.s32.totalorder %s23, 1
      %p188 = por %p186, %p187
      %p189 = scmp.ne.s32.totalorder %s180, %s181
      %p190 = scmp.eq.s32.totalorder %s23, 0
      %p191 = por %p189, %p190
      %p192 = scmp.ne.s32.totalorder %s180, %s181
      %p193 = scmp.eq.s32.totalorder %s24, 1
      %p194 = por %p192, %p193
      %p196 = scmp.ne.s32.totalorder %s181, %s195
      %p197 = scmp.eq.s32.totalorder %s24, 0
      %p198 = por %p196, %p197
      %s200 = sadd.s32 %s199, 1
      %p203 = scmp.eq.s32.totalorder %s18, 1
      %p204 = scmp.ne.s32.totalorder %s199, %s201
      %p205 = scmp.eq.s32.totalorder %s18, 0
      %p206 = por %p204, %p205
      %p207 = scmp.ne.s32.totalorder %s199, %s201
      %p208 = scmp.eq.s32.totalorder %s23, 1
      %p209 = por %p207, %p208
      %p210 = scmp.ne.s32.totalorder %s201, %s202
      %p211 = scmp.eq.s32.totalorder %s23, 0
      %p212 = por %p210, %p211
      %p213 = scmp.ne.s32.totalorder %s201, %s202
      %p214 = scmp.eq.s32.totalorder %s24, 1
      %p215 = por %p213, %p214
      %p217 = scmp.ne.s32.totalorder %s202, %s216
      %p218 = scmp.eq.s32.totalorder %s24, 0
      %p219 = por %p217, %p218
      %s220 = ssub.s32 %s18, %s25
      %p221 = scmp.eq.s32.totalorder %s220, 0
      %s223 = sadd.s32 %s222, 1
      %s224 = scalar_select %p221, %s222, %s223
      %p227 = pneg %p221
      %p228 = scmp.eq.s32.totalorder %s18, 1
      %p229 = por %p227, %p228
      %p230 = scmp.ne.s32.totalorder %s222, %s225
      %p231 = scmp.eq.s32.totalorder %s18, 0
      %p232 = por %p230, %p231
      %p233 = scmp.ne.s32.totalorder %s222, %s225
      %p234 = scmp.eq.s32.totalorder %s23, 1
      %p235 = por %p233, %p234
      %p236 = scmp.ne.s32.totalorder %s225, %s226
      %p237 = scmp.eq.s32.totalorder %s23, 0
      %p238 = por %p236, %p237
      %p239 = scmp.ne.s32.totalorder %s225, %s226
      %p240 = scmp.eq.s32.totalorder %s24, 1
      %p241 = por %p239, %p240
      %p243 = scmp.ne.s32.totalorder %s226, %s242
      %p244 = scmp.eq.s32.totalorder %s24, 0
      %p245 = por %p243, %p244
      %p246 = scmp.le.s32.totalorder 1, %s18
      %p247 = scmp.lt.s32.totalorder %s18, 3
      %p248 = pnand %p246, %p247
      %p249 = pneg %p248
      // Predicated region
      $region9: #{tpu_custom_call.1} parent=5 // pred_check
        _
      $region10: #{tpu_custom_call.1} parent=5 // pred_check_branch
        %251 = sbr.rel (%p248) target = $region12
      $region11: #{tpu_custom_call.1} parent=5 // pred_region
        %s252 = ssub.s32 %s18, 1
        // Predicated region
        $region13: #{tpu_custom_call.1} parent=11 // pred_check
          %p253 = pneg %p65
        $region14: #{tpu_custom_call.1} parent=11 // pred_check_branch
          %255 = sbr.rel (%p253) target = $region16
        $region15: #{tpu_custom_call.1} parent=11 // pred_region
          _
        $region16: #{tpu_custom_call.1} parent=11 // pred_fallthru
          _
        // Predicated region
        $region17: #{tpu_custom_call.1} parent=11 // pred_check
          %p256 = pneg %p86
        $region18: #{tpu_custom_call.1} parent=11 // pred_check_branch
          %258 = sbr.rel (%p256) target = $region20
        $region19: #{tpu_custom_call.1} parent=11 // pred_region
          _
        $region20: #{tpu_custom_call.1} parent=11 // pred_fallthru
          _
        // Predicated region
        $region21: #{tpu_custom_call.1} parent=11 // pred_check
          %p259 = pneg %p107
        $region22: #{tpu_custom_call.1} parent=11 // pred_check_branch
          %261 = sbr.rel (%p259) target = $region24
        $region23: #{tpu_custom_call.1} parent=11 // pred_region
          _
        $region24: #{tpu_custom_call.1} parent=11 // pred_fallthru
          _
        // Predicated region
        $region25: #{tpu_custom_call.1} parent=11 // pred_check
          %p262 = pneg %p128
        $region26: #{tpu_custom_call.1} parent=11 // pred_check_branch
          %264 = sbr.rel (%p262) target = $region28
        $region27: #{tpu_custom_call.1} parent=11 // pred_region
          _
        $region28: #{tpu_custom_call.1} parent=11 // pred_fallthru
          _
        // Predicated region
        $region29: #{tpu_custom_call.1} parent=11 // pred_check
          %p265 = pneg %p149
        $region30: #{tpu_custom_call.1} parent=11 // pred_check_branch
          %267 = sbr.rel (%p265) target = $region32
        $region31: #{tpu_custom_call.1} parent=11 // pred_region
          _
        $region32: #{tpu_custom_call.1} parent=11 // pred_fallthru
          _
        // Predicated region
        $region33: #{tpu_custom_call.1} parent=11 // pred_check
          %p268 = pneg %p170
        $region34: #{tpu_custom_call.1} parent=11 // pred_check_branch
          %270 = sbr.rel (%p268) target = $region36
        $region35: #{tpu_custom_call.1} parent=11 // pred_region
          _
        $region36: #{tpu_custom_call.1} parent=11 // pred_fallthru
          _
        // Predicated region
        $region37: #{tpu_custom_call.1} parent=11 // pred_check
          %p271 = pneg %p191
        $region38: #{tpu_custom_call.1} parent=11 // pred_check_branch
          %273 = sbr.rel (%p271) target = $region40
        $region39: #{tpu_custom_call.1} parent=11 // pred_region
          _
        $region40: #{tpu_custom_call.1} parent=11 // pred_fallthru
          _
        // Predicated region
        $region41: #{tpu_custom_call.1} parent=11 // pred_check
          %p274 = pneg %p212
        $region42: #{tpu_custom_call.1} parent=11 // pred_check_branch
          %276 = sbr.rel (%p274) target = $region44
        $region43: #{tpu_custom_call.1} parent=11 // pred_region
          _
        $region44: #{tpu_custom_call.1} parent=11 // pred_fallthru
          _
      $region12: #{tpu_custom_call.1} parent=5 // pred_fallthru
        _
      %p277 = scmp.lt.s32.totalorder %s18, 2
      // Predicated region
      $region45: #{tpu_custom_call.1} parent=5 // pred_check
        %p278 = pneg %p277
      $region46: #{tpu_custom_call.1} parent=5 // pred_check_branch
        %280 = sbr.rel (%p278) target = $region48
      $region47: #{tpu_custom_call.1} parent=5 // pred_region
        // Predicated region
        $region49: #{tpu_custom_call.1} parent=47 // pred_check
          %p281 = pneg %p38
        $region50: #{tpu_custom_call.1} parent=47 // pred_check_branch
          %283 = sbr.rel (%p281) target = $region52
        $region51: #{tpu_custom_call.1} parent=47 // pred_region
          %p284 = scmp.lt.s32.totalorder %s18, 1
          %s285 = scalar_select %p284, %s18, 1
          %s286 = smul.addr %s285, 32
          %s287 = smul.addr %s286, 8
          %s288 = scalar_lea.vmem %s0, %s287
        $region52: #{tpu_custom_call.1} parent=47 // pred_fallthru
          _
      $region48: #{tpu_custom_call.1} parent=5 // pred_fallthru
        _
      %p289 = scmp.le.s32.totalorder 1, %s18
      %p290 = scmp.lt.s32.totalorder %s18, 3
      %p291 = pnand %p289, %p290
      %p292 = pneg %p291
      // Predicated region
      $region53: #{tpu_custom_call.1} parent=5 // pred_check
        _
      $region54: #{tpu_custom_call.1} parent=5 // pred_check_branch
        %294 = sbr.rel (%p291) target = $region56
      $region55: #{tpu_custom_call.1} parent=5 // pred_region
        %s295 = ssub.s32 %s18, 1
        %p296 = scmp.lt.s32.totalorder %s23, 1
        %s297 = scalar_select %p296, %s23, 1
        %s298 = smul.addr %s297, 32
        %s299 = smul.addr %s298, 8
        %s300 = scalar_lea.vmem %s0, %s299
        %p301 = pneg %p44
        %p302 = pneg %p41
        %p303 = pneg %p65
        %p304 = pneg %p62
        %p305 = pneg %p86
        %p306 = pneg %p83
        %p307 = pneg %p107
        %p308 = pneg %p104
        %p309 = pneg %p128
        %p310 = pneg %p125
        %p311 = pneg %p149
        %p312 = pneg %p146
        %p313 = pneg %p170
        %p314 = pneg %p167
        %p315 = pneg %p191
        %p316 = pneg %p188
        %p317 = pneg %p212
        %p318 = pneg %p209
        %p319 = pneg %p238
        %p320 = pneg %p235
        %s321 = sand.u32 %s225, 1
        %s322 = scalar_lea.sflag [#allocation4], %s321
        %s323 = sand.u32 %s225, 1
        %s324 = smul.addr %s323, 4
        %s325 = scalar_lea.vmem [#allocation3], %s324
        %p326 = scmp.lt.s32.totalorder %s23, 1
        %s327 = scalar_select %p326, %s23, 1
        %s328 = smul.addr %s327, 32
        %s329 = smul.addr %s328, 8
        %s330 = scalar_lea.vmem %s0, %s329
        %vm331 = vcmask 261120
        %332 = vst.msk [vmem:[#allocation2] sm:$0xff] %vm331, 0.0
        %333 = vst.msk [vmem:[#allocation2 + $0x8] sm:$0xff] %vm331, 0.0
        %vm334 = vcmask 254976
        %335 = vst.msk [vmem:[#allocation2 + $0x10] sm:$0x3] %vm334, 0.0
        %336 = vst.msk [vmem:[#allocation2 + $0x18] sm:$0xff] %vm331, 0.0
        %337 = vst.msk [vmem:[#allocation2 + $0x20] sm:$0xff] %vm331, 0.0
        %338 = vst.msk [vmem:[#allocation2 + $0x28] sm:$0x3] %vm334, 0.0
        %339 = vst.msk [vmem:[#allocation2 + $0x30] sm:$0xff] %vm331, 0.0
        %340 = vst.msk [vmem:[#allocation2 + $0x38] sm:$0xff] %vm331, 0.0
        %341 = vst.msk [vmem:[#allocation2 + $0x40] sm:$0x3] %vm334, 0.0
        %342 = vst.msk [vmem:[#allocation2 + $0x48] sm:$0xff] %vm331, 0.0
        %343 = vst.msk [vmem:[#allocation2 + $0x50] sm:$0xff] %vm331, 0.0
        %344 = vst.msk [vmem:[#allocation2 + $0x58] sm:$0x3] %vm334, 0.0
        %345 = vst.msk [vmem:[#allocation2 + $0x60] sm:$0xff] %vm331, 0.0
        %346 = vst.msk [vmem:[#allocation2 + $0x68] sm:$0xff] %vm331, 0.0
        %347 = vst.msk [vmem:[#allocation2 + $0x70] sm:$0x3] %vm334, 0.0
        %348 = vst.msk [vmem:[#allocation2 + $0x78] sm:$0xff] %vm331, 0.0
        %349 = vst.msk [vmem:[#allocation2 + $0x80] sm:$0xff] %vm331, 0.0
        %350 = vst.msk [vmem:[#allocation2 + $0x88] sm:$0x3] %vm334, 0.0
        %351 = vst.msk [vmem:[#allocation2 + $0x90] sm:$0xff] %vm331, 0.0
        %352 = vst.msk [vmem:[#allocation2 + $0x98] sm:$0xff] %vm331, 0.0
        %353 = vst.msk [vmem:[#allocation2 + $0xa0] sm:$0x3] %vm334, 0.0
        %354 = vst.msk [vmem:[#allocation2 + $0xa8] sm:$0xff] %vm331, 0.0
        %355 = vst.msk [vmem:[#allocation2 + $0xb0] sm:$0xff] %vm331, 0.0
        %356 = vst.msk [vmem:[#allocation2 + $0xb8] sm:$0x3] %vm334, 0.0
        %357 = vst.msk [vmem:[#allocation2 + $0xc0] sm:$0xff] %vm331, 0.0
        %358 = vst.msk [vmem:[#allocation2 + $0xc8] sm:$0xff] %vm331, 0.0
        %359 = vst.msk [vmem:[#allocation2 + $0xd0] sm:$0x3] %vm334, 0.0
        %360 = vst.msk [vmem:[#allocation2 + $0xd8] sm:$0xff] %vm331, 0.0
        %361 = vst.msk [vmem:[#allocation2 + $0xe0] sm:$0xff] %vm331, 0.0
        %362 = vst.msk [vmem:[#allocation2 + $0xe8] sm:$0x3] %vm334, 0.0
        %363 = vst.msk [vmem:[#allocation2 + $0xf0] sm:$0xff] %vm331, 0.0
        %364 = vst.msk [vmem:[#allocation2 + $0xf8] sm:$0xff] %vm331, 0.0
        %365 = vst.msk [vmem:[#allocation2 + $0x100] sm:$0x3] %vm334, 0.0
        %366 = vst.msk [vmem:[#allocation2 + $0x108] sm:$0xff] %vm331, 0.0
        %367 = vst.msk [vmem:[#allocation2 + $0x110] sm:$0xff] %vm331, 0.0
        %368 = vst.msk [vmem:[#allocation2 + $0x118] sm:$0x3] %vm334, 0.0
        %369 = vst.msk [vmem:[#allocation2 + $0x120] sm:$0xff] %vm331, 0.0
        %370 = vst.msk [vmem:[#allocation2 + $0x128] sm:$0xff] %vm331, 0.0
        %371 = vst.msk [vmem:[#allocation2 + $0x130] sm:$0x3] %vm334, 0.0
        %372 = vst.msk [vmem:[#allocation2 + $0x138] sm:$0xff] %vm331, 0.0
        %373 = vst.msk [vmem:[#allocation2 + $0x140] sm:$0xff] %vm331, 0.0
        %374 = vst.msk [vmem:[#allocation2 + $0x148] sm:$0x3] %vm334, 0.0
        %375 = vst.msk [vmem:[#allocation2 + $0x150] sm:$0xff] %vm331, 0.0
        %376 = vst.msk [vmem:[#allocation2 + $0x158] sm:$0xff] %vm331, 0.0
        %377 = vst.msk [vmem:[#allocation2 + $0x160] sm:$0x3] %vm334, 0.0
        %378 = vst.msk [vmem:[#allocation2 + $0x168] sm:$0xff] %vm331, 0.0
        %379 = vst.msk [vmem:[#allocation2 + $0x170] sm:$0xff] %vm331, 0.0
        %380 = vst.msk [vmem:[#allocation2 + $0x178] sm:$0x3] %vm334, 0.0
        %381 = vst.msk [vmem:[#allocation2 + $0x180] sm:$0xff] %vm331, 0.0
        %382 = vst.msk [vmem:[#allocation2 + $0x188] sm:$0xff] %vm331, 0.0
        %383 = vst.msk [vmem:[#allocation2 + $0x190] sm:$0x3] %vm334, 0.0
        %384 = vst.msk [vmem:[#allocation2 + $0x198] sm:$0xff] %vm331, 0.0
        %385 = vst.msk [vmem:[#allocation2 + $0x1a0] sm:$0xff] %vm331, 0.0
        %386 = vst.msk [vmem:[#allocation2 + $0x1a8] sm:$0x3] %vm334, 0.0
        %v387 = vld [vmem:[%s330] sm:$0xff]
        %v388 = vld [vmem:[%s330 + $0x8] sm:$0xff]
        %v389 = vld [vmem:[%s330 + $0x10] sm:$0xff]
        %v390 = vld [vmem:[%s330 + $0x18] sm:$0xff]
        %v391 = vld [vmem:[%s330 + $0x20] sm:$0xff]
        %v392 = vld [vmem:[%s330 + $0x28] sm:$0xff]
        %v393 = vld [vmem:[%s330 + $0x30] sm:$0xff]
        %v394 = vld [vmem:[%s330 + $0x38] sm:$0xff]
        %v395 = vld [vmem:[%s330 + $0x40] sm:$0xff]
        %v396 = vld [vmem:[%s330 + $0x48] sm:$0xff]
        %v397 = vld [vmem:[%s330 + $0x50] sm:$0xff]
        %v398 = vld [vmem:[%s330 + $0x58] sm:$0xff]
        %v399 = vld [vmem:[%s330 + $0x60] sm:$0xff]
        %v400 = vld [vmem:[%s330 + $0x68] sm:$0xff]
        %v401 = vld [vmem:[%s330 + $0x70] sm:$0xff]
        %v402 = vld [vmem:[%s330 + $0x78] sm:$0xff]
        %v403 = vld [vmem:[%s330 + $0x80] sm:$0xff]
        %v404 = vld [vmem:[%s330 + $0x88] sm:$0xff]
        %v405 = vld [vmem:[%s330 + $0x90] sm:$0xff]
        %v406 = vld [vmem:[%s330 + $0x98] sm:$0xff]
        %v407 = vld [vmem:[%s330 + $0xa0] sm:$0xff]
        %v408 = vld [vmem:[%s330 + $0xa8] sm:$0xff]
        %v409 = vld [vmem:[%s330 + $0xb0] sm:$0xff]
        %v410 = vld [vmem:[%s330 + $0xb8] sm:$0xff]
        %v411 = vld [vmem:[%s330 + $0xc0] sm:$0xff]
        %v412 = vld [vmem:[%s330 + $0xc8] sm:$0xff]
        %v413 = vld [vmem:[%s330 + $0xd0] sm:$0xff]
        %v414 = vld [vmem:[%s330 + $0xd8] sm:$0xff]
        %v415 = vld [vmem:[%s330 + $0xe0] sm:$0xff]
        %v416 = vld [vmem:[%s330 + $0xe8] sm:$0xff]
        %v417 = vld [vmem:[%s330 + $0xf0] sm:$0xff]
        %v418 = vld [vmem:[%s330 + $0xf8] sm:$0xff]
        %s419 = scalar_lea.vmem [#allocation2], 24
        %vm420 = vcmask 89088
        %421 = vst.msk [vmem:[%s419 + $0x1] sm:$0xff] %vm420, %v387
        %422 = vst.msk [vmem:[%s419 + $0x9] sm:$0xff] %vm420, %v388
        %423 = vst.msk [vmem:[%s419 + $0x19] sm:$0xff] %vm420, %v389
        %424 = vst.msk [vmem:[%s419 + $0x21] sm:$0xff] %vm420, %v390
        %425 = vst.msk [vmem:[%s419 + $0x31] sm:$0xff] %vm420, %v391
        %426 = vst.msk [vmem:[%s419 + $0x39] sm:$0xff] %vm420, %v392
        %427 = vst.msk [vmem:[%s419 + $0x49] sm:$0xff] %vm420, %v393
        %428 = vst.msk [vmem:[%s419 + $0x51] sm:$0xff] %vm420, %v394
        %429 = vst.msk [vmem:[%s419 + $0x61] sm:$0xff] %vm420, %v395
        %430 = vst.msk [vmem:[%s419 + $0x69] sm:$0xff] %vm420, %v396
        %431 = vst.msk [vmem:[%s419 + $0x79] sm:$0xff] %vm420, %v397
        %432 = vst.msk [vmem:[%s419 + $0x81] sm:$0xff] %vm420, %v398
        %433 = vst.msk [vmem:[%s419 + $0x91] sm:$0xff] %vm420, %v399
        %434 = vst.msk [vmem:[%s419 + $0x99] sm:$0xff] %vm420, %v400
        %435 = vst.msk [vmem:[%s419 + $0xa9] sm:$0xff] %vm420, %v401
        %436 = vst.msk [vmem:[%s419 + $0xb1] sm:$0xff] %vm420, %v402
        %437 = vst.msk [vmem:[%s419 + $0xc1] sm:$0xff] %vm420, %v403
        %438 = vst.msk [vmem:[%s419 + $0xc9] sm:$0xff] %vm420, %v404
        %439 = vst.msk [vmem:[%s419 + $0xd9] sm:$0xff] %vm420, %v405
        %440 = vst.msk [vmem:[%s419 + $0xe1] sm:$0xff] %vm420, %v406
        %441 = vst.msk [vmem:[%s419 + $0xf1] sm:$0xff] %vm420, %v407
        %442 = vst.msk [vmem:[%s419 + $0xf9] sm:$0xff] %vm420, %v408
        %443 = vst.msk [vmem:[%s419 + $0x109] sm:$0xff] %vm420, %v409
        %444 = vst.msk [vmem:[%s419 + $0x111] sm:$0xff] %vm420, %v410
        %445 = vst.msk [vmem:[%s419 + $0x121] sm:$0xff] %vm420, %v411
        %446 = vst.msk [vmem:[%s419 + $0x129] sm:$0xff] %vm420, %v412
        %447 = vst.msk [vmem:[%s419 + $0x139] sm:$0xff] %vm420, %v413
        %448 = vst.msk [vmem:[%s419 + $0x141] sm:$0xff] %vm420, %v414
        %449 = vst.msk [vmem:[%s419 + $0x151] sm:$0xff] %vm420, %v415
        %450 = vst.msk [vmem:[%s419 + $0x159] sm:$0xff] %vm420, %v416
        %451 = vst.msk [vmem:[%s419 + $0x169] sm:$0xff] %vm420, %v417
        %452 = vst.msk [vmem:[%s419 + $0x171] sm:$0xff] %vm420, %v418
        %v453 = vld [vmem:[%s1] sm:$0xff]
        %v454 = vld [vmem:[%s1 + $0x8] sm:$0xff]
        %v455 = vld [vmem:[%s1 + $0x10] sm:$0xff]
        %v456 = vld [vmem:[%s1 + $0x18] sm:$0xff]
        %v457 = vld [vmem:[%s1 + $0x20] sm:$0xff]
        %v458 = vld [vmem:[%s1 + $0x28] sm:$0xff]
        %v459 = vld [vmem:[%s1 + $0x30] sm:$0xff]
        %v460 = vld [vmem:[%s1 + $0x38] sm:$0xff]
        %v461 = vld [vmem:[%s1 + $0x40] sm:$0xff]
        %v462 = vld [vmem:[%s1 + $0x48] sm:$0xff]
        %v463 = vld [vmem:[%s1 + $0x50] sm:$0xff]
        %v464 = vld [vmem:[%s1 + $0x58] sm:$0xff]
        %v465 = vld [vmem:[%s1 + $0x60] sm:$0x7]
        %v466 = vld [vmem:[%s2] sm:$0x1]
        %v467 = vld [vmem:[#allocation2] sm:$0xff]
        %v468 = vld [vmem:[#allocation2 + $0x8] sm:$0xff]
        %v469 = vld [vmem:[#allocation2 + $0x10] sm:$0x3]
        %v470 = vld [vmem:[#allocation2 + $0x18] sm:$0xff]
        %v471 = vld [vmem:[#allocation2 + $0x20] sm:$0xff]
        %v472 = vld [vmem:[#allocation2 + $0x28] sm:$0x3]
        %v473 = vld [vmem:[#allocation2 + $0x30] sm:$0xff]
        %v474 = vld [vmem:[#allocation2 + $0x38] sm:$0xff]
        %v475 = vld [vmem:[#allocation2 + $0x40] sm:$0x3]
        %v476 = vld [vmem:[#allocation2 + $0x48] sm:$0xff]
        %v477 = vld [vmem:[#allocation2 + $0x50] sm:$0xff]
        %v478 = vld [vmem:[#allocation2 + $0x58] sm:$0x3]
        %v479 = vld [vmem:[#allocation2 + $0x60] sm:$0xff]
        %v480 = vld [vmem:[#allocation2 + $0x68] sm:$0xff]
        %v481 = vld [vmem:[#allocation2 + $0x70] sm:$0x3]
        %v482 = vld [vmem:[#allocation2 + $0x78] sm:$0xff]
        %v483 = vld [vmem:[#allocation2 + $0x80] sm:$0xff]
        %v484 = vld [vmem:[#allocation2 + $0x88] sm:$0x3]
        %v485 = vld [vmem:[#allocation2 + $0x90] sm:$0xff]
        %v486 = vld [vmem:[#allocation2 + $0x98] sm:$0xff]
        %v487 = vld [vmem:[#allocation2 + $0xa0] sm:$0x3]
        %v488 = vld [vmem:[#allocation2 + $0xa8] sm:$0xff]
        %v489 = vld [vmem:[#allocation2 + $0xb0] sm:$0xff]
        %v490 = vld [vmem:[#allocation2 + $0xb8] sm:$0x3]
        %v491 = vld [vmem:[#allocation2 + $0xc0] sm:$0xff]
        %v492 = vld [vmem:[#allocation2 + $0xc8] sm:$0xff]
        %v493 = vld [vmem:[#allocation2 + $0xd0] sm:$0x3]
        %v494 = vld [vmem:[#allocation2 + $0xd8] sm:$0xff]
        %v495 = vld [vmem:[#allocation2 + $0xe0] sm:$0xff]
        %v496 = vld [vmem:[#allocation2 + $0xe8] sm:$0x3]
        %v497 = vld [vmem:[#allocation2 + $0xf0] sm:$0xff]
        %v498 = vld [vmem:[#allocation2 + $0xf8] sm:$0xff]
        %v499 = vld [vmem:[#allocation2 + $0x100] sm:$0x3]
        %v500 = vld [vmem:[#allocation2 + $0x108] sm:$0xff]
        %v501 = vld [vmem:[#allocation2 + $0x110] sm:$0xff]
        %v502 = vld [vmem:[#allocation2 + $0x118] sm:$0x3]
        %v503 = vld [vmem:[#allocation2 + $0x120] sm:$0xff]
        %v504 = vld [vmem:[#allocation2 + $0x128] sm:$0xff]
        %v505 = vld [vmem:[#allocation2 + $0x130] sm:$0x3]
        %v506 = vld [vmem:[#allocation2 + $0x138] sm:$0xff]
        %v507 = vld [vmem:[#allocation2 + $0x140] sm:$0xff]
        %v508 = vld [vmem:[#allocation2 + $0x148] sm:$0x3]
        %v509 = vld [vmem:[#allocation2 + $0x150] sm:$0xff]
        %v510 = vld [vmem:[#allocation2 + $0x158] sm:$0xff]
        %v511 = vld [vmem:[#allocation2 + $0x160] sm:$0x3]
        %v512 = vld [vmem:[#allocation2 + $0x168] sm:$0xff]
        %v513 = vld [vmem:[#allocation2 + $0x170] sm:$0xff]
        %v514 = vld [vmem:[#allocation2 + $0x178] sm:$0x3]
        %v515 = vld [vmem:[#allocation2 + $0x180] sm:$0xff]
        %v516 = vld [vmem:[#allocation2 + $0x188] sm:$0xff]
        %v517 = vld [vmem:[#allocation2 + $0x190] sm:$0x3]
        %v518 = vld [vmem:[#allocation2 + $0x198] sm:$0xff]
        %v519 = vld [vmem:[#allocation2 + $0x1a0] sm:$0xff]
        %v520 = vld [vmem:[#allocation2 + $0x1a8] sm:$0x3]
        %vm569 = vcmask 1046528
        %v570 = vrot.slane %v467, 1
        %v571 = vrot.slane %v468, 1
        %v572 = vsel %vm569, %v570, %v571
        %v573 = vrot.slane %v469, 1
        %v574 = vsel %vm569, %v571, %v573
        %v575 = vrot.slane %v470, 1
        %v576 = vrot.slane %v471, 1
        %v577 = vsel %vm569, %v575, %v576
        %v578 = vrot.slane %v472, 1
        %v579 = vsel %vm569, %v576, %v578
        %v580 = vrot.slane %v473, 1
        %v581 = vrot.slane %v474, 1
        %v582 = vsel %vm569, %v580, %v581
        %v583 = vrot.slane %v475, 1
        %v584 = vsel %vm569, %v581, %v583
        %v585 = vrot.slane %v476, 1
        %v586 = vrot.slane %v477, 1
        %v587 = vsel %vm569, %v585, %v586
        %v588 = vrot.slane %v478, 1
        %v589 = vsel %vm569, %v586, %v588
        %v590 = vrot.slane %v479, 1
        %v591 = vrot.slane %v480, 1
        %v592 = vsel %vm569, %v590, %v591
        %v593 = vrot.slane %v481, 1
        %v594 = vsel %vm569, %v591, %v593
        %v595 = vrot.slane %v482, 1
        %v596 = vrot.slane %v483, 1
        %v597 = vsel %vm569, %v595, %v596
        %v598 = vrot.slane %v484, 1
        %v599 = vsel %vm569, %v596, %v598
        %v600 = vrot.slane %v485, 1
        %v601 = vrot.slane %v486, 1
        %v602 = vsel %vm569, %v600, %v601
        %v603 = vrot.slane %v487, 1
        %v604 = vsel %vm569, %v601, %v603
        %v605 = vrot.slane %v488, 1
        %v606 = vrot.slane %v489, 1
        %v607 = vsel %vm569, %v605, %v606
        %v608 = vrot.slane %v490, 1
        %v609 = vsel %vm569, %v606, %v608
        %v610 = vrot.slane %v491, 1
        %v611 = vrot.slane %v492, 1
        %v612 = vsel %vm569, %v610, %v611
        %v613 = vrot.slane %v493, 1
        %v614 = vsel %vm569, %v611, %v613
        %v615 = vrot.slane %v494, 1
        %v616 = vrot.slane %v495, 1
        %v617 = vsel %vm569, %v615, %v616
        %v618 = vrot.slane %v496, 1
        %v619 = vsel %vm569, %v616, %v618
        %v620 = vrot.slane %v497, 1
        %v621 = vrot.slane %v498, 1
        %v622 = vsel %vm569, %v620, %v621
        %v623 = vrot.slane %v499, 1
        %v624 = vsel %vm569, %v621, %v623
        %v625 = vrot.slane %v500, 1
        %v626 = vrot.slane %v501, 1
        %v627 = vsel %vm569, %v625, %v626
        %v628 = vrot.slane %v502, 1
        %v629 = vsel %vm569, %v626, %v628
        %v630 = vrot.slane %v503, 1
        %v631 = vrot.slane %v504, 1
        %v632 = vsel %vm569, %v630, %v631
        %v633 = vrot.slane %v505, 1
        %v634 = vsel %vm569, %v631, %v633
        %v635 = vrot.slane %v506, 1
        %v636 = vrot.slane %v507, 1
        %v637 = vsel %vm569, %v635, %v636
        %v638 = vrot.slane %v508, 1
        %v639 = vsel %vm569, %v636, %v638
        %v640 = vrot.slane %v509, 1
        %v641 = vrot.slane %v510, 1
        %v642 = vsel %vm569, %v640, %v641
        %v643 = vrot.slane %v511, 1
        %v644 = vsel %vm569, %v641, %v643
        %v645 = vrot.slane %v512, 1
        %v646 = vrot.slane %v513, 1
        %v647 = vsel %vm569, %v645, %v646
        %v648 = vrot.slane %v514, 1
        %v649 = vsel %vm569, %v646, %v648
        %vm650 = vcmask 1045504
        %v651 = vrot.slane %v467, 2
        %v652 = vrot.slane %v468, 2
        %v653 = vsel %vm650, %v651, %v652
        %v654 = vrot.slane %v469, 2
        %v655 = vsel %vm650, %v652, %v654
        %v656 = vrot.slane %v470, 2
        %v657 = vrot.slane %v471, 2
        %v658 = vsel %vm650, %v656, %v657
        %v659 = vrot.slane %v472, 2
        %v660 = vsel %vm650, %v657, %v659
        %v661 = vrot.slane %v473, 2
        %v662 = vrot.slane %v474, 2
        %v663 = vsel %vm650, %v661, %v662
        %v664 = vrot.slane %v475, 2
        %v665 = vsel %vm650, %v662, %v664
        %v666 = vrot.slane %v476, 2
        %v667 = vrot.slane %v477, 2
        %v668 = vsel %vm650, %v666, %v667
        %v669 = vrot.slane %v478, 2
        %v670 = vsel %vm650, %v667, %v669
        %v671 = vrot.slane %v479, 2
        %v672 = vrot.slane %v480, 2
        %v673 = vsel %vm650, %v671, %v672
        %v674 = vrot.slane %v481, 2
        %v675 = vsel %vm650, %v672, %v674
        %v676 = vrot.slane %v482, 2
        %v677 = vrot.slane %v483, 2
        %v678 = vsel %vm650, %v676, %v677
        %v679 = vrot.slane %v484, 2
        %v680 = vsel %vm650, %v677, %v679
        %v681 = vrot.slane %v485, 2
        %v682 = vrot.slane %v486, 2
        %v683 = vsel %vm650, %v681, %v682
        %v684 = vrot.slane %v487, 2
        %v685 = vsel %vm650, %v682, %v684
        %v686 = vrot.slane %v488, 2
        %v687 = vrot.slane %v489, 2
        %v688 = vsel %vm650, %v686, %v687
        %v689 = vrot.slane %v490, 2
        %v690 = vsel %vm650, %v687, %v689
        %v691 = vrot.slane %v491, 2
        %v692 = vrot.slane %v492, 2
        %v693 = vsel %vm650, %v691, %v692
        %v694 = vrot.slane %v493, 2
        %v695 = vsel %vm650, %v692, %v694
        %v696 = vrot.slane %v494, 2
        %v697 = vrot.slane %v495, 2
        %v698 = vsel %vm650, %v696, %v697
        %v699 = vrot.slane %v496, 2
        %v700 = vsel %vm650, %v697, %v699
        %v701 = vrot.slane %v497, 2
        %v702 = vrot.slane %v498, 2
        %v703 = vsel %vm650, %v701, %v702
        %v704 = vrot.slane %v499, 2
        %v705 = vsel %vm650, %v702, %v704
        %v706 = vrot.slane %v500, 2
        %v707 = vrot.slane %v501, 2
        %v708 = vsel %vm650, %v706, %v707
        %v709 = vrot.slane %v502, 2
        %v710 = vsel %vm650, %v707, %v709
        %v711 = vrot.slane %v503, 2
        %v712 = vrot.slane %v504, 2
        %v713 = vsel %vm650, %v711, %v712
        %v714 = vrot.slane %v505, 2
        %v715 = vsel %vm650, %v712, %v714
        %v716 = vrot.slane %v506, 2
        %v717 = vrot.slane %v507, 2
        %v718 = vsel %vm650, %v716, %v717
        %v719 = vrot.slane %v508, 2
        %v720 = vsel %vm650, %v717, %v719
        %v721 = vrot.slane %v509, 2
        %v722 = vrot.slane %v510, 2
        %v723 = vsel %vm650, %v721, %v722
        %v724 = vrot.slane %v511, 2
        %v725 = vsel %vm650, %v722, %v724
        %v726 = vrot.slane %v512, 2
        %v727 = vrot.slane %v513, 2
        %v728 = vsel %vm650, %v726, %v727
        %v729 = vrot.slane %v514, 2
        %v730 = vsel %vm650, %v727, %v729
        %v734 = vrot.slane %v515, 1
        %v735 = vrot.slane %v516, 1
        %v736 = vsel %vm569, %v734, %v735
        %v737 = vrot.slane %v517, 1
        %v738 = vsel %vm569, %v735, %v737
        %v739 = vrot.slane %v515, 2
        %v740 = vrot.slane %v516, 2
        %v741 = vsel %vm650, %v739, %v740
        %v742 = vrot.slane %v517, 2
        %v743 = vsel %vm650, %v740, %v742
        %v747 = vrot.slane %v518, 1
        %v748 = vrot.slane %v519, 1
        %v749 = vsel %vm569, %v747, %v748
        %v750 = vrot.slane %v520, 1
        %v751 = vsel %vm569, %v748, %v750
        %v752 = vrot.slane %v518, 2
        %v753 = vrot.slane %v519, 2
        %v754 = vsel %vm650, %v752, %v753
        %v755 = vrot.slane %v520, 2
        %v756 = vsel %vm650, %v753, %v755
        %757 = vrot.lane.b32.xlu0 %v572, 11
        %v758 = vpop.permute.xlu0 %757
        %759 = vrot.lane.b32.xlu0 %v574, 11
        %v760 = vpop.permute.xlu0 %759
        %761 = vrot.lane.b32.xlu0 %v577, 11
        %v762 = vpop.permute.xlu0 %761
        %763 = vrot.lane.b32.xlu0 %v579, 11
        %v764 = vpop.permute.xlu0 %763
        %765 = vrot.lane.b32.xlu0 %v582, 11
        %v766 = vpop.permute.xlu0 %765
        %767 = vrot.lane.b32.xlu0 %v584, 11
        %v768 = vpop.permute.xlu0 %767
        %769 = vrot.lane.b32.xlu0 %v587, 11
        %v770 = vpop.permute.xlu0 %769
        %771 = vrot.lane.b32.xlu0 %v589, 11
        %v772 = vpop.permute.xlu0 %771
        %773 = vrot.lane.b32.xlu0 %v592, 11
        %v774 = vpop.permute.xlu0 %773
        %775 = vrot.lane.b32.xlu0 %v594, 11
        %v776 = vpop.permute.xlu0 %775
        %777 = vrot.lane.b32.xlu0 %v597, 11
        %v778 = vpop.permute.xlu0 %777
        %779 = vrot.lane.b32.xlu0 %v599, 11
        %v780 = vpop.permute.xlu0 %779
        %781 = vrot.lane.b32.xlu0 %v602, 11
        %v782 = vpop.permute.xlu0 %781
        %783 = vrot.lane.b32.xlu0 %v604, 11
        %v784 = vpop.permute.xlu0 %783
        %785 = vrot.lane.b32.xlu0 %v607, 11
        %v786 = vpop.permute.xlu0 %785
        %787 = vrot.lane.b32.xlu0 %v609, 11
        %v788 = vpop.permute.xlu0 %787
        %789 = vrot.lane.b32.xlu0 %v612, 11
        %v790 = vpop.permute.xlu0 %789
        %791 = vrot.lane.b32.xlu0 %v614, 11
        %v792 = vpop.permute.xlu0 %791
        %793 = vrot.lane.b32.xlu0 %v617, 11
        %v794 = vpop.permute.xlu0 %793
        %795 = vrot.lane.b32.xlu0 %v619, 11
        %v796 = vpop.permute.xlu0 %795
        %797 = vrot.lane.b32.xlu0 %v622, 11
        %v798 = vpop.permute.xlu0 %797
        %799 = vrot.lane.b32.xlu0 %v624, 11
        %v800 = vpop.permute.xlu0 %799
        %801 = vrot.lane.b32.xlu0 %v627, 11
        %v802 = vpop.permute.xlu0 %801
        %803 = vrot.lane.b32.xlu0 %v629, 11
        %v804 = vpop.permute.xlu0 %803
        %805 = vrot.lane.b32.xlu0 %v632, 11
        %v806 = vpop.permute.xlu0 %805
        %807 = vrot.lane.b32.xlu0 %v634, 11
        %v808 = vpop.permute.xlu0 %807
        %809 = vrot.lane.b32.xlu0 %v637, 11
        %v810 = vpop.permute.xlu0 %809
        %811 = vrot.lane.b32.xlu0 %v639, 11
        %v812 = vpop.permute.xlu0 %811
        %813 = vrot.lane.b32.xlu0 %v642, 11
        %v814 = vpop.permute.xlu0 %813
        %815 = vrot.lane.b32.xlu0 %v644, 11
        %v816 = vpop.permute.xlu0 %815
        %817 = vrot.lane.b32.xlu0 %v647, 11
        %v818 = vpop.permute.xlu0 %817
        %819 = vrot.lane.b32.xlu0 %v649, 11
        %v820 = vpop.permute.xlu0 %819
        %853 = vrot.lane.b32.xlu0 %v653, 22
        %v854 = vpop.permute.xlu0 %853
        %855 = vrot.lane.b32.xlu0 %v655, 22
        %v856 = vpop.permute.xlu0 %855
        %857 = vrot.lane.b32.xlu0 %v658, 22
        %v858 = vpop.permute.xlu0 %857
        %859 = vrot.lane.b32.xlu0 %v660, 22
        %v860 = vpop.permute.xlu0 %859
        %861 = vrot.lane.b32.xlu0 %v663, 22
        %v862 = vpop.permute.xlu0 %861
        %863 = vrot.lane.b32.xlu0 %v665, 22
        %v864 = vpop.permute.xlu0 %863
        %865 = vrot.lane.b32.xlu0 %v668, 22
        %v866 = vpop.permute.xlu0 %865
        %867 = vrot.lane.b32.xlu0 %v670, 22
        %v868 = vpop.permute.xlu0 %867
        %869 = vrot.lane.b32.xlu0 %v673, 22
        %v870 = vpop.permute.xlu0 %869
        %871 = vrot.lane.b32.xlu0 %v675, 22
        %v872 = vpop.permute.xlu0 %871
        %873 = vrot.lane.b32.xlu0 %v678, 22
        %v874 = vpop.permute.xlu0 %873
        %875 = vrot.lane.b32.xlu0 %v680, 22
        %v876 = vpop.permute.xlu0 %875
        %877 = vrot.lane.b32.xlu0 %v683, 22
        %v878 = vpop.permute.xlu0 %877
        %879 = vrot.lane.b32.xlu0 %v685, 22
        %v880 = vpop.permute.xlu0 %879
        %881 = vrot.lane.b32.xlu0 %v688, 22
        %v882 = vpop.permute.xlu0 %881
        %883 = vrot.lane.b32.xlu0 %v690, 22
        %v884 = vpop.permute.xlu0 %883
        %885 = vrot.lane.b32.xlu0 %v693, 22
        %v886 = vpop.permute.xlu0 %885
        %887 = vrot.lane.b32.xlu0 %v695, 22
        %v888 = vpop.permute.xlu0 %887
        %889 = vrot.lane.b32.xlu0 %v698, 22
        %v890 = vpop.permute.xlu0 %889
        %891 = vrot.lane.b32.xlu0 %v700, 22
        %v892 = vpop.permute.xlu0 %891
        %893 = vrot.lane.b32.xlu0 %v703, 22
        %v894 = vpop.permute.xlu0 %893
        %895 = vrot.lane.b32.xlu0 %v705, 22
        %v896 = vpop.permute.xlu0 %895
        %897 = vrot.lane.b32.xlu0 %v708, 22
        %v898 = vpop.permute.xlu0 %897
        %899 = vrot.lane.b32.xlu0 %v710, 22
        %v900 = vpop.permute.xlu0 %899
        %901 = vrot.lane.b32.xlu0 %v713, 22
        %v902 = vpop.permute.xlu0 %901
        %903 = vrot.lane.b32.xlu0 %v715, 22
        %v904 = vpop.permute.xlu0 %903
        %905 = vrot.lane.b32.xlu0 %v718, 22
        %v906 = vpop.permute.xlu0 %905
        %907 = vrot.lane.b32.xlu0 %v720, 22
        %v908 = vpop.permute.xlu0 %907
        %909 = vrot.lane.b32.xlu0 %v723, 22
        %v910 = vpop.permute.xlu0 %909
        %911 = vrot.lane.b32.xlu0 %v725, 22
        %v912 = vpop.permute.xlu0 %911
        %913 = vrot.lane.b32.xlu0 %v728, 22
        %v914 = vpop.permute.xlu0 %913
        %915 = vrot.lane.b32.xlu0 %v730, 22
        %v916 = vpop.permute.xlu0 %915
        %949 = vrot.lane.b32.xlu0 %v470, 33
        %v950 = vpop.permute.xlu0 %949
        %951 = vrot.lane.b32.xlu0 %v471, 33
        %v952 = vpop.permute.xlu0 %951
        %953 = vrot.lane.b32.xlu0 %v473, 33
        %v954 = vpop.permute.xlu0 %953
        %955 = vrot.lane.b32.xlu0 %v474, 33
        %v956 = vpop.permute.xlu0 %955
        %957 = vrot.lane.b32.xlu0 %v476, 33
        %v958 = vpop.permute.xlu0 %957
        %959 = vrot.lane.b32.xlu0 %v477, 33
        %v960 = vpop.permute.xlu0 %959
        %961 = vrot.lane.b32.xlu0 %v479, 33
        %v962 = vpop.permute.xlu0 %961
        %963 = vrot.lane.b32.xlu0 %v480, 33
        %v964 = vpop.permute.xlu0 %963
        %965 = vrot.lane.b32.xlu0 %v482, 33
        %v966 = vpop.permute.xlu0 %965
        %967 = vrot.lane.b32.xlu0 %v483, 33
        %v968 = vpop.permute.xlu0 %967
        %969 = vrot.lane.b32.xlu0 %v485, 33
        %v970 = vpop.permute.xlu0 %969
        %971 = vrot.lane.b32.xlu0 %v486, 33
        %v972 = vpop.permute.xlu0 %971
        %973 = vrot.lane.b32.xlu0 %v488, 33
        %v974 = vpop.permute.xlu0 %973
        %975 = vrot.lane.b32.xlu0 %v489, 33
        %v976 = vpop.permute.xlu0 %975
        %977 = vrot.lane.b32.xlu0 %v491, 33
        %v978 = vpop.permute.xlu0 %977
        %979 = vrot.lane.b32.xlu0 %v492, 33
        %v980 = vpop.permute.xlu0 %979
        %981 = vrot.lane.b32.xlu0 %v494, 33
        %v982 = vpop.permute.xlu0 %981
        %983 = vrot.lane.b32.xlu0 %v495, 33
        %v984 = vpop.permute.xlu0 %983
        %985 = vrot.lane.b32.xlu0 %v497, 33
        %v986 = vpop.permute.xlu0 %985
        %987 = vrot.lane.b32.xlu0 %v498, 33
        %v988 = vpop.permute.xlu0 %987
        %989 = vrot.lane.b32.xlu0 %v500, 33
        %v990 = vpop.permute.xlu0 %989
        %991 = vrot.lane.b32.xlu0 %v501, 33
        %v992 = vpop.permute.xlu0 %991
        %993 = vrot.lane.b32.xlu0 %v503, 33
        %v994 = vpop.permute.xlu0 %993
        %995 = vrot.lane.b32.xlu0 %v504, 33
        %v996 = vpop.permute.xlu0 %995
        %997 = vrot.lane.b32.xlu0 %v506, 33
        %v998 = vpop.permute.xlu0 %997
        %999 = vrot.lane.b32.xlu0 %v507, 33
        %v1000 = vpop.permute.xlu0 %999
        %1001 = vrot.lane.b32.xlu0 %v509, 33
        %v1002 = vpop.permute.xlu0 %1001
        %1003 = vrot.lane.b32.xlu0 %v510, 33
        %v1004 = vpop.permute.xlu0 %1003
        %1005 = vrot.lane.b32.xlu0 %v512, 33
        %v1006 = vpop.permute.xlu0 %1005
        %1007 = vrot.lane.b32.xlu0 %v513, 33
        %v1008 = vpop.permute.xlu0 %1007
        %1009 = vrot.lane.b32.xlu0 %v515, 33
        %v1010 = vpop.permute.xlu0 %1009
        %1011 = vrot.lane.b32.xlu0 %v516, 33
        %v1012 = vpop.permute.xlu0 %1011
        %1045 = vrot.lane.b32.xlu0 %v577, 44
        %v1046 = vpop.permute.xlu0 %1045
        %1047 = vrot.lane.b32.xlu0 %v579, 44
        %v1048 = vpop.permute.xlu0 %1047
        %1049 = vrot.lane.b32.xlu0 %v582, 44
        %v1050 = vpop.permute.xlu0 %1049
        %1051 = vrot.lane.b32.xlu0 %v584, 44
        %v1052 = vpop.permute.xlu0 %1051
        %1053 = vrot.lane.b32.xlu0 %v587, 44
        %v1054 = vpop.permute.xlu0 %1053
        %1055 = vrot.lane.b32.xlu0 %v589, 44
        %v1056 = vpop.permute.xlu0 %1055
        %1057 = vrot.lane.b32.xlu0 %v592, 44
        %v1058 = vpop.permute.xlu0 %1057
        %1059 = vrot.lane.b32.xlu0 %v594, 44
        %v1060 = vpop.permute.xlu0 %1059
        %1061 = vrot.lane.b32.xlu0 %v597, 44
        %v1062 = vpop.permute.xlu0 %1061
        %1063 = vrot.lane.b32.xlu0 %v599, 44
        %v1064 = vpop.permute.xlu0 %1063
        %1065 = vrot.lane.b32.xlu0 %v602, 44
        %v1066 = vpop.permute.xlu0 %1065
        %1067 = vrot.lane.b32.xlu0 %v604, 44
        %v1068 = vpop.permute.xlu0 %1067
        %1069 = vrot.lane.b32.xlu0 %v607, 44
        %v1070 = vpop.permute.xlu0 %1069
        %1071 = vrot.lane.b32.xlu0 %v609, 44
        %v1072 = vpop.permute.xlu0 %1071
        %1073 = vrot.lane.b32.xlu0 %v612, 44
        %v1074 = vpop.permute.xlu0 %1073
        %1075 = vrot.lane.b32.xlu0 %v614, 44
        %v1076 = vpop.permute.xlu0 %1075
        %1077 = vrot.lane.b32.xlu0 %v617, 44
        %v1078 = vpop.permute.xlu0 %1077
        %1079 = vrot.lane.b32.xlu0 %v619, 44
        %v1080 = vpop.permute.xlu0 %1079
        %1081 = vrot.lane.b32.xlu0 %v622, 44
        %v1082 = vpop.permute.xlu0 %1081
        %1083 = vrot.lane.b32.xlu0 %v624, 44
        %v1084 = vpop.permute.xlu0 %1083
        %1085 = vrot.lane.b32.xlu0 %v627, 44
        %v1086 = vpop.permute.xlu0 %1085
        %1087 = vrot.lane.b32.xlu0 %v629, 44
        %v1088 = vpop.permute.xlu0 %1087
        %1089 = vrot.lane.b32.xlu0 %v632, 44
        %v1090 = vpop.permute.xlu0 %1089
        %1091 = vrot.lane.b32.xlu0 %v634, 44
        %v1092 = vpop.permute.xlu0 %1091
        %1093 = vrot.lane.b32.xlu0 %v637, 44
        %v1094 = vpop.permute.xlu0 %1093
        %1095 = vrot.lane.b32.xlu0 %v639, 44
        %v1096 = vpop.permute.xlu0 %1095
        %1097 = vrot.lane.b32.xlu0 %v642, 44
        %v1098 = vpop.permute.xlu0 %1097
        %1099 = vrot.lane.b32.xlu0 %v644, 44
        %v1100 = vpop.permute.xlu0 %1099
        %1101 = vrot.lane.b32.xlu0 %v647, 44
        %v1102 = vpop.permute.xlu0 %1101
        %1103 = vrot.lane.b32.xlu0 %v649, 44
        %v1104 = vpop.permute.xlu0 %1103
        %1105 = vrot.lane.b32.xlu0 %v736, 44
        %v1106 = vpop.permute.xlu0 %1105
        %1107 = vrot.lane.b32.xlu0 %v738, 44
        %v1108 = vpop.permute.xlu0 %1107
        %1141 = vrot.lane.b32.xlu0 %v658, 55
        %v1142 = vpop.permute.xlu0 %1141
        %1143 = vrot.lane.b32.xlu0 %v660, 55
        %v1144 = vpop.permute.xlu0 %1143
        %1145 = vrot.lane.b32.xlu0 %v663, 55
        %v1146 = vpop.permute.xlu0 %1145
        %1147 = vrot.lane.b32.xlu0 %v665, 55
        %v1148 = vpop.permute.xlu0 %1147
        %1149 = vrot.lane.b32.xlu0 %v668, 55
        %v1150 = vpop.permute.xlu0 %1149
        %1151 = vrot.lane.b32.xlu0 %v670, 55
        %v1152 = vpop.permute.xlu0 %1151
        %1153 = vrot.lane.b32.xlu0 %v673, 55
        %v1154 = vpop.permute.xlu0 %1153
        %1155 = vrot.lane.b32.xlu0 %v675, 55
        %v1156 = vpop.permute.xlu0 %1155
        %1157 = vrot.lane.b32.xlu0 %v678, 55
        %v1158 = vpop.permute.xlu0 %1157
        %1159 = vrot.lane.b32.xlu0 %v680, 55
        %v1160 = vpop.permute.xlu0 %1159
        %1161 = vrot.lane.b32.xlu0 %v683, 55
        %v1162 = vpop.permute.xlu0 %1161
        %1163 = vrot.lane.b32.xlu0 %v685, 55
        %v1164 = vpop.permute.xlu0 %1163
        %1165 = vrot.lane.b32.xlu0 %v688, 55
        %v1166 = vpop.permute.xlu0 %1165
        %1167 = vrot.lane.b32.xlu0 %v690, 55
        %v1168 = vpop.permute.xlu0 %1167
        %1169 = vrot.lane.b32.xlu0 %v693, 55
        %v1170 = vpop.permute.xlu0 %1169
        %1171 = vrot.lane.b32.xlu0 %v695, 55
        %v1172 = vpop.permute.xlu0 %1171
        %1173 = vrot.lane.b32.xlu0 %v698, 55
        %v1174 = vpop.permute.xlu0 %1173
        %1175 = vrot.lane.b32.xlu0 %v700, 55
        %v1176 = vpop.permute.xlu0 %1175
        %1177 = vrot.lane.b32.xlu0 %v703, 55
        %v1178 = vpop.permute.xlu0 %1177
        %1179 = vrot.lane.b32.xlu0 %v705, 55
        %v1180 = vpop.permute.xlu0 %1179
        %1181 = vrot.lane.b32.xlu0 %v708, 55
        %v1182 = vpop.permute.xlu0 %1181
        %1183 = vrot.lane.b32.xlu0 %v710, 55
        %v1184 = vpop.permute.xlu0 %1183
        %1185 = vrot.lane.b32.xlu0 %v713, 55
        %v1186 = vpop.permute.xlu0 %1185
        %1187 = vrot.lane.b32.xlu0 %v715, 55
        %v1188 = vpop.permute.xlu0 %1187
        %1189 = vrot.lane.b32.xlu0 %v718, 55
        %v1190 = vpop.permute.xlu0 %1189
        %1191 = vrot.lane.b32.xlu0 %v720, 55
        %v1192 = vpop.permute.xlu0 %1191
        %1193 = vrot.lane.b32.xlu0 %v723, 55
        %v1194 = vpop.permute.xlu0 %1193
        %1195 = vrot.lane.b32.xlu0 %v725, 55
        %v1196 = vpop.permute.xlu0 %1195
        %1197 = vrot.lane.b32.xlu0 %v728, 55
        %v1198 = vpop.permute.xlu0 %1197
        %1199 = vrot.lane.b32.xlu0 %v730, 55
        %v1200 = vpop.permute.xlu0 %1199
        %1201 = vrot.lane.b32.xlu0 %v741, 55
        %v1202 = vpop.permute.xlu0 %1201
        %1203 = vrot.lane.b32.xlu0 %v743, 55
        %v1204 = vpop.permute.xlu0 %1203
        %1237 = vrot.lane.b32.xlu0 %v473, 66
        %v1238 = vpop.permute.xlu0 %1237
        %1239 = vrot.lane.b32.xlu0 %v474, 66
        %v1240 = vpop.permute.xlu0 %1239
        %1241 = vrot.lane.b32.xlu0 %v476, 66
        %v1242 = vpop.permute.xlu0 %1241
        %1243 = vrot.lane.b32.xlu0 %v477, 66
        %v1244 = vpop.permute.xlu0 %1243
        %1245 = vrot.lane.b32.xlu0 %v479, 66
        %v1246 = vpop.permute.xlu0 %1245
        %1247 = vrot.lane.b32.xlu0 %v480, 66
        %v1248 = vpop.permute.xlu0 %1247
        %1249 = vrot.lane.b32.xlu0 %v482, 66
        %v1250 = vpop.permute.xlu0 %1249
        %1251 = vrot.lane.b32.xlu0 %v483, 66
        %v1252 = vpop.permute.xlu0 %1251
        %1253 = vrot.lane.b32.xlu0 %v485, 66
        %v1254 = vpop.permute.xlu0 %1253
        %1255 = vrot.lane.b32.xlu0 %v486, 66
        %v1256 = vpop.permute.xlu0 %1255
        %1257 = vrot.lane.b32.xlu0 %v488, 66
        %v1258 = vpop.permute.xlu0 %1257
        %1259 = vrot.lane.b32.xlu0 %v489, 66
        %v1260 = vpop.permute.xlu0 %1259
        %1261 = vrot.lane.b32.xlu0 %v491, 66
        %v1262 = vpop.permute.xlu0 %1261
        %1263 = vrot.lane.b32.xlu0 %v492, 66
        %v1264 = vpop.permute.xlu0 %1263
        %1265 = vrot.lane.b32.xlu0 %v494, 66
        %v1266 = vpop.permute.xlu0 %1265
        %1267 = vrot.lane.b32.xlu0 %v495, 66
        %v1268 = vpop.permute.xlu0 %1267
        %1269 = vrot.lane.b32.xlu0 %v497, 66
        %v1270 = vpop.permute.xlu0 %1269
        %1271 = vrot.lane.b32.xlu0 %v498, 66
        %v1272 = vpop.permute.xlu0 %1271
        %1273 = vrot.lane.b32.xlu0 %v500, 66
        %v1274 = vpop.permute.xlu0 %1273
        %1275 = vrot.lane.b32.xlu0 %v501, 66
        %v1276 = vpop.permute.xlu0 %1275
        %1277 = vrot.lane.b32.xlu0 %v503, 66
        %v1278 = vpop.permute.xlu0 %1277
        %1279 = vrot.lane.b32.xlu0 %v504, 66
        %v1280 = vpop.permute.xlu0 %1279
        %1281 = vrot.lane.b32.xlu0 %v506, 66
        %v1282 = vpop.permute.xlu0 %1281
        %1283 = vrot.lane.b32.xlu0 %v507, 66
        %v1284 = vpop.permute.xlu0 %1283
        %1285 = vrot.lane.b32.xlu0 %v509, 66
        %v1286 = vpop.permute.xlu0 %1285
        %1287 = vrot.lane.b32.xlu0 %v510, 66
        %v1288 = vpop.permute.xlu0 %1287
        %1289 = vrot.lane.b32.xlu0 %v512, 66
        %v1290 = vpop.permute.xlu0 %1289
        %1291 = vrot.lane.b32.xlu0 %v513, 66
        %v1292 = vpop.permute.xlu0 %1291
        %1293 = vrot.lane.b32.xlu0 %v515, 66
        %v1294 = vpop.permute.xlu0 %1293
        %1295 = vrot.lane.b32.xlu0 %v516, 66
        %v1296 = vpop.permute.xlu0 %1295
        %1297 = vrot.lane.b32.xlu0 %v518, 66
        %v1298 = vpop.permute.xlu0 %1297
        %1299 = vrot.lane.b32.xlu0 %v519, 66
        %v1300 = vpop.permute.xlu0 %1299
        %1333 = vrot.lane.b32.xlu0 %v582, 77
        %v1334 = vpop.permute.xlu0 %1333
        %1335 = vrot.lane.b32.xlu0 %v584, 77
        %v1336 = vpop.permute.xlu0 %1335
        %1337 = vrot.lane.b32.xlu0 %v587, 77
        %v1338 = vpop.permute.xlu0 %1337
        %1339 = vrot.lane.b32.xlu0 %v589, 77
        %v1340 = vpop.permute.xlu0 %1339
        %1341 = vrot.lane.b32.xlu0 %v592, 77
        %v1342 = vpop.permute.xlu0 %1341
        %1343 = vrot.lane.b32.xlu0 %v594, 77
        %v1344 = vpop.permute.xlu0 %1343
        %1345 = vrot.lane.b32.xlu0 %v597, 77
        %v1346 = vpop.permute.xlu0 %1345
        %1347 = vrot.lane.b32.xlu0 %v599, 77
        %v1348 = vpop.permute.xlu0 %1347
        %1349 = vrot.lane.b32.xlu0 %v602, 77
        %v1350 = vpop.permute.xlu0 %1349
        %1351 = vrot.lane.b32.xlu0 %v604, 77
        %v1352 = vpop.permute.xlu0 %1351
        %1353 = vrot.lane.b32.xlu0 %v607, 77
        %v1354 = vpop.permute.xlu0 %1353
        %1355 = vrot.lane.b32.xlu0 %v609, 77
        %v1356 = vpop.permute.xlu0 %1355
        %1357 = vrot.lane.b32.xlu0 %v612, 77
        %v1358 = vpop.permute.xlu0 %1357
        %1359 = vrot.lane.b32.xlu0 %v614, 77
        %v1360 = vpop.permute.xlu0 %1359
        %1361 = vrot.lane.b32.xlu0 %v617, 77
        %v1362 = vpop.permute.xlu0 %1361
        %1363 = vrot.lane.b32.xlu0 %v619, 77
        %v1364 = vpop.permute.xlu0 %1363
        %1365 = vrot.lane.b32.xlu0 %v622, 77
        %v1366 = vpop.permute.xlu0 %1365
        %1367 = vrot.lane.b32.xlu0 %v624, 77
        %v1368 = vpop.permute.xlu0 %1367
        %1369 = vrot.lane.b32.xlu0 %v627, 77
        %v1370 = vpop.permute.xlu0 %1369
        %1371 = vrot.lane.b32.xlu0 %v629, 77
        %v1372 = vpop.permute.xlu0 %1371
        %1373 = vrot.lane.b32.xlu0 %v632, 77
        %v1374 = vpop.permute.xlu0 %1373
        %1375 = vrot.lane.b32.xlu0 %v634, 77
        %v1376 = vpop.permute.xlu0 %1375
        %1377 = vrot.lane.b32.xlu0 %v637, 77
        %v1378 = vpop.permute.xlu0 %1377
        %1379 = vrot.lane.b32.xlu0 %v639, 77
        %v1380 = vpop.permute.xlu0 %1379
        %1381 = vrot.lane.b32.xlu0 %v642, 77
        %v1382 = vpop.permute.xlu0 %1381
        %1383 = vrot.lane.b32.xlu0 %v644, 77
        %v1384 = vpop.permute.xlu0 %1383
        %1385 = vrot.lane.b32.xlu0 %v647, 77
        %v1386 = vpop.permute.xlu0 %1385
        %1387 = vrot.lane.b32.xlu0 %v649, 77
        %v1388 = vpop.permute.xlu0 %1387
        %1389 = vrot.lane.b32.xlu0 %v736, 77
        %v1390 = vpop.permute.xlu0 %1389
        %1391 = vrot.lane.b32.xlu0 %v738, 77
        %v1392 = vpop.permute.xlu0 %1391
        %1393 = vrot.lane.b32.xlu0 %v749, 77
        %v1394 = vpop.permute.xlu0 %1393
        %1395 = vrot.lane.b32.xlu0 %v751, 77
        %v1396 = vpop.permute.xlu0 %1395
        %1429 = vrot.lane.b32.xlu0 %v663, 88
        %v1430 = vpop.permute.xlu0 %1429
        %1431 = vrot.lane.b32.xlu0 %v665, 88
        %v1432 = vpop.permute.xlu0 %1431
        %1433 = vrot.lane.b32.xlu0 %v668, 88
        %v1434 = vpop.permute.xlu0 %1433
        %1435 = vrot.lane.b32.xlu0 %v670, 88
        %v1436 = vpop.permute.xlu0 %1435
        %1437 = vrot.lane.b32.xlu0 %v673, 88
        %v1438 = vpop.permute.xlu0 %1437
        %1439 = vrot.lane.b32.xlu0 %v675, 88
        %v1440 = vpop.permute.xlu0 %1439
        %1441 = vrot.lane.b32.xlu0 %v678, 88
        %v1442 = vpop.permute.xlu0 %1441
        %1443 = vrot.lane.b32.xlu0 %v680, 88
        %v1444 = vpop.permute.xlu0 %1443
        %1445 = vrot.lane.b32.xlu0 %v683, 88
        %v1446 = vpop.permute.xlu0 %1445
        %1447 = vrot.lane.b32.xlu0 %v685, 88
        %v1448 = vpop.permute.xlu0 %1447
        %1449 = vrot.lane.b32.xlu0 %v688, 88
        %v1450 = vpop.permute.xlu0 %1449
        %1451 = vrot.lane.b32.xlu0 %v690, 88
        %v1452 = vpop.permute.xlu0 %1451
        %1453 = vrot.lane.b32.xlu0 %v693, 88
        %v1454 = vpop.permute.xlu0 %1453
        %1455 = vrot.lane.b32.xlu0 %v695, 88
        %v1456 = vpop.permute.xlu0 %1455
        %1457 = vrot.lane.b32.xlu0 %v698, 88
        %v1458 = vpop.permute.xlu0 %1457
        %1459 = vrot.lane.b32.xlu0 %v700, 88
        %v1460 = vpop.permute.xlu0 %1459
        %1461 = vrot.lane.b32.xlu0 %v703, 88
        %v1462 = vpop.permute.xlu0 %1461
        %1463 = vrot.lane.b32.xlu0 %v705, 88
        %v1464 = vpop.permute.xlu0 %1463
        %1465 = vrot.lane.b32.xlu0 %v708, 88
        %v1466 = vpop.permute.xlu0 %1465
        %1467 = vrot.lane.b32.xlu0 %v710, 88
        %v1468 = vpop.permute.xlu0 %1467
        %1469 = vrot.lane.b32.xlu0 %v713, 88
        %v1470 = vpop.permute.xlu0 %1469
        %1471 = vrot.lane.b32.xlu0 %v715, 88
        %v1472 = vpop.permute.xlu0 %1471
        %1473 = vrot.lane.b32.xlu0 %v718, 88
        %v1474 = vpop.permute.xlu0 %1473
        %1475 = vrot.lane.b32.xlu0 %v720, 88
        %v1476 = vpop.permute.xlu0 %1475
        %1477 = vrot.lane.b32.xlu0 %v723, 88
        %v1478 = vpop.permute.xlu0 %1477
        %1479 = vrot.lane.b32.xlu0 %v725, 88
        %v1480 = vpop.permute.xlu0 %1479
        %1481 = vrot.lane.b32.xlu0 %v728, 88
        %v1482 = vpop.permute.xlu0 %1481
        %1483 = vrot.lane.b32.xlu0 %v730, 88
        %v1484 = vpop.permute.xlu0 %1483
        %1485 = vrot.lane.b32.xlu0 %v741, 88
        %v1486 = vpop.permute.xlu0 %1485
        %1487 = vrot.lane.b32.xlu0 %v743, 88
        %v1488 = vpop.permute.xlu0 %1487
        %1489 = vrot.lane.b32.xlu0 %v754, 88
        %v1490 = vpop.permute.xlu0 %1489
        %1491 = vrot.lane.b32.xlu0 %v756, 88
        %v1492 = vpop.permute.xlu0 %1491
        %v1525 = vsel %vm420, %v467, %v758
        %v1526 = vsel %vm420, %v468, %v760
        %v1527 = vsel %vm420, %v470, %v762
        %v1528 = vsel %vm420, %v471, %v764
        %v1529 = vsel %vm420, %v473, %v766
        %v1530 = vsel %vm420, %v474, %v768
        %v1531 = vsel %vm420, %v476, %v770
        %v1532 = vsel %vm420, %v477, %v772
        %v1533 = vsel %vm420, %v479, %v774
        %v1534 = vsel %vm420, %v480, %v776
        %v1535 = vsel %vm420, %v482, %v778
        %v1536 = vsel %vm420, %v483, %v780
        %v1537 = vsel %vm420, %v485, %v782
        %v1538 = vsel %vm420, %v486, %v784
        %v1539 = vsel %vm420, %v488, %v786
        %v1540 = vsel %vm420, %v489, %v788
        %v1541 = vsel %vm420, %v491, %v790
        %v1542 = vsel %vm420, %v492, %v792
        %v1543 = vsel %vm420, %v494, %v794
        %v1544 = vsel %vm420, %v495, %v796
        %v1545 = vsel %vm420, %v497, %v798
        %v1546 = vsel %vm420, %v498, %v800
        %v1547 = vsel %vm420, %v500, %v802
        %v1548 = vsel %vm420, %v501, %v804
        %v1549 = vsel %vm420, %v503, %v806
        %v1550 = vsel %vm420, %v504, %v808
        %v1551 = vsel %vm420, %v506, %v810
        %v1552 = vsel %vm420, %v507, %v812
        %v1553 = vsel %vm420, %v509, %v814
        %v1554 = vsel %vm420, %v510, %v816
        %v1555 = vsel %vm420, %v512, %v818
        %v1556 = vsel %vm420, %v513, %v820
        %vm1557 = vcmask 179200
        %v1558 = vsel %vm1557, %v1525, %v854
        %v1559 = vsel %vm1557, %v1526, %v856
        %v1560 = vsel %vm1557, %v1527, %v858
        %v1561 = vsel %vm1557, %v1528, %v860
        %v1562 = vsel %vm1557, %v1529, %v862
        %v1563 = vsel %vm1557, %v1530, %v864
        %v1564 = vsel %vm1557, %v1531, %v866
        %v1565 = vsel %vm1557, %v1532, %v868
        %v1566 = vsel %vm1557, %v1533, %v870
        %v1567 = vsel %vm1557, %v1534, %v872
        %v1568 = vsel %vm1557, %v1535, %v874
        %v1569 = vsel %vm1557, %v1536, %v876
        %v1570 = vsel %vm1557, %v1537, %v878
        %v1571 = vsel %vm1557, %v1538, %v880
        %v1572 = vsel %vm1557, %v1539, %v882
        %v1573 = vsel %vm1557, %v1540, %v884
        %v1574 = vsel %vm1557, %v1541, %v886
        %v1575 = vsel %vm1557, %v1542, %v888
        %v1576 = vsel %vm1557, %v1543, %v890
        %v1577 = vsel %vm1557, %v1544, %v892
        %v1578 = vsel %vm1557, %v1545, %v894
        %v1579 = vsel %vm1557, %v1546, %v896
        %v1580 = vsel %vm1557, %v1547, %v898
        %v1581 = vsel %vm1557, %v1548, %v900
        %v1582 = vsel %vm1557, %v1549, %v902
        %v1583 = vsel %vm1557, %v1550, %v904
        %v1584 = vsel %vm1557, %v1551, %v906
        %v1585 = vsel %vm1557, %v1552, %v908
        %v1586 = vsel %vm1557, %v1553, %v910
        %v1587 = vsel %vm1557, %v1554, %v912
        %v1588 = vsel %vm1557, %v1555, %v914
        %v1589 = vsel %vm1557, %v1556, %v916
        %vm1590 = vcmask 269312
        %v1591 = vsel %vm1590, %v1558, %v950
        %v1592 = vsel %vm1590, %v1559, %v952
        %v1593 = vsel %vm1590, %v1560, %v954
        %v1594 = vsel %vm1590, %v1561, %v956
        %v1595 = vsel %vm1590, %v1562, %v958
        %v1596 = vsel %vm1590, %v1563, %v960
        %v1597 = vsel %vm1590, %v1564, %v962
        %v1598 = vsel %vm1590, %v1565, %v964
        %v1599 = vsel %vm1590, %v1566, %v966
        %v1600 = vsel %vm1590, %v1567, %v968
        %v1601 = vsel %vm1590, %v1568, %v970
        %v1602 = vsel %vm1590, %v1569, %v972
        %v1603 = vsel %vm1590, %v1570, %v974
        %v1604 = vsel %vm1590, %v1571, %v976
        %v1605 = vsel %vm1590, %v1572, %v978
        %v1606 = vsel %vm1590, %v1573, %v980
        %v1607 = vsel %vm1590, %v1574, %v982
        %v1608 = vsel %vm1590, %v1575, %v984
        %v1609 = vsel %vm1590, %v1576, %v986
        %v1610 = vsel %vm1590, %v1577, %v988
        %v1611 = vsel %vm1590, %v1578, %v990
        %v1612 = vsel %vm1590, %v1579, %v992
        %v1613 = vsel %vm1590, %v1580, %v994
        %v1614 = vsel %vm1590, %v1581, %v996
        %v1615 = vsel %vm1590, %v1582, %v998
        %v1616 = vsel %vm1590, %v1583, %v1000
        %v1617 = vsel %vm1590, %v1584, %v1002
        %v1618 = vsel %vm1590, %v1585, %v1004
        %v1619 = vsel %vm1590, %v1586, %v1006
        %v1620 = vsel %vm1590, %v1587, %v1008
        %v1621 = vsel %vm1590, %v1588, %v1010
        %v1622 = vsel %vm1590, %v1589, %v1012
        %vm1623 = vcmask 359424
        %v1624 = vsel %vm1623, %v1591, %v1046
        %v1625 = vsel %vm1623, %v1592, %v1048
        %v1626 = vsel %vm1623, %v1593, %v1050
        %v1627 = vsel %vm1623, %v1594, %v1052
        %v1628 = vsel %vm1623, %v1595, %v1054
        %v1629 = vsel %vm1623, %v1596, %v1056
        %v1630 = vsel %vm1623, %v1597, %v1058
        %v1631 = vsel %vm1623, %v1598, %v1060
        %v1632 = vsel %vm1623, %v1599, %v1062
        %v1633 = vsel %vm1623, %v1600, %v1064
        %v1634 = vsel %vm1623, %v1601, %v1066
        %v1635 = vsel %vm1623, %v1602, %v1068
        %v1636 = vsel %vm1623, %v1603, %v1070
        %v1637 = vsel %vm1623, %v1604, %v1072
        %v1638 = vsel %vm1623, %v1605, %v1074
        %v1639 = vsel %vm1623, %v1606, %v1076
        %v1640 = vsel %vm1623, %v1607, %v1078
        %v1641 = vsel %vm1623, %v1608, %v1080
        %v1642 = vsel %vm1623, %v1609, %v1082
        %v1643 = vsel %vm1623, %v1610, %v1084
        %v1644 = vsel %vm1623, %v1611, %v1086
        %v1645 = vsel %vm1623, %v1612, %v1088
        %v1646 = vsel %vm1623, %v1613, %v1090
        %v1647 = vsel %vm1623, %v1614, %v1092
        %v1648 = vsel %vm1623, %v1615, %v1094
        %v1649 = vsel %vm1623, %v1616, %v1096
        %v1650 = vsel %vm1623, %v1617, %v1098
        %v1651 = vsel %vm1623, %v1618, %v1100
        %v1652 = vsel %vm1623, %v1619, %v1102
        %v1653 = vsel %vm1623, %v1620, %v1104
        %v1654 = vsel %vm1623, %v1621, %v1106
        %v1655 = vsel %vm1623, %v1622, %v1108
        %vm1656 = vcmask 449536
        %v1657 = vsel %vm1656, %v1624, %v1142
        %v1658 = vsel %vm1656, %v1625, %v1144
        %v1659 = vsel %vm1656, %v1626, %v1146
        %v1660 = vsel %vm1656, %v1627, %v1148
        %v1661 = vsel %vm1656, %v1628, %v1150
        %v1662 = vsel %vm1656, %v1629, %v1152
        %v1663 = vsel %vm1656, %v1630, %v1154
        %v1664 = vsel %vm1656, %v1631, %v1156
        %v1665 = vsel %vm1656, %v1632, %v1158
        %v1666 = vsel %vm1656, %v1633, %v1160
        %v1667 = vsel %vm1656, %v1634, %v1162
        %v1668 = vsel %vm1656, %v1635, %v1164
        %v1669 = vsel %vm1656, %v1636, %v1166
        %v1670 = vsel %vm1656, %v1637, %v1168
        %v1671 = vsel %vm1656, %v1638, %v1170
        %v1672 = vsel %vm1656, %v1639, %v1172
        %v1673 = vsel %vm1656, %v1640, %v1174
        %v1674 = vsel %vm1656, %v1641, %v1176
        %v1675 = vsel %vm1656, %v1642, %v1178
        %v1676 = vsel %vm1656, %v1643, %v1180
        %v1677 = vsel %vm1656, %v1644, %v1182
        %v1678 = vsel %vm1656, %v1645, %v1184
        %v1679 = vsel %vm1656, %v1646, %v1186
        %v1680 = vsel %vm1656, %v1647, %v1188
        %v1681 = vsel %vm1656, %v1648, %v1190
        %v1682 = vsel %vm1656, %v1649, %v1192
        %v1683 = vsel %vm1656, %v1650, %v1194
        %v1684 = vsel %vm1656, %v1651, %v1196
        %v1685 = vsel %vm1656, %v1652, %v1198
        %v1686 = vsel %vm1656, %v1653, %v1200
        %v1687 = vsel %vm1656, %v1654, %v1202
        %v1688 = vsel %vm1656, %v1655, %v1204
        %vm1689 = vcmask 539648
        %v1690 = vsel %vm1689, %v1657, %v1238
        %v1691 = vsel %vm1689, %v1658, %v1240
        %v1692 = vsel %vm1689, %v1659, %v1242
        %v1693 = vsel %vm1689, %v1660, %v1244
        %v1694 = vsel %vm1689, %v1661, %v1246
        %v1695 = vsel %vm1689, %v1662, %v1248
        %v1696 = vsel %vm1689, %v1663, %v1250
        %v1697 = vsel %vm1689, %v1664, %v1252
        %v1698 = vsel %vm1689, %v1665, %v1254
        %v1699 = vsel %vm1689, %v1666, %v1256
        %v1700 = vsel %vm1689, %v1667, %v1258
        %v1701 = vsel %vm1689, %v1668, %v1260
        %v1702 = vsel %vm1689, %v1669, %v1262
        %v1703 = vsel %vm1689, %v1670, %v1264
        %v1704 = vsel %vm1689, %v1671, %v1266
        %v1705 = vsel %vm1689, %v1672, %v1268
        %v1706 = vsel %vm1689, %v1673, %v1270
        %v1707 = vsel %vm1689, %v1674, %v1272
        %v1708 = vsel %vm1689, %v1675, %v1274
        %v1709 = vsel %vm1689, %v1676, %v1276
        %v1710 = vsel %vm1689, %v1677, %v1278
        %v1711 = vsel %vm1689, %v1678, %v1280
        %v1712 = vsel %vm1689, %v1679, %v1282
        %v1713 = vsel %vm1689, %v1680, %v1284
        %v1714 = vsel %vm1689, %v1681, %v1286
        %v1715 = vsel %vm1689, %v1682, %v1288
        %v1716 = vsel %vm1689, %v1683, %v1290
        %v1717 = vsel %vm1689, %v1684, %v1292
        %v1718 = vsel %vm1689, %v1685, %v1294
        %v1719 = vsel %vm1689, %v1686, %v1296
        %v1720 = vsel %vm1689, %v1687, %v1298
        %v1721 = vsel %vm1689, %v1688, %v1300
        %vm1722 = vcmask 629760
        %v1723 = vsel %vm1722, %v1690, %v1334
        %v1724 = vsel %vm1722, %v1691, %v1336
        %v1725 = vsel %vm1722, %v1692, %v1338
        %v1726 = vsel %vm1722, %v1693, %v1340
        %v1727 = vsel %vm1722, %v1694, %v1342
        %v1728 = vsel %vm1722, %v1695, %v1344
        %v1729 = vsel %vm1722, %v1696, %v1346
        %v1730 = vsel %vm1722, %v1697, %v1348
        %v1731 = vsel %vm1722, %v1698, %v1350
        %v1732 = vsel %vm1722, %v1699, %v1352
        %v1733 = vsel %vm1722, %v1700, %v1354
        %v1734 = vsel %vm1722, %v1701, %v1356
        %v1735 = vsel %vm1722, %v1702, %v1358
        %v1736 = vsel %vm1722, %v1703, %v1360
        %v1737 = vsel %vm1722, %v1704, %v1362
        %v1738 = vsel %vm1722, %v1705, %v1364
        %v1739 = vsel %vm1722, %v1706, %v1366
        %v1740 = vsel %vm1722, %v1707, %v1368
        %v1741 = vsel %vm1722, %v1708, %v1370
        %v1742 = vsel %vm1722, %v1709, %v1372
        %v1743 = vsel %vm1722, %v1710, %v1374
        %v1744 = vsel %vm1722, %v1711, %v1376
        %v1745 = vsel %vm1722, %v1712, %v1378
        %v1746 = vsel %vm1722, %v1713, %v1380
        %v1747 = vsel %vm1722, %v1714, %v1382
        %v1748 = vsel %vm1722, %v1715, %v1384
        %v1749 = vsel %vm1722, %v1716, %v1386
        %v1750 = vsel %vm1722, %v1717, %v1388
        %v1751 = vsel %vm1722, %v1718, %v1390
        %v1752 = vsel %vm1722, %v1719, %v1392
        %v1753 = vsel %vm1722, %v1720, %v1394
        %v1754 = vsel %vm1722, %v1721, %v1396
        %vm1755 = vcmask 719872
        %v1756 = vsel %vm1755, %v1723, %v1430
        %v1757 = vsel %vm1755, %v1724, %v1432
        %v1758 = vsel %vm1755, %v1725, %v1434
        %v1759 = vsel %vm1755, %v1726, %v1436
        %v1760 = vsel %vm1755, %v1727, %v1438
        %v1761 = vsel %vm1755, %v1728, %v1440
        %v1762 = vsel %vm1755, %v1729, %v1442
        %v1763 = vsel %vm1755, %v1730, %v1444
        %v1764 = vsel %vm1755, %v1731, %v1446
        %v1765 = vsel %vm1755, %v1732, %v1448
        %v1766 = vsel %vm1755, %v1733, %v1450
        %v1767 = vsel %vm1755, %v1734, %v1452
        %v1768 = vsel %vm1755, %v1735, %v1454
        %v1769 = vsel %vm1755, %v1736, %v1456
        %v1770 = vsel %vm1755, %v1737, %v1458
        %v1771 = vsel %vm1755, %v1738, %v1460
        %v1772 = vsel %vm1755, %v1739, %v1462
        %v1773 = vsel %vm1755, %v1740, %v1464
        %v1774 = vsel %vm1755, %v1741, %v1466
        %v1775 = vsel %vm1755, %v1742, %v1468
        %v1776 = vsel %vm1755, %v1743, %v1470
        %v1777 = vsel %vm1755, %v1744, %v1472
        %v1778 = vsel %vm1755, %v1745, %v1474
        %v1779 = vsel %vm1755, %v1746, %v1476
        %v1780 = vsel %vm1755, %v1747, %v1478
        %v1781 = vsel %vm1755, %v1748, %v1480
        %v1782 = vsel %vm1755, %v1749, %v1482
        %v1783 = vsel %vm1755, %v1750, %v1484
        %v1784 = vsel %vm1755, %v1751, %v1486
        %v1785 = vsel %vm1755, %v1752, %v1488
        %v1786 = vsel %vm1755, %v1753, %v1490
        %v1787 = vsel %vm1755, %v1754, %v1492
        %v1789 = vperm.slane %v466, 0
        %vm1791 = vcmask 809984
        %v1793 = vsel %vm1791, %v1756, 0
        %v1796 = vsel %vm1791, %v1757, 0
        %v1799 = vsel %vm1791, %v1758, 0
        %v1802 = vsel %vm1791, %v1759, 0
        %v1805 = vsel %vm1791, %v1760, 0
        %v1808 = vsel %vm1791, %v1761, 0
        %v1811 = vsel %vm1791, %v1762, 0
        %v1814 = vsel %vm1791, %v1763, 0
        %v1817 = vsel %vm1791, %v1764, 0
        %v1820 = vsel %vm1791, %v1765, 0
        %v1823 = vsel %vm1791, %v1766, 0
        %v1826 = vsel %vm1791, %v1767, 0
        %v1829 = vsel %vm1791, %v1768, 0
        %v1832 = vsel %vm1791, %v1769, 0
        %v1835 = vsel %vm1791, %v1770, 0
        %v1838 = vsel %vm1791, %v1771, 0
        %v1841 = vsel %vm1791, %v1772, 0
        %v1844 = vsel %vm1791, %v1773, 0
        %v1847 = vsel %vm1791, %v1774, 0
        %v1850 = vsel %vm1791, %v1775, 0
        %v1853 = vsel %vm1791, %v1776, 0
        %v1856 = vsel %vm1791, %v1777, 0
        %v1859 = vsel %vm1791, %v1778, 0
        %v1862 = vsel %vm1791, %v1779, 0
        %v1865 = vsel %vm1791, %v1780, 0
        %v1868 = vsel %vm1791, %v1781, 0
        %v1871 = vsel %vm1791, %v1782, 0
        %v1874 = vsel %vm1791, %v1783, 0
        %v1877 = vsel %vm1791, %v1784, 0
        %v1880 = vsel %vm1791, %v1785, 0
        %v1883 = vsel %vm1791, %v1786, 0
        %v1886 = vsel %vm1791, %v1787, 0
        %vm1888 = vcmask 1042432
        %v1890 = vsel %vm1888, %v465, 0
        %1892 = vmatpush.msra.mxu0 0.0
        %1893 = vmatpush.msra.mxu0 0.0
        %1894 = vmatpush.msra.mxu0 0.0
        %1895 = vmatpush.msra.mxu0 %v1890
        %1896 = vmatpush.msra.mxu0 %v464
        %1897 = vmatpush.msra.mxu0 %v463
        %1898 = vmatpush.msra.mxu0 %v462
        %1899 = vmatpush.msra.mxu0 %v461
        %1900 = vmatpush.msra.mxu0 %v460
        %1901 = vmatpush.msra.mxu0 %v459
        %1902 = vmatpush.msra.mxu0 %v458
        %1903 = vmatpush.msra.mxu0 %v457
        %1904 = vmatpush.msra.mxu0 %v456
        %1905 = vmatpush.msra.mxu0 %v455
        %1906 = vmatpush.msra.mxu0 %v454
        %1907 = vmatpush.msra.mxu0 %v453
        %1908 = vmatmul.f32.gmra.mxu0 %v1793
        %v1909 = vpop.f32.mrf.mxu0
        %v1910 = vadd.f32 %v1789, %v1909
        %1911 = vmatmul.f32.gmra.mxu0 %v1796
        %v1912 = vpop.f32.mrf.mxu0
        %v1913 = vadd.f32 %v1789, %v1912
        %1914 = vmatmul.f32.gmra.mxu0 %v1799
        %v1915 = vpop.f32.mrf.mxu0
        %v1916 = vadd.f32 %v1789, %v1915
        %1917 = vmatmul.f32.gmra.mxu0 %v1802
        %v1918 = vpop.f32.mrf.mxu0
        %v1919 = vadd.f32 %v1789, %v1918
        %1920 = vmatmul.f32.gmra.mxu0 %v1805
        %v1921 = vpop.f32.mrf.mxu0
        %v1922 = vadd.f32 %v1789, %v1921
        %1923 = vmatmul.f32.gmra.mxu0 %v1808
        %v1924 = vpop.f32.mrf.mxu0
        %v1925 = vadd.f32 %v1789, %v1924
        %1926 = vmatmul.f32.gmra.mxu0 %v1811
        %v1927 = vpop.f32.mrf.mxu0
        %v1928 = vadd.f32 %v1789, %v1927
        %1929 = vmatmul.f32.gmra.mxu0 %v1814
        %v1930 = vpop.f32.mrf.mxu0
        %v1931 = vadd.f32 %v1789, %v1930
        %1932 = vmatmul.f32.gmra.mxu0 %v1817
        %v1933 = vpop.f32.mrf.mxu0
        %v1934 = vadd.f32 %v1789, %v1933
        %1935 = vmatmul.f32.gmra.mxu0 %v1820
        %v1936 = vpop.f32.mrf.mxu0
        %v1937 = vadd.f32 %v1789, %v1936
        %1938 = vmatmul.f32.gmra.mxu0 %v1823
        %v1939 = vpop.f32.mrf.mxu0
        %v1940 = vadd.f32 %v1789, %v1939
        %1941 = vmatmul.f32.gmra.mxu0 %v1826
        %v1942 = vpop.f32.mrf.mxu0
        %v1943 = vadd.f32 %v1789, %v1942
        %1944 = vmatmul.f32.gmra.mxu0 %v1829
        %v1945 = vpop.f32.mrf.mxu0
        %v1946 = vadd.f32 %v1789, %v1945
        %1947 = vmatmul.f32.gmra.mxu0 %v1832
        %v1948 = vpop.f32.mrf.mxu0
        %v1949 = vadd.f32 %v1789, %v1948
        %1950 = vmatmul.f32.gmra.mxu0 %v1835
        %v1951 = vpop.f32.mrf.mxu0
        %v1952 = vadd.f32 %v1789, %v1951
        %1953 = vmatmul.f32.gmra.mxu0 %v1838
        %v1954 = vpop.f32.mrf.mxu0
        %v1955 = vadd.f32 %v1789, %v1954
        %1956 = vmatmul.f32.gmra.mxu0 %v1841
        %v1957 = vpop.f32.mrf.mxu0
        %v1958 = vadd.f32 %v1789, %v1957
        %1959 = vmatmul.f32.gmra.mxu0 %v1844
        %v1960 = vpop.f32.mrf.mxu0
        %v1961 = vadd.f32 %v1789, %v1960
        %1962 = vmatmul.f32.gmra.mxu0 %v1847
        %v1963 = vpop.f32.mrf.mxu0
        %v1964 = vadd.f32 %v1789, %v1963
        %1965 = vmatmul.f32.gmra.mxu0 %v1850
        %v1966 = vpop.f32.mrf.mxu0
        %v1967 = vadd.f32 %v1789, %v1966
        %1968 = vmatmul.f32.gmra.mxu0 %v1853
        %v1969 = vpop.f32.mrf.mxu0
        %v1970 = vadd.f32 %v1789, %v1969
        %1971 = vmatmul.f32.gmra.mxu0 %v1856
        %v1972 = vpop.f32.mrf.mxu0
        %v1973 = vadd.f32 %v1789, %v1972
        %1974 = vmatmul.f32.gmra.mxu0 %v1859
        %v1975 = vpop.f32.mrf.mxu0
        %v1976 = vadd.f32 %v1789, %v1975
        %1977 = vmatmul.f32.gmra.mxu0 %v1862
        %v1978 = vpop.f32.mrf.mxu0
        %v1979 = vadd.f32 %v1789, %v1978
        %1980 = vmatmul.f32.gmra.mxu0 %v1865
        %v1981 = vpop.f32.mrf.mxu0
        %v1982 = vadd.f32 %v1789, %v1981
        %1983 = vmatmul.f32.gmra.mxu0 %v1868
        %v1984 = vpop.f32.mrf.mxu0
        %v1985 = vadd.f32 %v1789, %v1984
        %1986 = vmatmul.f32.gmra.mxu0 %v1871
        %v1987 = vpop.f32.mrf.mxu0
        %v1988 = vadd.f32 %v1789, %v1987
        %1989 = vmatmul.f32.gmra.mxu0 %v1874
        %v1990 = vpop.f32.mrf.mxu0
        %v1991 = vadd.f32 %v1789, %v1990
        %1992 = vmatmul.f32.gmra.mxu0 %v1877
        %v1993 = vpop.f32.mrf.mxu0
        %v1994 = vadd.f32 %v1789, %v1993
        %1995 = vmatmul.f32.gmra.mxu0 %v1880
        %v1996 = vpop.f32.mrf.mxu0
        %v1997 = vadd.f32 %v1789, %v1996
        %1998 = vmatmul.f32.gmra.mxu0 %v1883
        %v1999 = vpop.f32.mrf.mxu0
        %v2000 = vadd.f32 %v1789, %v1999
        %2001 = vmatmul.f32.gmra.mxu0 %v1886
        %v2002 = vpop.f32.mrf.mxu0
        %v2003 = vadd.f32 %v1789, %v2002
        %2004 = vdwg.mxu0
        %v2005 = vmax.f32 %v1910, 0.0
        %v2006 = vmax.f32 %v1913, 0.0
        %v2007 = vmax.f32 %v1916, 0.0
        %v2008 = vmax.f32 %v1919, 0.0
        %v2009 = vmax.f32 %v1922, 0.0
        %v2010 = vmax.f32 %v1925, 0.0
        %v2011 = vmax.f32 %v1928, 0.0
        %v2012 = vmax.f32 %v1931, 0.0
        %v2013 = vmax.f32 %v1934, 0.0
        %v2014 = vmax.f32 %v1937, 0.0
        %v2015 = vmax.f32 %v1940, 0.0
        %v2016 = vmax.f32 %v1943, 0.0
        %v2017 = vmax.f32 %v1946, 0.0
        %v2018 = vmax.f32 %v1949, 0.0
        %v2019 = vmax.f32 %v1952, 0.0
        %v2020 = vmax.f32 %v1955, 0.0
        %v2021 = vmax.f32 %v1958, 0.0
        %v2022 = vmax.f32 %v1961, 0.0
        %v2023 = vmax.f32 %v1964, 0.0
        %v2024 = vmax.f32 %v1967, 0.0
        %v2025 = vmax.f32 %v1970, 0.0
        %v2026 = vmax.f32 %v1973, 0.0
        %v2027 = vmax.f32 %v1976, 0.0
        %v2028 = vmax.f32 %v1979, 0.0
        %v2029 = vmax.f32 %v1982, 0.0
        %v2030 = vmax.f32 %v1985, 0.0
        %v2031 = vmax.f32 %v1988, 0.0
        %v2032 = vmax.f32 %v1991, 0.0
        %v2033 = vmax.f32 %v1994, 0.0
        %v2034 = vmax.f32 %v1997, 0.0
        %v2035 = vmax.f32 %v2000, 0.0
        %v2036 = vmax.f32 %v2003, 0.0
        %vm2037 = vcmask 130048
        %2038 = vst.msk [vmem:[%s419 + $0x1] sm:$0xff] %vm2037, %v2005
        %2039 = vst.msk [vmem:[%s419 + $0x9] sm:$0xff] %vm2037, %v2006
        %2040 = vst.msk [vmem:[%s419 + $0x19] sm:$0xff] %vm2037, %v2007
        %2041 = vst.msk [vmem:[%s419 + $0x21] sm:$0xff] %vm2037, %v2008
        %2042 = vst.msk [vmem:[%s419 + $0x31] sm:$0xff] %vm2037, %v2009
        %2043 = vst.msk [vmem:[%s419 + $0x39] sm:$0xff] %vm2037, %v2010
        %2044 = vst.msk [vmem:[%s419 + $0x49] sm:$0xff] %vm2037, %v2011
        %2045 = vst.msk [vmem:[%s419 + $0x51] sm:$0xff] %vm2037, %v2012
        %2046 = vst.msk [vmem:[%s419 + $0x61] sm:$0xff] %vm2037, %v2013
        %2047 = vst.msk [vmem:[%s419 + $0x69] sm:$0xff] %vm2037, %v2014
        %2048 = vst.msk [vmem:[%s419 + $0x79] sm:$0xff] %vm2037, %v2015
        %2049 = vst.msk [vmem:[%s419 + $0x81] sm:$0xff] %vm2037, %v2016
        %2050 = vst.msk [vmem:[%s419 + $0x91] sm:$0xff] %vm2037, %v2017
        %2051 = vst.msk [vmem:[%s419 + $0x99] sm:$0xff] %vm2037, %v2018
        %2052 = vst.msk [vmem:[%s419 + $0xa9] sm:$0xff] %vm2037, %v2019
        %2053 = vst.msk [vmem:[%s419 + $0xb1] sm:$0xff] %vm2037, %v2020
        %2054 = vst.msk [vmem:[%s419 + $0xc1] sm:$0xff] %vm2037, %v2021
        %2055 = vst.msk [vmem:[%s419 + $0xc9] sm:$0xff] %vm2037, %v2022
        %2056 = vst.msk [vmem:[%s419 + $0xd9] sm:$0xff] %vm2037, %v2023
        %2057 = vst.msk [vmem:[%s419 + $0xe1] sm:$0xff] %vm2037, %v2024
        %2058 = vst.msk [vmem:[%s419 + $0xf1] sm:$0xff] %vm2037, %v2025
        %2059 = vst.msk [vmem:[%s419 + $0xf9] sm:$0xff] %vm2037, %v2026
        %2060 = vst.msk [vmem:[%s419 + $0x109] sm:$0xff] %vm2037, %v2027
        %2061 = vst.msk [vmem:[%s419 + $0x111] sm:$0xff] %vm2037, %v2028
        %2062 = vst.msk [vmem:[%s419 + $0x121] sm:$0xff] %vm2037, %v2029
        %2063 = vst.msk [vmem:[%s419 + $0x129] sm:$0xff] %vm2037, %v2030
        %2064 = vst.msk [vmem:[%s419 + $0x139] sm:$0xff] %vm2037, %v2031
        %2065 = vst.msk [vmem:[%s419 + $0x141] sm:$0xff] %vm2037, %v2032
        %2066 = vst.msk [vmem:[%s419 + $0x151] sm:$0xff] %vm2037, %v2033
        %2067 = vst.msk [vmem:[%s419 + $0x159] sm:$0xff] %vm2037, %v2034
        %2068 = vst.msk [vmem:[%s419 + $0x169] sm:$0xff] %vm2037, %v2035
        %2069 = vst.msk [vmem:[%s419 + $0x171] sm:$0xff] %vm2037, %v2036
        %v2070 = vld [vmem:[%s3] sm:$0xff]
        %v2071 = vld [vmem:[%s3 + $0x8] sm:$0xff]
        %v2072 = vld [vmem:[%s3 + $0x10] sm:$0xff]
        %v2073 = vld [vmem:[%s3 + $0x18] sm:$0xff]
        %v2074 = vld [vmem:[%s3 + $0x20] sm:$0xff]
        %v2075 = vld [vmem:[%s3 + $0x28] sm:$0xff]
        %v2076 = vld [vmem:[%s3 + $0x30] sm:$0xff]
        %v2077 = vld [vmem:[%s3 + $0x38] sm:$0xff]
        %v2078 = vld [vmem:[%s3 + $0x40] sm:$0xff]
        %v2079 = vld [vmem:[%s3 + $0x48] sm:$0xff]
        %v2080 = vld [vmem:[%s3 + $0x50] sm:$0xff]
        %v2081 = vld [vmem:[%s3 + $0x58] sm:$0xff]
        %v2082 = vld [vmem:[%s3 + $0x60] sm:$0xff]
        %v2083 = vld [vmem:[%s3 + $0x68] sm:$0xff]
        %v2084 = vld [vmem:[%s3 + $0x70] sm:$0xff]
        %v2085 = vld [vmem:[%s3 + $0x78] sm:$0xff]
        %v2086 = vld [vmem:[%s3 + $0x80] sm:$0xff]
        %v2087 = vld [vmem:[%s3 + $0x88] sm:$0xff]
        %v2088 = vld [vmem:[%s4] sm:$0x1]
        %v2089 = vld [vmem:[#allocation2] sm:$0xff]
        %v2090 = vld [vmem:[#allocation2 + $0x8] sm:$0xff]
        %v2091 = vld [vmem:[#allocation2 + $0x10] sm:$0x3]
        %v2092 = vld [vmem:[#allocation2 + $0x18] sm:$0xff]
        %v2093 = vld [vmem:[#allocation2 + $0x20] sm:$0xff]
        %v2094 = vld [vmem:[#allocation2 + $0x28] sm:$0x3]
        %v2095 = vld [vmem:[#allocation2 + $0x30] sm:$0xff]
        %v2096 = vld [vmem:[#allocation2 + $0x38] sm:$0xff]
        %v2097 = vld [vmem:[#allocation2 + $0x40] sm:$0x3]
        %v2098 = vld [vmem:[#allocation2 + $0x48] sm:$0xff]
        %v2099 = vld [vmem:[#allocation2 + $0x50] sm:$0xff]
        %v2100 = vld [vmem:[#allocation2 + $0x58] sm:$0x3]
        %v2101 = vld [vmem:[#allocation2 + $0x60] sm:$0xff]
        %v2102 = vld [vmem:[#allocation2 + $0x68] sm:$0xff]
        %v2103 = vld [vmem:[#allocation2 + $0x70] sm:$0x3]
        %v2104 = vld [vmem:[#allocation2 + $0x78] sm:$0xff]
        %v2105 = vld [vmem:[#allocation2 + $0x80] sm:$0xff]
        %v2106 = vld [vmem:[#allocation2 + $0x88] sm:$0x3]
        %v2107 = vld [vmem:[#allocation2 + $0x90] sm:$0xff]
        %v2108 = vld [vmem:[#allocation2 + $0x98] sm:$0xff]
        %v2109 = vld [vmem:[#allocation2 + $0xa0] sm:$0x3]
        %v2110 = vld [vmem:[#allocation2 + $0xa8] sm:$0xff]
        %v2111 = vld [vmem:[#allocation2 + $0xb0] sm:$0xff]
        %v2112 = vld [vmem:[#allocation2 + $0xb8] sm:$0x3]
        %v2113 = vld [vmem:[#allocation2 + $0xc0] sm:$0xff]
        %v2114 = vld [vmem:[#allocation2 + $0xc8] sm:$0xff]
        %v2115 = vld [vmem:[#allocation2 + $0xd0] sm:$0x3]
        %v2116 = vld [vmem:[#allocation2 + $0xd8] sm:$0xff]
        %v2117 = vld [vmem:[#allocation2 + $0xe0] sm:$0xff]
        %v2118 = vld [vmem:[#allocation2 + $0xe8] sm:$0x3]
        %v2119 = vld [vmem:[#allocation2 + $0xf0] sm:$0xff]
        %v2120 = vld [vmem:[#allocation2 + $0xf8] sm:$0xff]
        %v2121 = vld [vmem:[#allocation2 + $0x100] sm:$0x3]
        %v2122 = vld [vmem:[#allocation2 + $0x108] sm:$0xff]
        %v2123 = vld [vmem:[#allocation2 + $0x110] sm:$0xff]
        %v2124 = vld [vmem:[#allocation2 + $0x118] sm:$0x3]
        %v2125 = vld [vmem:[#allocation2 + $0x120] sm:$0xff]
        %v2126 = vld [vmem:[#allocation2 + $0x128] sm:$0xff]
        %v2127 = vld [vmem:[#allocation2 + $0x130] sm:$0x3]
        %v2128 = vld [vmem:[#allocation2 + $0x138] sm:$0xff]
        %v2129 = vld [vmem:[#allocation2 + $0x140] sm:$0xff]
        %v2130 = vld [vmem:[#allocation2 + $0x148] sm:$0x3]
        %v2131 = vld [vmem:[#allocation2 + $0x150] sm:$0xff]
        %v2132 = vld [vmem:[#allocation2 + $0x158] sm:$0xff]
        %v2133 = vld [vmem:[#allocation2 + $0x160] sm:$0x3]
        %v2134 = vld [vmem:[#allocation2 + $0x168] sm:$0xff]
        %v2135 = vld [vmem:[#allocation2 + $0x170] sm:$0xff]
        %v2136 = vld [vmem:[#allocation2 + $0x178] sm:$0x3]
        %v2137 = vld [vmem:[#allocation2 + $0x180] sm:$0xff]
        %v2138 = vld [vmem:[#allocation2 + $0x188] sm:$0xff]
        %v2139 = vld [vmem:[#allocation2 + $0x190] sm:$0x3]
        %v2140 = vld [vmem:[#allocation2 + $0x198] sm:$0xff]
        %v2141 = vld [vmem:[#allocation2 + $0x1a0] sm:$0xff]
        %v2142 = vld [vmem:[#allocation2 + $0x1a8] sm:$0x3]
        %v2191 = vrot.slane %v2089, 1
        %v2192 = vrot.slane %v2090, 1
        %v2193 = vsel %vm569, %v2191, %v2192
        %v2194 = vrot.slane %v2091, 1
        %v2195 = vsel %vm569, %v2192, %v2194
        %v2196 = vrot.slane %v2092, 1
        %v2197 = vrot.slane %v2093, 1
        %v2198 = vsel %vm569, %v2196, %v2197
        %v2199 = vrot.slane %v2094, 1
        %v2200 = vsel %vm569, %v2197, %v2199
        %v2201 = vrot.slane %v2095, 1
        %v2202 = vrot.slane %v2096, 1
        %v2203 = vsel %vm569, %v2201, %v2202
        %v2204 = vrot.slane %v2097, 1
        %v2205 = vsel %vm569, %v2202, %v2204
        %v2206 = vrot.slane %v2098, 1
        %v2207 = vrot.slane %v2099, 1
        %v2208 = vsel %vm569, %v2206, %v2207
        %v2209 = vrot.slane %v2100, 1
        %v2210 = vsel %vm569, %v2207, %v2209
        %v2211 = vrot.slane %v2101, 1
        %v2212 = vrot.slane %v2102, 1
        %v2213 = vsel %vm569, %v2211, %v2212
        %v2214 = vrot.slane %v2103, 1
        %v2215 = vsel %vm569, %v2212, %v2214
        %v2216 = vrot.slane %v2104, 1
        %v2217 = vrot.slane %v2105, 1
        %v2218 = vsel %vm569, %v2216, %v2217
        %v2219 = vrot.slane %v2106, 1
        %v2220 = vsel %vm569, %v2217, %v2219
        %v2221 = vrot.slane %v2107, 1
        %v2222 = vrot.slane %v2108, 1
        %v2223 = vsel %vm569, %v2221, %v2222
        %v2224 = vrot.slane %v2109, 1
        %v2225 = vsel %vm569, %v2222, %v2224
        %v2226 = vrot.slane %v2110, 1
        %v2227 = vrot.slane %v2111, 1
        %v2228 = vsel %vm569, %v2226, %v2227
        %v2229 = vrot.slane %v2112, 1
        %v2230 = vsel %vm569, %v2227, %v2229
        %v2231 = vrot.slane %v2113, 1
        %v2232 = vrot.slane %v2114, 1
        %v2233 = vsel %vm569, %v2231, %v2232
        %v2234 = vrot.slane %v2115, 1
        %v2235 = vsel %vm569, %v2232, %v2234
        %v2236 = vrot.slane %v2116, 1
        %v2237 = vrot.slane %v2117, 1
        %v2238 = vsel %vm569, %v2236, %v2237
        %v2239 = vrot.slane %v2118, 1
        %v2240 = vsel %vm569, %v2237, %v2239
        %v2241 = vrot.slane %v2119, 1
        %v2242 = vrot.slane %v2120, 1
        %v2243 = vsel %vm569, %v2241, %v2242
        %v2244 = vrot.slane %v2121, 1
        %v2245 = vsel %vm569, %v2242, %v2244
        %v2246 = vrot.slane %v2122, 1
        %v2247 = vrot.slane %v2123, 1
        %v2248 = vsel %vm569, %v2246, %v2247
        %v2249 = vrot.slane %v2124, 1
        %v2250 = vsel %vm569, %v2247, %v2249
        %v2251 = vrot.slane %v2125, 1
        %v2252 = vrot.slane %v2126, 1
        %v2253 = vsel %vm569, %v2251, %v2252
        %v2254 = vrot.slane %v2127, 1
        %v2255 = vsel %vm569, %v2252, %v2254
        %v2256 = vrot.slane %v2128, 1
        %v2257 = vrot.slane %v2129, 1
        %v2258 = vsel %vm569, %v2256, %v2257
        %v2259 = vrot.slane %v2130, 1
        %v2260 = vsel %vm569, %v2257, %v2259
        %v2261 = vrot.slane %v2131, 1
        %v2262 = vrot.slane %v2132, 1
        %v2263 = vsel %vm569, %v2261, %v2262
        %v2264 = vrot.slane %v2133, 1
        %v2265 = vsel %vm569, %v2262, %v2264
        %v2266 = vrot.slane %v2134, 1
        %v2267 = vrot.slane %v2135, 1
        %v2268 = vsel %vm569, %v2266, %v2267
        %v2269 = vrot.slane %v2136, 1
        %v2270 = vsel %vm569, %v2267, %v2269
        %v2271 = vrot.slane %v2089, 2
        %v2272 = vrot.slane %v2090, 2
        %v2273 = vsel %vm650, %v2271, %v2272
        %v2274 = vrot.slane %v2091, 2
        %v2275 = vsel %vm650, %v2272, %v2274
        %v2276 = vrot.slane %v2092, 2
        %v2277 = vrot.slane %v2093, 2
        %v2278 = vsel %vm650, %v2276, %v2277
        %v2279 = vrot.slane %v2094, 2
        %v2280 = vsel %vm650, %v2277, %v2279
        %v2281 = vrot.slane %v2095, 2
        %v2282 = vrot.slane %v2096, 2
        %v2283 = vsel %vm650, %v2281, %v2282
        %v2284 = vrot.slane %v2097, 2
        %v2285 = vsel %vm650, %v2282, %v2284
        %v2286 = vrot.slane %v2098, 2
        %v2287 = vrot.slane %v2099, 2
        %v2288 = vsel %vm650, %v2286, %v2287
        %v2289 = vrot.slane %v2100, 2
        %v2290 = vsel %vm650, %v2287, %v2289
        %v2291 = vrot.slane %v2101, 2
        %v2292 = vrot.slane %v2102, 2
        %v2293 = vsel %vm650, %v2291, %v2292
        %v2294 = vrot.slane %v2103, 2
        %v2295 = vsel %vm650, %v2292, %v2294
        %v2296 = vrot.slane %v2104, 2
        %v2297 = vrot.slane %v2105, 2
        %v2298 = vsel %vm650, %v2296, %v2297
        %v2299 = vrot.slane %v2106, 2
        %v2300 = vsel %vm650, %v2297, %v2299
        %v2301 = vrot.slane %v2107, 2
        %v2302 = vrot.slane %v2108, 2
        %v2303 = vsel %vm650, %v2301, %v2302
        %v2304 = vrot.slane %v2109, 2
        %v2305 = vsel %vm650, %v2302, %v2304
        %v2306 = vrot.slane %v2110, 2
        %v2307 = vrot.slane %v2111, 2
        %v2308 = vsel %vm650, %v2306, %v2307
        %v2309 = vrot.slane %v2112, 2
        %v2310 = vsel %vm650, %v2307, %v2309
        %v2311 = vrot.slane %v2113, 2
        %v2312 = vrot.slane %v2114, 2
        %v2313 = vsel %vm650, %v2311, %v2312
        %v2314 = vrot.slane %v2115, 2
        %v2315 = vsel %vm650, %v2312, %v2314
        %v2316 = vrot.slane %v2116, 2
        %v2317 = vrot.slane %v2117, 2
        %v2318 = vsel %vm650, %v2316, %v2317
        %v2319 = vrot.slane %v2118, 2
        %v2320 = vsel %vm650, %v2317, %v2319
        %v2321 = vrot.slane %v2119, 2
        %v2322 = vrot.slane %v2120, 2
        %v2323 = vsel %vm650, %v2321, %v2322
        %v2324 = vrot.slane %v2121, 2
        %v2325 = vsel %vm650, %v2322, %v2324
        %v2326 = vrot.slane %v2122, 2
        %v2327 = vrot.slane %v2123, 2
        %v2328 = vsel %vm650, %v2326, %v2327
        %v2329 = vrot.slane %v2124, 2
        %v2330 = vsel %vm650, %v2327, %v2329
        %v2331 = vrot.slane %v2125, 2
        %v2332 = vrot.slane %v2126, 2
        %v2333 = vsel %vm650, %v2331, %v2332
        %v2334 = vrot.slane %v2127, 2
        %v2335 = vsel %vm650, %v2332, %v2334
        %v2336 = vrot.slane %v2128, 2
        %v2337 = vrot.slane %v2129, 2
        %v2338 = vsel %vm650, %v2336, %v2337
        %v2339 = vrot.slane %v2130, 2
        %v2340 = vsel %vm650, %v2337, %v2339
        %v2341 = vrot.slane %v2131, 2
        %v2342 = vrot.slane %v2132, 2
        %v2343 = vsel %vm650, %v2341, %v2342
        %v2344 = vrot.slane %v2133, 2
        %v2345 = vsel %vm650, %v2342, %v2344
        %v2346 = vrot.slane %v2134, 2
        %v2347 = vrot.slane %v2135, 2
        %v2348 = vsel %vm650, %v2346, %v2347
        %v2349 = vrot.slane %v2136, 2
        %v2350 = vsel %vm650, %v2347, %v2349
        %v2354 = vrot.slane %v2137, 1
        %v2355 = vrot.slane %v2138, 1
        %v2356 = vsel %vm569, %v2354, %v2355
        %v2357 = vrot.slane %v2139, 1
        %v2358 = vsel %vm569, %v2355, %v2357
        %v2359 = vrot.slane %v2137, 2
        %v2360 = vrot.slane %v2138, 2
        %v2361 = vsel %vm650, %v2359, %v2360
        %v2362 = vrot.slane %v2139, 2
        %v2363 = vsel %vm650, %v2360, %v2362
        %v2367 = vrot.slane %v2140, 1
        %v2368 = vrot.slane %v2141, 1
        %v2369 = vsel %vm569, %v2367, %v2368
        %v2370 = vrot.slane %v2142, 1
        %v2371 = vsel %vm569, %v2368, %v2370
        %v2372 = vrot.slane %v2140, 2
        %v2373 = vrot.slane %v2141, 2
        %v2374 = vsel %vm650, %v2372, %v2373
        %v2375 = vrot.slane %v2142, 2
        %v2376 = vsel %vm650, %v2373, %v2375
        %2377 = vrot.lane.b32.xlu0 %v2193, 16
        %v2378 = vpop.permute.xlu0 %2377
        %2379 = vrot.lane.b32.xlu0 %v2195, 16
        %v2380 = vpop.permute.xlu0 %2379
        %2381 = vrot.lane.b32.xlu0 %v2198, 16
        %v2382 = vpop.permute.xlu0 %2381
        %2383 = vrot.lane.b32.xlu0 %v2200, 16
        %v2384 = vpop.permute.xlu0 %2383
        %2385 = vrot.lane.b32.xlu0 %v2203, 16
        %v2386 = vpop.permute.xlu0 %2385
        %2387 = vrot.lane.b32.xlu0 %v2205, 16
        %v2388 = vpop.permute.xlu0 %2387
        %2389 = vrot.lane.b32.xlu0 %v2208, 16
        %v2390 = vpop.permute.xlu0 %2389
        %2391 = vrot.lane.b32.xlu0 %v2210, 16
        %v2392 = vpop.permute.xlu0 %2391
        %2393 = vrot.lane.b32.xlu0 %v2213, 16
        %v2394 = vpop.permute.xlu0 %2393
        %2395 = vrot.lane.b32.xlu0 %v2215, 16
        %v2396 = vpop.permute.xlu0 %2395
        %2397 = vrot.lane.b32.xlu0 %v2218, 16
        %v2398 = vpop.permute.xlu0 %2397
        %2399 = vrot.lane.b32.xlu0 %v2220, 16
        %v2400 = vpop.permute.xlu0 %2399
        %2401 = vrot.lane.b32.xlu0 %v2223, 16
        %v2402 = vpop.permute.xlu0 %2401
        %2403 = vrot.lane.b32.xlu0 %v2225, 16
        %v2404 = vpop.permute.xlu0 %2403
        %2405 = vrot.lane.b32.xlu0 %v2228, 16
        %v2406 = vpop.permute.xlu0 %2405
        %2407 = vrot.lane.b32.xlu0 %v2230, 16
        %v2408 = vpop.permute.xlu0 %2407
        %2409 = vrot.lane.b32.xlu0 %v2233, 16
        %v2410 = vpop.permute.xlu0 %2409
        %2411 = vrot.lane.b32.xlu0 %v2235, 16
        %v2412 = vpop.permute.xlu0 %2411
        %2413 = vrot.lane.b32.xlu0 %v2238, 16
        %v2414 = vpop.permute.xlu0 %2413
        %2415 = vrot.lane.b32.xlu0 %v2240, 16
        %v2416 = vpop.permute.xlu0 %2415
        %2417 = vrot.lane.b32.xlu0 %v2243, 16
        %v2418 = vpop.permute.xlu0 %2417
        %2419 = vrot.lane.b32.xlu0 %v2245, 16
        %v2420 = vpop.permute.xlu0 %2419
        %2421 = vrot.lane.b32.xlu0 %v2248, 16
        %v2422 = vpop.permute.xlu0 %2421
        %2423 = vrot.lane.b32.xlu0 %v2250, 16
        %v2424 = vpop.permute.xlu0 %2423
        %2425 = vrot.lane.b32.xlu0 %v2253, 16
        %v2426 = vpop.permute.xlu0 %2425
        %2427 = vrot.lane.b32.xlu0 %v2255, 16
        %v2428 = vpop.permute.xlu0 %2427
        %2429 = vrot.lane.b32.xlu0 %v2258, 16
        %v2430 = vpop.permute.xlu0 %2429
        %2431 = vrot.lane.b32.xlu0 %v2260, 16
        %v2432 = vpop.permute.xlu0 %2431
        %2433 = vrot.lane.b32.xlu0 %v2263, 16
        %v2434 = vpop.permute.xlu0 %2433
        %2435 = vrot.lane.b32.xlu0 %v2265, 16
        %v2436 = vpop.permute.xlu0 %2435
        %2437 = vrot.lane.b32.xlu0 %v2268, 16
        %v2438 = vpop.permute.xlu0 %2437
        %2439 = vrot.lane.b32.xlu0 %v2270, 16
        %v2440 = vpop.permute.xlu0 %2439
        %2473 = vrot.lane.b32.xlu0 %v2273, 32
        %v2474 = vpop.permute.xlu0 %2473
        %2475 = vrot.lane.b32.xlu0 %v2275, 32
        %v2476 = vpop.permute.xlu0 %2475
        %2477 = vrot.lane.b32.xlu0 %v2278, 32
        %v2478 = vpop.permute.xlu0 %2477
        %2479 = vrot.lane.b32.xlu0 %v2280, 32
        %v2480 = vpop.permute.xlu0 %2479
        %2481 = vrot.lane.b32.xlu0 %v2283, 32
        %v2482 = vpop.permute.xlu0 %2481
        %2483 = vrot.lane.b32.xlu0 %v2285, 32
        %v2484 = vpop.permute.xlu0 %2483
        %2485 = vrot.lane.b32.xlu0 %v2288, 32
        %v2486 = vpop.permute.xlu0 %2485
        %2487 = vrot.lane.b32.xlu0 %v2290, 32
        %v2488 = vpop.permute.xlu0 %2487
        %2489 = vrot.lane.b32.xlu0 %v2293, 32
        %v2490 = vpop.permute.xlu0 %2489
        %2491 = vrot.lane.b32.xlu0 %v2295, 32
        %v2492 = vpop.permute.xlu0 %2491
        %2493 = vrot.lane.b32.xlu0 %v2298, 32
        %v2494 = vpop.permute.xlu0 %2493
        %2495 = vrot.lane.b32.xlu0 %v2300, 32
        %v2496 = vpop.permute.xlu0 %2495
        %2497 = vrot.lane.b32.xlu0 %v2303, 32
        %v2498 = vpop.permute.xlu0 %2497
        %2499 = vrot.lane.b32.xlu0 %v2305, 32
        %v2500 = vpop.permute.xlu0 %2499
        %2501 = vrot.lane.b32.xlu0 %v2308, 32
        %v2502 = vpop.permute.xlu0 %2501
        %2503 = vrot.lane.b32.xlu0 %v2310, 32
        %v2504 = vpop.permute.xlu0 %2503
        %2505 = vrot.lane.b32.xlu0 %v2313, 32
        %v2506 = vpop.permute.xlu0 %2505
        %2507 = vrot.lane.b32.xlu0 %v2315, 32
        %v2508 = vpop.permute.xlu0 %2507
        %2509 = vrot.lane.b32.xlu0 %v2318, 32
        %v2510 = vpop.permute.xlu0 %2509
        %2511 = vrot.lane.b32.xlu0 %v2320, 32
        %v2512 = vpop.permute.xlu0 %2511
        %2513 = vrot.lane.b32.xlu0 %v2323, 32
        %v2514 = vpop.permute.xlu0 %2513
        %2515 = vrot.lane.b32.xlu0 %v2325, 32
        %v2516 = vpop.permute.xlu0 %2515
        %2517 = vrot.lane.b32.xlu0 %v2328, 32
        %v2518 = vpop.permute.xlu0 %2517
        %2519 = vrot.lane.b32.xlu0 %v2330, 32
        %v2520 = vpop.permute.xlu0 %2519
        %2521 = vrot.lane.b32.xlu0 %v2333, 32
        %v2522 = vpop.permute.xlu0 %2521
        %2523 = vrot.lane.b32.xlu0 %v2335, 32
        %v2524 = vpop.permute.xlu0 %2523
        %2525 = vrot.lane.b32.xlu0 %v2338, 32
        %v2526 = vpop.permute.xlu0 %2525
        %2527 = vrot.lane.b32.xlu0 %v2340, 32
        %v2528 = vpop.permute.xlu0 %2527
        %2529 = vrot.lane.b32.xlu0 %v2343, 32
        %v2530 = vpop.permute.xlu0 %2529
        %2531 = vrot.lane.b32.xlu0 %v2345, 32
        %v2532 = vpop.permute.xlu0 %2531
        %2533 = vrot.lane.b32.xlu0 %v2348, 32
        %v2534 = vpop.permute.xlu0 %2533
        %2535 = vrot.lane.b32.xlu0 %v2350, 32
        %v2536 = vpop.permute.xlu0 %2535
        %2569 = vrot.lane.b32.xlu0 %v2092, 48
        %v2570 = vpop.permute.xlu0 %2569
        %2571 = vrot.lane.b32.xlu0 %v2093, 48
        %v2572 = vpop.permute.xlu0 %2571
        %2573 = vrot.lane.b32.xlu0 %v2095, 48
        %v2574 = vpop.permute.xlu0 %2573
        %2575 = vrot.lane.b32.xlu0 %v2096, 48
        %v2576 = vpop.permute.xlu0 %2575
        %2577 = vrot.lane.b32.xlu0 %v2098, 48
        %v2578 = vpop.permute.xlu0 %2577
        %2579 = vrot.lane.b32.xlu0 %v2099, 48
        %v2580 = vpop.permute.xlu0 %2579
        %2581 = vrot.lane.b32.xlu0 %v2101, 48
        %v2582 = vpop.permute.xlu0 %2581
        %2583 = vrot.lane.b32.xlu0 %v2102, 48
        %v2584 = vpop.permute.xlu0 %2583
        %2585 = vrot.lane.b32.xlu0 %v2104, 48
        %v2586 = vpop.permute.xlu0 %2585
        %2587 = vrot.lane.b32.xlu0 %v2105, 48
        %v2588 = vpop.permute.xlu0 %2587
        %2589 = vrot.lane.b32.xlu0 %v2107, 48
        %v2590 = vpop.permute.xlu0 %2589
        %2591 = vrot.lane.b32.xlu0 %v2108, 48
        %v2592 = vpop.permute.xlu0 %2591
        %2593 = vrot.lane.b32.xlu0 %v2110, 48
        %v2594 = vpop.permute.xlu0 %2593
        %2595 = vrot.lane.b32.xlu0 %v2111, 48
        %v2596 = vpop.permute.xlu0 %2595
        %2597 = vrot.lane.b32.xlu0 %v2113, 48
        %v2598 = vpop.permute.xlu0 %2597
        %2599 = vrot.lane.b32.xlu0 %v2114, 48
        %v2600 = vpop.permute.xlu0 %2599
        %2601 = vrot.lane.b32.xlu0 %v2116, 48
        %v2602 = vpop.permute.xlu0 %2601
        %2603 = vrot.lane.b32.xlu0 %v2117, 48
        %v2604 = vpop.permute.xlu0 %2603
        %2605 = vrot.lane.b32.xlu0 %v2119, 48
        %v2606 = vpop.permute.xlu0 %2605
        %2607 = vrot.lane.b32.xlu0 %v2120, 48
        %v2608 = vpop.permute.xlu0 %2607
        %2609 = vrot.lane.b32.xlu0 %v2122, 48
        %v2610 = vpop.permute.xlu0 %2609
        %2611 = vrot.lane.b32.xlu0 %v2123, 48
        %v2612 = vpop.permute.xlu0 %2611
        %2613 = vrot.lane.b32.xlu0 %v2125, 48
        %v2614 = vpop.permute.xlu0 %2613
        %2615 = vrot.lane.b32.xlu0 %v2126, 48
        %v2616 = vpop.permute.xlu0 %2615
        %2617 = vrot.lane.b32.xlu0 %v2128, 48
        %v2618 = vpop.permute.xlu0 %2617
        %2619 = vrot.lane.b32.xlu0 %v2129, 48
        %v2620 = vpop.permute.xlu0 %2619
        %2621 = vrot.lane.b32.xlu0 %v2131, 48
        %v2622 = vpop.permute.xlu0 %2621
        %2623 = vrot.lane.b32.xlu0 %v2132, 48
        %v2624 = vpop.permute.xlu0 %2623
        %2625 = vrot.lane.b32.xlu0 %v2134, 48
        %v2626 = vpop.permute.xlu0 %2625
        %2627 = vrot.lane.b32.xlu0 %v2135, 48
        %v2628 = vpop.permute.xlu0 %2627
        %2629 = vrot.lane.b32.xlu0 %v2137, 48
        %v2630 = vpop.permute.xlu0 %2629
        %2631 = vrot.lane.b32.xlu0 %v2138, 48
        %v2632 = vpop.permute.xlu0 %2631
        %2665 = vrot.lane.b32.xlu0 %v2198, 64
        %v2666 = vpop.permute.xlu0 %2665
        %2667 = vrot.lane.b32.xlu0 %v2200, 64
        %v2668 = vpop.permute.xlu0 %2667
        %2669 = vrot.lane.b32.xlu0 %v2203, 64
        %v2670 = vpop.permute.xlu0 %2669
        %2671 = vrot.lane.b32.xlu0 %v2205, 64
        %v2672 = vpop.permute.xlu0 %2671
        %2673 = vrot.lane.b32.xlu0 %v2208, 64
        %v2674 = vpop.permute.xlu0 %2673
        %2675 = vrot.lane.b32.xlu0 %v2210, 64
        %v2676 = vpop.permute.xlu0 %2675
        %2677 = vrot.lane.b32.xlu0 %v2213, 64
        %v2678 = vpop.permute.xlu0 %2677
        %2679 = vrot.lane.b32.xlu0 %v2215, 64
        %v2680 = vpop.permute.xlu0 %2679
        %2681 = vrot.lane.b32.xlu0 %v2218, 64
        %v2682 = vpop.permute.xlu0 %2681
        %2683 = vrot.lane.b32.xlu0 %v2220, 64
        %v2684 = vpop.permute.xlu0 %2683
        %2685 = vrot.lane.b32.xlu0 %v2223, 64
        %v2686 = vpop.permute.xlu0 %2685
        %2687 = vrot.lane.b32.xlu0 %v2225, 64
        %v2688 = vpop.permute.xlu0 %2687
        %2689 = vrot.lane.b32.xlu0 %v2228, 64
        %v2690 = vpop.permute.xlu0 %2689
        %2691 = vrot.lane.b32.xlu0 %v2230, 64
        %v2692 = vpop.permute.xlu0 %2691
        %2693 = vrot.lane.b32.xlu0 %v2233, 64
        %v2694 = vpop.permute.xlu0 %2693
        %2695 = vrot.lane.b32.xlu0 %v2235, 64
        %v2696 = vpop.permute.xlu0 %2695
        %2697 = vrot.lane.b32.xlu0 %v2238, 64
        %v2698 = vpop.permute.xlu0 %2697
        %2699 = vrot.lane.b32.xlu0 %v2240, 64
        %v2700 = vpop.permute.xlu0 %2699
        %2701 = vrot.lane.b32.xlu0 %v2243, 64
        %v2702 = vpop.permute.xlu0 %2701
        %2703 = vrot.lane.b32.xlu0 %v2245, 64
        %v2704 = vpop.permute.xlu0 %2703
        %2705 = vrot.lane.b32.xlu0 %v2248, 64
        %v2706 = vpop.permute.xlu0 %2705
        %2707 = vrot.lane.b32.xlu0 %v2250, 64
        %v2708 = vpop.permute.xlu0 %2707
        %2709 = vrot.lane.b32.xlu0 %v2253, 64
        %v2710 = vpop.permute.xlu0 %2709
        %2711 = vrot.lane.b32.xlu0 %v2255, 64
        %v2712 = vpop.permute.xlu0 %2711
        %2713 = vrot.lane.b32.xlu0 %v2258, 64
        %v2714 = vpop.permute.xlu0 %2713
        %2715 = vrot.lane.b32.xlu0 %v2260, 64
        %v2716 = vpop.permute.xlu0 %2715
        %2717 = vrot.lane.b32.xlu0 %v2263, 64
        %v2718 = vpop.permute.xlu0 %2717
        %2719 = vrot.lane.b32.xlu0 %v2265, 64
        %v2720 = vpop.permute.xlu0 %2719
        %2721 = vrot.lane.b32.xlu0 %v2268, 64
        %v2722 = vpop.permute.xlu0 %2721
        %2723 = vrot.lane.b32.xlu0 %v2270, 64
        %v2724 = vpop.permute.xlu0 %2723
        %2725 = vrot.lane.b32.xlu0 %v2356, 64
        %v2726 = vpop.permute.xlu0 %2725
        %2727 = vrot.lane.b32.xlu0 %v2358, 64
        %v2728 = vpop.permute.xlu0 %2727
        %2761 = vrot.lane.b32.xlu0 %v2278, 80
        %v2762 = vpop.permute.xlu0 %2761
        %2763 = vrot.lane.b32.xlu0 %v2280, 80
        %v2764 = vpop.permute.xlu0 %2763
        %2765 = vrot.lane.b32.xlu0 %v2283, 80
        %v2766 = vpop.permute.xlu0 %2765
        %2767 = vrot.lane.b32.xlu0 %v2285, 80
        %v2768 = vpop.permute.xlu0 %2767
        %2769 = vrot.lane.b32.xlu0 %v2288, 80
        %v2770 = vpop.permute.xlu0 %2769
        %2771 = vrot.lane.b32.xlu0 %v2290, 80
        %v2772 = vpop.permute.xlu0 %2771
        %2773 = vrot.lane.b32.xlu0 %v2293, 80
        %v2774 = vpop.permute.xlu0 %2773
        %2775 = vrot.lane.b32.xlu0 %v2295, 80
        %v2776 = vpop.permute.xlu0 %2775
        %2777 = vrot.lane.b32.xlu0 %v2298, 80
        %v2778 = vpop.permute.xlu0 %2777
        %2779 = vrot.lane.b32.xlu0 %v2300, 80
        %v2780 = vpop.permute.xlu0 %2779
        %2781 = vrot.lane.b32.xlu0 %v2303, 80
        %v2782 = vpop.permute.xlu0 %2781
        %2783 = vrot.lane.b32.xlu0 %v2305, 80
        %v2784 = vpop.permute.xlu0 %2783
        %2785 = vrot.lane.b32.xlu0 %v2308, 80
        %v2786 = vpop.permute.xlu0 %2785
        %2787 = vrot.lane.b32.xlu0 %v2310, 80
        %v2788 = vpop.permute.xlu0 %2787
        %2789 = vrot.lane.b32.xlu0 %v2313, 80
        %v2790 = vpop.permute.xlu0 %2789
        %2791 = vrot.lane.b32.xlu0 %v2315, 80
        %v2792 = vpop.permute.xlu0 %2791
        %2793 = vrot.lane.b32.xlu0 %v2318, 80
        %v2794 = vpop.permute.xlu0 %2793
        %2795 = vrot.lane.b32.xlu0 %v2320, 80
        %v2796 = vpop.permute.xlu0 %2795
        %2797 = vrot.lane.b32.xlu0 %v2323, 80
        %v2798 = vpop.permute.xlu0 %2797
        %2799 = vrot.lane.b32.xlu0 %v2325, 80
        %v2800 = vpop.permute.xlu0 %2799
        %2801 = vrot.lane.b32.xlu0 %v2328, 80
        %v2802 = vpop.permute.xlu0 %2801
        %2803 = vrot.lane.b32.xlu0 %v2330, 80
        %v2804 = vpop.permute.xlu0 %2803
        %2805 = vrot.lane.b32.xlu0 %v2333, 80
        %v2806 = vpop.permute.xlu0 %2805
        %2807 = vrot.lane.b32.xlu0 %v2335, 80
        %v2808 = vpop.permute.xlu0 %2807
        %2809 = vrot.lane.b32.xlu0 %v2338, 80
        %v2810 = vpop.permute.xlu0 %2809
        %2811 = vrot.lane.b32.xlu0 %v2340, 80
        %v2812 = vpop.permute.xlu0 %2811
        %2813 = vrot.lane.b32.xlu0 %v2343, 80
        %v2814 = vpop.permute.xlu0 %2813
        %2815 = vrot.lane.b32.xlu0 %v2345, 80
        %v2816 = vpop.permute.xlu0 %2815
        %2817 = vrot.lane.b32.xlu0 %v2348, 80
        %v2818 = vpop.permute.xlu0 %2817
        %2819 = vrot.lane.b32.xlu0 %v2350, 80
        %v2820 = vpop.permute.xlu0 %2819
        %2821 = vrot.lane.b32.xlu0 %v2361, 80
        %v2822 = vpop.permute.xlu0 %2821
        %2823 = vrot.lane.b32.xlu0 %v2363, 80
        %v2824 = vpop.permute.xlu0 %2823
        %2857 = vrot.lane.b32.xlu0 %v2095, 96
        %v2858 = vpop.permute.xlu0 %2857
        %2859 = vrot.lane.b32.xlu0 %v2096, 96
        %v2860 = vpop.permute.xlu0 %2859
        %2861 = vrot.lane.b32.xlu0 %v2098, 96
        %v2862 = vpop.permute.xlu0 %2861
        %2863 = vrot.lane.b32.xlu0 %v2099, 96
        %v2864 = vpop.permute.xlu0 %2863
        %2865 = vrot.lane.b32.xlu0 %v2101, 96
        %v2866 = vpop.permute.xlu0 %2865
        %2867 = vrot.lane.b32.xlu0 %v2102, 96
        %v2868 = vpop.permute.xlu0 %2867
        %2869 = vrot.lane.b32.xlu0 %v2104, 96
        %v2870 = vpop.permute.xlu0 %2869
        %2871 = vrot.lane.b32.xlu0 %v2105, 96
        %v2872 = vpop.permute.xlu0 %2871
        %2873 = vrot.lane.b32.xlu0 %v2107, 96
        %v2874 = vpop.permute.xlu0 %2873
        %2875 = vrot.lane.b32.xlu0 %v2108, 96
        %v2876 = vpop.permute.xlu0 %2875
        %2877 = vrot.lane.b32.xlu0 %v2110, 96
        %v2878 = vpop.permute.xlu0 %2877
        %2879 = vrot.lane.b32.xlu0 %v2111, 96
        %v2880 = vpop.permute.xlu0 %2879
        %2881 = vrot.lane.b32.xlu0 %v2113, 96
        %v2882 = vpop.permute.xlu0 %2881
        %2883 = vrot.lane.b32.xlu0 %v2114, 96
        %v2884 = vpop.permute.xlu0 %2883
        %2885 = vrot.lane.b32.xlu0 %v2116, 96
        %v2886 = vpop.permute.xlu0 %2885
        %2887 = vrot.lane.b32.xlu0 %v2117, 96
        %v2888 = vpop.permute.xlu0 %2887
        %2889 = vrot.lane.b32.xlu0 %v2119, 96
        %v2890 = vpop.permute.xlu0 %2889
        %2891 = vrot.lane.b32.xlu0 %v2120, 96
        %v2892 = vpop.permute.xlu0 %2891
        %2893 = vrot.lane.b32.xlu0 %v2122, 96
        %v2894 = vpop.permute.xlu0 %2893
        %2895 = vrot.lane.b32.xlu0 %v2123, 96
        %v2896 = vpop.permute.xlu0 %2895
        %2897 = vrot.lane.b32.xlu0 %v2125, 96
        %v2898 = vpop.permute.xlu0 %2897
        %2899 = vrot.lane.b32.xlu0 %v2126, 96
        %v2900 = vpop.permute.xlu0 %2899
        %2901 = vrot.lane.b32.xlu0 %v2128, 96
        %v2902 = vpop.permute.xlu0 %2901
        %2903 = vrot.lane.b32.xlu0 %v2129, 96
        %v2904 = vpop.permute.xlu0 %2903
        %2905 = vrot.lane.b32.xlu0 %v2131, 96
        %v2906 = vpop.permute.xlu0 %2905
        %2907 = vrot.lane.b32.xlu0 %v2132, 96
        %v2908 = vpop.permute.xlu0 %2907
        %2909 = vrot.lane.b32.xlu0 %v2134, 96
        %v2910 = vpop.permute.xlu0 %2909
        %2911 = vrot.lane.b32.xlu0 %v2135, 96
        %v2912 = vpop.permute.xlu0 %2911
        %2913 = vrot.lane.b32.xlu0 %v2137, 96
        %v2914 = vpop.permute.xlu0 %2913
        %2915 = vrot.lane.b32.xlu0 %v2138, 96
        %v2916 = vpop.permute.xlu0 %2915
        %2917 = vrot.lane.b32.xlu0 %v2140, 96
        %v2918 = vpop.permute.xlu0 %2917
        %2919 = vrot.lane.b32.xlu0 %v2141, 96
        %v2920 = vpop.permute.xlu0 %2919
        %2953 = vrot.lane.b32.xlu0 %v2203, 112
        %v2954 = vpop.permute.xlu0 %2953
        %2955 = vrot.lane.b32.xlu0 %v2205, 112
        %v2956 = vpop.permute.xlu0 %2955
        %2957 = vrot.lane.b32.xlu0 %v2208, 112
        %v2958 = vpop.permute.xlu0 %2957
        %2959 = vrot.lane.b32.xlu0 %v2210, 112
        %v2960 = vpop.permute.xlu0 %2959
        %2961 = vrot.lane.b32.xlu0 %v2213, 112
        %v2962 = vpop.permute.xlu0 %2961
        %2963 = vrot.lane.b32.xlu0 %v2215, 112
        %v2964 = vpop.permute.xlu0 %2963
        %2965 = vrot.lane.b32.xlu0 %v2218, 112
        %v2966 = vpop.permute.xlu0 %2965
        %2967 = vrot.lane.b32.xlu0 %v2220, 112
        %v2968 = vpop.permute.xlu0 %2967
        %2969 = vrot.lane.b32.xlu0 %v2223, 112
        %v2970 = vpop.permute.xlu0 %2969
        %2971 = vrot.lane.b32.xlu0 %v2225, 112
        %v2972 = vpop.permute.xlu0 %2971
        %2973 = vrot.lane.b32.xlu0 %v2228, 112
        %v2974 = vpop.permute.xlu0 %2973
        %2975 = vrot.lane.b32.xlu0 %v2230, 112
        %v2976 = vpop.permute.xlu0 %2975
        %2977 = vrot.lane.b32.xlu0 %v2233, 112
        %v2978 = vpop.permute.xlu0 %2977
        %2979 = vrot.lane.b32.xlu0 %v2235, 112
        %v2980 = vpop.permute.xlu0 %2979
        %2981 = vrot.lane.b32.xlu0 %v2238, 112
        %v2982 = vpop.permute.xlu0 %2981
        %2983 = vrot.lane.b32.xlu0 %v2240, 112
        %v2984 = vpop.permute.xlu0 %2983
        %2985 = vrot.lane.b32.xlu0 %v2243, 112
        %v2986 = vpop.permute.xlu0 %2985
        %2987 = vrot.lane.b32.xlu0 %v2245, 112
        %v2988 = vpop.permute.xlu0 %2987
        %2989 = vrot.lane.b32.xlu0 %v2248, 112
        %v2990 = vpop.permute.xlu0 %2989
        %2991 = vrot.lane.b32.xlu0 %v2250, 112
        %v2992 = vpop.permute.xlu0 %2991
        %2993 = vrot.lane.b32.xlu0 %v2253, 112
        %v2994 = vpop.permute.xlu0 %2993
        %2995 = vrot.lane.b32.xlu0 %v2255, 112
        %v2996 = vpop.permute.xlu0 %2995
        %2997 = vrot.lane.b32.xlu0 %v2258, 112
        %v2998 = vpop.permute.xlu0 %2997
        %2999 = vrot.lane.b32.xlu0 %v2260, 112
        %v3000 = vpop.permute.xlu0 %2999
        %3001 = vrot.lane.b32.xlu0 %v2263, 112
        %v3002 = vpop.permute.xlu0 %3001
        %3003 = vrot.lane.b32.xlu0 %v2265, 112
        %v3004 = vpop.permute.xlu0 %3003
        %3005 = vrot.lane.b32.xlu0 %v2268, 112
        %v3006 = vpop.permute.xlu0 %3005
        %3007 = vrot.lane.b32.xlu0 %v2270, 112
        %v3008 = vpop.permute.xlu0 %3007
        %3009 = vrot.lane.b32.xlu0 %v2356, 112
        %v3010 = vpop.permute.xlu0 %3009
        %3011 = vrot.lane.b32.xlu0 %v2358, 112
        %v3012 = vpop.permute.xlu0 %3011
        %3013 = vrot.lane.b32.xlu0 %v2369, 112
        %v3014 = vpop.permute.xlu0 %3013
        %3015 = vrot.lane.b32.xlu0 %v2371, 112
        %v3016 = vpop.permute.xlu0 %3015
        %v3049 = vsel %vm2037, %v2089, %v2378
        %v3050 = vsel %vm2037, %v2090, %v2380
        %v3051 = vsel %vm2037, %v2092, %v2382
        %v3052 = vsel %vm2037, %v2093, %v2384
        %v3053 = vsel %vm2037, %v2095, %v2386
        %v3054 = vsel %vm2037, %v2096, %v2388
        %v3055 = vsel %vm2037, %v2098, %v2390
        %v3056 = vsel %vm2037, %v2099, %v2392
        %v3057 = vsel %vm2037, %v2101, %v2394
        %v3058 = vsel %vm2037, %v2102, %v2396
        %v3059 = vsel %vm2037, %v2104, %v2398
        %v3060 = vsel %vm2037, %v2105, %v2400
        %v3061 = vsel %vm2037, %v2107, %v2402
        %v3062 = vsel %vm2037, %v2108, %v2404
        %v3063 = vsel %vm2037, %v2110, %v2406
        %v3064 = vsel %vm2037, %v2111, %v2408
        %v3065 = vsel %vm2037, %v2113, %v2410
        %v3066 = vsel %vm2037, %v2114, %v2412
        %v3067 = vsel %vm2037, %v2116, %v2414
        %v3068 = vsel %vm2037, %v2117, %v2416
        %v3069 = vsel %vm2037, %v2119, %v2418
        %v3070 = vsel %vm2037, %v2120, %v2420
        %v3071 = vsel %vm2037, %v2122, %v2422
        %v3072 = vsel %vm2037, %v2123, %v2424
        %v3073 = vsel %vm2037, %v2125, %v2426
        %v3074 = vsel %vm2037, %v2126, %v2428
        %v3075 = vsel %vm2037, %v2128, %v2430
        %v3076 = vsel %vm2037, %v2129, %v2432
        %v3077 = vsel %vm2037, %v2131, %v2434
        %v3078 = vsel %vm2037, %v2132, %v2436
        %v3079 = vsel %vm2037, %v2134, %v2438
        %v3080 = vsel %vm2037, %v2135, %v2440
        %v3081 = vsel %vm331, %v3049, %v2474
        %v3082 = vsel %vm331, %v3050, %v2476
        %v3083 = vsel %vm331, %v3051, %v2478
        %v3084 = vsel %vm331, %v3052, %v2480
        %v3085 = vsel %vm331, %v3053, %v2482
        %v3086 = vsel %vm331, %v3054, %v2484
        %v3087 = vsel %vm331, %v3055, %v2486
        %v3088 = vsel %vm331, %v3056, %v2488
        %v3089 = vsel %vm331, %v3057, %v2490
        %v3090 = vsel %vm331, %v3058, %v2492
        %v3091 = vsel %vm331, %v3059, %v2494
        %v3092 = vsel %vm331, %v3060, %v2496
        %v3093 = vsel %vm331, %v3061, %v2498
        %v3094 = vsel %vm331, %v3062, %v2500
        %v3095 = vsel %vm331, %v3063, %v2502
        %v3096 = vsel %vm331, %v3064, %v2504
        %v3097 = vsel %vm331, %v3065, %v2506
        %v3098 = vsel %vm331, %v3066, %v2508
        %v3099 = vsel %vm331, %v3067, %v2510
        %v3100 = vsel %vm331, %v3068, %v2512
        %v3101 = vsel %vm331, %v3069, %v2514
        %v3102 = vsel %vm331, %v3070, %v2516
        %v3103 = vsel %vm331, %v3071, %v2518
        %v3104 = vsel %vm331, %v3072, %v2520
        %v3105 = vsel %vm331, %v3073, %v2522
        %v3106 = vsel %vm331, %v3074, %v2524
        %v3107 = vsel %vm331, %v3075, %v2526
        %v3108 = vsel %vm331, %v3076, %v2528
        %v3109 = vsel %vm331, %v3077, %v2530
        %v3110 = vsel %vm331, %v3078, %v2532
        %v3111 = vsel %vm331, %v3079, %v2534
        %v3112 = vsel %vm331, %v3080, %v2536
        %vm3113 = vcmask 392192
        %v3114 = vsel %vm3113, %v3081, %v2570
        %v3115 = vsel %vm3113, %v3082, %v2572
        %v3116 = vsel %vm3113, %v3083, %v2574
        %v3117 = vsel %vm3113, %v3084, %v2576
        %v3118 = vsel %vm3113, %v3085, %v2578
        %v3119 = vsel %vm3113, %v3086, %v2580
        %v3120 = vsel %vm3113, %v3087, %v2582
        %v3121 = vsel %vm3113, %v3088, %v2584
        %v3122 = vsel %vm3113, %v3089, %v2586
        %v3123 = vsel %vm3113, %v3090, %v2588
        %v3124 = vsel %vm3113, %v3091, %v2590
        %v3125 = vsel %vm3113, %v3092, %v2592
        %v3126 = vsel %vm3113, %v3093, %v2594
        %v3127 = vsel %vm3113, %v3094, %v2596
        %v3128 = vsel %vm3113, %v3095, %v2598
        %v3129 = vsel %vm3113, %v3096, %v2600
        %v3130 = vsel %vm3113, %v3097, %v2602
        %v3131 = vsel %vm3113, %v3098, %v2604
        %v3132 = vsel %vm3113, %v3099, %v2606
        %v3133 = vsel %vm3113, %v3100, %v2608
        %v3134 = vsel %vm3113, %v3101, %v2610
        %v3135 = vsel %vm3113, %v3102, %v2612
        %v3136 = vsel %vm3113, %v3103, %v2614
        %v3137 = vsel %vm3113, %v3104, %v2616
        %v3138 = vsel %vm3113, %v3105, %v2618
        %v3139 = vsel %vm3113, %v3106, %v2620
        %v3140 = vsel %vm3113, %v3107, %v2622
        %v3141 = vsel %vm3113, %v3108, %v2624
        %v3142 = vsel %vm3113, %v3109, %v2626
        %v3143 = vsel %vm3113, %v3110, %v2628
        %v3144 = vsel %vm3113, %v3111, %v2630
        %v3145 = vsel %vm3113, %v3112, %v2632
        %vm3146 = vcmask 523264
        %v3147 = vsel %vm3146, %v3114, %v2666
        %v3148 = vsel %vm3146, %v3115, %v2668
        %v3149 = vsel %vm3146, %v3116, %v2670
        %v3150 = vsel %vm3146, %v3117, %v2672
        %v3151 = vsel %vm3146, %v3118, %v2674
        %v3152 = vsel %vm3146, %v3119, %v2676
        %v3153 = vsel %vm3146, %v3120, %v2678
        %v3154 = vsel %vm3146, %v3121, %v2680
        %v3155 = vsel %vm3146, %v3122, %v2682
        %v3156 = vsel %vm3146, %v3123, %v2684
        %v3157 = vsel %vm3146, %v3124, %v2686
        %v3158 = vsel %vm3146, %v3125, %v2688
        %v3159 = vsel %vm3146, %v3126, %v2690
        %v3160 = vsel %vm3146, %v3127, %v2692
        %v3161 = vsel %vm3146, %v3128, %v2694
        %v3162 = vsel %vm3146, %v3129, %v2696
        %v3163 = vsel %vm3146, %v3130, %v2698
        %v3164 = vsel %vm3146, %v3131, %v2700
        %v3165 = vsel %vm3146, %v3132, %v2702
        %v3166 = vsel %vm3146, %v3133, %v2704
        %v3167 = vsel %vm3146, %v3134, %v2706
        %v3168 = vsel %vm3146, %v3135, %v2708
        %v3169 = vsel %vm3146, %v3136, %v2710
        %v3170 = vsel %vm3146, %v3137, %v2712
        %v3171 = vsel %vm3146, %v3138, %v2714
        %v3172 = vsel %vm3146, %v3139, %v2716
        %v3173 = vsel %vm3146, %v3140, %v2718
        %v3174 = vsel %vm3146, %v3141, %v2720
        %v3175 = vsel %vm3146, %v3142, %v2722
        %v3176 = vsel %vm3146, %v3143, %v2724
        %v3177 = vsel %vm3146, %v3144, %v2726
        %v3178 = vsel %vm3146, %v3145, %v2728
        %vm3179 = vcmask 654336
        %v3180 = vsel %vm3179, %v3147, %v2762
        %v3181 = vsel %vm3179, %v3148, %v2764
        %v3182 = vsel %vm3179, %v3149, %v2766
        %v3183 = vsel %vm3179, %v3150, %v2768
        %v3184 = vsel %vm3179, %v3151, %v2770
        %v3185 = vsel %vm3179, %v3152, %v2772
        %v3186 = vsel %vm3179, %v3153, %v2774
        %v3187 = vsel %vm3179, %v3154, %v2776
        %v3188 = vsel %vm3179, %v3155, %v2778
        %v3189 = vsel %vm3179, %v3156, %v2780
        %v3190 = vsel %vm3179, %v3157, %v2782
        %v3191 = vsel %vm3179, %v3158, %v2784
        %v3192 = vsel %vm3179, %v3159, %v2786
        %v3193 = vsel %vm3179, %v3160, %v2788
        %v3194 = vsel %vm3179, %v3161, %v2790
        %v3195 = vsel %vm3179, %v3162, %v2792
        %v3196 = vsel %vm3179, %v3163, %v2794
        %v3197 = vsel %vm3179, %v3164, %v2796
        %v3198 = vsel %vm3179, %v3165, %v2798
        %v3199 = vsel %vm3179, %v3166, %v2800
        %v3200 = vsel %vm3179, %v3167, %v2802
        %v3201 = vsel %vm3179, %v3168, %v2804
        %v3202 = vsel %vm3179, %v3169, %v2806
        %v3203 = vsel %vm3179, %v3170, %v2808
        %v3204 = vsel %vm3179, %v3171, %v2810
        %v3205 = vsel %vm3179, %v3172, %v2812
        %v3206 = vsel %vm3179, %v3173, %v2814
        %v3207 = vsel %vm3179, %v3174, %v2816
        %v3208 = vsel %vm3179, %v3175, %v2818
        %v3209 = vsel %vm3179, %v3176, %v2820
        %v3210 = vsel %vm3179, %v3177, %v2822
        %v3211 = vsel %vm3179, %v3178, %v2824
        %vm3212 = vcmask 785408
        %v3213 = vsel %vm3212, %v3180, %v2858
        %v3214 = vsel %vm3212, %v3181, %v2860
        %v3215 = vsel %vm3212, %v3182, %v2862
        %v3216 = vsel %vm3212, %v3183, %v2864
        %v3217 = vsel %vm3212, %v3184, %v2866
        %v3218 = vsel %vm3212, %v3185, %v2868
        %v3219 = vsel %vm3212, %v3186, %v2870
        %v3220 = vsel %vm3212, %v3187, %v2872
        %v3221 = vsel %vm3212, %v3188, %v2874
        %v3222 = vsel %vm3212, %v3189, %v2876
        %v3223 = vsel %vm3212, %v3190, %v2878
        %v3224 = vsel %vm3212, %v3191, %v2880
        %v3225 = vsel %vm3212, %v3192, %v2882
        %v3226 = vsel %vm3212, %v3193, %v2884
        %v3227 = vsel %vm3212, %v3194, %v2886
        %v3228 = vsel %vm3212, %v3195, %v2888
        %v3229 = vsel %vm3212, %v3196, %v2890
        %v3230 = vsel %vm3212, %v3197, %v2892
        %v3231 = vsel %vm3212, %v3198, %v2894
        %v3232 = vsel %vm3212, %v3199, %v2896
        %v3233 = vsel %vm3212, %v3200, %v2898
        %v3234 = vsel %vm3212, %v3201, %v2900
        %v3235 = vsel %vm3212, %v3202, %v2902
        %v3236 = vsel %vm3212, %v3203, %v2904
        %v3237 = vsel %vm3212, %v3204, %v2906
        %v3238 = vsel %vm3212, %v3205, %v2908
        %v3239 = vsel %vm3212, %v3206, %v2910
        %v3240 = vsel %vm3212, %v3207, %v2912
        %v3241 = vsel %vm3212, %v3208, %v2914
        %v3242 = vsel %vm3212, %v3209, %v2916
        %v3243 = vsel %vm3212, %v3210, %v2918
        %v3244 = vsel %vm3212, %v3211, %v2920
        %vm3245 = vcmask 916480
        %v3246 = vsel %vm3245, %v3213, %v2954
        %v3247 = vsel %vm3245, %v3214, %v2956
        %v3248 = vsel %vm3245, %v3215, %v2958
        %v3249 = vsel %vm3245, %v3216, %v2960
        %v3250 = vsel %vm3245, %v3217, %v2962
        %v3251 = vsel %vm3245, %v3218, %v2964
        %v3252 = vsel %vm3245, %v3219, %v2966
        %v3253 = vsel %vm3245, %v3220, %v2968
        %v3254 = vsel %vm3245, %v3221, %v2970
        %v3255 = vsel %vm3245, %v3222, %v2972
        %v3256 = vsel %vm3245, %v3223, %v2974
        %v3257 = vsel %vm3245, %v3224, %v2976
        %v3258 = vsel %vm3245, %v3225, %v2978
        %v3259 = vsel %vm3245, %v3226, %v2980
        %v3260 = vsel %vm3245, %v3227, %v2982
        %v3261 = vsel %vm3245, %v3228, %v2984
        %v3262 = vsel %vm3245, %v3229, %v2986
        %v3263 = vsel %vm3245, %v3230, %v2988
        %v3264 = vsel %vm3245, %v3231, %v2990
        %v3265 = vsel %vm3245, %v3232, %v2992
        %v3266 = vsel %vm3245, %v3233, %v2994
        %v3267 = vsel %vm3245, %v3234, %v2996
        %v3268 = vsel %vm3245, %v3235, %v2998
        %v3269 = vsel %vm3245, %v3236, %v3000
        %v3270 = vsel %vm3245, %v3237, %v3002
        %v3271 = vsel %vm3245, %v3238, %v3004
        %v3272 = vsel %vm3245, %v3239, %v3006
        %v3273 = vsel %vm3245, %v3240, %v3008
        %v3274 = vsel %vm3245, %v3241, %v3010
        %v3275 = vsel %vm3245, %v3242, %v3012
        %v3276 = vsel %vm3245, %v3243, %v3014
        %v3277 = vsel %vm3245, %v3244, %v3016
        %v3279 = vperm.slane %v2088, 0
        %v3281 = vsel %vm2037, %v2283, 0
        %v3283 = vsel %vm2037, %v2285, 0
        %v3285 = vsel %vm2037, %v2288, 0
        %v3287 = vsel %vm2037, %v2290, 0
        %v3289 = vsel %vm2037, %v2293, 0
        %v3291 = vsel %vm2037, %v2295, 0
        %v3293 = vsel %vm2037, %v2298, 0
        %v3295 = vsel %vm2037, %v2300, 0
        %v3297 = vsel %vm2037, %v2303, 0
        %v3299 = vsel %vm2037, %v2305, 0
        %v3301 = vsel %vm2037, %v2308, 0
        %v3303 = vsel %vm2037, %v2310, 0
        %v3305 = vsel %vm2037, %v2313, 0
        %v3307 = vsel %vm2037, %v2315, 0
        %v3309 = vsel %vm2037, %v2318, 0
        %v3311 = vsel %vm2037, %v2320, 0
        %v3313 = vsel %vm2037, %v2323, 0
        %v3315 = vsel %vm2037, %v2325, 0
        %v3317 = vsel %vm2037, %v2328, 0
        %v3319 = vsel %vm2037, %v2330, 0
        %v3321 = vsel %vm2037, %v2333, 0
        %v3323 = vsel %vm2037, %v2335, 0
        %v3325 = vsel %vm2037, %v2338, 0
        %v3327 = vsel %vm2037, %v2340, 0
        %v3329 = vsel %vm2037, %v2343, 0
        %v3331 = vsel %vm2037, %v2345, 0
        %v3333 = vsel %vm2037, %v2348, 0
        %v3335 = vsel %vm2037, %v2350, 0
        %v3337 = vsel %vm2037, %v2361, 0
        %v3339 = vsel %vm2037, %v2363, 0
        %v3341 = vsel %vm2037, %v2374, 0
        %v3343 = vsel %vm2037, %v2376, 0
        %3345 = vmatpush.msra.mxu0 %v2085
        %3346 = vmatpush.msra.mxu0 %v2084
        %3347 = vmatpush.msra.mxu0 %v2083
        %3348 = vmatpush.msra.mxu0 %v2082
        %3349 = vmatpush.msra.mxu0 %v2081
        %3350 = vmatpush.msra.mxu0 %v2080
        %3351 = vmatpush.msra.mxu0 %v2079
        %3352 = vmatpush.msra.mxu0 %v2078
        %3353 = vmatpush.msra.mxu0 %v2077
        %3354 = vmatpush.msra.mxu0 %v2076
        %3355 = vmatpush.msra.mxu0 %v2075
        %3356 = vmatpush.msra.mxu0 %v2074
        %3357 = vmatpush.msra.mxu0 %v2073
        %3358 = vmatpush.msra.mxu0 %v2072
        %3359 = vmatpush.msra.mxu0 %v2071
        %3360 = vmatpush.msra.mxu0 %v2070
        %3361 = vmatmul.f32.gmra.mxu0 %v3246
        %v3362 = vpop.f32.mrf.mxu0
        %v3363 = vadd.f32 %v3279, %v3362
        %3364 = vmatmul.f32.gmra.mxu0 %v3247
        %v3365 = vpop.f32.mrf.mxu0
        %v3366 = vadd.f32 %v3279, %v3365
        %3367 = vmatmul.f32.gmra.mxu0 %v3248
        %v3368 = vpop.f32.mrf.mxu0
        %v3369 = vadd.f32 %v3279, %v3368
        %3370 = vmatmul.f32.gmra.mxu0 %v3249
        %v3371 = vpop.f32.mrf.mxu0
        %v3372 = vadd.f32 %v3279, %v3371
        %3373 = vmatmul.f32.gmra.mxu0 %v3250
        %v3374 = vpop.f32.mrf.mxu0
        %v3375 = vadd.f32 %v3279, %v3374
        %3376 = vmatmul.f32.gmra.mxu0 %v3251
        %v3377 = vpop.f32.mrf.mxu0
        %v3378 = vadd.f32 %v3279, %v3377
        %3379 = vmatmul.f32.gmra.mxu0 %v3252
        %v3380 = vpop.f32.mrf.mxu0
        %v3381 = vadd.f32 %v3279, %v3380
        %3382 = vmatmul.f32.gmra.mxu0 %v3253
        %v3383 = vpop.f32.mrf.mxu0
        %v3384 = vadd.f32 %v3279, %v3383
        %3385 = vmatmul.f32.gmra.mxu0 %v3254
        %v3386 = vpop.f32.mrf.mxu0
        %v3387 = vadd.f32 %v3279, %v3386
        %3388 = vmatmul.f32.gmra.mxu0 %v3255
        %v3389 = vpop.f32.mrf.mxu0
        %v3390 = vadd.f32 %v3279, %v3389
        %3391 = vmatmul.f32.gmra.mxu0 %v3256
        %v3392 = vpop.f32.mrf.mxu0
        %v3393 = vadd.f32 %v3279, %v3392
        %3394 = vmatmul.f32.gmra.mxu0 %v3257
        %v3395 = vpop.f32.mrf.mxu0
        %v3396 = vadd.f32 %v3279, %v3395
        %3397 = vmatmul.f32.gmra.mxu0 %v3258
        %v3398 = vpop.f32.mrf.mxu0
        %v3399 = vadd.f32 %v3279, %v3398
        %3400 = vmatmul.f32.gmra.mxu0 %v3259
        %v3401 = vpop.f32.mrf.mxu0
        %v3402 = vadd.f32 %v3279, %v3401
        %3403 = vmatmul.f32.gmra.mxu0 %v3260
        %v3404 = vpop.f32.mrf.mxu0
        %v3405 = vadd.f32 %v3279, %v3404
        %3406 = vmatmul.f32.gmra.mxu0 %v3261
        %v3407 = vpop.f32.mrf.mxu0
        %v3408 = vadd.f32 %v3279, %v3407
        %3409 = vmatmul.f32.gmra.mxu0 %v3262
        %v3410 = vpop.f32.mrf.mxu0
        %v3411 = vadd.f32 %v3279, %v3410
        %3412 = vmatmul.f32.gmra.mxu0 %v3263
        %v3413 = vpop.f32.mrf.mxu0
        %v3414 = vadd.f32 %v3279, %v3413
        %3415 = vmatmul.f32.gmra.mxu0 %v3264
        %v3416 = vpop.f32.mrf.mxu0
        %v3417 = vadd.f32 %v3279, %v3416
        %3418 = vmatmul.f32.gmra.mxu0 %v3265
        %v3419 = vpop.f32.mrf.mxu0
        %v3420 = vadd.f32 %v3279, %v3419
        %3421 = vmatmul.f32.gmra.mxu0 %v3266
        %v3422 = vpop.f32.mrf.mxu0
        %v3423 = vadd.f32 %v3279, %v3422
        %3424 = vmatmul.f32.gmra.mxu0 %v3267
        %v3425 = vpop.f32.mrf.mxu0
        %v3426 = vadd.f32 %v3279, %v3425
        %3427 = vmatmul.f32.gmra.mxu0 %v3268
        %v3428 = vpop.f32.mrf.mxu0
        %v3429 = vadd.f32 %v3279, %v3428
        %3430 = vmatmul.f32.gmra.mxu0 %v3269
        %v3431 = vpop.f32.mrf.mxu0
        %v3432 = vadd.f32 %v3279, %v3431
        %3433 = vmatmul.f32.gmra.mxu0 %v3270
        %v3434 = vpop.f32.mrf.mxu0
        %v3435 = vadd.f32 %v3279, %v3434
        %3436 = vmatmul.f32.gmra.mxu0 %v3271
        %v3437 = vpop.f32.mrf.mxu0
        %v3438 = vadd.f32 %v3279, %v3437
        %3439 = vmatmul.f32.gmra.mxu0 %v3272
        %v3440 = vpop.f32.mrf.mxu0
        %v3441 = vadd.f32 %v3279, %v3440
        %3442 = vmatmul.f32.gmra.mxu0 %v3273
        %v3443 = vpop.f32.mrf.mxu0
        %v3444 = vadd.f32 %v3279, %v3443
        %3445 = vmatmul.f32.gmra.mxu0 %v3274
        %v3446 = vpop.f32.mrf.mxu0
        %v3447 = vadd.f32 %v3279, %v3446
        %3448 = vmatmul.f32.gmra.mxu0 %v3275
        %v3449 = vpop.f32.mrf.mxu0
        %v3450 = vadd.f32 %v3279, %v3449
        %3451 = vmatmul.f32.gmra.mxu0 %v3276
        %v3452 = vpop.f32.mrf.mxu0
        %v3453 = vadd.f32 %v3279, %v3452
        %3454 = vmatmul.f32.gmra.mxu0 %v3277
        %v3455 = vpop.f32.mrf.mxu0
        %v3456 = vadd.f32 %v3279, %v3455
        %3457 = vdwg.mxu0
        %3458 = vmatpush.msra.mxu0 0.0
        %3459 = vmatpush.msra.mxu0 0.0
        %3460 = vmatpush.msra.mxu0 0.0
        %3461 = vmatpush.msra.mxu0 0.0
        %3462 = vmatpush.msra.mxu0 0.0
        %3463 = vmatpush.msra.mxu0 0.0
        %3464 = vmatpush.msra.mxu0 0.0
        %3465 = vmatpush.msra.mxu0 0.0
        %3466 = vmatpush.msra.mxu0 0.0
        %3467 = vmatpush.msra.mxu0 0.0
        %3468 = vmatpush.msra.mxu0 0.0
        %3469 = vmatpush.msra.mxu0 0.0
        %3470 = vmatpush.msra.mxu0 0.0
        %3471 = vmatpush.msra.mxu0 0.0
        %3472 = vmatpush.msra.mxu0 %v2087
        %3473 = vmatpush.msra.mxu0 %v2086
        %3474 = vmatmul.f32.gmra.mxu0 %v3281
        %v3475 = vpop.f32.mrf.mxu0
        %v3476 = vadd.f32 %v3363, %v3475
        %3477 = vmatmul.f32.gmra.mxu0 %v3283
        %v3478 = vpop.f32.mrf.mxu0
        %v3479 = vadd.f32 %v3366, %v3478
        %3480 = vmatmul.f32.gmra.mxu0 %v3285
        %v3481 = vpop.f32.mrf.mxu0
        %v3482 = vadd.f32 %v3369, %v3481
        %3483 = vmatmul.f32.gmra.mxu0 %v3287
        %v3484 = vpop.f32.mrf.mxu0
        %v3485 = vadd.f32 %v3372, %v3484
        %3486 = vmatmul.f32.gmra.mxu0 %v3289
        %v3487 = vpop.f32.mrf.mxu0
        %v3488 = vadd.f32 %v3375, %v3487
        %3489 = vmatmul.f32.gmra.mxu0 %v3291
        %v3490 = vpop.f32.mrf.mxu0
        %v3491 = vadd.f32 %v3378, %v3490
        %3492 = vmatmul.f32.gmra.mxu0 %v3293
        %v3493 = vpop.f32.mrf.mxu0
        %v3494 = vadd.f32 %v3381, %v3493
        %3495 = vmatmul.f32.gmra.mxu0 %v3295
        %v3496 = vpop.f32.mrf.mxu0
        %v3497 = vadd.f32 %v3384, %v3496
        %3498 = vmatmul.f32.gmra.mxu0 %v3297
        %v3499 = vpop.f32.mrf.mxu0
        %v3500 = vadd.f32 %v3387, %v3499
        %3501 = vmatmul.f32.gmra.mxu0 %v3299
        %v3502 = vpop.f32.mrf.mxu0
        %v3503 = vadd.f32 %v3390, %v3502
        %3504 = vmatmul.f32.gmra.mxu0 %v3301
        %v3505 = vpop.f32.mrf.mxu0
        %v3506 = vadd.f32 %v3393, %v3505
        %3507 = vmatmul.f32.gmra.mxu0 %v3303
        %v3508 = vpop.f32.mrf.mxu0
        %v3509 = vadd.f32 %v3396, %v3508
        %3510 = vmatmul.f32.gmra.mxu0 %v3305
        %v3511 = vpop.f32.mrf.mxu0
        %v3512 = vadd.f32 %v3399, %v3511
        %3513 = vmatmul.f32.gmra.mxu0 %v3307
        %v3514 = vpop.f32.mrf.mxu0
        %v3515 = vadd.f32 %v3402, %v3514
        %3516 = vmatmul.f32.gmra.mxu0 %v3309
        %v3517 = vpop.f32.mrf.mxu0
        %v3518 = vadd.f32 %v3405, %v3517
        %3519 = vmatmul.f32.gmra.mxu0 %v3311
        %v3520 = vpop.f32.mrf.mxu0
        %v3521 = vadd.f32 %v3408, %v3520
        %3522 = vmatmul.f32.gmra.mxu0 %v3313
        %v3523 = vpop.f32.mrf.mxu0
        %v3524 = vadd.f32 %v3411, %v3523
        %3525 = vmatmul.f32.gmra.mxu0 %v3315
        %v3526 = vpop.f32.mrf.mxu0
        %v3527 = vadd.f32 %v3414, %v3526
        %3528 = vmatmul.f32.gmra.mxu0 %v3317
        %v3529 = vpop.f32.mrf.mxu0
        %v3530 = vadd.f32 %v3417, %v3529
        %3531 = vmatmul.f32.gmra.mxu0 %v3319
        %v3532 = vpop.f32.mrf.mxu0
        %v3533 = vadd.f32 %v3420, %v3532
        %3534 = vmatmul.f32.gmra.mxu0 %v3321
        %v3535 = vpop.f32.mrf.mxu0
        %v3536 = vadd.f32 %v3423, %v3535
        %3537 = vmatmul.f32.gmra.mxu0 %v3323
        %v3538 = vpop.f32.mrf.mxu0
        %v3539 = vadd.f32 %v3426, %v3538
        %3540 = vmatmul.f32.gmra.mxu0 %v3325
        %v3541 = vpop.f32.mrf.mxu0
        %v3542 = vadd.f32 %v3429, %v3541
        %3543 = vmatmul.f32.gmra.mxu0 %v3327
        %v3544 = vpop.f32.mrf.mxu0
        %v3545 = vadd.f32 %v3432, %v3544
        %3546 = vmatmul.f32.gmra.mxu0 %v3329
        %v3547 = vpop.f32.mrf.mxu0
        %v3548 = vadd.f32 %v3435, %v3547
        %3549 = vmatmul.f32.gmra.mxu0 %v3331
        %v3550 = vpop.f32.mrf.mxu0
        %v3551 = vadd.f32 %v3438, %v3550
        %3552 = vmatmul.f32.gmra.mxu0 %v3333
        %v3553 = vpop.f32.mrf.mxu0
        %v3554 = vadd.f32 %v3441, %v3553
        %3555 = vmatmul.f32.gmra.mxu0 %v3335
        %v3556 = vpop.f32.mrf.mxu0
        %v3557 = vadd.f32 %v3444, %v3556
        %3558 = vmatmul.f32.gmra.mxu0 %v3337
        %v3559 = vpop.f32.mrf.mxu0
        %v3560 = vadd.f32 %v3447, %v3559
        %3561 = vmatmul.f32.gmra.mxu0 %v3339
        %v3562 = vpop.f32.mrf.mxu0
        %v3563 = vadd.f32 %v3450, %v3562
        %3564 = vmatmul.f32.gmra.mxu0 %v3341
        %v3565 = vpop.f32.mrf.mxu0
        %v3566 = vadd.f32 %v3453, %v3565
        %3567 = vmatmul.f32.gmra.mxu0 %v3343
        %v3568 = vpop.f32.mrf.mxu0
        %v3569 = vadd.f32 %v3456, %v3568
        %3570 = vdwg.mxu0
        %v3571 = vmax.f32 %v3476, 0.0
        %v3572 = vmax.f32 %v3479, 0.0
        %v3573 = vmax.f32 %v3482, 0.0
        %v3574 = vmax.f32 %v3485, 0.0
        %v3575 = vmax.f32 %v3488, 0.0
        %v3576 = vmax.f32 %v3491, 0.0
        %v3577 = vmax.f32 %v3494, 0.0
        %v3578 = vmax.f32 %v3497, 0.0
        %v3579 = vmax.f32 %v3500, 0.0
        %v3580 = vmax.f32 %v3503, 0.0
        %v3581 = vmax.f32 %v3506, 0.0
        %v3582 = vmax.f32 %v3509, 0.0
        %v3583 = vmax.f32 %v3512, 0.0
        %v3584 = vmax.f32 %v3515, 0.0
        %v3585 = vmax.f32 %v3518, 0.0
        %v3586 = vmax.f32 %v3521, 0.0
        %v3587 = vmax.f32 %v3524, 0.0
        %v3588 = vmax.f32 %v3527, 0.0
        %v3589 = vmax.f32 %v3530, 0.0
        %v3590 = vmax.f32 %v3533, 0.0
        %v3591 = vmax.f32 %v3536, 0.0
        %v3592 = vmax.f32 %v3539, 0.0
        %v3593 = vmax.f32 %v3542, 0.0
        %v3594 = vmax.f32 %v3545, 0.0
        %v3595 = vmax.f32 %v3548, 0.0
        %v3596 = vmax.f32 %v3551, 0.0
        %v3597 = vmax.f32 %v3554, 0.0
        %v3598 = vmax.f32 %v3557, 0.0
        %v3599 = vmax.f32 %v3560, 0.0
        %v3600 = vmax.f32 %v3563, 0.0
        %v3601 = vmax.f32 %v3566, 0.0
        %v3602 = vmax.f32 %v3569, 0.0
        %3603 = vst.msk [vmem:[%s419 + $0x1] sm:$0xff] %vm331, %v3571
        %3604 = vst.msk [vmem:[%s419 + $0x9] sm:$0xff] %vm331, %v3572
        %3605 = vst.msk [vmem:[%s419 + $0x19] sm:$0xff] %vm331, %v3573
        %3606 = vst.msk [vmem:[%s419 + $0x21] sm:$0xff] %vm331, %v3574
        %3607 = vst.msk [vmem:[%s419 + $0x31] sm:$0xff] %vm331, %v3575
        %3608 = vst.msk [vmem:[%s419 + $0x39] sm:$0xff] %vm331, %v3576
        %3609 = vst.msk [vmem:[%s419 + $0x49] sm:$0xff] %vm331, %v3577
        %3610 = vst.msk [vmem:[%s419 + $0x51] sm:$0xff] %vm331, %v3578
        %3611 = vst.msk [vmem:[%s419 + $0x61] sm:$0xff] %vm331, %v3579
        %3612 = vst.msk [vmem:[%s419 + $0x69] sm:$0xff] %vm331, %v3580
        %3613 = vst.msk [vmem:[%s419 + $0x79] sm:$0xff] %vm331, %v3581
        %3614 = vst.msk [vmem:[%s419 + $0x81] sm:$0xff] %vm331, %v3582
        %3615 = vst.msk [vmem:[%s419 + $0x91] sm:$0xff] %vm331, %v3583
        %3616 = vst.msk [vmem:[%s419 + $0x99] sm:$0xff] %vm331, %v3584
        %3617 = vst.msk [vmem:[%s419 + $0xa9] sm:$0xff] %vm331, %v3585
        %3618 = vst.msk [vmem:[%s419 + $0xb1] sm:$0xff] %vm331, %v3586
        %3619 = vst.msk [vmem:[%s419 + $0xc1] sm:$0xff] %vm331, %v3587
        %3620 = vst.msk [vmem:[%s419 + $0xc9] sm:$0xff] %vm331, %v3588
        %3621 = vst.msk [vmem:[%s419 + $0xd9] sm:$0xff] %vm331, %v3589
        %3622 = vst.msk [vmem:[%s419 + $0xe1] sm:$0xff] %vm331, %v3590
        %3623 = vst.msk [vmem:[%s419 + $0xf1] sm:$0xff] %vm331, %v3591
        %3624 = vst.msk [vmem:[%s419 + $0xf9] sm:$0xff] %vm331, %v3592
        %3625 = vst.msk [vmem:[%s419 + $0x109] sm:$0xff] %vm331, %v3593
        %3626 = vst.msk [vmem:[%s419 + $0x111] sm:$0xff] %vm331, %v3594
        %3627 = vst.msk [vmem:[%s419 + $0x121] sm:$0xff] %vm331, %v3595
        %3628 = vst.msk [vmem:[%s419 + $0x129] sm:$0xff] %vm331, %v3596
        %3629 = vst.msk [vmem:[%s419 + $0x139] sm:$0xff] %vm331, %v3597
        %3630 = vst.msk [vmem:[%s419 + $0x141] sm:$0xff] %vm331, %v3598
        %3631 = vst.msk [vmem:[%s419 + $0x151] sm:$0xff] %vm331, %v3599
        %3632 = vst.msk [vmem:[%s419 + $0x159] sm:$0xff] %vm331, %v3600
        %3633 = vst.msk [vmem:[%s419 + $0x169] sm:$0xff] %vm331, %v3601
        %3634 = vst.msk [vmem:[%s419 + $0x171] sm:$0xff] %vm331, %v3602
        %v3635 = vld [vmem:[%s5] sm:$0xff]
        %v3636 = vld [vmem:[%s5 + $0x8] sm:$0xff]
        %v3637 = vld [vmem:[%s5 + $0x10] sm:$0xff]
        %v3638 = vld [vmem:[%s5 + $0x18] sm:$0xff]
        %v3639 = vld [vmem:[%s5 + $0x20] sm:$0xff]
        %v3640 = vld [vmem:[%s5 + $0x28] sm:$0xff]
        %v3641 = vld [vmem:[%s5 + $0x30] sm:$0xff]
        %v3642 = vld [vmem:[%s5 + $0x38] sm:$0xff]
        %v3643 = vld [vmem:[%s5 + $0x40] sm:$0xff]
        %v3644 = vld [vmem:[%s5 + $0x48] sm:$0xff]
        %v3645 = vld [vmem:[%s5 + $0x50] sm:$0xff]
        %v3646 = vld [vmem:[%s5 + $0x58] sm:$0xff]
        %v3647 = vld [vmem:[%s5 + $0x60] sm:$0xff]
        %v3648 = vld [vmem:[%s5 + $0x68] sm:$0xff]
        %v3649 = vld [vmem:[%s5 + $0x70] sm:$0xff]
        %v3650 = vld [vmem:[%s5 + $0x78] sm:$0xff]
        %v3651 = vld [vmem:[%s5 + $0x80] sm:$0xff]
        %v3652 = vld [vmem:[%s5 + $0x88] sm:$0xff]
        %v3653 = vld [vmem:[%s5 + $0x90] sm:$0xff]
        %v3654 = vld [vmem:[%s5 + $0x98] sm:$0xff]
        %v3655 = vld [vmem:[%s5 + $0xa0] sm:$0xff]
        %v3656 = vld [vmem:[%s5 + $0xa8] sm:$0xff]
        %v3657 = vld [vmem:[%s5 + $0xb0] sm:$0xff]
        %v3658 = vld [vmem:[%s5 + $0xb8] sm:$0xff]
        %v3659 = vld [vmem:[%s5 + $0xc0] sm:$0xff]
        %v3660 = vld [vmem:[%s5 + $0xc8] sm:$0xff]
        %v3661 = vld [vmem:[%s5 + $0xd0] sm:$0xff]
        %v3662 = vld [vmem:[%s5 + $0xd8] sm:$0xff]
        %v3663 = vld [vmem:[%s5 + $0xe0] sm:$0xff]
        %v3664 = vld [vmem:[%s5 + $0xe8] sm:$0xff]
        %v3665 = vld [vmem:[%s5 + $0xf0] sm:$0xff]
        %v3666 = vld [vmem:[%s5 + $0xf8] sm:$0xff]
        %v3667 = vld [vmem:[%s5 + $0x100] sm:$0xff]
        %v3668 = vld [vmem:[%s5 + $0x108] sm:$0xff]
        %v3669 = vld [vmem:[%s5 + $0x110] sm:$0xff]
        %v3670 = vld [vmem:[%s5 + $0x118] sm:$0xff]
        %v3671 = vld [vmem:[%s6] sm:$0x1]
        %v3672 = vld [vmem:[#allocation2] sm:$0xff]
        %v3673 = vld [vmem:[#allocation2 + $0x8] sm:$0xff]
        %v3674 = vld [vmem:[#allocation2 + $0x10] sm:$0x3]
        %v3675 = vld [vmem:[#allocation2 + $0x18] sm:$0xff]
        %v3676 = vld [vmem:[#allocation2 + $0x20] sm:$0xff]
        %v3677 = vld [vmem:[#allocation2 + $0x28] sm:$0x3]
        %v3678 = vld [vmem:[#allocation2 + $0x30] sm:$0xff]
        %v3679 = vld [vmem:[#allocation2 + $0x38] sm:$0xff]
        %v3680 = vld [vmem:[#allocation2 + $0x40] sm:$0x3]
        %v3681 = vld [vmem:[#allocation2 + $0x48] sm:$0xff]
        %v3682 = vld [vmem:[#allocation2 + $0x50] sm:$0xff]
        %v3683 = vld [vmem:[#allocation2 + $0x58] sm:$0x3]
        %v3684 = vld [vmem:[#allocation2 + $0x60] sm:$0xff]
        %v3685 = vld [vmem:[#allocation2 + $0x68] sm:$0xff]
        %v3686 = vld [vmem:[#allocation2 + $0x70] sm:$0x3]
        %v3687 = vld [vmem:[#allocation2 + $0x78] sm:$0xff]
        %v3688 = vld [vmem:[#allocation2 + $0x80] sm:$0xff]
        %v3689 = vld [vmem:[#allocation2 + $0x88] sm:$0x3]
        %v3690 = vld [vmem:[#allocation2 + $0x90] sm:$0xff]
        %v3691 = vld [vmem:[#allocation2 + $0x98] sm:$0xff]
        %v3692 = vld [vmem:[#allocation2 + $0xa0] sm:$0x3]
        %v3693 = vld [vmem:[#allocation2 + $0xa8] sm:$0xff]
        %v3694 = vld [vmem:[#allocation2 + $0xb0] sm:$0xff]
        %v3695 = vld [vmem:[#allocation2 + $0xb8] sm:$0x3]
        %v3696 = vld [vmem:[#allocation2 + $0xc0] sm:$0xff]
        %v3697 = vld [vmem:[#allocation2 + $0xc8] sm:$0xff]
        %v3698 = vld [vmem:[#allocation2 + $0xd0] sm:$0x3]
        %v3699 = vld [vmem:[#allocation2 + $0xd8] sm:$0xff]
        %v3700 = vld [vmem:[#allocation2 + $0xe0] sm:$0xff]
        %v3701 = vld [vmem:[#allocation2 + $0xe8] sm:$0x3]
        %v3702 = vld [vmem:[#allocation2 + $0xf0] sm:$0xff]
        %v3703 = vld [vmem:[#allocation2 + $0xf8] sm:$0xff]
        %v3704 = vld [vmem:[#allocation2 + $0x100] sm:$0x3]
        %v3705 = vld [vmem:[#allocation2 + $0x108] sm:$0xff]
        %v3706 = vld [vmem:[#allocation2 + $0x110] sm:$0xff]
        %v3707 = vld [vmem:[#allocation2 + $0x118] sm:$0x3]
        %v3708 = vld [vmem:[#allocation2 + $0x120] sm:$0xff]
        %v3709 = vld [vmem:[#allocation2 + $0x128] sm:$0xff]
        %v3710 = vld [vmem:[#allocation2 + $0x130] sm:$0x3]
        %v3711 = vld [vmem:[#allocation2 + $0x138] sm:$0xff]
        %v3712 = vld [vmem:[#allocation2 + $0x140] sm:$0xff]
        %v3713 = vld [vmem:[#allocation2 + $0x148] sm:$0x3]
        %v3714 = vld [vmem:[#allocation2 + $0x150] sm:$0xff]
        %v3715 = vld [vmem:[#allocation2 + $0x158] sm:$0xff]
        %v3716 = vld [vmem:[#allocation2 + $0x160] sm:$0x3]
        %v3717 = vld [vmem:[#allocation2 + $0x168] sm:$0xff]
        %v3718 = vld [vmem:[#allocation2 + $0x170] sm:$0xff]
        %v3719 = vld [vmem:[#allocation2 + $0x178] sm:$0x3]
        %v3720 = vld [vmem:[#allocation2 + $0x180] sm:$0xff]
        %v3721 = vld [vmem:[#allocation2 + $0x188] sm:$0xff]
        %v3722 = vld [vmem:[#allocation2 + $0x190] sm:$0x3]
        %v3723 = vld [vmem:[#allocation2 + $0x198] sm:$0xff]
        %v3724 = vld [vmem:[#allocation2 + $0x1a0] sm:$0xff]
        %v3725 = vld [vmem:[#allocation2 + $0x1a8] sm:$0x3]
        %v3774 = vrot.slane %v3672, 1
        %v3775 = vrot.slane %v3673, 1
        %v3776 = vsel %vm569, %v3774, %v3775
        %v3777 = vrot.slane %v3674, 1
        %v3778 = vsel %vm569, %v3775, %v3777
        %v3779 = vrot.slane %v3675, 1
        %v3780 = vrot.slane %v3676, 1
        %v3781 = vsel %vm569, %v3779, %v3780
        %v3782 = vrot.slane %v3677, 1
        %v3783 = vsel %vm569, %v3780, %v3782
        %v3784 = vrot.slane %v3678, 1
        %v3785 = vrot.slane %v3679, 1
        %v3786 = vsel %vm569, %v3784, %v3785
        %v3787 = vrot.slane %v3680, 1
        %v3788 = vsel %vm569, %v3785, %v3787
        %v3789 = vrot.slane %v3681, 1
        %v3790 = vrot.slane %v3682, 1
        %v3791 = vsel %vm569, %v3789, %v3790
        %v3792 = vrot.slane %v3683, 1
        %v3793 = vsel %vm569, %v3790, %v3792
        %v3794 = vrot.slane %v3684, 1
        %v3795 = vrot.slane %v3685, 1
        %v3796 = vsel %vm569, %v3794, %v3795
        %v3797 = vrot.slane %v3686, 1
        %v3798 = vsel %vm569, %v3795, %v3797
        %v3799 = vrot.slane %v3687, 1
        %v3800 = vrot.slane %v3688, 1
        %v3801 = vsel %vm569, %v3799, %v3800
        %v3802 = vrot.slane %v3689, 1
        %v3803 = vsel %vm569, %v3800, %v3802
        %v3804 = vrot.slane %v3690, 1
        %v3805 = vrot.slane %v3691, 1
        %v3806 = vsel %vm569, %v3804, %v3805
        %v3807 = vrot.slane %v3692, 1
        %v3808 = vsel %vm569, %v3805, %v3807
        %v3809 = vrot.slane %v3693, 1
        %v3810 = vrot.slane %v3694, 1
        %v3811 = vsel %vm569, %v3809, %v3810
        %v3812 = vrot.slane %v3695, 1
        %v3813 = vsel %vm569, %v3810, %v3812
        %v3814 = vrot.slane %v3696, 1
        %v3815 = vrot.slane %v3697, 1
        %v3816 = vsel %vm569, %v3814, %v3815
        %v3817 = vrot.slane %v3698, 1
        %v3818 = vsel %vm569, %v3815, %v3817
        %v3819 = vrot.slane %v3699, 1
        %v3820 = vrot.slane %v3700, 1
        %v3821 = vsel %vm569, %v3819, %v3820
        %v3822 = vrot.slane %v3701, 1
        %v3823 = vsel %vm569, %v3820, %v3822
        %v3824 = vrot.slane %v3702, 1
        %v3825 = vrot.slane %v3703, 1
        %v3826 = vsel %vm569, %v3824, %v3825
        %v3827 = vrot.slane %v3704, 1
        %v3828 = vsel %vm569, %v3825, %v3827
        %v3829 = vrot.slane %v3705, 1
        %v3830 = vrot.slane %v3706, 1
        %v3831 = vsel %vm569, %v3829, %v3830
        %v3832 = vrot.slane %v3707, 1
        %v3833 = vsel %vm569, %v3830, %v3832
        %v3834 = vrot.slane %v3708, 1
        %v3835 = vrot.slane %v3709, 1
        %v3836 = vsel %vm569, %v3834, %v3835
        %v3837 = vrot.slane %v3710, 1
        %v3838 = vsel %vm569, %v3835, %v3837
        %v3839 = vrot.slane %v3711, 1
        %v3840 = vrot.slane %v3712, 1
        %v3841 = vsel %vm569, %v3839, %v3840
        %v3842 = vrot.slane %v3713, 1
        %v3843 = vsel %vm569, %v3840, %v3842
        %v3844 = vrot.slane %v3714, 1
        %v3845 = vrot.slane %v3715, 1
        %v3846 = vsel %vm569, %v3844, %v3845
        %v3847 = vrot.slane %v3716, 1
        %v3848 = vsel %vm569, %v3845, %v3847
        %v3849 = vrot.slane %v3717, 1
        %v3850 = vrot.slane %v3718, 1
        %v3851 = vsel %vm569, %v3849, %v3850
        %v3852 = vrot.slane %v3719, 1
        %v3853 = vsel %vm569, %v3850, %v3852
        %v3854 = vrot.slane %v3672, 2
        %v3855 = vrot.slane %v3673, 2
        %v3856 = vsel %vm650, %v3854, %v3855
        %v3857 = vrot.slane %v3674, 2
        %v3858 = vsel %vm650, %v3855, %v3857
        %v3859 = vrot.slane %v3675, 2
        %v3860 = vrot.slane %v3676, 2
        %v3861 = vsel %vm650, %v3859, %v3860
        %v3862 = vrot.slane %v3677, 2
        %v3863 = vsel %vm650, %v3860, %v3862
        %v3864 = vrot.slane %v3678, 2
        %v3865 = vrot.slane %v3679, 2
        %v3866 = vsel %vm650, %v3864, %v3865
        %v3867 = vrot.slane %v3680, 2
        %v3868 = vsel %vm650, %v3865, %v3867
        %v3869 = vrot.slane %v3681, 2
        %v3870 = vrot.slane %v3682, 2
        %v3871 = vsel %vm650, %v3869, %v3870
        %v3872 = vrot.slane %v3683, 2
        %v3873 = vsel %vm650, %v3870, %v3872
        %v3874 = vrot.slane %v3684, 2
        %v3875 = vrot.slane %v3685, 2
        %v3876 = vsel %vm650, %v3874, %v3875
        %v3877 = vrot.slane %v3686, 2
        %v3878 = vsel %vm650, %v3875, %v3877
        %v3879 = vrot.slane %v3687, 2
        %v3880 = vrot.slane %v3688, 2
        %v3881 = vsel %vm650, %v3879, %v3880
        %v3882 = vrot.slane %v3689, 2
        %v3883 = vsel %vm650, %v3880, %v3882
        %v3884 = vrot.slane %v3690, 2
        %v3885 = vrot.slane %v3691, 2
        %v3886 = vsel %vm650, %v3884, %v3885
        %v3887 = vrot.slane %v3692, 2
        %v3888 = vsel %vm650, %v3885, %v3887
        %v3889 = vrot.slane %v3693, 2
        %v3890 = vrot.slane %v3694, 2
        %v3891 = vsel %vm650, %v3889, %v3890
        %v3892 = vrot.slane %v3695, 2
        %v3893 = vsel %vm650, %v3890, %v3892
        %v3894 = vrot.slane %v3696, 2
        %v3895 = vrot.slane %v3697, 2
        %v3896 = vsel %vm650, %v3894, %v3895
        %v3897 = vrot.slane %v3698, 2
        %v3898 = vsel %vm650, %v3895, %v3897
        %v3899 = vrot.slane %v3699, 2
        %v3900 = vrot.slane %v3700, 2
        %v3901 = vsel %vm650, %v3899, %v3900
        %v3902 = vrot.slane %v3701, 2
        %v3903 = vsel %vm650, %v3900, %v3902
        %v3904 = vrot.slane %v3702, 2
        %v3905 = vrot.slane %v3703, 2
        %v3906 = vsel %vm650, %v3904, %v3905
        %v3907 = vrot.slane %v3704, 2
        %v3908 = vsel %vm650, %v3905, %v3907
        %v3909 = vrot.slane %v3705, 2
        %v3910 = vrot.slane %v3706, 2
        %v3911 = vsel %vm650, %v3909, %v3910
        %v3912 = vrot.slane %v3707, 2
        %v3913 = vsel %vm650, %v3910, %v3912
        %v3914 = vrot.slane %v3708, 2
        %v3915 = vrot.slane %v3709, 2
        %v3916 = vsel %vm650, %v3914, %v3915
        %v3917 = vrot.slane %v3710, 2
        %v3918 = vsel %vm650, %v3915, %v3917
        %v3919 = vrot.slane %v3711, 2
        %v3920 = vrot.slane %v3712, 2
        %v3921 = vsel %vm650, %v3919, %v3920
        %v3922 = vrot.slane %v3713, 2
        %v3923 = vsel %vm650, %v3920, %v3922
        %v3924 = vrot.slane %v3714, 2
        %v3925 = vrot.slane %v3715, 2
        %v3926 = vsel %vm650, %v3924, %v3925
        %v3927 = vrot.slane %v3716, 2
        %v3928 = vsel %vm650, %v3925, %v3927
        %v3929 = vrot.slane %v3717, 2
        %v3930 = vrot.slane %v3718, 2
        %v3931 = vsel %vm650, %v3929, %v3930
        %v3932 = vrot.slane %v3719, 2
        %v3933 = vsel %vm650, %v3930, %v3932
        %v3937 = vrot.slane %v3720, 1
        %v3938 = vrot.slane %v3721, 1
        %v3939 = vsel %vm569, %v3937, %v3938
        %v3940 = vrot.slane %v3722, 1
        %v3941 = vsel %vm569, %v3938, %v3940
        %v3974 = vrot.slane %v3720, 2
        %v3975 = vrot.slane %v3721, 2
        %v3976 = vsel %vm650, %v3974, %v3975
        %v3977 = vrot.slane %v3722, 2
        %v3978 = vsel %vm650, %v3975, %v3977
        %v3982 = vrot.slane %v3723, 1
        %v3983 = vrot.slane %v3724, 1
        %v3984 = vsel %vm569, %v3982, %v3983
        %v3985 = vrot.slane %v3725, 1
        %v3986 = vsel %vm569, %v3983, %v3985
        %v3987 = vrot.slane %v3723, 2
        %v3988 = vrot.slane %v3724, 2
        %v3989 = vsel %vm650, %v3987, %v3988
        %v3990 = vrot.slane %v3725, 2
        %v3991 = vsel %vm650, %v3988, %v3990
        %3992 = vrot.lane.b32.xlu0 %v3776, 32
        %v3993 = vpop.permute.xlu0 %3992
        %3994 = vrot.lane.b32.xlu0 %v3778, 32
        %v3995 = vpop.permute.xlu0 %3994
        %3996 = vrot.lane.b32.xlu0 %v3781, 32
        %v3997 = vpop.permute.xlu0 %3996
        %3998 = vrot.lane.b32.xlu0 %v3783, 32
        %v3999 = vpop.permute.xlu0 %3998
        %4000 = vrot.lane.b32.xlu0 %v3786, 32
        %v4001 = vpop.permute.xlu0 %4000
        %4002 = vrot.lane.b32.xlu0 %v3788, 32
        %v4003 = vpop.permute.xlu0 %4002
        %4004 = vrot.lane.b32.xlu0 %v3791, 32
        %v4005 = vpop.permute.xlu0 %4004
        %4006 = vrot.lane.b32.xlu0 %v3793, 32
        %v4007 = vpop.permute.xlu0 %4006
        %4008 = vrot.lane.b32.xlu0 %v3796, 32
        %v4009 = vpop.permute.xlu0 %4008
        %4010 = vrot.lane.b32.xlu0 %v3798, 32
        %v4011 = vpop.permute.xlu0 %4010
        %4012 = vrot.lane.b32.xlu0 %v3801, 32
        %v4013 = vpop.permute.xlu0 %4012
        %4014 = vrot.lane.b32.xlu0 %v3803, 32
        %v4015 = vpop.permute.xlu0 %4014
        %4016 = vrot.lane.b32.xlu0 %v3806, 32
        %v4017 = vpop.permute.xlu0 %4016
        %4018 = vrot.lane.b32.xlu0 %v3808, 32
        %v4019 = vpop.permute.xlu0 %4018
        %4020 = vrot.lane.b32.xlu0 %v3811, 32
        %v4021 = vpop.permute.xlu0 %4020
        %4022 = vrot.lane.b32.xlu0 %v3813, 32
        %v4023 = vpop.permute.xlu0 %4022
        %4024 = vrot.lane.b32.xlu0 %v3816, 32
        %v4025 = vpop.permute.xlu0 %4024
        %4026 = vrot.lane.b32.xlu0 %v3818, 32
        %v4027 = vpop.permute.xlu0 %4026
        %4028 = vrot.lane.b32.xlu0 %v3821, 32
        %v4029 = vpop.permute.xlu0 %4028
        %4030 = vrot.lane.b32.xlu0 %v3823, 32
        %v4031 = vpop.permute.xlu0 %4030
        %4032 = vrot.lane.b32.xlu0 %v3826, 32
        %v4033 = vpop.permute.xlu0 %4032
        %4034 = vrot.lane.b32.xlu0 %v3828, 32
        %v4035 = vpop.permute.xlu0 %4034
        %4036 = vrot.lane.b32.xlu0 %v3831, 32
        %v4037 = vpop.permute.xlu0 %4036
        %4038 = vrot.lane.b32.xlu0 %v3833, 32
        %v4039 = vpop.permute.xlu0 %4038
        %4040 = vrot.lane.b32.xlu0 %v3836, 32
        %v4041 = vpop.permute.xlu0 %4040
        %4042 = vrot.lane.b32.xlu0 %v3838, 32
        %v4043 = vpop.permute.xlu0 %4042
        %4044 = vrot.lane.b32.xlu0 %v3841, 32
        %v4045 = vpop.permute.xlu0 %4044
        %4046 = vrot.lane.b32.xlu0 %v3843, 32
        %v4047 = vpop.permute.xlu0 %4046
        %4048 = vrot.lane.b32.xlu0 %v3846, 32
        %v4049 = vpop.permute.xlu0 %4048
        %4050 = vrot.lane.b32.xlu0 %v3848, 32
        %v4051 = vpop.permute.xlu0 %4050
        %4052 = vrot.lane.b32.xlu0 %v3851, 32
        %v4053 = vpop.permute.xlu0 %4052
        %4054 = vrot.lane.b32.xlu0 %v3853, 32
        %v4055 = vpop.permute.xlu0 %4054
        %4088 = vrot.lane.b32.xlu0 %v3856, 64
        %v4089 = vpop.permute.xlu0 %4088
        %4090 = vrot.lane.b32.xlu0 %v3858, 64
        %v4091 = vpop.permute.xlu0 %4090
        %4092 = vrot.lane.b32.xlu0 %v3861, 64
        %v4093 = vpop.permute.xlu0 %4092
        %4094 = vrot.lane.b32.xlu0 %v3863, 64
        %v4095 = vpop.permute.xlu0 %4094
        %4096 = vrot.lane.b32.xlu0 %v3866, 64
        %v4097 = vpop.permute.xlu0 %4096
        %4098 = vrot.lane.b32.xlu0 %v3868, 64
        %v4099 = vpop.permute.xlu0 %4098
        %4100 = vrot.lane.b32.xlu0 %v3871, 64
        %v4101 = vpop.permute.xlu0 %4100
        %4102 = vrot.lane.b32.xlu0 %v3873, 64
        %v4103 = vpop.permute.xlu0 %4102
        %4104 = vrot.lane.b32.xlu0 %v3876, 64
        %v4105 = vpop.permute.xlu0 %4104
        %4106 = vrot.lane.b32.xlu0 %v3878, 64
        %v4107 = vpop.permute.xlu0 %4106
        %4108 = vrot.lane.b32.xlu0 %v3881, 64
        %v4109 = vpop.permute.xlu0 %4108
        %4110 = vrot.lane.b32.xlu0 %v3883, 64
        %v4111 = vpop.permute.xlu0 %4110
        %4112 = vrot.lane.b32.xlu0 %v3886, 64
        %v4113 = vpop.permute.xlu0 %4112
        %4114 = vrot.lane.b32.xlu0 %v3888, 64
        %v4115 = vpop.permute.xlu0 %4114
        %4116 = vrot.lane.b32.xlu0 %v3891, 64
        %v4117 = vpop.permute.xlu0 %4116
        %4118 = vrot.lane.b32.xlu0 %v3893, 64
        %v4119 = vpop.permute.xlu0 %4118
        %4120 = vrot.lane.b32.xlu0 %v3896, 64
        %v4121 = vpop.permute.xlu0 %4120
        %4122 = vrot.lane.b32.xlu0 %v3898, 64
        %v4123 = vpop.permute.xlu0 %4122
        %4124 = vrot.lane.b32.xlu0 %v3901, 64
        %v4125 = vpop.permute.xlu0 %4124
        %4126 = vrot.lane.b32.xlu0 %v3903, 64
        %v4127 = vpop.permute.xlu0 %4126
        %4128 = vrot.lane.b32.xlu0 %v3906, 64
        %v4129 = vpop.permute.xlu0 %4128
        %4130 = vrot.lane.b32.xlu0 %v3908, 64
        %v4131 = vpop.permute.xlu0 %4130
        %4132 = vrot.lane.b32.xlu0 %v3911, 64
        %v4133 = vpop.permute.xlu0 %4132
        %4134 = vrot.lane.b32.xlu0 %v3913, 64
        %v4135 = vpop.permute.xlu0 %4134
        %4136 = vrot.lane.b32.xlu0 %v3916, 64
        %v4137 = vpop.permute.xlu0 %4136
        %4138 = vrot.lane.b32.xlu0 %v3918, 64
        %v4139 = vpop.permute.xlu0 %4138
        %4140 = vrot.lane.b32.xlu0 %v3921, 64
        %v4141 = vpop.permute.xlu0 %4140
        %4142 = vrot.lane.b32.xlu0 %v3923, 64
        %v4143 = vpop.permute.xlu0 %4142
        %4144 = vrot.lane.b32.xlu0 %v3926, 64
        %v4145 = vpop.permute.xlu0 %4144
        %4146 = vrot.lane.b32.xlu0 %v3928, 64
        %v4147 = vpop.permute.xlu0 %4146
        %4148 = vrot.lane.b32.xlu0 %v3931, 64
        %v4149 = vpop.permute.xlu0 %4148
        %4150 = vrot.lane.b32.xlu0 %v3933, 64
        %v4151 = vpop.permute.xlu0 %4150
        %4184 = vrot.lane.b32.xlu0 %v3675, 96
        %v4185 = vpop.permute.xlu0 %4184
        %4186 = vrot.lane.b32.xlu0 %v3676, 96
        %v4187 = vpop.permute.xlu0 %4186
        %4188 = vrot.lane.b32.xlu0 %v3678, 96
        %v4189 = vpop.permute.xlu0 %4188
        %4190 = vrot.lane.b32.xlu0 %v3679, 96
        %v4191 = vpop.permute.xlu0 %4190
        %4192 = vrot.lane.b32.xlu0 %v3681, 96
        %v4193 = vpop.permute.xlu0 %4192
        %4194 = vrot.lane.b32.xlu0 %v3682, 96
        %v4195 = vpop.permute.xlu0 %4194
        %4196 = vrot.lane.b32.xlu0 %v3684, 96
        %v4197 = vpop.permute.xlu0 %4196
        %4198 = vrot.lane.b32.xlu0 %v3685, 96
        %v4199 = vpop.permute.xlu0 %4198
        %4200 = vrot.lane.b32.xlu0 %v3687, 96
        %v4201 = vpop.permute.xlu0 %4200
        %4202 = vrot.lane.b32.xlu0 %v3688, 96
        %v4203 = vpop.permute.xlu0 %4202
        %4204 = vrot.lane.b32.xlu0 %v3690, 96
        %v4205 = vpop.permute.xlu0 %4204
        %4206 = vrot.lane.b32.xlu0 %v3691, 96
        %v4207 = vpop.permute.xlu0 %4206
        %4208 = vrot.lane.b32.xlu0 %v3693, 96
        %v4209 = vpop.permute.xlu0 %4208
        %4210 = vrot.lane.b32.xlu0 %v3694, 96
        %v4211 = vpop.permute.xlu0 %4210
        %4212 = vrot.lane.b32.xlu0 %v3696, 96
        %v4213 = vpop.permute.xlu0 %4212
        %4214 = vrot.lane.b32.xlu0 %v3697, 96
        %v4215 = vpop.permute.xlu0 %4214
        %4216 = vrot.lane.b32.xlu0 %v3699, 96
        %v4217 = vpop.permute.xlu0 %4216
        %4218 = vrot.lane.b32.xlu0 %v3700, 96
        %v4219 = vpop.permute.xlu0 %4218
        %4220 = vrot.lane.b32.xlu0 %v3702, 96
        %v4221 = vpop.permute.xlu0 %4220
        %4222 = vrot.lane.b32.xlu0 %v3703, 96
        %v4223 = vpop.permute.xlu0 %4222
        %4224 = vrot.lane.b32.xlu0 %v3705, 96
        %v4225 = vpop.permute.xlu0 %4224
        %4226 = vrot.lane.b32.xlu0 %v3706, 96
        %v4227 = vpop.permute.xlu0 %4226
        %4228 = vrot.lane.b32.xlu0 %v3708, 96
        %v4229 = vpop.permute.xlu0 %4228
        %4230 = vrot.lane.b32.xlu0 %v3709, 96
        %v4231 = vpop.permute.xlu0 %4230
        %4232 = vrot.lane.b32.xlu0 %v3711, 96
        %v4233 = vpop.permute.xlu0 %4232
        %4234 = vrot.lane.b32.xlu0 %v3712, 96
        %v4235 = vpop.permute.xlu0 %4234
        %4236 = vrot.lane.b32.xlu0 %v3714, 96
        %v4237 = vpop.permute.xlu0 %4236
        %4238 = vrot.lane.b32.xlu0 %v3715, 96
        %v4239 = vpop.permute.xlu0 %4238
        %4240 = vrot.lane.b32.xlu0 %v3717, 96
        %v4241 = vpop.permute.xlu0 %4240
        %4242 = vrot.lane.b32.xlu0 %v3718, 96
        %v4243 = vpop.permute.xlu0 %4242
        %4244 = vrot.lane.b32.xlu0 %v3720, 96
        %v4245 = vpop.permute.xlu0 %4244
        %4246 = vrot.lane.b32.xlu0 %v3721, 96
        %v4247 = vpop.permute.xlu0 %4246
        %4280 = vrot.lane.b32.xlu0 %v3861, 32
        %v4281 = vpop.permute.xlu0 %4280
        %4282 = vrot.lane.b32.xlu0 %v3863, 32
        %v4283 = vpop.permute.xlu0 %4282
        %4284 = vrot.lane.b32.xlu0 %v3866, 32
        %v4285 = vpop.permute.xlu0 %4284
        %4286 = vrot.lane.b32.xlu0 %v3868, 32
        %v4287 = vpop.permute.xlu0 %4286
        %4288 = vrot.lane.b32.xlu0 %v3871, 32
        %v4289 = vpop.permute.xlu0 %4288
        %4290 = vrot.lane.b32.xlu0 %v3873, 32
        %v4291 = vpop.permute.xlu0 %4290
        %4292 = vrot.lane.b32.xlu0 %v3876, 32
        %v4293 = vpop.permute.xlu0 %4292
        %4294 = vrot.lane.b32.xlu0 %v3878, 32
        %v4295 = vpop.permute.xlu0 %4294
        %4296 = vrot.lane.b32.xlu0 %v3881, 32
        %v4297 = vpop.permute.xlu0 %4296
        %4298 = vrot.lane.b32.xlu0 %v3883, 32
        %v4299 = vpop.permute.xlu0 %4298
        %4300 = vrot.lane.b32.xlu0 %v3886, 32
        %v4301 = vpop.permute.xlu0 %4300
        %4302 = vrot.lane.b32.xlu0 %v3888, 32
        %v4303 = vpop.permute.xlu0 %4302
        %4304 = vrot.lane.b32.xlu0 %v3891, 32
        %v4305 = vpop.permute.xlu0 %4304
        %4306 = vrot.lane.b32.xlu0 %v3893, 32
        %v4307 = vpop.permute.xlu0 %4306
        %4308 = vrot.lane.b32.xlu0 %v3896, 32
        %v4309 = vpop.permute.xlu0 %4308
        %4310 = vrot.lane.b32.xlu0 %v3898, 32
        %v4311 = vpop.permute.xlu0 %4310
        %4312 = vrot.lane.b32.xlu0 %v3901, 32
        %v4313 = vpop.permute.xlu0 %4312
        %4314 = vrot.lane.b32.xlu0 %v3903, 32
        %v4315 = vpop.permute.xlu0 %4314
        %4316 = vrot.lane.b32.xlu0 %v3906, 32
        %v4317 = vpop.permute.xlu0 %4316
        %4318 = vrot.lane.b32.xlu0 %v3908, 32
        %v4319 = vpop.permute.xlu0 %4318
        %4320 = vrot.lane.b32.xlu0 %v3911, 32
        %v4321 = vpop.permute.xlu0 %4320
        %4322 = vrot.lane.b32.xlu0 %v3913, 32
        %v4323 = vpop.permute.xlu0 %4322
        %4324 = vrot.lane.b32.xlu0 %v3916, 32
        %v4325 = vpop.permute.xlu0 %4324
        %4326 = vrot.lane.b32.xlu0 %v3918, 32
        %v4327 = vpop.permute.xlu0 %4326
        %4328 = vrot.lane.b32.xlu0 %v3921, 32
        %v4329 = vpop.permute.xlu0 %4328
        %4330 = vrot.lane.b32.xlu0 %v3923, 32
        %v4331 = vpop.permute.xlu0 %4330
        %4332 = vrot.lane.b32.xlu0 %v3926, 32
        %v4333 = vpop.permute.xlu0 %4332
        %4334 = vrot.lane.b32.xlu0 %v3928, 32
        %v4335 = vpop.permute.xlu0 %4334
        %4336 = vrot.lane.b32.xlu0 %v3931, 32
        %v4337 = vpop.permute.xlu0 %4336
        %4338 = vrot.lane.b32.xlu0 %v3933, 32
        %v4339 = vpop.permute.xlu0 %4338
        %4340 = vrot.lane.b32.xlu0 %v3976, 32
        %v4341 = vpop.permute.xlu0 %4340
        %4342 = vrot.lane.b32.xlu0 %v3978, 32
        %v4343 = vpop.permute.xlu0 %4342
        %4376 = vrot.lane.b32.xlu0 %v3678, 64
        %v4377 = vpop.permute.xlu0 %4376
        %4378 = vrot.lane.b32.xlu0 %v3679, 64
        %v4379 = vpop.permute.xlu0 %4378
        %4380 = vrot.lane.b32.xlu0 %v3681, 64
        %v4381 = vpop.permute.xlu0 %4380
        %4382 = vrot.lane.b32.xlu0 %v3682, 64
        %v4383 = vpop.permute.xlu0 %4382
        %4384 = vrot.lane.b32.xlu0 %v3684, 64
        %v4385 = vpop.permute.xlu0 %4384
        %4386 = vrot.lane.b32.xlu0 %v3685, 64
        %v4387 = vpop.permute.xlu0 %4386
        %4388 = vrot.lane.b32.xlu0 %v3687, 64
        %v4389 = vpop.permute.xlu0 %4388
        %4390 = vrot.lane.b32.xlu0 %v3688, 64
        %v4391 = vpop.permute.xlu0 %4390
        %4392 = vrot.lane.b32.xlu0 %v3690, 64
        %v4393 = vpop.permute.xlu0 %4392
        %4394 = vrot.lane.b32.xlu0 %v3691, 64
        %v4395 = vpop.permute.xlu0 %4394
        %4396 = vrot.lane.b32.xlu0 %v3693, 64
        %v4397 = vpop.permute.xlu0 %4396
        %4398 = vrot.lane.b32.xlu0 %v3694, 64
        %v4399 = vpop.permute.xlu0 %4398
        %4400 = vrot.lane.b32.xlu0 %v3696, 64
        %v4401 = vpop.permute.xlu0 %4400
        %4402 = vrot.lane.b32.xlu0 %v3697, 64
        %v4403 = vpop.permute.xlu0 %4402
        %4404 = vrot.lane.b32.xlu0 %v3699, 64
        %v4405 = vpop.permute.xlu0 %4404
        %4406 = vrot.lane.b32.xlu0 %v3700, 64
        %v4407 = vpop.permute.xlu0 %4406
        %4408 = vrot.lane.b32.xlu0 %v3702, 64
        %v4409 = vpop.permute.xlu0 %4408
        %4410 = vrot.lane.b32.xlu0 %v3703, 64
        %v4411 = vpop.permute.xlu0 %4410
        %4412 = vrot.lane.b32.xlu0 %v3705, 64
        %v4413 = vpop.permute.xlu0 %4412
        %4414 = vrot.lane.b32.xlu0 %v3706, 64
        %v4415 = vpop.permute.xlu0 %4414
        %4416 = vrot.lane.b32.xlu0 %v3708, 64
        %v4417 = vpop.permute.xlu0 %4416
        %4418 = vrot.lane.b32.xlu0 %v3709, 64
        %v4419 = vpop.permute.xlu0 %4418
        %4420 = vrot.lane.b32.xlu0 %v3711, 64
        %v4421 = vpop.permute.xlu0 %4420
        %4422 = vrot.lane.b32.xlu0 %v3712, 64
        %v4423 = vpop.permute.xlu0 %4422
        %4424 = vrot.lane.b32.xlu0 %v3714, 64
        %v4425 = vpop.permute.xlu0 %4424
        %4426 = vrot.lane.b32.xlu0 %v3715, 64
        %v4427 = vpop.permute.xlu0 %4426
        %4428 = vrot.lane.b32.xlu0 %v3717, 64
        %v4429 = vpop.permute.xlu0 %4428
        %4430 = vrot.lane.b32.xlu0 %v3718, 64
        %v4431 = vpop.permute.xlu0 %4430
        %4432 = vrot.lane.b32.xlu0 %v3720, 64
        %v4433 = vpop.permute.xlu0 %4432
        %4434 = vrot.lane.b32.xlu0 %v3721, 64
        %v4435 = vpop.permute.xlu0 %4434
        %4436 = vrot.lane.b32.xlu0 %v3723, 64
        %v4437 = vpop.permute.xlu0 %4436
        %4438 = vrot.lane.b32.xlu0 %v3724, 64
        %v4439 = vpop.permute.xlu0 %4438
        %4472 = vrot.lane.b32.xlu0 %v3786, 96
        %v4473 = vpop.permute.xlu0 %4472
        %4474 = vrot.lane.b32.xlu0 %v3788, 96
        %v4475 = vpop.permute.xlu0 %4474
        %4476 = vrot.lane.b32.xlu0 %v3791, 96
        %v4477 = vpop.permute.xlu0 %4476
        %4478 = vrot.lane.b32.xlu0 %v3793, 96
        %v4479 = vpop.permute.xlu0 %4478
        %4480 = vrot.lane.b32.xlu0 %v3796, 96
        %v4481 = vpop.permute.xlu0 %4480
        %4482 = vrot.lane.b32.xlu0 %v3798, 96
        %v4483 = vpop.permute.xlu0 %4482
        %4484 = vrot.lane.b32.xlu0 %v3801, 96
        %v4485 = vpop.permute.xlu0 %4484
        %4486 = vrot.lane.b32.xlu0 %v3803, 96
        %v4487 = vpop.permute.xlu0 %4486
        %4488 = vrot.lane.b32.xlu0 %v3806, 96
        %v4489 = vpop.permute.xlu0 %4488
        %4490 = vrot.lane.b32.xlu0 %v3808, 96
        %v4491 = vpop.permute.xlu0 %4490
        %4492 = vrot.lane.b32.xlu0 %v3811, 96
        %v4493 = vpop.permute.xlu0 %4492
        %4494 = vrot.lane.b32.xlu0 %v3813, 96
        %v4495 = vpop.permute.xlu0 %4494
        %4496 = vrot.lane.b32.xlu0 %v3816, 96
        %v4497 = vpop.permute.xlu0 %4496
        %4498 = vrot.lane.b32.xlu0 %v3818, 96
        %v4499 = vpop.permute.xlu0 %4498
        %4500 = vrot.lane.b32.xlu0 %v3821, 96
        %v4501 = vpop.permute.xlu0 %4500
        %4502 = vrot.lane.b32.xlu0 %v3823, 96
        %v4503 = vpop.permute.xlu0 %4502
        %4504 = vrot.lane.b32.xlu0 %v3826, 96
        %v4505 = vpop.permute.xlu0 %4504
        %4506 = vrot.lane.b32.xlu0 %v3828, 96
        %v4507 = vpop.permute.xlu0 %4506
        %4508 = vrot.lane.b32.xlu0 %v3831, 96
        %v4509 = vpop.permute.xlu0 %4508
        %4510 = vrot.lane.b32.xlu0 %v3833, 96
        %v4511 = vpop.permute.xlu0 %4510
        %4512 = vrot.lane.b32.xlu0 %v3836, 96
        %v4513 = vpop.permute.xlu0 %4512
        %4514 = vrot.lane.b32.xlu0 %v3838, 96
        %v4515 = vpop.permute.xlu0 %4514
        %4516 = vrot.lane.b32.xlu0 %v3841, 96
        %v4517 = vpop.permute.xlu0 %4516
        %4518 = vrot.lane.b32.xlu0 %v3843, 96
        %v4519 = vpop.permute.xlu0 %4518
        %4520 = vrot.lane.b32.xlu0 %v3846, 96
        %v4521 = vpop.permute.xlu0 %4520
        %4522 = vrot.lane.b32.xlu0 %v3848, 96
        %v4523 = vpop.permute.xlu0 %4522
        %4524 = vrot.lane.b32.xlu0 %v3851, 96
        %v4525 = vpop.permute.xlu0 %4524
        %4526 = vrot.lane.b32.xlu0 %v3853, 96
        %v4527 = vpop.permute.xlu0 %4526
        %4528 = vrot.lane.b32.xlu0 %v3939, 96
        %v4529 = vpop.permute.xlu0 %4528
        %4530 = vrot.lane.b32.xlu0 %v3941, 96
        %v4531 = vpop.permute.xlu0 %4530
        %4532 = vrot.lane.b32.xlu0 %v3984, 96
        %v4533 = vpop.permute.xlu0 %4532
        %4534 = vrot.lane.b32.xlu0 %v3986, 96
        %v4535 = vpop.permute.xlu0 %4534
        %v4568 = vsel %vm331, %v3672, %v3993
        %v4569 = vsel %vm331, %v3673, %v3995
        %v4570 = vsel %vm331, %v3675, %v3997
        %v4571 = vsel %vm331, %v3676, %v3999
        %v4572 = vsel %vm331, %v3678, %v4001
        %v4573 = vsel %vm331, %v3679, %v4003
        %v4574 = vsel %vm331, %v3681, %v4005
        %v4575 = vsel %vm331, %v3682, %v4007
        %v4576 = vsel %vm331, %v3684, %v4009
        %v4577 = vsel %vm331, %v3685, %v4011
        %v4578 = vsel %vm331, %v3687, %v4013
        %v4579 = vsel %vm331, %v3688, %v4015
        %v4580 = vsel %vm331, %v3690, %v4017
        %v4581 = vsel %vm331, %v3691, %v4019
        %v4582 = vsel %vm331, %v3693, %v4021
        %v4583 = vsel %vm331, %v3694, %v4023
        %v4584 = vsel %vm331, %v3696, %v4025
        %v4585 = vsel %vm331, %v3697, %v4027
        %v4586 = vsel %vm331, %v3699, %v4029
        %v4587 = vsel %vm331, %v3700, %v4031
        %v4588 = vsel %vm331, %v3702, %v4033
        %v4589 = vsel %vm331, %v3703, %v4035
        %v4590 = vsel %vm331, %v3705, %v4037
        %v4591 = vsel %vm331, %v3706, %v4039
        %v4592 = vsel %vm331, %v3708, %v4041
        %v4593 = vsel %vm331, %v3709, %v4043
        %v4594 = vsel %vm331, %v3711, %v4045
        %v4595 = vsel %vm331, %v3712, %v4047
        %v4596 = vsel %vm331, %v3714, %v4049
        %v4597 = vsel %vm331, %v3715, %v4051
        %v4598 = vsel %vm331, %v3717, %v4053
        %v4599 = vsel %vm331, %v3718, %v4055
        %v4600 = vsel %vm3146, %v4568, %v4089
        %v4601 = vsel %vm3146, %v4569, %v4091
        %v4602 = vsel %vm3146, %v4570, %v4093
        %v4603 = vsel %vm3146, %v4571, %v4095
        %v4604 = vsel %vm3146, %v4572, %v4097
        %v4605 = vsel %vm3146, %v4573, %v4099
        %v4606 = vsel %vm3146, %v4574, %v4101
        %v4607 = vsel %vm3146, %v4575, %v4103
        %v4608 = vsel %vm3146, %v4576, %v4105
        %v4609 = vsel %vm3146, %v4577, %v4107
        %v4610 = vsel %vm3146, %v4578, %v4109
        %v4611 = vsel %vm3146, %v4579, %v4111
        %v4612 = vsel %vm3146, %v4580, %v4113
        %v4613 = vsel %vm3146, %v4581, %v4115
        %v4614 = vsel %vm3146, %v4582, %v4117
        %v4615 = vsel %vm3146, %v4583, %v4119
        %v4616 = vsel %vm3146, %v4584, %v4121
        %v4617 = vsel %vm3146, %v4585, %v4123
        %v4618 = vsel %vm3146, %v4586, %v4125
        %v4619 = vsel %vm3146, %v4587, %v4127
        %v4620 = vsel %vm3146, %v4588, %v4129
        %v4621 = vsel %vm3146, %v4589, %v4131
        %v4622 = vsel %vm3146, %v4590, %v4133
        %v4623 = vsel %vm3146, %v4591, %v4135
        %v4624 = vsel %vm3146, %v4592, %v4137
        %v4625 = vsel %vm3146, %v4593, %v4139
        %v4626 = vsel %vm3146, %v4594, %v4141
        %v4627 = vsel %vm3146, %v4595, %v4143
        %v4628 = vsel %vm3146, %v4596, %v4145
        %v4629 = vsel %vm3146, %v4597, %v4147
        %v4630 = vsel %vm3146, %v4598, %v4149
        %v4631 = vsel %vm3146, %v4599, %v4151
        %v4632 = vsel %vm3212, %v4600, %v4185
        %v4633 = vsel %vm3212, %v4601, %v4187
        %v4634 = vsel %vm3212, %v4602, %v4189
        %v4635 = vsel %vm3212, %v4603, %v4191
        %v4636 = vsel %vm3212, %v4604, %v4193
        %v4637 = vsel %vm3212, %v4605, %v4195
        %v4638 = vsel %vm3212, %v4606, %v4197
        %v4639 = vsel %vm3212, %v4607, %v4199
        %v4640 = vsel %vm3212, %v4608, %v4201
        %v4641 = vsel %vm3212, %v4609, %v4203
        %v4642 = vsel %vm3212, %v4610, %v4205
        %v4643 = vsel %vm3212, %v4611, %v4207
        %v4644 = vsel %vm3212, %v4612, %v4209
        %v4645 = vsel %vm3212, %v4613, %v4211
        %v4646 = vsel %vm3212, %v4614, %v4213
        %v4647 = vsel %vm3212, %v4615, %v4215
        %v4648 = vsel %vm3212, %v4616, %v4217
        %v4649 = vsel %vm3212, %v4617, %v4219
        %v4650 = vsel %vm3212, %v4618, %v4221
        %v4651 = vsel %vm3212, %v4619, %v4223
        %v4652 = vsel %vm3212, %v4620, %v4225
        %v4653 = vsel %vm3212, %v4621, %v4227
        %v4654 = vsel %vm3212, %v4622, %v4229
        %v4655 = vsel %vm3212, %v4623, %v4231
        %v4656 = vsel %vm3212, %v4624, %v4233
        %v4657 = vsel %vm3212, %v4625, %v4235
        %v4658 = vsel %vm3212, %v4626, %v4237
        %v4659 = vsel %vm3212, %v4627, %v4239
        %v4660 = vsel %vm3212, %v4628, %v4241
        %v4661 = vsel %vm3212, %v4629, %v4243
        %v4662 = vsel %vm3212, %v4630, %v4245
        %v4663 = vsel %vm3212, %v4631, %v4247
        %v4664 = vsel %vm331, %v3781, %v4281
        %v4665 = vsel %vm331, %v3783, %v4283
        %v4666 = vsel %vm331, %v3786, %v4285
        %v4667 = vsel %vm331, %v3788, %v4287
        %v4668 = vsel %vm331, %v3791, %v4289
        %v4669 = vsel %vm331, %v3793, %v4291
        %v4670 = vsel %vm331, %v3796, %v4293
        %v4671 = vsel %vm331, %v3798, %v4295
        %v4672 = vsel %vm331, %v3801, %v4297
        %v4673 = vsel %vm331, %v3803, %v4299
        %v4674 = vsel %vm331, %v3806, %v4301
        %v4675 = vsel %vm331, %v3808, %v4303
        %v4676 = vsel %vm331, %v3811, %v4305
        %v4677 = vsel %vm331, %v3813, %v4307
        %v4678 = vsel %vm331, %v3816, %v4309
        %v4679 = vsel %vm331, %v3818, %v4311
        %v4680 = vsel %vm331, %v3821, %v4313
        %v4681 = vsel %vm331, %v3823, %v4315
        %v4682 = vsel %vm331, %v3826, %v4317
        %v4683 = vsel %vm331, %v3828, %v4319
        %v4684 = vsel %vm331, %v3831, %v4321
        %v4685 = vsel %vm331, %v3833, %v4323
        %v4686 = vsel %vm331, %v3836, %v4325
        %v4687 = vsel %vm331, %v3838, %v4327
        %v4688 = vsel %vm331, %v3841, %v4329
        %v4689 = vsel %vm331, %v3843, %v4331
        %v4690 = vsel %vm331, %v3846, %v4333
        %v4691 = vsel %vm331, %v3848, %v4335
        %v4692 = vsel %vm331, %v3851, %v4337
        %v4693 = vsel %vm331, %v3853, %v4339
        %v4694 = vsel %vm331, %v3939, %v4341
        %v4695 = vsel %vm331, %v3941, %v4343
        %v4696 = vsel %vm3146, %v4664, %v4377
        %v4697 = vsel %vm3146, %v4665, %v4379
        %v4698 = vsel %vm3146, %v4666, %v4381
        %v4699 = vsel %vm3146, %v4667, %v4383
        %v4700 = vsel %vm3146, %v4668, %v4385
        %v4701 = vsel %vm3146, %v4669, %v4387
        %v4702 = vsel %vm3146, %v4670, %v4389
        %v4703 = vsel %vm3146, %v4671, %v4391
        %v4704 = vsel %vm3146, %v4672, %v4393
        %v4705 = vsel %vm3146, %v4673, %v4395
        %v4706 = vsel %vm3146, %v4674, %v4397
        %v4707 = vsel %vm3146, %v4675, %v4399
        %v4708 = vsel %vm3146, %v4676, %v4401
        %v4709 = vsel %vm3146, %v4677, %v4403
        %v4710 = vsel %vm3146, %v4678, %v4405
        %v4711 = vsel %vm3146, %v4679, %v4407
        %v4712 = vsel %vm3146, %v4680, %v4409
        %v4713 = vsel %vm3146, %v4681, %v4411
        %v4714 = vsel %vm3146, %v4682, %v4413
        %v4715 = vsel %vm3146, %v4683, %v4415
        %v4716 = vsel %vm3146, %v4684, %v4417
        %v4717 = vsel %vm3146, %v4685, %v4419
        %v4718 = vsel %vm3146, %v4686, %v4421
        %v4719 = vsel %vm3146, %v4687, %v4423
        %v4720 = vsel %vm3146, %v4688, %v4425
        %v4721 = vsel %vm3146, %v4689, %v4427
        %v4722 = vsel %vm3146, %v4690, %v4429
        %v4723 = vsel %vm3146, %v4691, %v4431
        %v4724 = vsel %vm3146, %v4692, %v4433
        %v4725 = vsel %vm3146, %v4693, %v4435
        %v4726 = vsel %vm3146, %v4694, %v4437
        %v4727 = vsel %vm3146, %v4695, %v4439
        %v4728 = vsel %vm3212, %v4696, %v4473
        %v4729 = vsel %vm3212, %v4697, %v4475
        %v4730 = vsel %vm3212, %v4698, %v4477
        %v4731 = vsel %vm3212, %v4699, %v4479
        %v4732 = vsel %vm3212, %v4700, %v4481
        %v4733 = vsel %vm3212, %v4701, %v4483
        %v4734 = vsel %vm3212, %v4702, %v4485
        %v4735 = vsel %vm3212, %v4703, %v4487
        %v4736 = vsel %vm3212, %v4704, %v4489
        %v4737 = vsel %vm3212, %v4705, %v4491
        %v4738 = vsel %vm3212, %v4706, %v4493
        %v4739 = vsel %vm3212, %v4707, %v4495
        %v4740 = vsel %vm3212, %v4708, %v4497
        %v4741 = vsel %vm3212, %v4709, %v4499
        %v4742 = vsel %vm3212, %v4710, %v4501
        %v4743 = vsel %vm3212, %v4711, %v4503
        %v4744 = vsel %vm3212, %v4712, %v4505
        %v4745 = vsel %vm3212, %v4713, %v4507
        %v4746 = vsel %vm3212, %v4714, %v4509
        %v4747 = vsel %vm3212, %v4715, %v4511
        %v4748 = vsel %vm3212, %v4716, %v4513
        %v4749 = vsel %vm3212, %v4717, %v4515
        %v4750 = vsel %vm3212, %v4718, %v4517
        %v4751 = vsel %vm3212, %v4719, %v4519
        %v4752 = vsel %vm3212, %v4720, %v4521
        %v4753 = vsel %vm3212, %v4721, %v4523
        %v4754 = vsel %vm3212, %v4722, %v4525
        %v4755 = vsel %vm3212, %v4723, %v4527
        %v4756 = vsel %vm3212, %v4724, %v4529
        %v4757 = vsel %vm3212, %v4725, %v4531
        %v4758 = vsel %vm3212, %v4726, %v4533
        %v4759 = vsel %vm3212, %v4727, %v4535
        %v4761 = vperm.slane %v3671, 0
        %v4763 = vsel %vm331, %v3866, 0
        %v4765 = vsel %vm331, %v3868, 0
        %v4767 = vsel %vm331, %v3871, 0
        %v4769 = vsel %vm331, %v3873, 0
        %v4771 = vsel %vm331, %v3876, 0
        %v4773 = vsel %vm331, %v3878, 0
        %v4775 = vsel %vm331, %v3881, 0
        %v4777 = vsel %vm331, %v3883, 0
        %v4779 = vsel %vm331, %v3886, 0
        %v4781 = vsel %vm331, %v3888, 0
        %v4783 = vsel %vm331, %v3891, 0
        %v4785 = vsel %vm331, %v3893, 0
        %v4787 = vsel %vm331, %v3896, 0
        %v4789 = vsel %vm331, %v3898, 0
        %v4791 = vsel %vm331, %v3901, 0
        %v4793 = vsel %vm331, %v3903, 0
        %v4795 = vsel %vm331, %v3906, 0
        %v4797 = vsel %vm331, %v3908, 0
        %v4799 = vsel %vm331, %v3911, 0
        %v4801 = vsel %vm331, %v3913, 0
        %v4803 = vsel %vm331, %v3916, 0
        %v4805 = vsel %vm331, %v3918, 0
        %v4807 = vsel %vm331, %v3921, 0
        %v4809 = vsel %vm331, %v3923, 0
        %v4811 = vsel %vm331, %v3926, 0
        %v4813 = vsel %vm331, %v3928, 0
        %v4815 = vsel %vm331, %v3931, 0
        %v4817 = vsel %vm331, %v3933, 0
        %v4819 = vsel %vm331, %v3976, 0
        %v4821 = vsel %vm331, %v3978, 0
        %v4823 = vsel %vm331, %v3989, 0
        %v4825 = vsel %vm331, %v3991, 0
        %4827 = vmatpush.msra.mxu0 %v3650
        %4828 = vmatpush.msra.mxu0 %v3649
        %4829 = vmatpush.msra.mxu0 %v3648
        %4830 = vmatpush.msra.mxu0 %v3647
        %4831 = vmatpush.msra.mxu0 %v3646
        %4832 = vmatpush.msra.mxu0 %v3645
        %4833 = vmatpush.msra.mxu0 %v3644
        %4834 = vmatpush.msra.mxu0 %v3643
        %4835 = vmatpush.msra.mxu0 %v3642
        %4836 = vmatpush.msra.mxu0 %v3641
        %4837 = vmatpush.msra.mxu0 %v3640
        %4838 = vmatpush.msra.mxu0 %v3639
        %4839 = vmatpush.msra.mxu0 %v3638
        %4840 = vmatpush.msra.mxu0 %v3637
        %4841 = vmatpush.msra.mxu0 %v3636
        %4842 = vmatpush.msra.mxu0 %v3635
        %4843 = vmatmul.f32.gmra.mxu0 %v4632
        %v4844 = vpop.f32.mrf.mxu0
        %v4845 = vadd.f32 %v4761, %v4844
        %4846 = vmatmul.f32.gmra.mxu0 %v4633
        %v4847 = vpop.f32.mrf.mxu0
        %v4848 = vadd.f32 %v4761, %v4847
        %4849 = vmatmul.f32.gmra.mxu0 %v4634
        %v4850 = vpop.f32.mrf.mxu0
        %v4851 = vadd.f32 %v4761, %v4850
        %4852 = vmatmul.f32.gmra.mxu0 %v4635
        %v4853 = vpop.f32.mrf.mxu0
        %v4854 = vadd.f32 %v4761, %v4853
        %4855 = vmatmul.f32.gmra.mxu0 %v4636
        %v4856 = vpop.f32.mrf.mxu0
        %v4857 = vadd.f32 %v4761, %v4856
        %4858 = vmatmul.f32.gmra.mxu0 %v4637
        %v4859 = vpop.f32.mrf.mxu0
        %v4860 = vadd.f32 %v4761, %v4859
        %4861 = vmatmul.f32.gmra.mxu0 %v4638
        %v4862 = vpop.f32.mrf.mxu0
        %v4863 = vadd.f32 %v4761, %v4862
        %4864 = vmatmul.f32.gmra.mxu0 %v4639
        %v4865 = vpop.f32.mrf.mxu0
        %v4866 = vadd.f32 %v4761, %v4865
        %4867 = vmatmul.f32.gmra.mxu0 %v4640
        %v4868 = vpop.f32.mrf.mxu0
        %v4869 = vadd.f32 %v4761, %v4868
        %4870 = vmatmul.f32.gmra.mxu0 %v4641
        %v4871 = vpop.f32.mrf.mxu0
        %v4872 = vadd.f32 %v4761, %v4871
        %4873 = vmatmul.f32.gmra.mxu0 %v4642
        %v4874 = vpop.f32.mrf.mxu0
        %v4875 = vadd.f32 %v4761, %v4874
        %4876 = vmatmul.f32.gmra.mxu0 %v4643
        %v4877 = vpop.f32.mrf.mxu0
        %v4878 = vadd.f32 %v4761, %v4877
        %4879 = vmatmul.f32.gmra.mxu0 %v4644
        %v4880 = vpop.f32.mrf.mxu0
        %v4881 = vadd.f32 %v4761, %v4880
        %4882 = vmatmul.f32.gmra.mxu0 %v4645
        %v4883 = vpop.f32.mrf.mxu0
        %v4884 = vadd.f32 %v4761, %v4883
        %4885 = vmatmul.f32.gmra.mxu0 %v4646
        %v4886 = vpop.f32.mrf.mxu0
        %v4887 = vadd.f32 %v4761, %v4886
        %4888 = vmatmul.f32.gmra.mxu0 %v4647
        %v4889 = vpop.f32.mrf.mxu0
        %v4890 = vadd.f32 %v4761, %v4889
        %4891 = vmatmul.f32.gmra.mxu0 %v4648
        %v4892 = vpop.f32.mrf.mxu0
        %v4893 = vadd.f32 %v4761, %v4892
        %4894 = vmatmul.f32.gmra.mxu0 %v4649
        %v4895 = vpop.f32.mrf.mxu0
        %v4896 = vadd.f32 %v4761, %v4895
        %4897 = vmatmul.f32.gmra.mxu0 %v4650
        %v4898 = vpop.f32.mrf.mxu0
        %v4899 = vadd.f32 %v4761, %v4898
        %4900 = vmatmul.f32.gmra.mxu0 %v4651
        %v4901 = vpop.f32.mrf.mxu0
        %v4902 = vadd.f32 %v4761, %v4901
        %4903 = vmatmul.f32.gmra.mxu0 %v4652
        %v4904 = vpop.f32.mrf.mxu0
        %v4905 = vadd.f32 %v4761, %v4904
        %4906 = vmatmul.f32.gmra.mxu0 %v4653
        %v4907 = vpop.f32.mrf.mxu0
        %v4908 = vadd.f32 %v4761, %v4907
        %4909 = vmatmul.f32.gmra.mxu0 %v4654
        %v4910 = vpop.f32.mrf.mxu0
        %v4911 = vadd.f32 %v4761, %v4910
        %4912 = vmatmul.f32.gmra.mxu0 %v4655
        %v4913 = vpop.f32.mrf.mxu0
        %v4914 = vadd.f32 %v4761, %v4913
        %4915 = vmatmul.f32.gmra.mxu0 %v4656
        %v4916 = vpop.f32.mrf.mxu0
        %v4917 = vadd.f32 %v4761, %v4916
        %4918 = vmatmul.f32.gmra.mxu0 %v4657
        %v4919 = vpop.f32.mrf.mxu0
        %v4920 = vadd.f32 %v4761, %v4919
        %4921 = vmatmul.f32.gmra.mxu0 %v4658
        %v4922 = vpop.f32.mrf.mxu0
        %v4923 = vadd.f32 %v4761, %v4922
        %4924 = vmatmul.f32.gmra.mxu0 %v4659
        %v4925 = vpop.f32.mrf.mxu0
        %v4926 = vadd.f32 %v4761, %v4925
        %4927 = vmatmul.f32.gmra.mxu0 %v4660
        %v4928 = vpop.f32.mrf.mxu0
        %v4929 = vadd.f32 %v4761, %v4928
        %4930 = vmatmul.f32.gmra.mxu0 %v4661
        %v4931 = vpop.f32.mrf.mxu0
        %v4932 = vadd.f32 %v4761, %v4931
        %4933 = vmatmul.f32.gmra.mxu0 %v4662
        %v4934 = vpop.f32.mrf.mxu0
        %v4935 = vadd.f32 %v4761, %v4934
        %4936 = vmatmul.f32.gmra.mxu0 %v4663
        %v4937 = vpop.f32.mrf.mxu0
        %v4938 = vadd.f32 %v4761, %v4937
        %4939 = vdwg.mxu0
        %4940 = vmatpush.msra.mxu0 %v3666
        %4941 = vmatpush.msra.mxu0 %v3665
        %4942 = vmatpush.msra.mxu0 %v3664
        %4943 = vmatpush.msra.mxu0 %v3663
        %4944 = vmatpush.msra.mxu0 %v3662
        %4945 = vmatpush.msra.mxu0 %v3661
        %4946 = vmatpush.msra.mxu0 %v3660
        %4947 = vmatpush.msra.mxu0 %v3659
        %4948 = vmatpush.msra.mxu0 %v3658
        %4949 = vmatpush.msra.mxu0 %v3657
        %4950 = vmatpush.msra.mxu0 %v3656
        %4951 = vmatpush.msra.mxu0 %v3655
        %4952 = vmatpush.msra.mxu0 %v3654
        %4953 = vmatpush.msra.mxu0 %v3653
        %4954 = vmatpush.msra.mxu0 %v3652
        %4955 = vmatpush.msra.mxu0 %v3651
        %4956 = vmatmul.f32.gmra.mxu0 %v4728
        %v4957 = vpop.f32.mrf.mxu0
        %v4958 = vadd.f32 %v4845, %v4957
        %4959 = vmatmul.f32.gmra.mxu0 %v4729
        %v4960 = vpop.f32.mrf.mxu0
        %v4961 = vadd.f32 %v4848, %v4960
        %4962 = vmatmul.f32.gmra.mxu0 %v4730
        %v4963 = vpop.f32.mrf.mxu0
        %v4964 = vadd.f32 %v4851, %v4963
        %4965 = vmatmul.f32.gmra.mxu0 %v4731
        %v4966 = vpop.f32.mrf.mxu0
        %v4967 = vadd.f32 %v4854, %v4966
        %4968 = vmatmul.f32.gmra.mxu0 %v4732
        %v4969 = vpop.f32.mrf.mxu0
        %v4970 = vadd.f32 %v4857, %v4969
        %4971 = vmatmul.f32.gmra.mxu0 %v4733
        %v4972 = vpop.f32.mrf.mxu0
        %v4973 = vadd.f32 %v4860, %v4972
        %4974 = vmatmul.f32.gmra.mxu0 %v4734
        %v4975 = vpop.f32.mrf.mxu0
        %v4976 = vadd.f32 %v4863, %v4975
        %4977 = vmatmul.f32.gmra.mxu0 %v4735
        %v4978 = vpop.f32.mrf.mxu0
        %v4979 = vadd.f32 %v4866, %v4978
        %4980 = vmatmul.f32.gmra.mxu0 %v4736
        %v4981 = vpop.f32.mrf.mxu0
        %v4982 = vadd.f32 %v4869, %v4981
        %4983 = vmatmul.f32.gmra.mxu0 %v4737
        %v4984 = vpop.f32.mrf.mxu0
        %v4985 = vadd.f32 %v4872, %v4984
        %4986 = vmatmul.f32.gmra.mxu0 %v4738
        %v4987 = vpop.f32.mrf.mxu0
        %v4988 = vadd.f32 %v4875, %v4987
        %4989 = vmatmul.f32.gmra.mxu0 %v4739
        %v4990 = vpop.f32.mrf.mxu0
        %v4991 = vadd.f32 %v4878, %v4990
        %4992 = vmatmul.f32.gmra.mxu0 %v4740
        %v4993 = vpop.f32.mrf.mxu0
        %v4994 = vadd.f32 %v4881, %v4993
        %4995 = vmatmul.f32.gmra.mxu0 %v4741
        %v4996 = vpop.f32.mrf.mxu0
        %v4997 = vadd.f32 %v4884, %v4996
        %4998 = vmatmul.f32.gmra.mxu0 %v4742
        %v4999 = vpop.f32.mrf.mxu0
        %v5000 = vadd.f32 %v4887, %v4999
        %5001 = vmatmul.f32.gmra.mxu0 %v4743
        %v5002 = vpop.f32.mrf.mxu0
        %v5003 = vadd.f32 %v4890, %v5002
        %5004 = vmatmul.f32.gmra.mxu0 %v4744
        %v5005 = vpop.f32.mrf.mxu0
        %v5006 = vadd.f32 %v4893, %v5005
        %5007 = vmatmul.f32.gmra.mxu0 %v4745
        %v5008 = vpop.f32.mrf.mxu0
        %v5009 = vadd.f32 %v4896, %v5008
        %5010 = vmatmul.f32.gmra.mxu0 %v4746
        %v5011 = vpop.f32.mrf.mxu0
        %v5012 = vadd.f32 %v4899, %v5011
        %5013 = vmatmul.f32.gmra.mxu0 %v4747
        %v5014 = vpop.f32.mrf.mxu0
        %v5015 = vadd.f32 %v4902, %v5014
        %5016 = vmatmul.f32.gmra.mxu0 %v4748
        %v5017 = vpop.f32.mrf.mxu0
        %v5018 = vadd.f32 %v4905, %v5017
        %5019 = vmatmul.f32.gmra.mxu0 %v4749
        %v5020 = vpop.f32.mrf.mxu0
        %v5021 = vadd.f32 %v4908, %v5020
        %5022 = vmatmul.f32.gmra.mxu0 %v4750
        %v5023 = vpop.f32.mrf.mxu0
        %v5024 = vadd.f32 %v4911, %v5023
        %5025 = vmatmul.f32.gmra.mxu0 %v4751
        %v5026 = vpop.f32.mrf.mxu0
        %v5027 = vadd.f32 %v4914, %v5026
        %5028 = vmatmul.f32.gmra.mxu0 %v4752
        %v5029 = vpop.f32.mrf.mxu0
        %v5030 = vadd.f32 %v4917, %v5029
        %5031 = vmatmul.f32.gmra.mxu0 %v4753
        %v5032 = vpop.f32.mrf.mxu0
        %v5033 = vadd.f32 %v4920, %v5032
        %5034 = vmatmul.f32.gmra.mxu0 %v4754
        %v5035 = vpop.f32.mrf.mxu0
        %v5036 = vadd.f32 %v4923, %v5035
        %5037 = vmatmul.f32.gmra.mxu0 %v4755
        %v5038 = vpop.f32.mrf.mxu0
        %v5039 = vadd.f32 %v4926, %v5038
        %5040 = vmatmul.f32.gmra.mxu0 %v4756
        %v5041 = vpop.f32.mrf.mxu0
        %v5042 = vadd.f32 %v4929, %v5041
        %5043 = vmatmul.f32.gmra.mxu0 %v4757
        %v5044 = vpop.f32.mrf.mxu0
        %v5045 = vadd.f32 %v4932, %v5044
        %5046 = vmatmul.f32.gmra.mxu0 %v4758
        %v5047 = vpop.f32.mrf.mxu0
        %v5048 = vadd.f32 %v4935, %v5047
        %5049 = vmatmul.f32.gmra.mxu0 %v4759
        %v5050 = vpop.f32.mrf.mxu0
        %v5051 = vadd.f32 %v4938, %v5050
        %5052 = vdwg.mxu0
        %5053 = vmatpush.msra.mxu0 0.0
        %5054 = vmatpush.msra.mxu0 0.0
        %5055 = vmatpush.msra.mxu0 0.0
        %5056 = vmatpush.msra.mxu0 0.0
        %5057 = vmatpush.msra.mxu0 0.0
        %5058 = vmatpush.msra.mxu0 0.0
        %5059 = vmatpush.msra.mxu0 0.0
        %5060 = vmatpush.msra.mxu0 0.0
        %5061 = vmatpush.msra.mxu0 0.0
        %5062 = vmatpush.msra.mxu0 0.0
        %5063 = vmatpush.msra.mxu0 0.0
        %5064 = vmatpush.msra.mxu0 0.0
        %5065 = vmatpush.msra.mxu0 %v3670
        %5066 = vmatpush.msra.mxu0 %v3669
        %5067 = vmatpush.msra.mxu0 %v3668
        %5068 = vmatpush.msra.mxu0 %v3667
        %5069 = vmatmul.f32.gmra.mxu0 %v4763
        %v5070 = vpop.f32.mrf.mxu0
        %v5071 = vadd.f32 %v4958, %v5070
        %5072 = vmatmul.f32.gmra.mxu0 %v4765
        %v5073 = vpop.f32.mrf.mxu0
        %v5074 = vadd.f32 %v4961, %v5073
        %5075 = vmatmul.f32.gmra.mxu0 %v4767
        %v5076 = vpop.f32.mrf.mxu0
        %v5077 = vadd.f32 %v4964, %v5076
        %5078 = vmatmul.f32.gmra.mxu0 %v4769
        %v5079 = vpop.f32.mrf.mxu0
        %v5080 = vadd.f32 %v4967, %v5079
        %5081 = vmatmul.f32.gmra.mxu0 %v4771
        %v5082 = vpop.f32.mrf.mxu0
        %v5083 = vadd.f32 %v4970, %v5082
        %5084 = vmatmul.f32.gmra.mxu0 %v4773
        %v5085 = vpop.f32.mrf.mxu0
        %v5086 = vadd.f32 %v4973, %v5085
        %5087 = vmatmul.f32.gmra.mxu0 %v4775
        %v5088 = vpop.f32.mrf.mxu0
        %v5089 = vadd.f32 %v4976, %v5088
        %5090 = vmatmul.f32.gmra.mxu0 %v4777
        %v5091 = vpop.f32.mrf.mxu0
        %v5092 = vadd.f32 %v4979, %v5091
        %5093 = vmatmul.f32.gmra.mxu0 %v4779
        %v5094 = vpop.f32.mrf.mxu0
        %v5095 = vadd.f32 %v4982, %v5094
        %5096 = vmatmul.f32.gmra.mxu0 %v4781
        %v5097 = vpop.f32.mrf.mxu0
        %v5098 = vadd.f32 %v4985, %v5097
        %5099 = vmatmul.f32.gmra.mxu0 %v4783
        %v5100 = vpop.f32.mrf.mxu0
        %v5101 = vadd.f32 %v4988, %v5100
        %5102 = vmatmul.f32.gmra.mxu0 %v4785
        %v5103 = vpop.f32.mrf.mxu0
        %v5104 = vadd.f32 %v4991, %v5103
        %5105 = vmatmul.f32.gmra.mxu0 %v4787
        %v5106 = vpop.f32.mrf.mxu0
        %v5107 = vadd.f32 %v4994, %v5106
        %5108 = vmatmul.f32.gmra.mxu0 %v4789
        %v5109 = vpop.f32.mrf.mxu0
        %v5110 = vadd.f32 %v4997, %v5109
        %5111 = vmatmul.f32.gmra.mxu0 %v4791
        %v5112 = vpop.f32.mrf.mxu0
        %v5113 = vadd.f32 %v5000, %v5112
        %5114 = vmatmul.f32.gmra.mxu0 %v4793
        %v5115 = vpop.f32.mrf.mxu0
        %v5116 = vadd.f32 %v5003, %v5115
        %5117 = vmatmul.f32.gmra.mxu0 %v4795
        %v5118 = vpop.f32.mrf.mxu0
        %v5119 = vadd.f32 %v5006, %v5118
        %5120 = vmatmul.f32.gmra.mxu0 %v4797
        %v5121 = vpop.f32.mrf.mxu0
        %v5122 = vadd.f32 %v5009, %v5121
        %5123 = vmatmul.f32.gmra.mxu0 %v4799
        %v5124 = vpop.f32.mrf.mxu0
        %v5125 = vadd.f32 %v5012, %v5124
        %5126 = vmatmul.f32.gmra.mxu0 %v4801
        %v5127 = vpop.f32.mrf.mxu0
        %v5128 = vadd.f32 %v5015, %v5127
        %5129 = vmatmul.f32.gmra.mxu0 %v4803
        %v5130 = vpop.f32.mrf.mxu0
        %v5131 = vadd.f32 %v5018, %v5130
        %5132 = vmatmul.f32.gmra.mxu0 %v4805
        %v5133 = vpop.f32.mrf.mxu0
        %v5134 = vadd.f32 %v5021, %v5133
        %5135 = vmatmul.f32.gmra.mxu0 %v4807
        %v5136 = vpop.f32.mrf.mxu0
        %v5137 = vadd.f32 %v5024, %v5136
        %5138 = vmatmul.f32.gmra.mxu0 %v4809
        %v5139 = vpop.f32.mrf.mxu0
        %v5140 = vadd.f32 %v5027, %v5139
        %5141 = vmatmul.f32.gmra.mxu0 %v4811
        %v5142 = vpop.f32.mrf.mxu0
        %v5143 = vadd.f32 %v5030, %v5142
        %5144 = vmatmul.f32.gmra.mxu0 %v4813
        %v5145 = vpop.f32.mrf.mxu0
        %v5146 = vadd.f32 %v5033, %v5145
        %5147 = vmatmul.f32.gmra.mxu0 %v4815
        %v5148 = vpop.f32.mrf.mxu0
        %v5149 = vadd.f32 %v5036, %v5148
        %5150 = vmatmul.f32.gmra.mxu0 %v4817
        %v5151 = vpop.f32.mrf.mxu0
        %v5152 = vadd.f32 %v5039, %v5151
        %5153 = vmatmul.f32.gmra.mxu0 %v4819
        %v5154 = vpop.f32.mrf.mxu0
        %v5155 = vadd.f32 %v5042, %v5154
        %5156 = vmatmul.f32.gmra.mxu0 %v4821
        %v5157 = vpop.f32.mrf.mxu0
        %v5158 = vadd.f32 %v5045, %v5157
        %5159 = vmatmul.f32.gmra.mxu0 %v4823
        %v5160 = vpop.f32.mrf.mxu0
        %v5161 = vadd.f32 %v5048, %v5160
        %5162 = vmatmul.f32.gmra.mxu0 %v4825
        %v5163 = vpop.f32.mrf.mxu0
        %v5164 = vadd.f32 %v5051, %v5163
        %5165 = vdwg.mxu0
        %v5166 = vmax.f32 %v5071, 0.0
        %v5167 = vmax.f32 %v5074, 0.0
        %v5168 = vmax.f32 %v5077, 0.0
        %v5169 = vmax.f32 %v5080, 0.0
        %v5170 = vmax.f32 %v5083, 0.0
        %v5171 = vmax.f32 %v5086, 0.0
        %v5172 = vmax.f32 %v5089, 0.0
        %v5173 = vmax.f32 %v5092, 0.0
        %v5174 = vmax.f32 %v5095, 0.0
        %v5175 = vmax.f32 %v5098, 0.0
        %v5176 = vmax.f32 %v5101, 0.0
        %v5177 = vmax.f32 %v5104, 0.0
        %v5178 = vmax.f32 %v5107, 0.0
        %v5179 = vmax.f32 %v5110, 0.0
        %v5180 = vmax.f32 %v5113, 0.0
        %v5181 = vmax.f32 %v5116, 0.0
        %v5182 = vmax.f32 %v5119, 0.0
        %v5183 = vmax.f32 %v5122, 0.0
        %v5184 = vmax.f32 %v5125, 0.0
        %v5185 = vmax.f32 %v5128, 0.0
        %v5186 = vmax.f32 %v5131, 0.0
        %v5187 = vmax.f32 %v5134, 0.0
        %v5188 = vmax.f32 %v5137, 0.0
        %v5189 = vmax.f32 %v5140, 0.0
        %v5190 = vmax.f32 %v5143, 0.0
        %v5191 = vmax.f32 %v5146, 0.0
        %v5192 = vmax.f32 %v5149, 0.0
        %v5193 = vmax.f32 %v5152, 0.0
        %v5194 = vmax.f32 %v5155, 0.0
        %v5195 = vmax.f32 %v5158, 0.0
        %v5196 = vmax.f32 %v5161, 0.0
        %v5197 = vmax.f32 %v5164, 0.0
        %5230 = vrot.lane.b32.xlu0 %v5166, 2
        %v5231 = vpop.permute.xlu0 %5230
        %5232 = vrot.lane.b32.xlu0 %v5167, 2
        %v5233 = vpop.permute.xlu0 %5232
        %5234 = vrot.lane.b32.xlu0 %v5168, 2
        %v5235 = vpop.permute.xlu0 %5234
        %5236 = vrot.lane.b32.xlu0 %v5169, 2
        %v5237 = vpop.permute.xlu0 %5236
        %5238 = vrot.lane.b32.xlu0 %v5170, 2
        %v5239 = vpop.permute.xlu0 %5238
        %5240 = vrot.lane.b32.xlu0 %v5171, 2
        %v5241 = vpop.permute.xlu0 %5240
        %5242 = vrot.lane.b32.xlu0 %v5172, 2
        %v5243 = vpop.permute.xlu0 %5242
        %5244 = vrot.lane.b32.xlu0 %v5173, 2
        %v5245 = vpop.permute.xlu0 %5244
        %5246 = vrot.lane.b32.xlu0 %v5174, 2
        %v5247 = vpop.permute.xlu0 %5246
        %5248 = vrot.lane.b32.xlu0 %v5175, 2
        %v5249 = vpop.permute.xlu0 %5248
        %5250 = vrot.lane.b32.xlu0 %v5176, 2
        %v5251 = vpop.permute.xlu0 %5250
        %5252 = vrot.lane.b32.xlu0 %v5177, 2
        %v5253 = vpop.permute.xlu0 %5252
        %5254 = vrot.lane.b32.xlu0 %v5178, 2
        %v5255 = vpop.permute.xlu0 %5254
        %5256 = vrot.lane.b32.xlu0 %v5179, 2
        %v5257 = vpop.permute.xlu0 %5256
        %5258 = vrot.lane.b32.xlu0 %v5180, 2
        %v5259 = vpop.permute.xlu0 %5258
        %5260 = vrot.lane.b32.xlu0 %v5181, 2
        %v5261 = vpop.permute.xlu0 %5260
        %5262 = vrot.lane.b32.xlu0 %v5182, 2
        %v5263 = vpop.permute.xlu0 %5262
        %5264 = vrot.lane.b32.xlu0 %v5183, 2
        %v5265 = vpop.permute.xlu0 %5264
        %5266 = vrot.lane.b32.xlu0 %v5184, 2
        %v5267 = vpop.permute.xlu0 %5266
        %5268 = vrot.lane.b32.xlu0 %v5185, 2
        %v5269 = vpop.permute.xlu0 %5268
        %5270 = vrot.lane.b32.xlu0 %v5186, 2
        %v5271 = vpop.permute.xlu0 %5270
        %5272 = vrot.lane.b32.xlu0 %v5187, 2
        %v5273 = vpop.permute.xlu0 %5272
        %5274 = vrot.lane.b32.xlu0 %v5188, 2
        %v5275 = vpop.permute.xlu0 %5274
        %5276 = vrot.lane.b32.xlu0 %v5189, 2
        %v5277 = vpop.permute.xlu0 %5276
        %5278 = vrot.lane.b32.xlu0 %v5190, 2
        %v5279 = vpop.permute.xlu0 %5278
        %5280 = vrot.lane.b32.xlu0 %v5191, 2
        %v5281 = vpop.permute.xlu0 %5280
        %5282 = vrot.lane.b32.xlu0 %v5192, 2
        %v5283 = vpop.permute.xlu0 %5282
        %5284 = vrot.lane.b32.xlu0 %v5193, 2
        %v5285 = vpop.permute.xlu0 %5284
        %5286 = vrot.lane.b32.xlu0 %v5194, 2
        %v5287 = vpop.permute.xlu0 %5286
        %5288 = vrot.lane.b32.xlu0 %v5195, 2
        %v5289 = vpop.permute.xlu0 %5288
        %5290 = vrot.lane.b32.xlu0 %v5196, 2
        %v5291 = vpop.permute.xlu0 %5290
        %5292 = vrot.lane.b32.xlu0 %v5197, 2
        %v5293 = vpop.permute.xlu0 %5292
        %vm5326 = vcmask 15360
        %v5327 = vsel %vm5326, %v387, %v5231
        %v5328 = vsel %vm5326, %v388, %v5233
        %v5329 = vsel %vm5326, %v389, %v5235
        %v5330 = vsel %vm5326, %v390, %v5237
        %v5331 = vsel %vm5326, %v391, %v5239
        %v5332 = vsel %vm5326, %v392, %v5241
        %v5333 = vsel %vm5326, %v393, %v5243
        %v5334 = vsel %vm5326, %v394, %v5245
        %v5335 = vsel %vm5326, %v395, %v5247
        %v5336 = vsel %vm5326, %v396, %v5249
        %v5337 = vsel %vm5326, %v397, %v5251
        %v5338 = vsel %vm5326, %v398, %v5253
        %v5339 = vsel %vm5326, %v399, %v5255
        %v5340 = vsel %vm5326, %v400, %v5257
        %v5341 = vsel %vm5326, %v401, %v5259
        %v5342 = vsel %vm5326, %v402, %v5261
        %v5343 = vsel %vm5326, %v403, %v5263
        %v5344 = vsel %vm5326, %v404, %v5265
        %v5345 = vsel %vm5326, %v405, %v5267
        %v5346 = vsel %vm5326, %v406, %v5269
        %v5347 = vsel %vm5326, %v407, %v5271
        %v5348 = vsel %vm5326, %v408, %v5273
        %v5349 = vsel %vm5326, %v409, %v5275
        %v5350 = vsel %vm5326, %v410, %v5277
        %v5351 = vsel %vm5326, %v411, %v5279
        %v5352 = vsel %vm5326, %v412, %v5281
        %v5353 = vsel %vm5326, %v413, %v5283
        %v5354 = vsel %vm5326, %v414, %v5285
        %v5355 = vsel %vm5326, %v415, %v5287
        %v5356 = vsel %vm5326, %v416, %v5289
        %v5357 = vsel %vm5326, %v417, %v5291
        %v5358 = vsel %vm5326, %v418, %v5293
        %vm5359 = vcmask 31744
        %5360 = vst.msk [vmem:[%s419 + $0x1] sm:$0xff] %vm5359, %v5327
        %5361 = vst.msk [vmem:[%s419 + $0x9] sm:$0xff] %vm5359, %v5328
        %5362 = vst.msk [vmem:[%s419 + $0x19] sm:$0xff] %vm5359, %v5329
        %5363 = vst.msk [vmem:[%s419 + $0x21] sm:$0xff] %vm5359, %v5330
        %5364 = vst.msk [vmem:[%s419 + $0x31] sm:$0xff] %vm5359, %v5331
        %5365 = vst.msk [vmem:[%s419 + $0x39] sm:$0xff] %vm5359, %v5332
        %5366 = vst.msk [vmem:[%s419 + $0x49] sm:$0xff] %vm5359, %v5333
        %5367 = vst.msk [vmem:[%s419 + $0x51] sm:$0xff] %vm5359, %v5334
        %5368 = vst.msk [vmem:[%s419 + $0x61] sm:$0xff] %vm5359, %v5335
        %5369 = vst.msk [vmem:[%s419 + $0x69] sm:$0xff] %vm5359, %v5336
        %5370 = vst.msk [vmem:[%s419 + $0x79] sm:$0xff] %vm5359, %v5337
        %5371 = vst.msk [vmem:[%s419 + $0x81] sm:$0xff] %vm5359, %v5338
        %5372 = vst.msk [vmem:[%s419 + $0x91] sm:$0xff] %vm5359, %v5339
        %5373 = vst.msk [vmem:[%s419 + $0x99] sm:$0xff] %vm5359, %v5340
        %5374 = vst.msk [vmem:[%s419 + $0xa9] sm:$0xff] %vm5359, %v5341
        %5375 = vst.msk [vmem:[%s419 + $0xb1] sm:$0xff] %vm5359, %v5342
        %5376 = vst.msk [vmem:[%s419 + $0xc1] sm:$0xff] %vm5359, %v5343
        %5377 = vst.msk [vmem:[%s419 + $0xc9] sm:$0xff] %vm5359, %v5344
        %5378 = vst.msk [vmem:[%s419 + $0xd9] sm:$0xff] %vm5359, %v5345
        %5379 = vst.msk [vmem:[%s419 + $0xe1] sm:$0xff] %vm5359, %v5346
        %5380 = vst.msk [vmem:[%s419 + $0xf1] sm:$0xff] %vm5359, %v5347
        %5381 = vst.msk [vmem:[%s419 + $0xf9] sm:$0xff] %vm5359, %v5348
        %5382 = vst.msk [vmem:[%s419 + $0x109] sm:$0xff] %vm5359, %v5349
        %5383 = vst.msk [vmem:[%s419 + $0x111] sm:$0xff] %vm5359, %v5350
        %5384 = vst.msk [vmem:[%s419 + $0x121] sm:$0xff] %vm5359, %v5351
        %5385 = vst.msk [vmem:[%s419 + $0x129] sm:$0xff] %vm5359, %v5352
        %5386 = vst.msk [vmem:[%s419 + $0x139] sm:$0xff] %vm5359, %v5353
        %5387 = vst.msk [vmem:[%s419 + $0x141] sm:$0xff] %vm5359, %v5354
        %5388 = vst.msk [vmem:[%s419 + $0x151] sm:$0xff] %vm5359, %v5355
        %5389 = vst.msk [vmem:[%s419 + $0x159] sm:$0xff] %vm5359, %v5356
        %5390 = vst.msk [vmem:[%s419 + $0x169] sm:$0xff] %vm5359, %v5357
        %5391 = vst.msk [vmem:[%s419 + $0x171] sm:$0xff] %vm5359, %v5358
        %v5392 = vld [vmem:[%s7] sm:$0xff]
        %v5393 = vld [vmem:[%s7 + $0x8] sm:$0xff]
        %v5394 = vld [vmem:[%s7 + $0x10] sm:$0xff]
        %v5395 = vld [vmem:[%s7 + $0x18] sm:$0xff]
        %v5396 = vld [vmem:[%s7 + $0x20] sm:$0xf]
        %v5397 = vld [vmem:[%s8] sm:$0x1]
        %v5398 = vld [vmem:[#allocation2] sm:$0xff]
        %v5399 = vld [vmem:[#allocation2 + $0x8] sm:$0xff]
        %v5400 = vld [vmem:[#allocation2 + $0x10] sm:$0x3]
        %v5401 = vld [vmem:[#allocation2 + $0x18] sm:$0xff]
        %v5402 = vld [vmem:[#allocation2 + $0x20] sm:$0xff]
        %v5403 = vld [vmem:[#allocation2 + $0x28] sm:$0x3]
        %v5404 = vld [vmem:[#allocation2 + $0x30] sm:$0xff]
        %v5405 = vld [vmem:[#allocation2 + $0x38] sm:$0xff]
        %v5406 = vld [vmem:[#allocation2 + $0x40] sm:$0x3]
        %v5407 = vld [vmem:[#allocation2 + $0x48] sm:$0xff]
        %v5408 = vld [vmem:[#allocation2 + $0x50] sm:$0xff]
        %v5409 = vld [vmem:[#allocation2 + $0x58] sm:$0x3]
        %v5410 = vld [vmem:[#allocation2 + $0x60] sm:$0xff]
        %v5411 = vld [vmem:[#allocation2 + $0x68] sm:$0xff]
        %v5412 = vld [vmem:[#allocation2 + $0x70] sm:$0x3]
        %v5413 = vld [vmem:[#allocation2 + $0x78] sm:$0xff]
        %v5414 = vld [vmem:[#allocation2 + $0x80] sm:$0xff]
        %v5415 = vld [vmem:[#allocation2 + $0x88] sm:$0x3]
        %v5416 = vld [vmem:[#allocation2 + $0x90] sm:$0xff]
        %v5417 = vld [vmem:[#allocation2 + $0x98] sm:$0xff]
        %v5418 = vld [vmem:[#allocation2 + $0xa0] sm:$0x3]
        %v5419 = vld [vmem:[#allocation2 + $0xa8] sm:$0xff]
        %v5420 = vld [vmem:[#allocation2 + $0xb0] sm:$0xff]
        %v5421 = vld [vmem:[#allocation2 + $0xb8] sm:$0x3]
        %v5422 = vld [vmem:[#allocation2 + $0xc0] sm:$0xff]
        %v5423 = vld [vmem:[#allocation2 + $0xc8] sm:$0xff]
        %v5424 = vld [vmem:[#allocation2 + $0xd0] sm:$0x3]
        %v5425 = vld [vmem:[#allocation2 + $0xd8] sm:$0xff]
        %v5426 = vld [vmem:[#allocation2 + $0xe0] sm:$0xff]
        %v5427 = vld [vmem:[#allocation2 + $0xe8] sm:$0x3]
        %v5428 = vld [vmem:[#allocation2 + $0xf0] sm:$0xff]
        %v5429 = vld [vmem:[#allocation2 + $0xf8] sm:$0xff]
        %v5430 = vld [vmem:[#allocation2 + $0x100] sm:$0x3]
        %v5431 = vld [vmem:[#allocation2 + $0x108] sm:$0xff]
        %v5432 = vld [vmem:[#allocation2 + $0x110] sm:$0xff]
        %v5433 = vld [vmem:[#allocation2 + $0x118] sm:$0x3]
        %v5434 = vld [vmem:[#allocation2 + $0x120] sm:$0xff]
        %v5435 = vld [vmem:[#allocation2 + $0x128] sm:$0xff]
        %v5436 = vld [vmem:[#allocation2 + $0x130] sm:$0x3]
        %v5437 = vld [vmem:[#allocation2 + $0x138] sm:$0xff]
        %v5438 = vld [vmem:[#allocation2 + $0x140] sm:$0xff]
        %v5439 = vld [vmem:[#allocation2 + $0x148] sm:$0x3]
        %v5440 = vld [vmem:[#allocation2 + $0x150] sm:$0xff]
        %v5441 = vld [vmem:[#allocation2 + $0x158] sm:$0xff]
        %v5442 = vld [vmem:[#allocation2 + $0x160] sm:$0x3]
        %v5443 = vld [vmem:[#allocation2 + $0x168] sm:$0xff]
        %v5444 = vld [vmem:[#allocation2 + $0x170] sm:$0xff]
        %v5445 = vld [vmem:[#allocation2 + $0x178] sm:$0x3]
        %v5446 = vld [vmem:[#allocation2 + $0x180] sm:$0xff]
        %v5447 = vld [vmem:[#allocation2 + $0x188] sm:$0xff]
        %v5448 = vld [vmem:[#allocation2 + $0x190] sm:$0x3]
        %v5449 = vld [vmem:[#allocation2 + $0x198] sm:$0xff]
        %v5450 = vld [vmem:[#allocation2 + $0x1a0] sm:$0xff]
        %v5451 = vld [vmem:[#allocation2 + $0x1a8] sm:$0x3]
        %v5500 = vrot.slane %v5398, 1
        %v5501 = vrot.slane %v5399, 1
        %v5502 = vsel %vm569, %v5500, %v5501
        %v5503 = vrot.slane %v5400, 1
        %v5504 = vsel %vm569, %v5501, %v5503
        %v5505 = vrot.slane %v5401, 1
        %v5506 = vrot.slane %v5402, 1
        %v5507 = vsel %vm569, %v5505, %v5506
        %v5508 = vrot.slane %v5403, 1
        %v5509 = vsel %vm569, %v5506, %v5508
        %v5510 = vrot.slane %v5404, 1
        %v5511 = vrot.slane %v5405, 1
        %v5512 = vsel %vm569, %v5510, %v5511
        %v5513 = vrot.slane %v5406, 1
        %v5514 = vsel %vm569, %v5511, %v5513
        %v5515 = vrot.slane %v5407, 1
        %v5516 = vrot.slane %v5408, 1
        %v5517 = vsel %vm569, %v5515, %v5516
        %v5518 = vrot.slane %v5409, 1
        %v5519 = vsel %vm569, %v5516, %v5518
        %v5520 = vrot.slane %v5410, 1
        %v5521 = vrot.slane %v5411, 1
        %v5522 = vsel %vm569, %v5520, %v5521
        %v5523 = vrot.slane %v5412, 1
        %v5524 = vsel %vm569, %v5521, %v5523
        %v5525 = vrot.slane %v5413, 1
        %v5526 = vrot.slane %v5414, 1
        %v5527 = vsel %vm569, %v5525, %v5526
        %v5528 = vrot.slane %v5415, 1
        %v5529 = vsel %vm569, %v5526, %v5528
        %v5530 = vrot.slane %v5416, 1
        %v5531 = vrot.slane %v5417, 1
        %v5532 = vsel %vm569, %v5530, %v5531
        %v5533 = vrot.slane %v5418, 1
        %v5534 = vsel %vm569, %v5531, %v5533
        %v5535 = vrot.slane %v5419, 1
        %v5536 = vrot.slane %v5420, 1
        %v5537 = vsel %vm569, %v5535, %v5536
        %v5538 = vrot.slane %v5421, 1
        %v5539 = vsel %vm569, %v5536, %v5538
        %v5540 = vrot.slane %v5422, 1
        %v5541 = vrot.slane %v5423, 1
        %v5542 = vsel %vm569, %v5540, %v5541
        %v5543 = vrot.slane %v5424, 1
        %v5544 = vsel %vm569, %v5541, %v5543
        %v5545 = vrot.slane %v5425, 1
        %v5546 = vrot.slane %v5426, 1
        %v5547 = vsel %vm569, %v5545, %v5546
        %v5548 = vrot.slane %v5427, 1
        %v5549 = vsel %vm569, %v5546, %v5548
        %v5550 = vrot.slane %v5428, 1
        %v5551 = vrot.slane %v5429, 1
        %v5552 = vsel %vm569, %v5550, %v5551
        %v5553 = vrot.slane %v5430, 1
        %v5554 = vsel %vm569, %v5551, %v5553
        %v5555 = vrot.slane %v5431, 1
        %v5556 = vrot.slane %v5432, 1
        %v5557 = vsel %vm569, %v5555, %v5556
        %v5558 = vrot.slane %v5433, 1
        %v5559 = vsel %vm569, %v5556, %v5558
        %v5560 = vrot.slane %v5434, 1
        %v5561 = vrot.slane %v5435, 1
        %v5562 = vsel %vm569, %v5560, %v5561
        %v5563 = vrot.slane %v5436, 1
        %v5564 = vsel %vm569, %v5561, %v5563
        %v5565 = vrot.slane %v5437, 1
        %v5566 = vrot.slane %v5438, 1
        %v5567 = vsel %vm569, %v5565, %v5566
        %v5568 = vrot.slane %v5439, 1
        %v5569 = vsel %vm569, %v5566, %v5568
        %v5570 = vrot.slane %v5440, 1
        %v5571 = vrot.slane %v5441, 1
        %v5572 = vsel %vm569, %v5570, %v5571
        %v5573 = vrot.slane %v5442, 1
        %v5574 = vsel %vm569, %v5571, %v5573
        %v5575 = vrot.slane %v5443, 1
        %v5576 = vrot.slane %v5444, 1
        %v5577 = vsel %vm569, %v5575, %v5576
        %v5578 = vrot.slane %v5445, 1
        %v5579 = vsel %vm569, %v5576, %v5578
        %v5580 = vrot.slane %v5398, 2
        %v5581 = vrot.slane %v5399, 2
        %v5582 = vsel %vm650, %v5580, %v5581
        %v5583 = vrot.slane %v5400, 2
        %v5584 = vsel %vm650, %v5581, %v5583
        %v5585 = vrot.slane %v5401, 2
        %v5586 = vrot.slane %v5402, 2
        %v5587 = vsel %vm650, %v5585, %v5586
        %v5588 = vrot.slane %v5403, 2
        %v5589 = vsel %vm650, %v5586, %v5588
        %v5590 = vrot.slane %v5404, 2
        %v5591 = vrot.slane %v5405, 2
        %v5592 = vsel %vm650, %v5590, %v5591
        %v5593 = vrot.slane %v5406, 2
        %v5594 = vsel %vm650, %v5591, %v5593
        %v5595 = vrot.slane %v5407, 2
        %v5596 = vrot.slane %v5408, 2
        %v5597 = vsel %vm650, %v5595, %v5596
        %v5598 = vrot.slane %v5409, 2
        %v5599 = vsel %vm650, %v5596, %v5598
        %v5600 = vrot.slane %v5410, 2
        %v5601 = vrot.slane %v5411, 2
        %v5602 = vsel %vm650, %v5600, %v5601
        %v5603 = vrot.slane %v5412, 2
        %v5604 = vsel %vm650, %v5601, %v5603
        %v5605 = vrot.slane %v5413, 2
        %v5606 = vrot.slane %v5414, 2
        %v5607 = vsel %vm650, %v5605, %v5606
        %v5608 = vrot.slane %v5415, 2
        %v5609 = vsel %vm650, %v5606, %v5608
        %v5610 = vrot.slane %v5416, 2
        %v5611 = vrot.slane %v5417, 2
        %v5612 = vsel %vm650, %v5610, %v5611
        %v5613 = vrot.slane %v5418, 2
        %v5614 = vsel %vm650, %v5611, %v5613
        %v5615 = vrot.slane %v5419, 2
        %v5616 = vrot.slane %v5420, 2
        %v5617 = vsel %vm650, %v5615, %v5616
        %v5618 = vrot.slane %v5421, 2
        %v5619 = vsel %vm650, %v5616, %v5618
        %v5620 = vrot.slane %v5422, 2
        %v5621 = vrot.slane %v5423, 2
        %v5622 = vsel %vm650, %v5620, %v5621
        %v5623 = vrot.slane %v5424, 2
        %v5624 = vsel %vm650, %v5621, %v5623
        %v5625 = vrot.slane %v5425, 2
        %v5626 = vrot.slane %v5426, 2
        %v5627 = vsel %vm650, %v5625, %v5626
        %v5628 = vrot.slane %v5427, 2
        %v5629 = vsel %vm650, %v5626, %v5628
        %v5630 = vrot.slane %v5428, 2
        %v5631 = vrot.slane %v5429, 2
        %v5632 = vsel %vm650, %v5630, %v5631
        %v5633 = vrot.slane %v5430, 2
        %v5634 = vsel %vm650, %v5631, %v5633
        %v5635 = vrot.slane %v5431, 2
        %v5636 = vrot.slane %v5432, 2
        %v5637 = vsel %vm650, %v5635, %v5636
        %v5638 = vrot.slane %v5433, 2
        %v5639 = vsel %vm650, %v5636, %v5638
        %v5640 = vrot.slane %v5434, 2
        %v5641 = vrot.slane %v5435, 2
        %v5642 = vsel %vm650, %v5640, %v5641
        %v5643 = vrot.slane %v5436, 2
        %v5644 = vsel %vm650, %v5641, %v5643
        %v5645 = vrot.slane %v5437, 2
        %v5646 = vrot.slane %v5438, 2
        %v5647 = vsel %vm650, %v5645, %v5646
        %v5648 = vrot.slane %v5439, 2
        %v5649 = vsel %vm650, %v5646, %v5648
        %v5650 = vrot.slane %v5440, 2
        %v5651 = vrot.slane %v5441, 2
        %v5652 = vsel %vm650, %v5650, %v5651
        %v5653 = vrot.slane %v5442, 2
        %v5654 = vsel %vm650, %v5651, %v5653
        %v5655 = vrot.slane %v5443, 2
        %v5656 = vrot.slane %v5444, 2
        %v5657 = vsel %vm650, %v5655, %v5656
        %v5658 = vrot.slane %v5445, 2
        %v5659 = vsel %vm650, %v5656, %v5658
        %v5663 = vrot.slane %v5446, 1
        %v5664 = vrot.slane %v5447, 1
        %v5665 = vsel %vm569, %v5663, %v5664
        %v5666 = vrot.slane %v5448, 1
        %v5667 = vsel %vm569, %v5664, %v5666
        %v5668 = vrot.slane %v5446, 2
        %v5669 = vrot.slane %v5447, 2
        %v5670 = vsel %vm650, %v5668, %v5669
        %v5671 = vrot.slane %v5448, 2
        %v5672 = vsel %vm650, %v5669, %v5671
        %v5676 = vrot.slane %v5449, 1
        %v5677 = vrot.slane %v5450, 1
        %v5678 = vsel %vm569, %v5676, %v5677
        %v5679 = vrot.slane %v5451, 1
        %v5680 = vsel %vm569, %v5677, %v5679
        %v5681 = vrot.slane %v5449, 2
        %v5682 = vrot.slane %v5450, 2
        %v5683 = vsel %vm650, %v5681, %v5682
        %v5684 = vrot.slane %v5451, 2
        %v5685 = vsel %vm650, %v5682, %v5684
        %5686 = vrot.lane.b32.xlu0 %v5502, 4
        %v5687 = vpop.permute.xlu0 %5686
        %5688 = vrot.lane.b32.xlu0 %v5504, 4
        %v5689 = vpop.permute.xlu0 %5688
        %5690 = vrot.lane.b32.xlu0 %v5507, 4
        %v5691 = vpop.permute.xlu0 %5690
        %5692 = vrot.lane.b32.xlu0 %v5509, 4
        %v5693 = vpop.permute.xlu0 %5692
        %5694 = vrot.lane.b32.xlu0 %v5512, 4
        %v5695 = vpop.permute.xlu0 %5694
        %5696 = vrot.lane.b32.xlu0 %v5514, 4
        %v5697 = vpop.permute.xlu0 %5696
        %5698 = vrot.lane.b32.xlu0 %v5517, 4
        %v5699 = vpop.permute.xlu0 %5698
        %5700 = vrot.lane.b32.xlu0 %v5519, 4
        %v5701 = vpop.permute.xlu0 %5700
        %5702 = vrot.lane.b32.xlu0 %v5522, 4
        %v5703 = vpop.permute.xlu0 %5702
        %5704 = vrot.lane.b32.xlu0 %v5524, 4
        %v5705 = vpop.permute.xlu0 %5704
        %5706 = vrot.lane.b32.xlu0 %v5527, 4
        %v5707 = vpop.permute.xlu0 %5706
        %5708 = vrot.lane.b32.xlu0 %v5529, 4
        %v5709 = vpop.permute.xlu0 %5708
        %5710 = vrot.lane.b32.xlu0 %v5532, 4
        %v5711 = vpop.permute.xlu0 %5710
        %5712 = vrot.lane.b32.xlu0 %v5534, 4
        %v5713 = vpop.permute.xlu0 %5712
        %5714 = vrot.lane.b32.xlu0 %v5537, 4
        %v5715 = vpop.permute.xlu0 %5714
        %5716 = vrot.lane.b32.xlu0 %v5539, 4
        %v5717 = vpop.permute.xlu0 %5716
        %5718 = vrot.lane.b32.xlu0 %v5542, 4
        %v5719 = vpop.permute.xlu0 %5718
        %5720 = vrot.lane.b32.xlu0 %v5544, 4
        %v5721 = vpop.permute.xlu0 %5720
        %5722 = vrot.lane.b32.xlu0 %v5547, 4
        %v5723 = vpop.permute.xlu0 %5722
        %5724 = vrot.lane.b32.xlu0 %v5549, 4
        %v5725 = vpop.permute.xlu0 %5724
        %5726 = vrot.lane.b32.xlu0 %v5552, 4
        %v5727 = vpop.permute.xlu0 %5726
        %5728 = vrot.lane.b32.xlu0 %v5554, 4
        %v5729 = vpop.permute.xlu0 %5728
        %5730 = vrot.lane.b32.xlu0 %v5557, 4
        %v5731 = vpop.permute.xlu0 %5730
        %5732 = vrot.lane.b32.xlu0 %v5559, 4
        %v5733 = vpop.permute.xlu0 %5732
        %5734 = vrot.lane.b32.xlu0 %v5562, 4
        %v5735 = vpop.permute.xlu0 %5734
        %5736 = vrot.lane.b32.xlu0 %v5564, 4
        %v5737 = vpop.permute.xlu0 %5736
        %5738 = vrot.lane.b32.xlu0 %v5567, 4
        %v5739 = vpop.permute.xlu0 %5738
        %5740 = vrot.lane.b32.xlu0 %v5569, 4
        %v5741 = vpop.permute.xlu0 %5740
        %5742 = vrot.lane.b32.xlu0 %v5572, 4
        %v5743 = vpop.permute.xlu0 %5742
        %5744 = vrot.lane.b32.xlu0 %v5574, 4
        %v5745 = vpop.permute.xlu0 %5744
        %5746 = vrot.lane.b32.xlu0 %v5577, 4
        %v5747 = vpop.permute.xlu0 %5746
        %5748 = vrot.lane.b32.xlu0 %v5579, 4
        %v5749 = vpop.permute.xlu0 %5748
        %5782 = vrot.lane.b32.xlu0 %v5582, 8
        %v5783 = vpop.permute.xlu0 %5782
        %5784 = vrot.lane.b32.xlu0 %v5584, 8
        %v5785 = vpop.permute.xlu0 %5784
        %5786 = vrot.lane.b32.xlu0 %v5587, 8
        %v5787 = vpop.permute.xlu0 %5786
        %5788 = vrot.lane.b32.xlu0 %v5589, 8
        %v5789 = vpop.permute.xlu0 %5788
        %5790 = vrot.lane.b32.xlu0 %v5592, 8
        %v5791 = vpop.permute.xlu0 %5790
        %5792 = vrot.lane.b32.xlu0 %v5594, 8
        %v5793 = vpop.permute.xlu0 %5792
        %5794 = vrot.lane.b32.xlu0 %v5597, 8
        %v5795 = vpop.permute.xlu0 %5794
        %5796 = vrot.lane.b32.xlu0 %v5599, 8
        %v5797 = vpop.permute.xlu0 %5796
        %5798 = vrot.lane.b32.xlu0 %v5602, 8
        %v5799 = vpop.permute.xlu0 %5798
        %5800 = vrot.lane.b32.xlu0 %v5604, 8
        %v5801 = vpop.permute.xlu0 %5800
        %5802 = vrot.lane.b32.xlu0 %v5607, 8
        %v5803 = vpop.permute.xlu0 %5802
        %5804 = vrot.lane.b32.xlu0 %v5609, 8
        %v5805 = vpop.permute.xlu0 %5804
        %5806 = vrot.lane.b32.xlu0 %v5612, 8
        %v5807 = vpop.permute.xlu0 %5806
        %5808 = vrot.lane.b32.xlu0 %v5614, 8
        %v5809 = vpop.permute.xlu0 %5808
        %5810 = vrot.lane.b32.xlu0 %v5617, 8
        %v5811 = vpop.permute.xlu0 %5810
        %5812 = vrot.lane.b32.xlu0 %v5619, 8
        %v5813 = vpop.permute.xlu0 %5812
        %5814 = vrot.lane.b32.xlu0 %v5622, 8
        %v5815 = vpop.permute.xlu0 %5814
        %5816 = vrot.lane.b32.xlu0 %v5624, 8
        %v5817 = vpop.permute.xlu0 %5816
        %5818 = vrot.lane.b32.xlu0 %v5627, 8
        %v5819 = vpop.permute.xlu0 %5818
        %5820 = vrot.lane.b32.xlu0 %v5629, 8
        %v5821 = vpop.permute.xlu0 %5820
        %5822 = vrot.lane.b32.xlu0 %v5632, 8
        %v5823 = vpop.permute.xlu0 %5822
        %5824 = vrot.lane.b32.xlu0 %v5634, 8
        %v5825 = vpop.permute.xlu0 %5824
        %5826 = vrot.lane.b32.xlu0 %v5637, 8
        %v5827 = vpop.permute.xlu0 %5826
        %5828 = vrot.lane.b32.xlu0 %v5639, 8
        %v5829 = vpop.permute.xlu0 %5828
        %5830 = vrot.lane.b32.xlu0 %v5642, 8
        %v5831 = vpop.permute.xlu0 %5830
        %5832 = vrot.lane.b32.xlu0 %v5644, 8
        %v5833 = vpop.permute.xlu0 %5832
        %5834 = vrot.lane.b32.xlu0 %v5647, 8
        %v5835 = vpop.permute.xlu0 %5834
        %5836 = vrot.lane.b32.xlu0 %v5649, 8
        %v5837 = vpop.permute.xlu0 %5836
        %5838 = vrot.lane.b32.xlu0 %v5652, 8
        %v5839 = vpop.permute.xlu0 %5838
        %5840 = vrot.lane.b32.xlu0 %v5654, 8
        %v5841 = vpop.permute.xlu0 %5840
        %5842 = vrot.lane.b32.xlu0 %v5657, 8
        %v5843 = vpop.permute.xlu0 %5842
        %5844 = vrot.lane.b32.xlu0 %v5659, 8
        %v5845 = vpop.permute.xlu0 %5844
        %5878 = vrot.lane.b32.xlu0 %v5401, 12
        %v5879 = vpop.permute.xlu0 %5878
        %5880 = vrot.lane.b32.xlu0 %v5402, 12
        %v5881 = vpop.permute.xlu0 %5880
        %5882 = vrot.lane.b32.xlu0 %v5404, 12
        %v5883 = vpop.permute.xlu0 %5882
        %5884 = vrot.lane.b32.xlu0 %v5405, 12
        %v5885 = vpop.permute.xlu0 %5884
        %5886 = vrot.lane.b32.xlu0 %v5407, 12
        %v5887 = vpop.permute.xlu0 %5886
        %5888 = vrot.lane.b32.xlu0 %v5408, 12
        %v5889 = vpop.permute.xlu0 %5888
        %5890 = vrot.lane.b32.xlu0 %v5410, 12
        %v5891 = vpop.permute.xlu0 %5890
        %5892 = vrot.lane.b32.xlu0 %v5411, 12
        %v5893 = vpop.permute.xlu0 %5892
        %5894 = vrot.lane.b32.xlu0 %v5413, 12
        %v5895 = vpop.permute.xlu0 %5894
        %5896 = vrot.lane.b32.xlu0 %v5414, 12
        %v5897 = vpop.permute.xlu0 %5896
        %5898 = vrot.lane.b32.xlu0 %v5416, 12
        %v5899 = vpop.permute.xlu0 %5898
        %5900 = vrot.lane.b32.xlu0 %v5417, 12
        %v5901 = vpop.permute.xlu0 %5900
        %5902 = vrot.lane.b32.xlu0 %v5419, 12
        %v5903 = vpop.permute.xlu0 %5902
        %5904 = vrot.lane.b32.xlu0 %v5420, 12
        %v5905 = vpop.permute.xlu0 %5904
        %5906 = vrot.lane.b32.xlu0 %v5422, 12
        %v5907 = vpop.permute.xlu0 %5906
        %5908 = vrot.lane.b32.xlu0 %v5423, 12
        %v5909 = vpop.permute.xlu0 %5908
        %5910 = vrot.lane.b32.xlu0 %v5425, 12
        %v5911 = vpop.permute.xlu0 %5910
        %5912 = vrot.lane.b32.xlu0 %v5426, 12
        %v5913 = vpop.permute.xlu0 %5912
        %5914 = vrot.lane.b32.xlu0 %v5428, 12
        %v5915 = vpop.permute.xlu0 %5914
        %5916 = vrot.lane.b32.xlu0 %v5429, 12
        %v5917 = vpop.permute.xlu0 %5916
        %5918 = vrot.lane.b32.xlu0 %v5431, 12
        %v5919 = vpop.permute.xlu0 %5918
        %5920 = vrot.lane.b32.xlu0 %v5432, 12
        %v5921 = vpop.permute.xlu0 %5920
        %5922 = vrot.lane.b32.xlu0 %v5434, 12
        %v5923 = vpop.permute.xlu0 %5922
        %5924 = vrot.lane.b32.xlu0 %v5435, 12
        %v5925 = vpop.permute.xlu0 %5924
        %5926 = vrot.lane.b32.xlu0 %v5437, 12
        %v5927 = vpop.permute.xlu0 %5926
        %5928 = vrot.lane.b32.xlu0 %v5438, 12
        %v5929 = vpop.permute.xlu0 %5928
        %5930 = vrot.lane.b32.xlu0 %v5440, 12
        %v5931 = vpop.permute.xlu0 %5930
        %5932 = vrot.lane.b32.xlu0 %v5441, 12
        %v5933 = vpop.permute.xlu0 %5932
        %5934 = vrot.lane.b32.xlu0 %v5443, 12
        %v5935 = vpop.permute.xlu0 %5934
        %5936 = vrot.lane.b32.xlu0 %v5444, 12
        %v5937 = vpop.permute.xlu0 %5936
        %5938 = vrot.lane.b32.xlu0 %v5446, 12
        %v5939 = vpop.permute.xlu0 %5938
        %5940 = vrot.lane.b32.xlu0 %v5447, 12
        %v5941 = vpop.permute.xlu0 %5940
        %5974 = vrot.lane.b32.xlu0 %v5507, 16
        %v5975 = vpop.permute.xlu0 %5974
        %5976 = vrot.lane.b32.xlu0 %v5509, 16
        %v5977 = vpop.permute.xlu0 %5976
        %5978 = vrot.lane.b32.xlu0 %v5512, 16
        %v5979 = vpop.permute.xlu0 %5978
        %5980 = vrot.lane.b32.xlu0 %v5514, 16
        %v5981 = vpop.permute.xlu0 %5980
        %5982 = vrot.lane.b32.xlu0 %v5517, 16
        %v5983 = vpop.permute.xlu0 %5982
        %5984 = vrot.lane.b32.xlu0 %v5519, 16
        %v5985 = vpop.permute.xlu0 %5984
        %5986 = vrot.lane.b32.xlu0 %v5522, 16
        %v5987 = vpop.permute.xlu0 %5986
        %5988 = vrot.lane.b32.xlu0 %v5524, 16
        %v5989 = vpop.permute.xlu0 %5988
        %5990 = vrot.lane.b32.xlu0 %v5527, 16
        %v5991 = vpop.permute.xlu0 %5990
        %5992 = vrot.lane.b32.xlu0 %v5529, 16
        %v5993 = vpop.permute.xlu0 %5992
        %5994 = vrot.lane.b32.xlu0 %v5532, 16
        %v5995 = vpop.permute.xlu0 %5994
        %5996 = vrot.lane.b32.xlu0 %v5534, 16
        %v5997 = vpop.permute.xlu0 %5996
        %5998 = vrot.lane.b32.xlu0 %v5537, 16
        %v5999 = vpop.permute.xlu0 %5998
        %6000 = vrot.lane.b32.xlu0 %v5539, 16
        %v6001 = vpop.permute.xlu0 %6000
        %6002 = vrot.lane.b32.xlu0 %v5542, 16
        %v6003 = vpop.permute.xlu0 %6002
        %6004 = vrot.lane.b32.xlu0 %v5544, 16
        %v6005 = vpop.permute.xlu0 %6004
        %6006 = vrot.lane.b32.xlu0 %v5547, 16
        %v6007 = vpop.permute.xlu0 %6006
        %6008 = vrot.lane.b32.xlu0 %v5549, 16
        %v6009 = vpop.permute.xlu0 %6008
        %6010 = vrot.lane.b32.xlu0 %v5552, 16
        %v6011 = vpop.permute.xlu0 %6010
        %6012 = vrot.lane.b32.xlu0 %v5554, 16
        %v6013 = vpop.permute.xlu0 %6012
        %6014 = vrot.lane.b32.xlu0 %v5557, 16
        %v6015 = vpop.permute.xlu0 %6014
        %6016 = vrot.lane.b32.xlu0 %v5559, 16
        %v6017 = vpop.permute.xlu0 %6016
        %6018 = vrot.lane.b32.xlu0 %v5562, 16
        %v6019 = vpop.permute.xlu0 %6018
        %6020 = vrot.lane.b32.xlu0 %v5564, 16
        %v6021 = vpop.permute.xlu0 %6020
        %6022 = vrot.lane.b32.xlu0 %v5567, 16
        %v6023 = vpop.permute.xlu0 %6022
        %6024 = vrot.lane.b32.xlu0 %v5569, 16
        %v6025 = vpop.permute.xlu0 %6024
        %6026 = vrot.lane.b32.xlu0 %v5572, 16
        %v6027 = vpop.permute.xlu0 %6026
        %6028 = vrot.lane.b32.xlu0 %v5574, 16
        %v6029 = vpop.permute.xlu0 %6028
        %6030 = vrot.lane.b32.xlu0 %v5577, 16
        %v6031 = vpop.permute.xlu0 %6030
        %6032 = vrot.lane.b32.xlu0 %v5579, 16
        %v6033 = vpop.permute.xlu0 %6032
        %6034 = vrot.lane.b32.xlu0 %v5665, 16
        %v6035 = vpop.permute.xlu0 %6034
        %6036 = vrot.lane.b32.xlu0 %v5667, 16
        %v6037 = vpop.permute.xlu0 %6036
        %6070 = vrot.lane.b32.xlu0 %v5587, 20
        %v6071 = vpop.permute.xlu0 %6070
        %6072 = vrot.lane.b32.xlu0 %v5589, 20
        %v6073 = vpop.permute.xlu0 %6072
        %6074 = vrot.lane.b32.xlu0 %v5592, 20
        %v6075 = vpop.permute.xlu0 %6074
        %6076 = vrot.lane.b32.xlu0 %v5594, 20
        %v6077 = vpop.permute.xlu0 %6076
        %6078 = vrot.lane.b32.xlu0 %v5597, 20
        %v6079 = vpop.permute.xlu0 %6078
        %6080 = vrot.lane.b32.xlu0 %v5599, 20
        %v6081 = vpop.permute.xlu0 %6080
        %6082 = vrot.lane.b32.xlu0 %v5602, 20
        %v6083 = vpop.permute.xlu0 %6082
        %6084 = vrot.lane.b32.xlu0 %v5604, 20
        %v6085 = vpop.permute.xlu0 %6084
        %6086 = vrot.lane.b32.xlu0 %v5607, 20
        %v6087 = vpop.permute.xlu0 %6086
        %6088 = vrot.lane.b32.xlu0 %v5609, 20
        %v6089 = vpop.permute.xlu0 %6088
        %6090 = vrot.lane.b32.xlu0 %v5612, 20
        %v6091 = vpop.permute.xlu0 %6090
        %6092 = vrot.lane.b32.xlu0 %v5614, 20
        %v6093 = vpop.permute.xlu0 %6092
        %6094 = vrot.lane.b32.xlu0 %v5617, 20
        %v6095 = vpop.permute.xlu0 %6094
        %6096 = vrot.lane.b32.xlu0 %v5619, 20
        %v6097 = vpop.permute.xlu0 %6096
        %6098 = vrot.lane.b32.xlu0 %v5622, 20
        %v6099 = vpop.permute.xlu0 %6098
        %6100 = vrot.lane.b32.xlu0 %v5624, 20
        %v6101 = vpop.permute.xlu0 %6100
        %6102 = vrot.lane.b32.xlu0 %v5627, 20
        %v6103 = vpop.permute.xlu0 %6102
        %6104 = vrot.lane.b32.xlu0 %v5629, 20
        %v6105 = vpop.permute.xlu0 %6104
        %6106 = vrot.lane.b32.xlu0 %v5632, 20
        %v6107 = vpop.permute.xlu0 %6106
        %6108 = vrot.lane.b32.xlu0 %v5634, 20
        %v6109 = vpop.permute.xlu0 %6108
        %6110 = vrot.lane.b32.xlu0 %v5637, 20
        %v6111 = vpop.permute.xlu0 %6110
        %6112 = vrot.lane.b32.xlu0 %v5639, 20
        %v6113 = vpop.permute.xlu0 %6112
        %6114 = vrot.lane.b32.xlu0 %v5642, 20
        %v6115 = vpop.permute.xlu0 %6114
        %6116 = vrot.lane.b32.xlu0 %v5644, 20
        %v6117 = vpop.permute.xlu0 %6116
        %6118 = vrot.lane.b32.xlu0 %v5647, 20
        %v6119 = vpop.permute.xlu0 %6118
        %6120 = vrot.lane.b32.xlu0 %v5649, 20
        %v6121 = vpop.permute.xlu0 %6120
        %6122 = vrot.lane.b32.xlu0 %v5652, 20
        %v6123 = vpop.permute.xlu0 %6122
        %6124 = vrot.lane.b32.xlu0 %v5654, 20
        %v6125 = vpop.permute.xlu0 %6124
        %6126 = vrot.lane.b32.xlu0 %v5657, 20
        %v6127 = vpop.permute.xlu0 %6126
        %6128 = vrot.lane.b32.xlu0 %v5659, 20
        %v6129 = vpop.permute.xlu0 %6128
        %6130 = vrot.lane.b32.xlu0 %v5670, 20
        %v6131 = vpop.permute.xlu0 %6130
        %6132 = vrot.lane.b32.xlu0 %v5672, 20
        %v6133 = vpop.permute.xlu0 %6132
        %6166 = vrot.lane.b32.xlu0 %v5404, 24
        %v6167 = vpop.permute.xlu0 %6166
        %6168 = vrot.lane.b32.xlu0 %v5405, 24
        %v6169 = vpop.permute.xlu0 %6168
        %6170 = vrot.lane.b32.xlu0 %v5407, 24
        %v6171 = vpop.permute.xlu0 %6170
        %6172 = vrot.lane.b32.xlu0 %v5408, 24
        %v6173 = vpop.permute.xlu0 %6172
        %6174 = vrot.lane.b32.xlu0 %v5410, 24
        %v6175 = vpop.permute.xlu0 %6174
        %6176 = vrot.lane.b32.xlu0 %v5411, 24
        %v6177 = vpop.permute.xlu0 %6176
        %6178 = vrot.lane.b32.xlu0 %v5413, 24
        %v6179 = vpop.permute.xlu0 %6178
        %6180 = vrot.lane.b32.xlu0 %v5414, 24
        %v6181 = vpop.permute.xlu0 %6180
        %6182 = vrot.lane.b32.xlu0 %v5416, 24
        %v6183 = vpop.permute.xlu0 %6182
        %6184 = vrot.lane.b32.xlu0 %v5417, 24
        %v6185 = vpop.permute.xlu0 %6184
        %6186 = vrot.lane.b32.xlu0 %v5419, 24
        %v6187 = vpop.permute.xlu0 %6186
        %6188 = vrot.lane.b32.xlu0 %v5420, 24
        %v6189 = vpop.permute.xlu0 %6188
        %6190 = vrot.lane.b32.xlu0 %v5422, 24
        %v6191 = vpop.permute.xlu0 %6190
        %6192 = vrot.lane.b32.xlu0 %v5423, 24
        %v6193 = vpop.permute.xlu0 %6192
        %6194 = vrot.lane.b32.xlu0 %v5425, 24
        %v6195 = vpop.permute.xlu0 %6194
        %6196 = vrot.lane.b32.xlu0 %v5426, 24
        %v6197 = vpop.permute.xlu0 %6196
        %6198 = vrot.lane.b32.xlu0 %v5428, 24
        %v6199 = vpop.permute.xlu0 %6198
        %6200 = vrot.lane.b32.xlu0 %v5429, 24
        %v6201 = vpop.permute.xlu0 %6200
        %6202 = vrot.lane.b32.xlu0 %v5431, 24
        %v6203 = vpop.permute.xlu0 %6202
        %6204 = vrot.lane.b32.xlu0 %v5432, 24
        %v6205 = vpop.permute.xlu0 %6204
        %6206 = vrot.lane.b32.xlu0 %v5434, 24
        %v6207 = vpop.permute.xlu0 %6206
        %6208 = vrot.lane.b32.xlu0 %v5435, 24
        %v6209 = vpop.permute.xlu0 %6208
        %6210 = vrot.lane.b32.xlu0 %v5437, 24
        %v6211 = vpop.permute.xlu0 %6210
        %6212 = vrot.lane.b32.xlu0 %v5438, 24
        %v6213 = vpop.permute.xlu0 %6212
        %6214 = vrot.lane.b32.xlu0 %v5440, 24
        %v6215 = vpop.permute.xlu0 %6214
        %6216 = vrot.lane.b32.xlu0 %v5441, 24
        %v6217 = vpop.permute.xlu0 %6216
        %6218 = vrot.lane.b32.xlu0 %v5443, 24
        %v6219 = vpop.permute.xlu0 %6218
        %6220 = vrot.lane.b32.xlu0 %v5444, 24
        %v6221 = vpop.permute.xlu0 %6220
        %6222 = vrot.lane.b32.xlu0 %v5446, 24
        %v6223 = vpop.permute.xlu0 %6222
        %6224 = vrot.lane.b32.xlu0 %v5447, 24
        %v6225 = vpop.permute.xlu0 %6224
        %6226 = vrot.lane.b32.xlu0 %v5449, 24
        %v6227 = vpop.permute.xlu0 %6226
        %6228 = vrot.lane.b32.xlu0 %v5450, 24
        %v6229 = vpop.permute.xlu0 %6228
        %6262 = vrot.lane.b32.xlu0 %v5512, 28
        %v6263 = vpop.permute.xlu0 %6262
        %6264 = vrot.lane.b32.xlu0 %v5514, 28
        %v6265 = vpop.permute.xlu0 %6264
        %6266 = vrot.lane.b32.xlu0 %v5517, 28
        %v6267 = vpop.permute.xlu0 %6266
        %6268 = vrot.lane.b32.xlu0 %v5519, 28
        %v6269 = vpop.permute.xlu0 %6268
        %6270 = vrot.lane.b32.xlu0 %v5522, 28
        %v6271 = vpop.permute.xlu0 %6270
        %6272 = vrot.lane.b32.xlu0 %v5524, 28
        %v6273 = vpop.permute.xlu0 %6272
        %6274 = vrot.lane.b32.xlu0 %v5527, 28
        %v6275 = vpop.permute.xlu0 %6274
        %6276 = vrot.lane.b32.xlu0 %v5529, 28
        %v6277 = vpop.permute.xlu0 %6276
        %6278 = vrot.lane.b32.xlu0 %v5532, 28
        %v6279 = vpop.permute.xlu0 %6278
        %6280 = vrot.lane.b32.xlu0 %v5534, 28
        %v6281 = vpop.permute.xlu0 %6280
        %6282 = vrot.lane.b32.xlu0 %v5537, 28
        %v6283 = vpop.permute.xlu0 %6282
        %6284 = vrot.lane.b32.xlu0 %v5539, 28
        %v6285 = vpop.permute.xlu0 %6284
        %6286 = vrot.lane.b32.xlu0 %v5542, 28
        %v6287 = vpop.permute.xlu0 %6286
        %6288 = vrot.lane.b32.xlu0 %v5544, 28
        %v6289 = vpop.permute.xlu0 %6288
        %6290 = vrot.lane.b32.xlu0 %v5547, 28
        %v6291 = vpop.permute.xlu0 %6290
        %6292 = vrot.lane.b32.xlu0 %v5549, 28
        %v6293 = vpop.permute.xlu0 %6292
        %6294 = vrot.lane.b32.xlu0 %v5552, 28
        %v6295 = vpop.permute.xlu0 %6294
        %6296 = vrot.lane.b32.xlu0 %v5554, 28
        %v6297 = vpop.permute.xlu0 %6296
        %6298 = vrot.lane.b32.xlu0 %v5557, 28
        %v6299 = vpop.permute.xlu0 %6298
        %6300 = vrot.lane.b32.xlu0 %v5559, 28
        %v6301 = vpop.permute.xlu0 %6300
        %6302 = vrot.lane.b32.xlu0 %v5562, 28
        %v6303 = vpop.permute.xlu0 %6302
        %6304 = vrot.lane.b32.xlu0 %v5564, 28
        %v6305 = vpop.permute.xlu0 %6304
        %6306 = vrot.lane.b32.xlu0 %v5567, 28
        %v6307 = vpop.permute.xlu0 %6306
        %6308 = vrot.lane.b32.xlu0 %v5569, 28
        %v6309 = vpop.permute.xlu0 %6308
        %6310 = vrot.lane.b32.xlu0 %v5572, 28
        %v6311 = vpop.permute.xlu0 %6310
        %6312 = vrot.lane.b32.xlu0 %v5574, 28
        %v6313 = vpop.permute.xlu0 %6312
        %6314 = vrot.lane.b32.xlu0 %v5577, 28
        %v6315 = vpop.permute.xlu0 %6314
        %6316 = vrot.lane.b32.xlu0 %v5579, 28
        %v6317 = vpop.permute.xlu0 %6316
        %6318 = vrot.lane.b32.xlu0 %v5665, 28
        %v6319 = vpop.permute.xlu0 %6318
        %6320 = vrot.lane.b32.xlu0 %v5667, 28
        %v6321 = vpop.permute.xlu0 %6320
        %6322 = vrot.lane.b32.xlu0 %v5678, 28
        %v6323 = vpop.permute.xlu0 %6322
        %6324 = vrot.lane.b32.xlu0 %v5680, 28
        %v6325 = vpop.permute.xlu0 %6324
        %6358 = vrot.lane.b32.xlu0 %v5592, 32
        %v6359 = vpop.permute.xlu0 %6358
        %6360 = vrot.lane.b32.xlu0 %v5594, 32
        %v6361 = vpop.permute.xlu0 %6360
        %6362 = vrot.lane.b32.xlu0 %v5597, 32
        %v6363 = vpop.permute.xlu0 %6362
        %6364 = vrot.lane.b32.xlu0 %v5599, 32
        %v6365 = vpop.permute.xlu0 %6364
        %6366 = vrot.lane.b32.xlu0 %v5602, 32
        %v6367 = vpop.permute.xlu0 %6366
        %6368 = vrot.lane.b32.xlu0 %v5604, 32
        %v6369 = vpop.permute.xlu0 %6368
        %6370 = vrot.lane.b32.xlu0 %v5607, 32
        %v6371 = vpop.permute.xlu0 %6370
        %6372 = vrot.lane.b32.xlu0 %v5609, 32
        %v6373 = vpop.permute.xlu0 %6372
        %6374 = vrot.lane.b32.xlu0 %v5612, 32
        %v6375 = vpop.permute.xlu0 %6374
        %6376 = vrot.lane.b32.xlu0 %v5614, 32
        %v6377 = vpop.permute.xlu0 %6376
        %6378 = vrot.lane.b32.xlu0 %v5617, 32
        %v6379 = vpop.permute.xlu0 %6378
        %6380 = vrot.lane.b32.xlu0 %v5619, 32
        %v6381 = vpop.permute.xlu0 %6380
        %6382 = vrot.lane.b32.xlu0 %v5622, 32
        %v6383 = vpop.permute.xlu0 %6382
        %6384 = vrot.lane.b32.xlu0 %v5624, 32
        %v6385 = vpop.permute.xlu0 %6384
        %6386 = vrot.lane.b32.xlu0 %v5627, 32
        %v6387 = vpop.permute.xlu0 %6386
        %6388 = vrot.lane.b32.xlu0 %v5629, 32
        %v6389 = vpop.permute.xlu0 %6388
        %6390 = vrot.lane.b32.xlu0 %v5632, 32
        %v6391 = vpop.permute.xlu0 %6390
        %6392 = vrot.lane.b32.xlu0 %v5634, 32
        %v6393 = vpop.permute.xlu0 %6392
        %6394 = vrot.lane.b32.xlu0 %v5637, 32
        %v6395 = vpop.permute.xlu0 %6394
        %6396 = vrot.lane.b32.xlu0 %v5639, 32
        %v6397 = vpop.permute.xlu0 %6396
        %6398 = vrot.lane.b32.xlu0 %v5642, 32
        %v6399 = vpop.permute.xlu0 %6398
        %6400 = vrot.lane.b32.xlu0 %v5644, 32
        %v6401 = vpop.permute.xlu0 %6400
        %6402 = vrot.lane.b32.xlu0 %v5647, 32
        %v6403 = vpop.permute.xlu0 %6402
        %6404 = vrot.lane.b32.xlu0 %v5649, 32
        %v6405 = vpop.permute.xlu0 %6404
        %6406 = vrot.lane.b32.xlu0 %v5652, 32
        %v6407 = vpop.permute.xlu0 %6406
        %6408 = vrot.lane.b32.xlu0 %v5654, 32
        %v6409 = vpop.permute.xlu0 %6408
        %6410 = vrot.lane.b32.xlu0 %v5657, 32
        %v6411 = vpop.permute.xlu0 %6410
        %6412 = vrot.lane.b32.xlu0 %v5659, 32
        %v6413 = vpop.permute.xlu0 %6412
        %6414 = vrot.lane.b32.xlu0 %v5670, 32
        %v6415 = vpop.permute.xlu0 %6414
        %6416 = vrot.lane.b32.xlu0 %v5672, 32
        %v6417 = vpop.permute.xlu0 %6416
        %6418 = vrot.lane.b32.xlu0 %v5683, 32
        %v6419 = vpop.permute.xlu0 %6418
        %6420 = vrot.lane.b32.xlu0 %v5685, 32
        %v6421 = vpop.permute.xlu0 %6420
        %v6454 = vsel %vm5359, %v5398, %v5687
        %v6455 = vsel %vm5359, %v5399, %v5689
        %v6456 = vsel %vm5359, %v5401, %v5691
        %v6457 = vsel %vm5359, %v5402, %v5693
        %v6458 = vsel %vm5359, %v5404, %v5695
        %v6459 = vsel %vm5359, %v5405, %v5697
        %v6460 = vsel %vm5359, %v5407, %v5699
        %v6461 = vsel %vm5359, %v5408, %v5701
        %v6462 = vsel %vm5359, %v5410, %v5703
        %v6463 = vsel %vm5359, %v5411, %v5705
        %v6464 = vsel %vm5359, %v5413, %v5707
        %v6465 = vsel %vm5359, %v5414, %v5709
        %v6466 = vsel %vm5359, %v5416, %v5711
        %v6467 = vsel %vm5359, %v5417, %v5713
        %v6468 = vsel %vm5359, %v5419, %v5715
        %v6469 = vsel %vm5359, %v5420, %v5717
        %v6470 = vsel %vm5359, %v5422, %v5719
        %v6471 = vsel %vm5359, %v5423, %v5721
        %v6472 = vsel %vm5359, %v5425, %v5723
        %v6473 = vsel %vm5359, %v5426, %v5725
        %v6474 = vsel %vm5359, %v5428, %v5727
        %v6475 = vsel %vm5359, %v5429, %v5729
        %v6476 = vsel %vm5359, %v5431, %v5731
        %v6477 = vsel %vm5359, %v5432, %v5733
        %v6478 = vsel %vm5359, %v5434, %v5735
        %v6479 = vsel %vm5359, %v5435, %v5737
        %v6480 = vsel %vm5359, %v5437, %v5739
        %v6481 = vsel %vm5359, %v5438, %v5741
        %v6482 = vsel %vm5359, %v5440, %v5743
        %v6483 = vsel %vm5359, %v5441, %v5745
        %v6484 = vsel %vm5359, %v5443, %v5747
        %v6485 = vsel %vm5359, %v5444, %v5749
        %vm6486 = vcmask 64512
        %v6487 = vsel %vm6486, %v6454, %v5783
        %v6488 = vsel %vm6486, %v6455, %v5785
        %v6489 = vsel %vm6486, %v6456, %v5787
        %v6490 = vsel %vm6486, %v6457, %v5789
        %v6491 = vsel %vm6486, %v6458, %v5791
        %v6492 = vsel %vm6486, %v6459, %v5793
        %v6493 = vsel %vm6486, %v6460, %v5795
        %v6494 = vsel %vm6486, %v6461, %v5797
        %v6495 = vsel %vm6486, %v6462, %v5799
        %v6496 = vsel %vm6486, %v6463, %v5801
        %v6497 = vsel %vm6486, %v6464, %v5803
        %v6498 = vsel %vm6486, %v6465, %v5805
        %v6499 = vsel %vm6486, %v6466, %v5807
        %v6500 = vsel %vm6486, %v6467, %v5809
        %v6501 = vsel %vm6486, %v6468, %v5811
        %v6502 = vsel %vm6486, %v6469, %v5813
        %v6503 = vsel %vm6486, %v6470, %v5815
        %v6504 = vsel %vm6486, %v6471, %v5817
        %v6505 = vsel %vm6486, %v6472, %v5819
        %v6506 = vsel %vm6486, %v6473, %v5821
        %v6507 = vsel %vm6486, %v6474, %v5823
        %v6508 = vsel %vm6486, %v6475, %v5825
        %v6509 = vsel %vm6486, %v6476, %v5827
        %v6510 = vsel %vm6486, %v6477, %v5829
        %v6511 = vsel %vm6486, %v6478, %v5831
        %v6512 = vsel %vm6486, %v6479, %v5833
        %v6513 = vsel %vm6486, %v6480, %v5835
        %v6514 = vsel %vm6486, %v6481, %v5837
        %v6515 = vsel %vm6486, %v6482, %v5839
        %v6516 = vsel %vm6486, %v6483, %v5841
        %v6517 = vsel %vm6486, %v6484, %v5843
        %v6518 = vsel %vm6486, %v6485, %v5845
        %vm6519 = vcmask 97280
        %v6520 = vsel %vm6519, %v6487, %v5879
        %v6521 = vsel %vm6519, %v6488, %v5881
        %v6522 = vsel %vm6519, %v6489, %v5883
        %v6523 = vsel %vm6519, %v6490, %v5885
        %v6524 = vsel %vm6519, %v6491, %v5887
        %v6525 = vsel %vm6519, %v6492, %v5889
        %v6526 = vsel %vm6519, %v6493, %v5891
        %v6527 = vsel %vm6519, %v6494, %v5893
        %v6528 = vsel %vm6519, %v6495, %v5895
        %v6529 = vsel %vm6519, %v6496, %v5897
        %v6530 = vsel %vm6519, %v6497, %v5899
        %v6531 = vsel %vm6519, %v6498, %v5901
        %v6532 = vsel %vm6519, %v6499, %v5903
        %v6533 = vsel %vm6519, %v6500, %v5905
        %v6534 = vsel %vm6519, %v6501, %v5907
        %v6535 = vsel %vm6519, %v6502, %v5909
        %v6536 = vsel %vm6519, %v6503, %v5911
        %v6537 = vsel %vm6519, %v6504, %v5913
        %v6538 = vsel %vm6519, %v6505, %v5915
        %v6539 = vsel %vm6519, %v6506, %v5917
        %v6540 = vsel %vm6519, %v6507, %v5919
        %v6541 = vsel %vm6519, %v6508, %v5921
        %v6542 = vsel %vm6519, %v6509, %v5923
        %v6543 = vsel %vm6519, %v6510, %v5925
        %v6544 = vsel %vm6519, %v6511, %v5927
        %v6545 = vsel %vm6519, %v6512, %v5929
        %v6546 = vsel %vm6519, %v6513, %v5931
        %v6547 = vsel %vm6519, %v6514, %v5933
        %v6548 = vsel %vm6519, %v6515, %v5935
        %v6549 = vsel %vm6519, %v6516, %v5937
        %v6550 = vsel %vm6519, %v6517, %v5939
        %v6551 = vsel %vm6519, %v6518, %v5941
        %v6552 = vsel %vm2037, %v6520, %v5975
        %v6553 = vsel %vm2037, %v6521, %v5977
        %v6554 = vsel %vm2037, %v6522, %v5979
        %v6555 = vsel %vm2037, %v6523, %v5981
        %v6556 = vsel %vm2037, %v6524, %v5983
        %v6557 = vsel %vm2037, %v6525, %v5985
        %v6558 = vsel %vm2037, %v6526, %v5987
        %v6559 = vsel %vm2037, %v6527, %v5989
        %v6560 = vsel %vm2037, %v6528, %v5991
        %v6561 = vsel %vm2037, %v6529, %v5993
        %v6562 = vsel %vm2037, %v6530, %v5995
        %v6563 = vsel %vm2037, %v6531, %v5997
        %v6564 = vsel %vm2037, %v6532, %v5999
        %v6565 = vsel %vm2037, %v6533, %v6001
        %v6566 = vsel %vm2037, %v6534, %v6003
        %v6567 = vsel %vm2037, %v6535, %v6005
        %v6568 = vsel %vm2037, %v6536, %v6007
        %v6569 = vsel %vm2037, %v6537, %v6009
        %v6570 = vsel %vm2037, %v6538, %v6011
        %v6571 = vsel %vm2037, %v6539, %v6013
        %v6572 = vsel %vm2037, %v6540, %v6015
        %v6573 = vsel %vm2037, %v6541, %v6017
        %v6574 = vsel %vm2037, %v6542, %v6019
        %v6575 = vsel %vm2037, %v6543, %v6021
        %v6576 = vsel %vm2037, %v6544, %v6023
        %v6577 = vsel %vm2037, %v6545, %v6025
        %v6578 = vsel %vm2037, %v6546, %v6027
        %v6579 = vsel %vm2037, %v6547, %v6029
        %v6580 = vsel %vm2037, %v6548, %v6031
        %v6581 = vsel %vm2037, %v6549, %v6033
        %v6582 = vsel %vm2037, %v6550, %v6035
        %v6583 = vsel %vm2037, %v6551, %v6037
        %vm6584 = vcmask 162816
        %v6585 = vsel %vm6584, %v6552, %v6071
        %v6586 = vsel %vm6584, %v6553, %v6073
        %v6587 = vsel %vm6584, %v6554, %v6075
        %v6588 = vsel %vm6584, %v6555, %v6077
        %v6589 = vsel %vm6584, %v6556, %v6079
        %v6590 = vsel %vm6584, %v6557, %v6081
        %v6591 = vsel %vm6584, %v6558, %v6083
        %v6592 = vsel %vm6584, %v6559, %v6085
        %v6593 = vsel %vm6584, %v6560, %v6087
        %v6594 = vsel %vm6584, %v6561, %v6089
        %v6595 = vsel %vm6584, %v6562, %v6091
        %v6596 = vsel %vm6584, %v6563, %v6093
        %v6597 = vsel %vm6584, %v6564, %v6095
        %v6598 = vsel %vm6584, %v6565, %v6097
        %v6599 = vsel %vm6584, %v6566, %v6099
        %v6600 = vsel %vm6584, %v6567, %v6101
        %v6601 = vsel %vm6584, %v6568, %v6103
        %v6602 = vsel %vm6584, %v6569, %v6105
        %v6603 = vsel %vm6584, %v6570, %v6107
        %v6604 = vsel %vm6584, %v6571, %v6109
        %v6605 = vsel %vm6584, %v6572, %v6111
        %v6606 = vsel %vm6584, %v6573, %v6113
        %v6607 = vsel %vm6584, %v6574, %v6115
        %v6608 = vsel %vm6584, %v6575, %v6117
        %v6609 = vsel %vm6584, %v6576, %v6119
        %v6610 = vsel %vm6584, %v6577, %v6121
        %v6611 = vsel %vm6584, %v6578, %v6123
        %v6612 = vsel %vm6584, %v6579, %v6125
        %v6613 = vsel %vm6584, %v6580, %v6127
        %v6614 = vsel %vm6584, %v6581, %v6129
        %v6615 = vsel %vm6584, %v6582, %v6131
        %v6616 = vsel %vm6584, %v6583, %v6133
        %vm6617 = vcmask 195584
        %v6618 = vsel %vm6617, %v6585, %v6167
        %v6619 = vsel %vm6617, %v6586, %v6169
        %v6620 = vsel %vm6617, %v6587, %v6171
        %v6621 = vsel %vm6617, %v6588, %v6173
        %v6622 = vsel %vm6617, %v6589, %v6175
        %v6623 = vsel %vm6617, %v6590, %v6177
        %v6624 = vsel %vm6617, %v6591, %v6179
        %v6625 = vsel %vm6617, %v6592, %v6181
        %v6626 = vsel %vm6617, %v6593, %v6183
        %v6627 = vsel %vm6617, %v6594, %v6185
        %v6628 = vsel %vm6617, %v6595, %v6187
        %v6629 = vsel %vm6617, %v6596, %v6189
        %v6630 = vsel %vm6617, %v6597, %v6191
        %v6631 = vsel %vm6617, %v6598, %v6193
        %v6632 = vsel %vm6617, %v6599, %v6195
        %v6633 = vsel %vm6617, %v6600, %v6197
        %v6634 = vsel %vm6617, %v6601, %v6199
        %v6635 = vsel %vm6617, %v6602, %v6201
        %v6636 = vsel %vm6617, %v6603, %v6203
        %v6637 = vsel %vm6617, %v6604, %v6205
        %v6638 = vsel %vm6617, %v6605, %v6207
        %v6639 = vsel %vm6617, %v6606, %v6209
        %v6640 = vsel %vm6617, %v6607, %v6211
        %v6641 = vsel %vm6617, %v6608, %v6213
        %v6642 = vsel %vm6617, %v6609, %v6215
        %v6643 = vsel %vm6617, %v6610, %v6217
        %v6644 = vsel %vm6617, %v6611, %v6219
        %v6645 = vsel %vm6617, %v6612, %v6221
        %v6646 = vsel %vm6617, %v6613, %v6223
        %v6647 = vsel %vm6617, %v6614, %v6225
        %v6648 = vsel %vm6617, %v6615, %v6227
        %v6649 = vsel %vm6617, %v6616, %v6229
        %vm6650 = vcmask 228352
        %v6651 = vsel %vm6650, %v6618, %v6263
        %v6652 = vsel %vm6650, %v6619, %v6265
        %v6653 = vsel %vm6650, %v6620, %v6267
        %v6654 = vsel %vm6650, %v6621, %v6269
        %v6655 = vsel %vm6650, %v6622, %v6271
        %v6656 = vsel %vm6650, %v6623, %v6273
        %v6657 = vsel %vm6650, %v6624, %v6275
        %v6658 = vsel %vm6650, %v6625, %v6277
        %v6659 = vsel %vm6650, %v6626, %v6279
        %v6660 = vsel %vm6650, %v6627, %v6281
        %v6661 = vsel %vm6650, %v6628, %v6283
        %v6662 = vsel %vm6650, %v6629, %v6285
        %v6663 = vsel %vm6650, %v6630, %v6287
        %v6664 = vsel %vm6650, %v6631, %v6289
        %v6665 = vsel %vm6650, %v6632, %v6291
        %v6666 = vsel %vm6650, %v6633, %v6293
        %v6667 = vsel %vm6650, %v6634, %v6295
        %v6668 = vsel %vm6650, %v6635, %v6297
        %v6669 = vsel %vm6650, %v6636, %v6299
        %v6670 = vsel %vm6650, %v6637, %v6301
        %v6671 = vsel %vm6650, %v6638, %v6303
        %v6672 = vsel %vm6650, %v6639, %v6305
        %v6673 = vsel %vm6650, %v6640, %v6307
        %v6674 = vsel %vm6650, %v6641, %v6309
        %v6675 = vsel %vm6650, %v6642, %v6311
        %v6676 = vsel %vm6650, %v6643, %v6313
        %v6677 = vsel %vm6650, %v6644, %v6315
        %v6678 = vsel %vm6650, %v6645, %v6317
        %v6679 = vsel %vm6650, %v6646, %v6319
        %v6680 = vsel %vm6650, %v6647, %v6321
        %v6681 = vsel %vm6650, %v6648, %v6323
        %v6682 = vsel %vm6650, %v6649, %v6325
        %v6683 = vsel %vm331, %v6651, %v6359
        %v6684 = vsel %vm331, %v6652, %v6361
        %v6685 = vsel %vm331, %v6653, %v6363
        %v6686 = vsel %vm331, %v6654, %v6365
        %v6687 = vsel %vm331, %v6655, %v6367
        %v6688 = vsel %vm331, %v6656, %v6369
        %v6689 = vsel %vm331, %v6657, %v6371
        %v6690 = vsel %vm331, %v6658, %v6373
        %v6691 = vsel %vm331, %v6659, %v6375
        %v6692 = vsel %vm331, %v6660, %v6377
        %v6693 = vsel %vm331, %v6661, %v6379
        %v6694 = vsel %vm331, %v6662, %v6381
        %v6695 = vsel %vm331, %v6663, %v6383
        %v6696 = vsel %vm331, %v6664, %v6385
        %v6697 = vsel %vm331, %v6665, %v6387
        %v6698 = vsel %vm331, %v6666, %v6389
        %v6699 = vsel %vm331, %v6667, %v6391
        %v6700 = vsel %vm331, %v6668, %v6393
        %v6701 = vsel %vm331, %v6669, %v6395
        %v6702 = vsel %vm331, %v6670, %v6397
        %v6703 = vsel %vm331, %v6671, %v6399
        %v6704 = vsel %vm331, %v6672, %v6401
        %v6705 = vsel %vm331, %v6673, %v6403
        %v6706 = vsel %vm331, %v6674, %v6405
        %v6707 = vsel %vm331, %v6675, %v6407
        %v6708 = vsel %vm331, %v6676, %v6409
        %v6709 = vsel %vm331, %v6677, %v6411
        %v6710 = vsel %vm331, %v6678, %v6413
        %v6711 = vsel %vm331, %v6679, %v6415
        %v6712 = vsel %vm331, %v6680, %v6417
        %v6713 = vsel %vm331, %v6681, %v6419
        %v6714 = vsel %vm331, %v6682, %v6421
        %v6716 = vperm.slane %v5397, 0
        %vm6718 = vcmask 293888
        %v6720 = vsel %vm6718, %v6683, 0
        %v6723 = vsel %vm6718, %v6684, 0
        %v6726 = vsel %vm6718, %v6685, 0
        %v6729 = vsel %vm6718, %v6686, 0
        %v6732 = vsel %vm6718, %v6687, 0
        %v6735 = vsel %vm6718, %v6688, 0
        %v6738 = vsel %vm6718, %v6689, 0
        %v6741 = vsel %vm6718, %v6690, 0
        %v6744 = vsel %vm6718, %v6691, 0
        %v6747 = vsel %vm6718, %v6692, 0
        %v6750 = vsel %vm6718, %v6693, 0
        %v6753 = vsel %vm6718, %v6694, 0
        %v6756 = vsel %vm6718, %v6695, 0
        %v6759 = vsel %vm6718, %v6696, 0
        %v6762 = vsel %vm6718, %v6697, 0
        %v6765 = vsel %vm6718, %v6698, 0
        %v6768 = vsel %vm6718, %v6699, 0
        %v6771 = vsel %vm6718, %v6700, 0
        %v6774 = vsel %vm6718, %v6701, 0
        %v6777 = vsel %vm6718, %v6702, 0
        %v6780 = vsel %vm6718, %v6703, 0
        %v6783 = vsel %vm6718, %v6704, 0
        %v6786 = vsel %vm6718, %v6705, 0
        %v6789 = vsel %vm6718, %v6706, 0
        %v6792 = vsel %vm6718, %v6707, 0
        %v6795 = vsel %vm6718, %v6708, 0
        %v6798 = vsel %vm6718, %v6709, 0
        %v6801 = vsel %vm6718, %v6710, 0
        %v6804 = vsel %vm6718, %v6711, 0
        %v6807 = vsel %vm6718, %v6712, 0
        %v6810 = vsel %vm6718, %v6713, 0
        %v6813 = vsel %vm6718, %v6714, 0
        %vm6815 = vcmask 1043456
        %v6817 = vsel %vm6815, %v5396, 0
        %6819 = vmatpush.msra.mxu0 0.0
        %6820 = vmatpush.msra.mxu0 0.0
        %6821 = vmatpush.msra.mxu0 0.0
        %6822 = vmatpush.msra.mxu0 0.0
        %6823 = vmatpush.msra.mxu0 0.0
        %6824 = vmatpush.msra.mxu0 0.0
        %6825 = vmatpush.msra.mxu0 0.0
        %6826 = vmatpush.msra.mxu0 0.0
        %6827 = vmatpush.msra.mxu0 0.0
        %6828 = vmatpush.msra.mxu0 0.0
        %6829 = vmatpush.msra.mxu0 0.0
        %6830 = vmatpush.msra.mxu0 %v6817
        %6831 = vmatpush.msra.mxu0 %v5395
        %6832 = vmatpush.msra.mxu0 %v5394
        %6833 = vmatpush.msra.mxu0 %v5393
        %6834 = vmatpush.msra.mxu0 %v5392
        %6835 = vmatmul.f32.gmra.mxu0 %v6720
        %v6836 = vpop.f32.mrf.mxu0
        %v6837 = vadd.f32 %v6716, %v6836
        %6838 = vmatmul.f32.gmra.mxu0 %v6723
        %v6839 = vpop.f32.mrf.mxu0
        %v6840 = vadd.f32 %v6716, %v6839
        %6841 = vmatmul.f32.gmra.mxu0 %v6726
        %v6842 = vpop.f32.mrf.mxu0
        %v6843 = vadd.f32 %v6716, %v6842
        %6844 = vmatmul.f32.gmra.mxu0 %v6729
        %v6845 = vpop.f32.mrf.mxu0
        %v6846 = vadd.f32 %v6716, %v6845
        %6847 = vmatmul.f32.gmra.mxu0 %v6732
        %v6848 = vpop.f32.mrf.mxu0
        %v6849 = vadd.f32 %v6716, %v6848
        %6850 = vmatmul.f32.gmra.mxu0 %v6735
        %v6851 = vpop.f32.mrf.mxu0
        %v6852 = vadd.f32 %v6716, %v6851
        %6853 = vmatmul.f32.gmra.mxu0 %v6738
        %v6854 = vpop.f32.mrf.mxu0
        %v6855 = vadd.f32 %v6716, %v6854
        %6856 = vmatmul.f32.gmra.mxu0 %v6741
        %v6857 = vpop.f32.mrf.mxu0
        %v6858 = vadd.f32 %v6716, %v6857
        %6859 = vmatmul.f32.gmra.mxu0 %v6744
        %v6860 = vpop.f32.mrf.mxu0
        %v6861 = vadd.f32 %v6716, %v6860
        %6862 = vmatmul.f32.gmra.mxu0 %v6747
        %v6863 = vpop.f32.mrf.mxu0
        %v6864 = vadd.f32 %v6716, %v6863
        %6865 = vmatmul.f32.gmra.mxu0 %v6750
        %v6866 = vpop.f32.mrf.mxu0
        %v6867 = vadd.f32 %v6716, %v6866
        %6868 = vmatmul.f32.gmra.mxu0 %v6753
        %v6869 = vpop.f32.mrf.mxu0
        %v6870 = vadd.f32 %v6716, %v6869
        %6871 = vmatmul.f32.gmra.mxu0 %v6756
        %v6872 = vpop.f32.mrf.mxu0
        %v6873 = vadd.f32 %v6716, %v6872
        %6874 = vmatmul.f32.gmra.mxu0 %v6759
        %v6875 = vpop.f32.mrf.mxu0
        %v6876 = vadd.f32 %v6716, %v6875
        %6877 = vmatmul.f32.gmra.mxu0 %v6762
        %v6878 = vpop.f32.mrf.mxu0
        %v6879 = vadd.f32 %v6716, %v6878
        %6880 = vmatmul.f32.gmra.mxu0 %v6765
        %v6881 = vpop.f32.mrf.mxu0
        %v6882 = vadd.f32 %v6716, %v6881
        %6883 = vmatmul.f32.gmra.mxu0 %v6768
        %v6884 = vpop.f32.mrf.mxu0
        %v6885 = vadd.f32 %v6716, %v6884
        %6886 = vmatmul.f32.gmra.mxu0 %v6771
        %v6887 = vpop.f32.mrf.mxu0
        %v6888 = vadd.f32 %v6716, %v6887
        %6889 = vmatmul.f32.gmra.mxu0 %v6774
        %v6890 = vpop.f32.mrf.mxu0
        %v6891 = vadd.f32 %v6716, %v6890
        %6892 = vmatmul.f32.gmra.mxu0 %v6777
        %v6893 = vpop.f32.mrf.mxu0
        %v6894 = vadd.f32 %v6716, %v6893
        %6895 = vmatmul.f32.gmra.mxu0 %v6780
        %v6896 = vpop.f32.mrf.mxu0
        %v6897 = vadd.f32 %v6716, %v6896
        %6898 = vmatmul.f32.gmra.mxu0 %v6783
        %v6899 = vpop.f32.mrf.mxu0
        %v6900 = vadd.f32 %v6716, %v6899
        %6901 = vmatmul.f32.gmra.mxu0 %v6786
        %v6902 = vpop.f32.mrf.mxu0
        %v6903 = vadd.f32 %v6716, %v6902
        %6904 = vmatmul.f32.gmra.mxu0 %v6789
        %v6905 = vpop.f32.mrf.mxu0
        %v6906 = vadd.f32 %v6716, %v6905
        %6907 = vmatmul.f32.gmra.mxu0 %v6792
        %v6908 = vpop.f32.mrf.mxu0
        %v6909 = vadd.f32 %v6716, %v6908
        %6910 = vmatmul.f32.gmra.mxu0 %v6795
        %v6911 = vpop.f32.mrf.mxu0
        %v6912 = vadd.f32 %v6716, %v6911
        %6913 = vmatmul.f32.gmra.mxu0 %v6798
        %v6914 = vpop.f32.mrf.mxu0
        %v6915 = vadd.f32 %v6716, %v6914
        %6916 = vmatmul.f32.gmra.mxu0 %v6801
        %v6917 = vpop.f32.mrf.mxu0
        %v6918 = vadd.f32 %v6716, %v6917
        %6919 = vmatmul.f32.gmra.mxu0 %v6804
        %v6920 = vpop.f32.mrf.mxu0
        %v6921 = vadd.f32 %v6716, %v6920
        %6922 = vmatmul.f32.gmra.mxu0 %v6807
        %v6923 = vpop.f32.mrf.mxu0
        %v6924 = vadd.f32 %v6716, %v6923
        %6925 = vmatmul.f32.gmra.mxu0 %v6810
        %v6926 = vpop.f32.mrf.mxu0
        %v6927 = vadd.f32 %v6716, %v6926
        %6928 = vmatmul.f32.gmra.mxu0 %v6813
        %v6929 = vpop.f32.mrf.mxu0
        %v6930 = vadd.f32 %v6716, %v6929
        %6931 = vdwg.mxu0
        %v6932 = vmax.f32 %v6837, 0.0
        %v6933 = vmax.f32 %v6840, 0.0
        %v6934 = vmax.f32 %v6843, 0.0
        %v6935 = vmax.f32 %v6846, 0.0
        %v6936 = vmax.f32 %v6849, 0.0
        %v6937 = vmax.f32 %v6852, 0.0
        %v6938 = vmax.f32 %v6855, 0.0
        %v6939 = vmax.f32 %v6858, 0.0
        %v6940 = vmax.f32 %v6861, 0.0
        %v6941 = vmax.f32 %v6864, 0.0
        %v6942 = vmax.f32 %v6867, 0.0
        %v6943 = vmax.f32 %v6870, 0.0
        %v6944 = vmax.f32 %v6873, 0.0
        %v6945 = vmax.f32 %v6876, 0.0
        %v6946 = vmax.f32 %v6879, 0.0
        %v6947 = vmax.f32 %v6882, 0.0
        %v6948 = vmax.f32 %v6885, 0.0
        %v6949 = vmax.f32 %v6888, 0.0
        %v6950 = vmax.f32 %v6891, 0.0
        %v6951 = vmax.f32 %v6894, 0.0
        %v6952 = vmax.f32 %v6897, 0.0
        %v6953 = vmax.f32 %v6900, 0.0
        %v6954 = vmax.f32 %v6903, 0.0
        %v6955 = vmax.f32 %v6906, 0.0
        %v6956 = vmax.f32 %v6909, 0.0
        %v6957 = vmax.f32 %v6912, 0.0
        %v6958 = vmax.f32 %v6915, 0.0
        %v6959 = vmax.f32 %v6918, 0.0
        %v6960 = vmax.f32 %v6921, 0.0
        %v6961 = vmax.f32 %v6924, 0.0
        %v6962 = vmax.f32 %v6927, 0.0
        %v6963 = vmax.f32 %v6930, 0.0
        %6964 = vxpose.xlu0.b32.start [1/16] %v6932, 128
        %6965 = vxpose.xlu0.b32.cont [2/16] %v6933, 128
        %6966 = vxpose.xlu0.b32.cont [3/16] %v6934, 128
        %6967 = vxpose.xlu0.b32.cont [4/16] %v6935, 128
        %6968 = vxpose.xlu0.b32.cont [5/16] %v6936, 128
        %6969 = vxpose.xlu0.b32.cont [6/16] %v6937, 128
        %6970 = vxpose.xlu0.b32.cont [7/16] %v6938, 128
        %6971 = vxpose.xlu0.b32.cont [8/16] %v6939, 128
        %6972 = vxpose.xlu0.b32.cont [9/16] %v6940, 128
        %6973 = vxpose.xlu0.b32.cont [10/16] %v6941, 128
        %6974 = vxpose.xlu0.b32.cont [11/16] %v6942, 128
        %6975 = vxpose.xlu0.b32.cont [12/16] %v6943, 128
        %6976 = vxpose.xlu0.b32.cont [13/16] %v6944, 128
        %6977 = vxpose.xlu0.b32.cont [14/16] %v6945, 128
        %6978 = vxpose.xlu0.b32.cont [15/16] %v6946, 128
        %6979 = vxpose.xlu0.b32.end [16/16] %v6947, 128
        %v6980 = vpop.trf.xlu0
        %v6981 = vpop.trf.xlu0
        %v6982 = vpop.trf.xlu0
        %v6983 = vpop.trf.xlu0
        %v6984 = vpop.trf.xlu0
        %v6985 = vpop.trf.xlu0
        %v6986 = vpop.trf.xlu0
        %v6987 = vpop.trf.xlu0
        %v6988 = vpop.trf.xlu0
        %v6989 = vpop.trf.xlu0
        %v6990 = vpop.trf.xlu0
        %v6991 = vpop.trf.xlu0
        %v6992 = vpop.trf.xlu0
        %v6993 = vpop.trf.xlu0
        %v6994 = vpop.trf.xlu0
        %v6995 = vpop.trf.xlu0
        %6996 = vxpose.xlu0.b32.start [1/16] %v6948, 128
        %6997 = vxpose.xlu0.b32.cont [2/16] %v6949, 128
        %6998 = vxpose.xlu0.b32.cont [3/16] %v6950, 128
        %6999 = vxpose.xlu0.b32.cont [4/16] %v6951, 128
        %7000 = vxpose.xlu0.b32.cont [5/16] %v6952, 128
        %7001 = vxpose.xlu0.b32.cont [6/16] %v6953, 128
        %7002 = vxpose.xlu0.b32.cont [7/16] %v6954, 128
        %7003 = vxpose.xlu0.b32.cont [8/16] %v6955, 128
        %7004 = vxpose.xlu0.b32.cont [9/16] %v6956, 128
        %7005 = vxpose.xlu0.b32.cont [10/16] %v6957, 128
        %7006 = vxpose.xlu0.b32.cont [11/16] %v6958, 128
        %7007 = vxpose.xlu0.b32.cont [12/16] %v6959, 128
        %7008 = vxpose.xlu0.b32.cont [13/16] %v6960, 128
        %7009 = vxpose.xlu0.b32.cont [14/16] %v6961, 128
        %7010 = vxpose.xlu0.b32.cont [15/16] %v6962, 128
        %7011 = vxpose.xlu0.b32.end [16/16] %v6963, 128
        %v7012 = vpop.trf.xlu0
        %v7013 = vpop.trf.xlu0
        %v7014 = vpop.trf.xlu0
        %v7015 = vpop.trf.xlu0
        %v7016 = vpop.trf.xlu0
        %v7017 = vpop.trf.xlu0
        %v7018 = vpop.trf.xlu0
        %v7019 = vpop.trf.xlu0
        %v7020 = vpop.trf.xlu0
        %v7021 = vpop.trf.xlu0
        %v7022 = vpop.trf.xlu0
        %v7023 = vpop.trf.xlu0
        %v7024 = vpop.trf.xlu0
        %v7025 = vpop.trf.xlu0
        %v7026 = vpop.trf.xlu0
        %v7027 = vpop.trf.xlu0
        %v7030 = vrot.slane %v7012, 6
        %vm7031 = vcmask 1041408
        %v7032 = vsel %vm7031, %v6980, %v7030
        %7034 = vst [vmem:[%s325] sm:$0xf] %v7032
        %s7035 = sand.u32 %s225, 1
        %s7036 = scalar_lea.sflag [#allocation4], %s7035
        %s7037 = sand.u32 %s225, 1
        %s7038 = smul.addr %s7037, 4
        %s7039 = scalar_lea.vmem [#allocation3], %s7038
        // Predicated region
        $region57: #{tpu_custom_call.1} parent=55 // pred_check
          %p7040 = pneg %p235
        $region58: #{tpu_custom_call.1} parent=55 // pred_check_branch
          %7042 = sbr.rel (%p7040) target = $region60
        $region59: #{tpu_custom_call.1} parent=55 // pred_region
          %7044 = vsyncadd %s7036, 0
          %s7045 = smul.addr %s23, 2
          %s7046 = smul.addr %s7045, 2
          %s7047 = scalar_lea.hbm %s9, %s7046
          %s7049 = sshll.u32 %s7039, 4
          %s7050 = int_to_ptr.vmem [resolvable:$true] %s7049
          %s7051 = sshll.u32 %s7047, 4
          %s7052 = int_to_ptr.hbm [resolvable:$true] %s7051
          %7054 = dma.vmem_to_hbm [thread:$0]  %s7050, 64, %s7052, %s7036
        $region60: #{tpu_custom_call.1} parent=55 // pred_fallthru
          _
      $region56: #{tpu_custom_call.1} parent=5 // pred_fallthru
        _
      %p7055 = scmp.le.s32.totalorder 2, %s18
      // Predicated region
      $region61: #{tpu_custom_call.1} parent=5 // pred_check
        %p7056 = pneg %p7055
      $region62: #{tpu_custom_call.1} parent=5 // pred_check_branch
        %7058 = sbr.rel (%p7056) target = $region64
      $region63: #{tpu_custom_call.1} parent=5 // pred_region
        %s7059 = ssub.s32 %s18, 2
        // Predicated region
        $region65: #{tpu_custom_call.1} parent=63 // pred_check
          %p7060 = pneg %p241
        $region66: #{tpu_custom_call.1} parent=63 // pred_check_branch
          %7062 = sbr.rel (%p7060) target = $region68
        $region67: #{tpu_custom_call.1} parent=63 // pred_region
          %s7063 = sand.u32 %s226, 1
          %s7064 = scalar_lea.sflag [#allocation4], %s7063
          %s7065 = sand.u32 %s226, 1
          %s7066 = smul.addr %s7065, 4
          %s7067 = scalar_lea.vmem [#allocation3], %s7066
          %7069 = dma.done %s7064, 64
        $region68: #{tpu_custom_call.1} parent=63 // pred_fallthru
          _
      $region64: #{tpu_custom_call.1} parent=5 // pred_fallthru
        _
    $region6: #{tpu_custom_call.1} parent=1 // loop_footer
      %s22 = sadd.s32 1, %s18
    $region7: #{tpu_custom_call.1} parent=1 // loop_footer_branch
      %17 = sbr.rel target = $region3
    $region8: #{tpu_custom_call.1} parent=1 // loop_exit
      _
    %7070 = vsyncpa [#allocation4], 1
    %s7071 = scalar_lea.sflag [#allocation4], 1
    %7072 = vsyncpa %s7071, 1

</llo_original>
